<compile_context>
chip_gen: v7x
topology: tpu7x:2x2x1
jax: 0.10.0
libtpu: 0.0.40
codegen_flags: <defaults>
</compile_context>

<pallas_src>
import jax
import jax.numpy as jnp
from jax import lax
from jax.experimental import pallas as pl
from jax.experimental.pallas import tpu as pltpu


BT = 8  # images per grid step (batch tile)


# ----------------------------------------------------------------------------
# One-time parameter preprocessing (hoisted out of the per-call forward path).
# ----------------------------------------------------------------------------
def prepare_params(params):
    conv_w = params["conv_w"].astype(jnp.float32)   # (32, 1, 3, 3)
    conv_b = params["conv_b"].astype(jnp.float32)   # (32,)
    fc1_w = params["fc1_w"].astype(jnp.float32)     # (128, 5408)
    fc1_b = params["fc1_b"].astype(jnp.float32)     # (128,)
    fc2_w = params["fc2_w"].astype(jnp.float32)     # (10, 128)
    fc2_b = params["fc2_b"].astype(jnp.float32)     # (10,)

    w_hwc = jnp.transpose(conv_w[:, 0], (1, 2, 0))  # (3, 3, 32)  [di, dj, c]

    # Toeplitz-expanded conv weight:
    #   wc[di, jj, r*512 + p*32 + c] = w_hwc[di, jj - (2p + r), c]  (0 <= jj-j <= 2)
    # Columns with p >= 13 (spatial col j >= 26) are zero padding.
    wc = jnp.zeros((3, 28, 2, 16, 32), jnp.float32)
    for r in range(2):
        for p in range(13):
            j = 2 * p + r
            wc = wc.at[:, j:j + 3, r, p, :].set(w_hwc)
    wc = wc.reshape(3, 28, 1024)

    # Conv bias broadcast to the same (r, p, c) lane layout; zero on padded p.
    bc = jnp.zeros((2, 16, 32), jnp.float32).at[:, :13, :].set(conv_b[None, None, :])
    bc = bc.reshape(1, 1024)

    # fc1 weight permuted from PyTorch's (c, h, w) flatten order to the kernel's
    # (q, p_pad16, c) flatten order; zero rows for the padded p >= 13 columns.
    w1 = fc1_w.reshape(128, 32, 13, 13)             # [n, c, q, p]
    w1 = jnp.transpose(w1, (2, 3, 1, 0))            # [q, p, c, n]
    w1p = jnp.zeros((13, 16, 32, 128), jnp.float32).at[:, :13].set(w1)
    w1p = w1p.reshape(13 * 16 * 32, 128)            # (6656, 128)

    # fc2 padded to 128 output lanes (unmasked stores); wrapper slices [:, :10].
    w2p = jnp.zeros((128, 128), jnp.float32).at[:, :10].set(fc2_w.T)
    b2p = jnp.zeros((1, 128), jnp.float32).at[0, :10].set(fc2_b)

    return {
        "wc": wc, "bc": bc,
        "w1": w1p, "b1": fc1_b[None, :],
        "w2": w2p, "b2": b2p,
    }


# ----------------------------------------------------------------------------
# Fused kernel: conv(3x3) + bias + ReLU + maxpool(2,2) + flatten + fc1 + relu + fc2
# One grid step processes BT images.
# ----------------------------------------------------------------------------
def fused_cnn_kernel(x_ref, wc_ref, bc_ref, w1_ref, b1_ref, w2_ref, b2_ref, o_ref):
    bt = x_ref.shape[2]                 # batch tile
    xv = x_ref[...]                     # (2, 14, bt, 28): [row-parity, row//2, b, col]
    wc = wc_ref[...]                    # (3, 28, 1024)
    bc = bc_ref[...]                    # (1, 1024)

    def conv_pool_cols(s):
        # Conv output rows i = 2*q + s, laid out as rows (q, b); lanes (r, p, c).
        acc = None
        for di in range(3):
            t = s + di                              # input row = 2*q + t
            slab = xv[t % 2, t // 2: t // 2 + 13]   # (13, bt, 28)
            lhs = slab.reshape(13 * bt, 28)         # rows ordered (q, b)
            d = jnp.dot(lhs, wc[di], preferred_element_type=jnp.float32)
            acc = d if acc is None else acc + d     # (13*bt, 1024)
        a = jnp.maximum(acc + bc, 0.0)              # bias + ReLU
        # Max-pool over columns: r=0 half vs r=1 half (128-aligned lane slices).
        return jnp.maximum(a[:, :512], a[:, 512:])  # (13*bt, 512) lanes (p, c)

    # Max-pool over rows: even-row half (s=0) vs odd-row half (s=1).
    rp = jnp.maximum(conv_pool_cols(0), conv_pool_cols(1))   # (13*bt, 512)

    # Flatten to (bt, 13*512) in (q, p, c) order (matches the permuted fc1 weight).
    ps = jnp.concatenate([rp[q * bt:(q + 1) * bt, :] for q in range(13)], axis=1)

    h = jnp.dot(ps, w1_ref[...], preferred_element_type=jnp.float32) + b1_ref[...]
    h = jnp.maximum(h, 0.0)                                   # (bt, 128)
    y = jnp.dot(h, w2_ref[...], preferred_element_type=jnp.float32) + b2_ref[...]
    o_ref[...] = y                                            # (bt, 128), lane-dense


def cnn_forward(x_nchw, prep):
    """x_nchw: (B, 1, 28, 28) f32; prep: output of prepare_params -> (B, 10)."""
    B = x_nchw.shape[0]
    bpad = pl.cdiv(B, BT) * BT
    x_sq = x_nchw[:, 0]                                       # (B, 28, 28)
    if bpad != B:
        x_sq = jnp.pad(x_sq, ((0, bpad - B), (0, 0), (0, 0)))
    # (b, 2k+p, col) -> (p, k, b, col): row-parity split done once in the wrapper
    # so the kernel only needs aligned slices (no strided access in-kernel).
    x_prep = jnp.transpose(x_sq.reshape(bpad, 14, 2, 28), (2, 1, 0, 3))

    out = pl.pallas_call(
        fused_cnn_kernel,
        out_shape=jax.ShapeDtypeStruct((bpad, 128), jnp.float32),
        grid=(bpad // BT,),
        in_specs=[
            pl.BlockSpec((2, 14, BT, 28), lambda i: (0, 0, i, 0)),   # x tile
            pl.BlockSpec((3, 28, 1024), lambda i: (0, 0, 0)),        # conv (Toeplitz)
            pl.BlockSpec((1, 1024), lambda i: (0, 0)),               # conv bias
            pl.BlockSpec((6656, 128), lambda i: (0, 0)),             # fc1 w (resident)
            pl.BlockSpec((1, 128), lambda i: (0, 0)),                # fc1 b
            pl.BlockSpec((128, 128), lambda i: (0, 0)),              # fc2 w (padded)
            pl.BlockSpec((1, 128), lambda i: (0, 0)),                # fc2 b (padded)
        ],
        out_specs=pl.BlockSpec((BT, 128), lambda i: (i, 0)),
        compiler_params=pltpu.CompilerParams(dimension_semantics=("parallel",)),
    )(x_prep, prep["wc"], prep["bc"], prep["w1"], prep["b1"], prep["w2"], prep["b2"])

    return out[:B, :10]


# ----------------------------------------------------------------------------
# Pure-JAX reference matching the PyTorch module semantics.
# ----------------------------------------------------------------------------
def reference_forward(x_nchw, params):
    conv = lax.conv_general_dilated(
        x_nchw, params["conv_w"], window_strides=(1, 1), padding="VALID",
        dimension_numbers=("NCHW", "OIHW", "NCHW"),
    ) + params["conv_b"][None, :, None, None]
    conv = jnp.maximum(conv, 0.0)
    pooled = lax.reduce_window(
        conv, -jnp.inf, lax.max, (1, 1, 2, 2), (1, 1, 2, 2), "VALID"
    )                                                           # (B, 32, 13, 13)
    flat = pooled.reshape(x_nchw.shape[0], 32 * 13 * 13)
    h = jnp.maximum(flat @ params["fc1_w"].T + params["fc1_b"], 0.0)
    return h @ params["fc2_w"].T + params["fc2_b"]


if __name__ == "__main__":
    key = jax.random.PRNGKey(0)
    k_x, k_cw, k_cb, k_w1, k_b1, k_w2, k_b2 = jax.random.split(key, 7)

    # Deterministic synthetic parameters (PyTorch shapes), small scale.
    params = {
        "conv_w": jax.random.normal(k_cw, (32, 1, 3, 3), jnp.float32) * 0.1,
        "conv_b": jax.random.normal(k_cb, (32,), jnp.float32) * 0.1,
        "fc1_w": jax.random.normal(k_w1, (128, 32 * 13 * 13), jnp.float32) * 0.02,
        "fc1_b": jax.random.normal(k_b1, (128,), jnp.float32) * 0.1,
        "fc2_w": jax.random.normal(k_w2, (10, 128), jnp.float32) * 0.1,
        "fc2_b": jax.random.normal(k_b2, (10,), jnp.float32) * 0.1,
    }

    # Input consistent with the module's flatten: 1x28x28 (MNIST-style), batch=2.
    x = jax.random.normal(k_x, (2, 1, 28, 28), jnp.float32)

    prep = prepare_params(params)            # one-time weight preprocessing
    fwd = jax.jit(cnn_forward)

    out = jax.block_until_ready(fwd(x, prep))
    ref = jax.block_until_ready(reference_forward(x, params))

    assert out.shape == (2, 10), out.shape
    assert jnp.allclose(out, ref, atol=1e-3, rtol=1e-3), (out, ref)
    # TODO(synk): optional bf16 cast of fc1 weight/activation (v6e/v7x MXU) was
    # left out to preserve f32 parity with the PyTorch reference.
    print("KERNEL_OK")
</pallas_src>

<mosaic_0001>
module attributes {stable_mosaic.version = 11 : i64} {
  func.func @fused_cnn_kernel(%arg0: i32, %arg1: memref<2x14x8x28xf32, #tpu.memory_space<vmem>>, %arg2: memref<3x28x1024xf32, #tpu.memory_space<vmem>>, %arg3: memref<1x1024xf32, #tpu.memory_space<vmem>>, %arg4: memref<6656x128xf32, #tpu.memory_space<vmem>>, %arg5: memref<1x128xf32, #tpu.memory_space<vmem>>, %arg6: memref<128x128xf32, #tpu.memory_space<vmem>>, %arg7: memref<1x128xf32, #tpu.memory_space<vmem>>, %arg8: memref<8x128xf32, #tpu.memory_space<vmem>>) attributes {dimension_semantics = [#tpu.dimension_semantics<parallel>], iteration_bounds = array<i64: 1>, scalar_prefetch = 0 : i64, scratch_operands = 0 : i64, tpu.core_type = #tpu.core_type<tc>, window_params = [{transform_indices = @transform_0, window_bounds = array<i64: 2, 14, 8, 28>}, {pipeline_mode = #tpu.pipeline_mode<synchronous>, transform_indices = @transform_1, window_bounds = array<i64: 3, 28, 1024>}, {pipeline_mode = #tpu.pipeline_mode<synchronous>, transform_indices = @transform_2, window_bounds = array<i64: 1, 1024>}, {pipeline_mode = #tpu.pipeline_mode<synchronous>, transform_indices = @transform_3, window_bounds = array<i64: 6656, 128>}, {pipeline_mode = #tpu.pipeline_mode<synchronous>, transform_indices = @transform_4, window_bounds = array<i64: 1, 128>}, {pipeline_mode = #tpu.pipeline_mode<synchronous>, transform_indices = @transform_5, window_bounds = array<i64: 128, 128>}, {pipeline_mode = #tpu.pipeline_mode<synchronous>, transform_indices = @transform_6, window_bounds = array<i64: 1, 128>}, {transform_indices = @transform_7, window_bounds = array<i64: 8, 128>}]} {
    %c0 = arith.constant 0 : index
    %c0_0 = arith.constant 0 : index
    %c0_1 = arith.constant 0 : index
    %c0_2 = arith.constant 0 : index
    %0 = vector.load %arg1[%c0, %c0_0, %c0_1, %c0_2] : memref<2x14x8x28xf32, #tpu.memory_space<vmem>>, vector<2x14x8x28xf32>
    %c0_3 = arith.constant 0 : index
    %c0_4 = arith.constant 0 : index
    %c0_5 = arith.constant 0 : index
    %1 = vector.load %arg2[%c0_3, %c0_4, %c0_5] : memref<3x28x1024xf32, #tpu.memory_space<vmem>>, vector<3x28x1024xf32>
    %c0_6 = arith.constant 0 : index
    %c0_7 = arith.constant 0 : index
    %2 = vector.load %arg3[%c0_6, %c0_7] : memref<1x1024xf32, #tpu.memory_space<vmem>>, vector<1x1024xf32>
    %3 = vector.extract_strided_slice %0 {offsets = [0, 0, 0, 0], sizes = [1, 13, 8, 28], strides = [1, 1, 1, 1]} : vector<2x14x8x28xf32> to vector<1x13x8x28xf32>
    %4 = vector.shape_cast %3 : vector<1x13x8x28xf32> to vector<13x8x28xf32>
    %5 = vector.shape_cast %4 : vector<13x8x28xf32> to vector<104x28xf32>
    %6 = vector.extract_strided_slice %1 {offsets = [0, 0, 0], sizes = [1, 28, 1024], strides = [1, 1, 1]} : vector<3x28x1024xf32> to vector<1x28x1024xf32>
    %7 = vector.shape_cast %6 : vector<1x28x1024xf32> to vector<28x1024xf32>
    %cst = arith.constant dense<0.000000e+00> : vector<104x1024xf32>
    %8 = tpu.matmul %5, %7, %cst {dimension_numbers = #tpu.dot_dimension_numbers<[1], [0], [0], [1], [0, 0, 1, 1], [], []>} : vector<104x28xf32>, vector<28x1024xf32>, vector<104x1024xf32> -> vector<104x1024xf32>
    %9 = vector.extract_strided_slice %0 {offsets = [1, 0, 0, 0], sizes = [1, 13, 8, 28], strides = [1, 1, 1, 1]} : vector<2x14x8x28xf32> to vector<1x13x8x28xf32>
    %10 = vector.shape_cast %9 : vector<1x13x8x28xf32> to vector<13x8x28xf32>
    %11 = vector.shape_cast %10 : vector<13x8x28xf32> to vector<104x28xf32>
    %12 = vector.extract_strided_slice %1 {offsets = [1, 0, 0], sizes = [1, 28, 1024], strides = [1, 1, 1]} : vector<3x28x1024xf32> to vector<1x28x1024xf32>
    %13 = vector.shape_cast %12 : vector<1x28x1024xf32> to vector<28x1024xf32>
    %cst_8 = arith.constant dense<0.000000e+00> : vector<104x1024xf32>
    %14 = tpu.matmul %11, %13, %cst_8 {dimension_numbers = #tpu.dot_dimension_numbers<[1], [0], [0], [1], [0, 0, 1, 1], [], []>} : vector<104x28xf32>, vector<28x1024xf32>, vector<104x1024xf32> -> vector<104x1024xf32>
    %15 = arith.addf %8, %14 : vector<104x1024xf32>
    %16 = vector.extract_strided_slice %0 {offsets = [0, 1, 0, 0], sizes = [1, 13, 8, 28], strides = [1, 1, 1, 1]} : vector<2x14x8x28xf32> to vector<1x13x8x28xf32>
    %17 = vector.shape_cast %16 : vector<1x13x8x28xf32> to vector<13x8x28xf32>
    %18 = vector.shape_cast %17 : vector<13x8x28xf32> to vector<104x28xf32>
    %19 = vector.extract_strided_slice %1 {offsets = [2, 0, 0], sizes = [1, 28, 1024], strides = [1, 1, 1]} : vector<3x28x1024xf32> to vector<1x28x1024xf32>
    %20 = vector.shape_cast %19 : vector<1x28x1024xf32> to vector<28x1024xf32>
    %cst_9 = arith.constant dense<0.000000e+00> : vector<104x1024xf32>
    %21 = tpu.matmul %18, %20, %cst_9 {dimension_numbers = #tpu.dot_dimension_numbers<[1], [0], [0], [1], [0, 0, 1, 1], [], []>} : vector<104x28xf32>, vector<28x1024xf32>, vector<104x1024xf32> -> vector<104x1024xf32>
    %22 = arith.addf %15, %21 : vector<104x1024xf32>
    %23 = vector.broadcast %2 : vector<1x1024xf32> to vector<104x1024xf32>
    %24 = arith.addf %22, %23 : vector<104x1024xf32>
    %cst_10 = arith.constant 0.000000e+00 : f32
    %25 = vector.broadcast %cst_10 : f32 to vector<104x1024xf32>
    %26 = arith.maximumf %24, %25 : vector<104x1024xf32>
    %27 = vector.extract_strided_slice %26 {offsets = [0, 0], sizes = [104, 512], strides = [1, 1]} : vector<104x1024xf32> to vector<104x512xf32>
    %28 = vector.extract_strided_slice %26 {offsets = [0, 512], sizes = [104, 512], strides = [1, 1]} : vector<104x1024xf32> to vector<104x512xf32>
    %29 = arith.maximumf %27, %28 : vector<104x512xf32>
    %30 = vector.extract_strided_slice %0 {offsets = [1, 0, 0, 0], sizes = [1, 13, 8, 28], strides = [1, 1, 1, 1]} : vector<2x14x8x28xf32> to vector<1x13x8x28xf32>
    %31 = vector.shape_cast %30 : vector<1x13x8x28xf32> to vector<13x8x28xf32>
    %32 = vector.shape_cast %31 : vector<13x8x28xf32> to vector<104x28xf32>
    %33 = vector.extract_strided_slice %1 {offsets = [0, 0, 0], sizes = [1, 28, 1024], strides = [1, 1, 1]} : vector<3x28x1024xf32> to vector<1x28x1024xf32>
    %34 = vector.shape_cast %33 : vector<1x28x1024xf32> to vector<28x1024xf32>
    %cst_11 = arith.constant dense<0.000000e+00> : vector<104x1024xf32>
    %35 = tpu.matmul %32, %34, %cst_11 {dimension_numbers = #tpu.dot_dimension_numbers<[1], [0], [0], [1], [0, 0, 1, 1], [], []>} : vector<104x28xf32>, vector<28x1024xf32>, vector<104x1024xf32> -> vector<104x1024xf32>
    %36 = vector.extract_strided_slice %0 {offsets = [0, 1, 0, 0], sizes = [1, 13, 8, 28], strides = [1, 1, 1, 1]} : vector<2x14x8x28xf32> to vector<1x13x8x28xf32>
    %37 = vector.shape_cast %36 : vector<1x13x8x28xf32> to vector<13x8x28xf32>
    %38 = vector.shape_cast %37 : vector<13x8x28xf32> to vector<104x28xf32>
    %39 = vector.extract_strided_slice %1 {offsets = [1, 0, 0], sizes = [1, 28, 1024], strides = [1, 1, 1]} : vector<3x28x1024xf32> to vector<1x28x1024xf32>
    %40 = vector.shape_cast %39 : vector<1x28x1024xf32> to vector<28x1024xf32>
    %cst_12 = arith.constant dense<0.000000e+00> : vector<104x1024xf32>
    %41 = tpu.matmul %38, %40, %cst_12 {dimension_numbers = #tpu.dot_dimension_numbers<[1], [0], [0], [1], [0, 0, 1, 1], [], []>} : vector<104x28xf32>, vector<28x1024xf32>, vector<104x1024xf32> -> vector<104x1024xf32>
    %42 = arith.addf %35, %41 : vector<104x1024xf32>
    %43 = vector.extract_strided_slice %0 {offsets = [1, 1, 0, 0], sizes = [1, 13, 8, 28], strides = [1, 1, 1, 1]} : vector<2x14x8x28xf32> to vector<1x13x8x28xf32>
    %44 = vector.shape_cast %43 : vector<1x13x8x28xf32> to vector<13x8x28xf32>
    %45 = vector.shape_cast %44 : vector<13x8x28xf32> to vector<104x28xf32>
    %46 = vector.extract_strided_slice %1 {offsets = [2, 0, 0], sizes = [1, 28, 1024], strides = [1, 1, 1]} : vector<3x28x1024xf32> to vector<1x28x1024xf32>
    %47 = vector.shape_cast %46 : vector<1x28x1024xf32> to vector<28x1024xf32>
    %cst_13 = arith.constant dense<0.000000e+00> : vector<104x1024xf32>
    %48 = tpu.matmul %45, %47, %cst_13 {dimension_numbers = #tpu.dot_dimension_numbers<[1], [0], [0], [1], [0, 0, 1, 1], [], []>} : vector<104x28xf32>, vector<28x1024xf32>, vector<104x1024xf32> -> vector<104x1024xf32>
    %49 = arith.addf %42, %48 : vector<104x1024xf32>
    %50 = vector.broadcast %2 : vector<1x1024xf32> to vector<104x1024xf32>
    %51 = arith.addf %49, %50 : vector<104x1024xf32>
    %cst_14 = arith.constant 0.000000e+00 : f32
    %52 = vector.broadcast %cst_14 : f32 to vector<104x1024xf32>
    %53 = arith.maximumf %51, %52 : vector<104x1024xf32>
    %54 = vector.extract_strided_slice %53 {offsets = [0, 0], sizes = [104, 512], strides = [1, 1]} : vector<104x1024xf32> to vector<104x512xf32>
    %55 = vector.extract_strided_slice %53 {offsets = [0, 512], sizes = [104, 512], strides = [1, 1]} : vector<104x1024xf32> to vector<104x512xf32>
    %56 = arith.maximumf %54, %55 : vector<104x512xf32>
    %57 = arith.maximumf %29, %56 : vector<104x512xf32>
    %58 = vector.extract_strided_slice %57 {offsets = [0, 0], sizes = [8, 512], strides = [1, 1]} : vector<104x512xf32> to vector<8x512xf32>
    %59 = vector.extract_strided_slice %57 {offsets = [8, 0], sizes = [8, 512], strides = [1, 1]} : vector<104x512xf32> to vector<8x512xf32>
    %60 = vector.extract_strided_slice %57 {offsets = [16, 0], sizes = [8, 512], strides = [1, 1]} : vector<104x512xf32> to vector<8x512xf32>
    %61 = vector.extract_strided_slice %57 {offsets = [24, 0], sizes = [8, 512], strides = [1, 1]} : vector<104x512xf32> to vector<8x512xf32>
    %62 = vector.extract_strided_slice %57 {offsets = [32, 0], sizes = [8, 512], strides = [1, 1]} : vector<104x512xf32> to vector<8x512xf32>
    %63 = vector.extract_strided_slice %57 {offsets = [40, 0], sizes = [8, 512], strides = [1, 1]} : vector<104x512xf32> to vector<8x512xf32>
    %64 = vector.extract_strided_slice %57 {offsets = [48, 0], sizes = [8, 512], strides = [1, 1]} : vector<104x512xf32> to vector<8x512xf32>
    %65 = vector.extract_strided_slice %57 {offsets = [56, 0], sizes = [8, 512], strides = [1, 1]} : vector<104x512xf32> to vector<8x512xf32>
    %66 = vector.extract_strided_slice %57 {offsets = [64, 0], sizes = [8, 512], strides = [1, 1]} : vector<104x512xf32> to vector<8x512xf32>
    %67 = vector.extract_strided_slice %57 {offsets = [72, 0], sizes = [8, 512], strides = [1, 1]} : vector<104x512xf32> to vector<8x512xf32>
    %68 = vector.extract_strided_slice %57 {offsets = [80, 0], sizes = [8, 512], strides = [1, 1]} : vector<104x512xf32> to vector<8x512xf32>
    %69 = vector.extract_strided_slice %57 {offsets = [88, 0], sizes = [8, 512], strides = [1, 1]} : vector<104x512xf32> to vector<8x512xf32>
    %70 = vector.extract_strided_slice %57 {offsets = [96, 0], sizes = [8, 512], strides = [1, 1]} : vector<104x512xf32> to vector<8x512xf32>
    %71 = tpu.concatenate %58, %59, %60, %61, %62, %63, %64, %65, %66, %67, %68, %69, %70 in 1 : vector<8x512xf32>, vector<8x512xf32>, vector<8x512xf32>, vector<8x512xf32>, vector<8x512xf32>, vector<8x512xf32>, vector<8x512xf32>, vector<8x512xf32>, vector<8x512xf32>, vector<8x512xf32>, vector<8x512xf32>, vector<8x512xf32>, vector<8x512xf32> -> vector<8x6656xf32>
    %c0_15 = arith.constant 0 : index
    %c0_16 = arith.constant 0 : index
    %72 = vector.load %arg4[%c0_15, %c0_16] : memref<6656x128xf32, #tpu.memory_space<vmem>>, vector<6656x128xf32>
    %cst_17 = arith.constant dense<0.000000e+00> : vector<8x128xf32>
    %73 = tpu.matmul %71, %72, %cst_17 {dimension_numbers = #tpu.dot_dimension_numbers<[1], [0], [0], [1], [0, 0, 1, 1], [], []>} : vector<8x6656xf32>, vector<6656x128xf32>, vector<8x128xf32> -> vector<8x128xf32>
    %c0_18 = arith.constant 0 : index
    %c0_19 = arith.constant 0 : index
    %74 = vector.load %arg5[%c0_18, %c0_19] : memref<1x128xf32, #tpu.memory_space<vmem>>, vector<1x128xf32>
    %75 = vector.broadcast %74 : vector<1x128xf32> to vector<8x128xf32>
    %76 = arith.addf %73, %75 : vector<8x128xf32>
    %cst_20 = arith.constant 0.000000e+00 : f32
    %77 = vector.broadcast %cst_20 : f32 to vector<8x128xf32>
    %78 = arith.maximumf %76, %77 : vector<8x128xf32>
    %c0_21 = arith.constant 0 : index
    %c0_22 = arith.constant 0 : index
    %79 = vector.load %arg6[%c0_21, %c0_22] : memref<128x128xf32, #tpu.memory_space<vmem>>, vector<128x128xf32>
    %cst_23 = arith.constant dense<0.000000e+00> : vector<8x128xf32>
    %80 = tpu.matmul %78, %79, %cst_23 {dimension_numbers = #tpu.dot_dimension_numbers<[1], [0], [0], [1], [0, 0, 1, 1], [], []>} : vector<8x128xf32>, vector<128x128xf32>, vector<8x128xf32> -> vector<8x128xf32>
    %c0_24 = arith.constant 0 : index
    %c0_25 = arith.constant 0 : index
    %81 = vector.load %arg7[%c0_24, %c0_25] : memref<1x128xf32, #tpu.memory_space<vmem>>, vector<1x128xf32>
    %82 = vector.broadcast %81 : vector<1x128xf32> to vector<8x128xf32>
    %83 = arith.addf %80, %82 : vector<8x128xf32>
    %c0_26 = arith.constant 0 : index
    %c0_27 = arith.constant 0 : index
    %84 = vector.load %arg8[%c0_26, %c0_27] : memref<8x128xf32, #tpu.memory_space<vmem>>, vector<8x128xf32>
    tpu.vector_store %arg8[%c0_26, %c0_27], %83 {strides = array<i32>} : memref<8x128xf32, #tpu.memory_space<vmem>>, vector<8x128xf32>,
    return
  }
  func.func @transform_0(%arg0: i32) -> (i32, i32, i32, i32) {
    %c0_i32 = arith.constant 0 : i32
    %c0_i32_0 = arith.constant 0 : i32
    %c0_i32_1 = arith.constant 0 : i32
    %c0_i32_2 = arith.constant 0 : i32
    return %c0_i32, %c0_i32_0, %arg0, %c0_i32_1 : i32, i32, i32, i32
  }
  func.func @transform_1(%arg0: i32) -> (i32, i32, i32) {
    %c0_i32 = arith.constant 0 : i32
    %c0_i32_0 = arith.constant 0 : i32
    %c0_i32_1 = arith.constant 0 : i32
    %c0_i32_2 = arith.constant 0 : i32
    return %c0_i32, %c0_i32_0, %c0_i32_1 : i32, i32, i32
  }
  func.func @transform_2(%arg0: i32) -> (i32, i32) {
    %c0_i32 = arith.constant 0 : i32
    %c0_i32_0 = arith.constant 0 : i32
    %c0_i32_1 = arith.constant 0 : i32
    return %c0_i32, %c0_i32_0 : i32, i32
  }
  func.func @transform_3(%arg0: i32) -> (i32, i32) {
    %c0_i32 = arith.constant 0 : i32
    %c0_i32_0 = arith.constant 0 : i32
    %c0_i32_1 = arith.constant 0 : i32
    return %c0_i32, %c0_i32_0 : i32, i32
  }
  func.func @transform_4(%arg0: i32) -> (i32, i32) {
    %c0_i32 = arith.constant 0 : i32
    %c0_i32_0 = arith.constant 0 : i32
    %c0_i32_1 = arith.constant 0 : i32
    return %c0_i32, %c0_i32_0 : i32, i32
  }
  func.func @transform_5(%arg0: i32) -> (i32, i32) {
    %c0_i32 = arith.constant 0 : i32
    %c0_i32_0 = arith.constant 0 : i32
    %c0_i32_1 = arith.constant 0 : i32
    return %c0_i32, %c0_i32_0 : i32, i32
  }
  func.func @transform_6(%arg0: i32) -> (i32, i32) {
    %c0_i32 = arith.constant 0 : i32
    %c0_i32_0 = arith.constant 0 : i32
    %c0_i32_1 = arith.constant 0 : i32
    return %c0_i32, %c0_i32_0 : i32, i32
  }
  func.func @transform_7(%arg0: i32) -> (i32, i32) {
    %c0_i32 = arith.constant 0 : i32
    %c0_i32_0 = arith.constant 0 : i32
    return %arg0, %c0_i32 : i32, i32
  }
}

</mosaic_0001>

<llo_original>
// kernel: cnn_forward.1
$region0: #{cnn_forward.1}
  #allocation0 [shape = 'u32[]', space=smem, size = 0x4, offset = 0x4, fixed_abs, tag = 'smem constant byte address 0x4 - core index']
  #allocation1 [shape = 'u32[144,128]{1,0:T(1,128)}', space=vmem, size = 0x12000, scoped, tag = 'internal scratch']
  %s0 = inlined_call_operand.vmem [shape: f32[2,14,8,28], index: 0, kind: input, shape index: {}]
  %s1 = inlined_call_operand.hbm [shape: f32[3,28,1024], index: 1, kind: input, shape index: {}]
  %s2 = inlined_call_operand.hbm [shape: f32[1,1024], index: 2, kind: input, shape index: {}]
  %s3 = inlined_call_operand.hbm [shape: f32[6656,128], index: 3, kind: input, shape index: {}]
  %s4 = inlined_call_operand.hbm [shape: f32[1,128], index: 4, kind: input, shape index: {}]
  %s5 = inlined_call_operand.hbm [shape: f32[128,128], index: 5, kind: input, shape index: {}]
  %s6 = inlined_call_operand.hbm [shape: f32[1,128], index: 6, kind: input, shape index: {}]
  %s7 = inlined_call_operand.vmem [shape: f32[8,128], index: 7, kind: output, shape index: {}]
  %s8 = sld [smem:[#allocation0]]
  $region62: #{cnn_forward.1} parent=0
    _
  %s10 = ssub.s32 1, %s8
  %s11 = scalar_select 0, %s10, %s8
  $region1: #{cnn_forward.1} parent=0
    #allocation2 [shape = 'u8[393216]{0}', space=vmem, size = 0x60000, scoped, tag = 'input window, operand 1, single buffered']
    #allocation3 [shape = 's32[1]{0}', space=sflag, size = 0x4, scoped, tag = 'scoped memory for cnn_forward.1']
    #allocation4 [shape = 'u8[4096]{0}', space=vmem, size = 0x1000, scoped, tag = 'input window, operand 2, single buffered']
    #allocation5 [shape = 's32[1]{0}', space=sflag, size = 0x4, scoped, tag = 'scoped memory for cnn_forward.1']
    #allocation6 [shape = 'u8[3407872]{0}', space=vmem, size = 0x340000, scoped, tag = 'input window, operand 3, single buffered']
    #allocation7 [shape = 'u8[512]{0}', space=vmem, size = 0x400, scoped, tag = 'input window, operand 4, single buffered']
    #allocation8 [shape = 's32[1]{0}', space=sflag, size = 0x4, scoped, tag = 'scoped memory for cnn_forward.1']
    #allocation9 [shape = 'u8[65536]{0}', space=vmem, size = 0x10000, scoped, tag = 'input window, operand 5, single buffered']
    #allocation10 [shape = 'u8[512]{0}', space=vmem, size = 0x400, scoped, tag = 'input window, operand 6, single buffered']
    #allocation11 [shape = 's32[1]{0}', space=sflag, size = 0x4, scoped, tag = 'scoped memory for cnn_forward.1']
    %12 = vsyncpa [#allocation3], 0
    %13 = vsyncpa [#allocation5], 0
    %14 = vsyncpa [#allocation8], 0
    %15 = vsyncpa [#allocation11], 0
    // Predicated region
    $region2: #{cnn_forward.1} parent=1 // pred_check
      _
    $region3: #{cnn_forward.1} parent=1 // pred_check_branch
      %17 = sbr.rel (0) target = $region5
    $region4: #{cnn_forward.1} parent=1 // pred_region
      _
    $region5: #{cnn_forward.1} parent=1 // pred_fallthru
      _
    // Predicated region
    $region6: #{cnn_forward.1} parent=1 // pred_check
      _
    $region7: #{cnn_forward.1} parent=1 // pred_check_branch
      %19 = sbr.rel (0) target = $region9
    $region8: #{cnn_forward.1} parent=1 // pred_region
      %s21 = ssub.s32 12288, 12288
      %22 = vsyncadd [#allocation3], %s21
      %s23 = sshll.u32 [#allocation2], 4
      %s24 = int_to_ptr.vmem [resolvable:$true] %s23
      %29 = dma.hbm_to_vmem [thread:$0]  %s1, 12288, %s24, [#allocation3], 1024, 1024, 64
    $region9: #{cnn_forward.1} parent=1 // pred_fallthru
      _
    // Predicated region
    $region10: #{cnn_forward.1} parent=1 // pred_check
      _
    $region11: #{cnn_forward.1} parent=1 // pred_check_branch
      %31 = sbr.rel (0) target = $region13
    $region12: #{cnn_forward.1} parent=1 // pred_region
      %s33 = ssub.s32 128, 128
      %34 = vsyncadd [#allocation5], %s33
      %s36 = sshll.u32 [#allocation4], 4
      %s37 = int_to_ptr.vmem [resolvable:$true] %s36
      %39 = dma.hbm_to_vmem [thread:$0]  %s2, 128, %s37, [#allocation5]
    $region13: #{cnn_forward.1} parent=1 // pred_fallthru
      _
    // Predicated region
    $region14: #{cnn_forward.1} parent=1 // pred_check
      _
    $region15: #{cnn_forward.1} parent=1 // pred_check_branch
      %41 = sbr.rel (0) target = $region17
    $region16: #{cnn_forward.1} parent=1 // pred_region
      %s43 = ssub.s32 106496, 106496
      %44 = vsyncadd [#allocation5], %s43
      %s45 = sshll.u32 [#allocation6], 4
      %s46 = int_to_ptr.vmem [resolvable:$true] %s45
      %51 = dma.hbm_to_vmem [thread:$0]  %s3, 106496, %s46, [#allocation5], 128, 128, 8
    $region17: #{cnn_forward.1} parent=1 // pred_fallthru
      _
    // Predicated region
    $region18: #{cnn_forward.1} parent=1 // pred_check
      _
    $region19: #{cnn_forward.1} parent=1 // pred_check_branch
      %53 = sbr.rel (0) target = $region21
    $region20: #{cnn_forward.1} parent=1 // pred_region
      %s55 = ssub.s32 16, 16
      %56 = vsyncadd [#allocation8], %s55
      %s58 = sshll.u32 [#allocation7], 4
      %s59 = int_to_ptr.vmem [resolvable:$true] %s58
      %61 = dma.hbm_to_vmem [thread:$0]  %s4, 16, %s59, [#allocation8]
    $region21: #{cnn_forward.1} parent=1 // pred_fallthru
      _
    // Predicated region
    $region22: #{cnn_forward.1} parent=1 // pred_check
      _
    $region23: #{cnn_forward.1} parent=1 // pred_check_branch
      %63 = sbr.rel (0) target = $region25
    $region24: #{cnn_forward.1} parent=1 // pred_region
      %s65 = ssub.s32 2048, 2048
      %66 = vsyncadd [#allocation8], %s65
      %s67 = sshll.u32 [#allocation9], 4
      %s68 = int_to_ptr.vmem [resolvable:$true] %s67
      %73 = dma.hbm_to_vmem [thread:$0]  %s5, 2048, %s68, [#allocation8], 128, 128, 8
    $region25: #{cnn_forward.1} parent=1 // pred_fallthru
      _
    // Predicated region
    $region26: #{cnn_forward.1} parent=1 // pred_check
      _
    $region27: #{cnn_forward.1} parent=1 // pred_check_branch
      %75 = sbr.rel (0) target = $region29
    $region28: #{cnn_forward.1} parent=1 // pred_region
      %s77 = ssub.s32 16, 16
      %78 = vsyncadd [#allocation11], %s77
      %s80 = sshll.u32 [#allocation10], 4
      %s81 = int_to_ptr.vmem [resolvable:$true] %s80
      %83 = dma.hbm_to_vmem [thread:$0]  %s6, 16, %s81, [#allocation11]
    $region29: #{cnn_forward.1} parent=1 // pred_fallthru
      _
    // Predicated region
    $region30: #{cnn_forward.1} parent=1 // pred_check
      _
    $region31: #{cnn_forward.1} parent=1 // pred_check_branch
      %85 = sbr.rel (0) target = $region33
    $region32: #{cnn_forward.1} parent=1 // pred_region
      %86 = dma.done [#allocation3], 12288
    $region33: #{cnn_forward.1} parent=1 // pred_fallthru
      _
    // Predicated region
    $region34: #{cnn_forward.1} parent=1 // pred_check
      _
    $region35: #{cnn_forward.1} parent=1 // pred_check_branch
      %88 = sbr.rel (0) target = $region37
    $region36: #{cnn_forward.1} parent=1 // pred_region
      %89 = dma.done [#allocation5], 128
    $region37: #{cnn_forward.1} parent=1 // pred_fallthru
      _
    // Predicated region
    $region38: #{cnn_forward.1} parent=1 // pred_check
      _
    $region39: #{cnn_forward.1} parent=1 // pred_check_branch
      %91 = sbr.rel (0) target = $region41
    $region40: #{cnn_forward.1} parent=1 // pred_region
      %92 = dma.done [#allocation5], 106496
    $region41: #{cnn_forward.1} parent=1 // pred_fallthru
      _
    // Predicated region
    $region42: #{cnn_forward.1} parent=1 // pred_check
      _
    $region43: #{cnn_forward.1} parent=1 // pred_check_branch
      %94 = sbr.rel (0) target = $region45
    $region44: #{cnn_forward.1} parent=1 // pred_region
      %95 = dma.done [#allocation8], 16
    $region45: #{cnn_forward.1} parent=1 // pred_fallthru
      _
    // Predicated region
    $region46: #{cnn_forward.1} parent=1 // pred_check
      _
    $region47: #{cnn_forward.1} parent=1 // pred_check_branch
      %97 = sbr.rel (0) target = $region49
    $region48: #{cnn_forward.1} parent=1 // pred_region
      %98 = dma.done [#allocation8], 2048
    $region49: #{cnn_forward.1} parent=1 // pred_fallthru
      _
    // Predicated region
    $region50: #{cnn_forward.1} parent=1 // pred_check
      _
    $region51: #{cnn_forward.1} parent=1 // pred_check_branch
      %100 = sbr.rel (0) target = $region53
    $region52: #{cnn_forward.1} parent=1 // pred_region
      %101 = dma.done [#allocation11], 16
    $region53: #{cnn_forward.1} parent=1 // pred_fallthru
      _
    %v102 = vld [vmem:[%s0] sm:$0xff]
    %v103 = vld [vmem:[%s0 + $0x8] sm:$0xff]
    %v104 = vld [vmem:[%s0 + $0x10] sm:$0xff]
    %v105 = vld [vmem:[%s0 + $0x18] sm:$0xff]
    %v106 = vld [vmem:[%s0 + $0x20] sm:$0xff]
    %v107 = vld [vmem:[%s0 + $0x28] sm:$0xff]
    %v108 = vld [vmem:[%s0 + $0x30] sm:$0xff]
    %v109 = vld [vmem:[%s0 + $0x38] sm:$0xff]
    %v110 = vld [vmem:[%s0 + $0x40] sm:$0xff]
    %v111 = vld [vmem:[%s0 + $0x48] sm:$0xff]
    %v112 = vld [vmem:[%s0 + $0x50] sm:$0xff]
    %v113 = vld [vmem:[%s0 + $0x58] sm:$0xff]
    %v114 = vld [vmem:[%s0 + $0x60] sm:$0xff]
    %v115 = vld [vmem:[%s0 + $0x68] sm:$0xff]
    %v116 = vld [vmem:[%s0 + $0x70] sm:$0xff]
    %v117 = vld [vmem:[%s0 + $0x78] sm:$0xff]
    %v118 = vld [vmem:[%s0 + $0x80] sm:$0xff]
    %v119 = vld [vmem:[%s0 + $0x88] sm:$0xff]
    %v120 = vld [vmem:[%s0 + $0x90] sm:$0xff]
    %v121 = vld [vmem:[%s0 + $0x98] sm:$0xff]
    %v122 = vld [vmem:[%s0 + $0xa0] sm:$0xff]
    %v123 = vld [vmem:[%s0 + $0xa8] sm:$0xff]
    %v124 = vld [vmem:[%s0 + $0xb0] sm:$0xff]
    %v125 = vld [vmem:[%s0 + $0xb8] sm:$0xff]
    %v126 = vld [vmem:[%s0 + $0xc0] sm:$0xff]
    %v127 = vld [vmem:[%s0 + $0xc8] sm:$0xff]
    %v128 = vld [vmem:[%s0 + $0xd0] sm:$0xff]
    %v129 = vld [vmem:[%s0 + $0xd8] sm:$0xff]
    %v130 = vld [vmem:[#allocation2] sm:$0xff]
    %v131 = vld [vmem:[#allocation2 + $0x8] sm:$0xff]
    %v132 = vld [vmem:[#allocation2 + $0x10] sm:$0xff]
    %v133 = vld [vmem:[#allocation2 + $0x18] sm:$0xff]
    %v134 = vld [vmem:[#allocation2 + $0x20] sm:$0xff]
    %v135 = vld [vmem:[#allocation2 + $0x28] sm:$0xff]
    %v136 = vld [vmem:[#allocation2 + $0x30] sm:$0xff]
    %v137 = vld [vmem:[#allocation2 + $0x38] sm:$0xff]
    %v138 = vld [vmem:[#allocation2 + $0x40] sm:$0xff]
    %v139 = vld [vmem:[#allocation2 + $0x48] sm:$0xff]
    %v140 = vld [vmem:[#allocation2 + $0x50] sm:$0xff]
    %v141 = vld [vmem:[#allocation2 + $0x58] sm:$0xff]
    %v142 = vld [vmem:[#allocation2 + $0x60] sm:$0xff]
    %v143 = vld [vmem:[#allocation2 + $0x68] sm:$0xff]
    %v144 = vld [vmem:[#allocation2 + $0x70] sm:$0xff]
    %v145 = vld [vmem:[#allocation2 + $0x78] sm:$0xff]
    %v146 = vld [vmem:[#allocation2 + $0x80] sm:$0xff]
    %v147 = vld [vmem:[#allocation2 + $0x88] sm:$0xff]
    %v148 = vld [vmem:[#allocation2 + $0x90] sm:$0xff]
    %v149 = vld [vmem:[#allocation2 + $0x98] sm:$0xff]
    %v150 = vld [vmem:[#allocation2 + $0xa0] sm:$0xff]
    %v151 = vld [vmem:[#allocation2 + $0xa8] sm:$0xff]
    %v152 = vld [vmem:[#allocation2 + $0xb0] sm:$0xff]
    %v153 = vld [vmem:[#allocation2 + $0xb8] sm:$0xff]
    %v154 = vld [vmem:[#allocation2 + $0xc0] sm:$0xf]
    %v155 = vld [vmem:[#allocation2 + $0xc8] sm:$0xf]
    %v156 = vld [vmem:[#allocation2 + $0xd0] sm:$0xf]
    %v157 = vld [vmem:[#allocation2 + $0xd8] sm:$0xf]
    %v158 = vld [vmem:[#allocation2 + $0xe0] sm:$0xf]
    %v159 = vld [vmem:[#allocation2 + $0xe8] sm:$0xf]
    %v160 = vld [vmem:[#allocation2 + $0xf0] sm:$0xf]
    %v161 = vld [vmem:[#allocation2 + $0xf8] sm:$0xf]
    %v162 = vld [vmem:[#allocation2 + $0x100] sm:$0xff]
    %v163 = vld [vmem:[#allocation2 + $0x108] sm:$0xff]
    %v164 = vld [vmem:[#allocation2 + $0x110] sm:$0xff]
    %v165 = vld [vmem:[#allocation2 + $0x118] sm:$0xff]
    %v166 = vld [vmem:[#allocation2 + $0x120] sm:$0xff]
    %v167 = vld [vmem:[#allocation2 + $0x128] sm:$0xff]
    %v168 = vld [vmem:[#allocation2 + $0x130] sm:$0xff]
    %v169 = vld [vmem:[#allocation2 + $0x138] sm:$0xff]
    %v170 = vld [vmem:[#allocation2 + $0x140] sm:$0xff]
    %v171 = vld [vmem:[#allocation2 + $0x148] sm:$0xff]
    %v172 = vld [vmem:[#allocation2 + $0x150] sm:$0xff]
    %v173 = vld [vmem:[#allocation2 + $0x158] sm:$0xff]
    %v174 = vld [vmem:[#allocation2 + $0x160] sm:$0xff]
    %v175 = vld [vmem:[#allocation2 + $0x168] sm:$0xff]
    %v176 = vld [vmem:[#allocation2 + $0x170] sm:$0xff]
    %v177 = vld [vmem:[#allocation2 + $0x178] sm:$0xff]
    %v178 = vld [vmem:[#allocation2 + $0x180] sm:$0xff]
    %v179 = vld [vmem:[#allocation2 + $0x188] sm:$0xff]
    %v180 = vld [vmem:[#allocation2 + $0x190] sm:$0xff]
    %v181 = vld [vmem:[#allocation2 + $0x198] sm:$0xff]
    %v182 = vld [vmem:[#allocation2 + $0x1a0] sm:$0xff]
    %v183 = vld [vmem:[#allocation2 + $0x1a8] sm:$0xff]
    %v184 = vld [vmem:[#allocation2 + $0x1b0] sm:$0xff]
    %v185 = vld [vmem:[#allocation2 + $0x1b8] sm:$0xff]
    %v186 = vld [vmem:[#allocation2 + $0x1c0] sm:$0xf]
    %v187 = vld [vmem:[#allocation2 + $0x1c8] sm:$0xf]
    %v188 = vld [vmem:[#allocation2 + $0x1d0] sm:$0xf]
    %v189 = vld [vmem:[#allocation2 + $0x1d8] sm:$0xf]
    %v190 = vld [vmem:[#allocation2 + $0x1e0] sm:$0xf]
    %v191 = vld [vmem:[#allocation2 + $0x1e8] sm:$0xf]
    %v192 = vld [vmem:[#allocation2 + $0x1f0] sm:$0xf]
    %v193 = vld [vmem:[#allocation2 + $0x1f8] sm:$0xf]
    %v194 = vld [vmem:[#allocation2 + $0x200] sm:$0xff]
    %v195 = vld [vmem:[#allocation2 + $0x208] sm:$0xff]
    %v196 = vld [vmem:[#allocation2 + $0x210] sm:$0xff]
    %v197 = vld [vmem:[#allocation2 + $0x218] sm:$0xff]
    %v198 = vld [vmem:[#allocation2 + $0x220] sm:$0xff]
    %v199 = vld [vmem:[#allocation2 + $0x228] sm:$0xff]
    %v200 = vld [vmem:[#allocation2 + $0x230] sm:$0xff]
    %v201 = vld [vmem:[#allocation2 + $0x238] sm:$0xff]
    %v202 = vld [vmem:[#allocation2 + $0x240] sm:$0xff]
    %v203 = vld [vmem:[#allocation2 + $0x248] sm:$0xff]
    %v204 = vld [vmem:[#allocation2 + $0x250] sm:$0xff]
    %v205 = vld [vmem:[#allocation2 + $0x258] sm:$0xff]
    %v206 = vld [vmem:[#allocation2 + $0x260] sm:$0xff]
    %v207 = vld [vmem:[#allocation2 + $0x268] sm:$0xff]
    %v208 = vld [vmem:[#allocation2 + $0x270] sm:$0xff]
    %v209 = vld [vmem:[#allocation2 + $0x278] sm:$0xff]
    %v210 = vld [vmem:[#allocation2 + $0x280] sm:$0xff]
    %v211 = vld [vmem:[#allocation2 + $0x288] sm:$0xff]
    %v212 = vld [vmem:[#allocation2 + $0x290] sm:$0xff]
    %v213 = vld [vmem:[#allocation2 + $0x298] sm:$0xff]
    %v214 = vld [vmem:[#allocation2 + $0x2a0] sm:$0xff]
    %v215 = vld [vmem:[#allocation2 + $0x2a8] sm:$0xff]
    %v216 = vld [vmem:[#allocation2 + $0x2b0] sm:$0xff]
    %v217 = vld [vmem:[#allocation2 + $0x2b8] sm:$0xff]
    %v218 = vld [vmem:[#allocation2 + $0x2c0] sm:$0xf]
    %v219 = vld [vmem:[#allocation2 + $0x2c8] sm:$0xf]
    %v220 = vld [vmem:[#allocation2 + $0x2d0] sm:$0xf]
    %v221 = vld [vmem:[#allocation2 + $0x2d8] sm:$0xf]
    %v222 = vld [vmem:[#allocation2 + $0x2e0] sm:$0xf]
    %v223 = vld [vmem:[#allocation2 + $0x2e8] sm:$0xf]
    %v224 = vld [vmem:[#allocation2 + $0x2f0] sm:$0xf]
    %v225 = vld [vmem:[#allocation2 + $0x2f8] sm:$0xf]
    %v226 = vld [vmem:[#allocation4] sm:$0xff]
    %vm227 = vcmask 228352
    %v229 = vsel %vm227, %v116, 0
    %v232 = vsel %vm227, %v117, 0
    %v235 = vsel %vm227, %v118, 0
    %v238 = vsel %vm227, %v119, 0
    %v241 = vsel %vm227, %v120, 0
    %v244 = vsel %vm227, %v121, 0
    %v247 = vsel %vm227, %v122, 0
    %v250 = vsel %vm227, %v123, 0
    %v253 = vsel %vm227, %v124, 0
    %v256 = vsel %vm227, %v125, 0
    %v259 = vsel %vm227, %v126, 0
    %v262 = vsel %vm227, %v127, 0
    %v265 = vsel %vm227, %v128, 0
    %vm267 = vcmask 1043456
    %v269 = vsel %vm267, %v186, 0
    %v272 = vsel %vm267, %v187, 0
    %v275 = vsel %vm267, %v188, 0
    %v278 = vsel %vm267, %v189, 0
    %v281 = vsel %vm267, %v190, 0
    %v284 = vsel %vm267, %v191, 0
    %v287 = vsel %vm267, %v192, 0
    %v290 = vsel %vm267, %v193, 0
    %292 = vmatprep.subr.mxu0 %v163
    %293 = vmatpush1.msra.mxu0 %v162
    %294 = vmatprep.subr.mxu0 %v171
    %295 = vmatpush1.msra.mxu0 %v170
    %296 = vmatprep.subr.mxu0 %v179
    %297 = vmatpush1.msra.mxu0 %v178
    %298 = vmatprep.subr.mxu0 %v272
    %299 = vmatpush1.msra.mxu0 %v269
    %300 = vmatprep.subr.mxu0 0.0
    %301 = vmatpush1.msra.mxu0 0.0
    %302 = vmatprep.subr.mxu0 0.0
    %303 = vmatpush1.msra.mxu0 0.0
    %304 = vmatprep.subr.mxu0 0.0
    %305 = vmatpush1.msra.mxu0 0.0
    %306 = vmatprep.subr.mxu0 0.0
    %307 = vmatpush1.msra.mxu0 0.0
    %308 = vmatprep.subr.mxu0 0.0
    %309 = vmatpush1.msra.mxu0 0.0
    %310 = vmatprep.subr.mxu0 0.0
    %311 = vmatpush1.msra.mxu0 0.0
    %312 = vmatprep.subr.mxu0 0.0
    %313 = vmatpush1.msra.mxu0 0.0
    %314 = vmatprep.subr.mxu0 0.0
    %315 = vmatpush1.msra.mxu0 0.0
    %316 = vmatprep.subr.mxu0 0.0
    %317 = vmatpush1.msra.mxu0 0.0
    %318 = vmatprep.subr.mxu0 0.0
    %319 = vmatpush1.msra.mxu0 0.0
    %320 = vmatprep.subr.mxu0 0.0
    %321 = vmatpush1.msra.mxu0 0.0
    %322 = vmatprep.subr.mxu0 0.0
    %323 = vmatpush1.msra.mxu0 0.0
    %324 = vmatprep.subr.mxu0 0.0
    %325 = vmatpush1.msra.mxu0 0.0
    %326 = vmatprep.subr.mxu0 0.0
    %327 = vmatpush1.msra.mxu0 0.0
    %328 = vmatprep.subr.mxu0 0.0
    %329 = vmatpush1.msra.mxu0 0.0
    %330 = vmatprep.subr.mxu0 0.0
    %331 = vmatpush1.msra.mxu0 0.0
    %332 = vmatprep.subr.mxu0 0.0
    %333 = vmatpush1.msra.mxu0 0.0
    %334 = vmatprep.subr.mxu0 0.0
    %335 = vmatpush1.msra.mxu0 0.0
    %336 = vmatprep.subr.mxu0 0.0
    %337 = vmatpush1.msra.mxu0 0.0
    %338 = vmatprep.subr.mxu0 0.0
    %339 = vmatpush1.msra.mxu0 0.0
    %340 = vmatprep.subr.mxu0 0.0
    %341 = vmatpush1.msra.mxu0 0.0
    %342 = vmatprep.subr.mxu0 0.0
    %343 = vmatpush1.msra.mxu0 0.0
    %344 = vmatprep.subr.mxu0 0.0
    %345 = vmatpush1.msra.mxu0 0.0
    %346 = vmatprep.subr.mxu0 0.0
    %347 = vmatpush1.msra.mxu0 0.0
    %348 = vmatprep.subr.mxu0 0.0
    %349 = vmatpush1.msra.mxu0 0.0
    %350 = vmatprep.subr.mxu0 0.0
    %351 = vmatpush1.msra.mxu0 0.0
    %352 = vmatprep.subr.mxu0 0.0
    %353 = vmatpush1.msra.mxu0 0.0
    %354 = vmatprep.subr.mxu0 0.0
    %355 = vmatpush1.msra.mxu0 0.0
    %356 = vmatprep.mubr.f32.mxu0 0.0
    %357 = vmatmul.mubr.f32.gmra.mrb[0].mxu0 %v229
    %v358 = vpop.f32.mrb[0].mxu0
    %v359 = vadd.f32 0.0, %v358
    %v360 = vpop.f32.mrb[0].mxu0
    %v361 = vadd.f32 0.0, %v360
    %362 = vmatprep.mubr.f32.mxu0 0.0
    %363 = vmatmul.mubr.f32.gmra.mrb[0].mxu0 %v232
    %v364 = vpop.f32.mrb[0].mxu0
    %v365 = vadd.f32 0.0, %v364
    %v366 = vpop.f32.mrb[0].mxu0
    %v367 = vadd.f32 0.0, %v366
    %368 = vmatprep.mubr.f32.mxu0 0.0
    %369 = vmatmul.mubr.f32.gmra.mrb[0].mxu0 %v235
    %v370 = vpop.f32.mrb[0].mxu0
    %v371 = vadd.f32 0.0, %v370
    %v372 = vpop.f32.mrb[0].mxu0
    %v373 = vadd.f32 0.0, %v372
    %374 = vmatprep.mubr.f32.mxu0 0.0
    %375 = vmatmul.mubr.f32.gmra.mrb[0].mxu0 %v238
    %v376 = vpop.f32.mrb[0].mxu0
    %v377 = vadd.f32 0.0, %v376
    %v378 = vpop.f32.mrb[0].mxu0
    %v379 = vadd.f32 0.0, %v378
    %380 = vmatprep.mubr.f32.mxu0 0.0
    %381 = vmatmul.mubr.f32.gmra.mrb[0].mxu0 %v241
    %v382 = vpop.f32.mrb[0].mxu0
    %v383 = vadd.f32 0.0, %v382
    %v384 = vpop.f32.mrb[0].mxu0
    %v385 = vadd.f32 0.0, %v384
    %386 = vmatprep.mubr.f32.mxu0 0.0
    %387 = vmatmul.mubr.f32.gmra.mrb[0].mxu0 %v244
    %v388 = vpop.f32.mrb[0].mxu0
    %v389 = vadd.f32 0.0, %v388
    %v390 = vpop.f32.mrb[0].mxu0
    %v391 = vadd.f32 0.0, %v390
    %392 = vmatprep.mubr.f32.mxu0 0.0
    %393 = vmatmul.mubr.f32.gmra.mrb[0].mxu0 %v247
    %v394 = vpop.f32.mrb[0].mxu0
    %v395 = vadd.f32 0.0, %v394
    %v396 = vpop.f32.mrb[0].mxu0
    %v397 = vadd.f32 0.0, %v396
    %398 = vmatprep.mubr.f32.mxu0 0.0
    %399 = vmatmul.mubr.f32.gmra.mrb[0].mxu0 %v250
    %v400 = vpop.f32.mrb[0].mxu0
    %v401 = vadd.f32 0.0, %v400
    %v402 = vpop.f32.mrb[0].mxu0
    %v403 = vadd.f32 0.0, %v402
    %404 = vmatprep.mubr.f32.mxu0 0.0
    %405 = vmatmul.mubr.f32.gmra.mrb[0].mxu0 %v253
    %v406 = vpop.f32.mrb[0].mxu0
    %v407 = vadd.f32 0.0, %v406
    %v408 = vpop.f32.mrb[0].mxu0
    %v409 = vadd.f32 0.0, %v408
    %410 = vmatprep.mubr.f32.mxu0 0.0
    %411 = vmatmul.mubr.f32.gmra.mrb[0].mxu0 %v256
    %v412 = vpop.f32.mrb[0].mxu0
    %v413 = vadd.f32 0.0, %v412
    %v414 = vpop.f32.mrb[0].mxu0
    %v415 = vadd.f32 0.0, %v414
    %416 = vmatprep.mubr.f32.mxu0 0.0
    %417 = vmatmul.mubr.f32.gmra.mrb[0].mxu0 %v259
    %v418 = vpop.f32.mrb[0].mxu0
    %v419 = vadd.f32 0.0, %v418
    %v420 = vpop.f32.mrb[0].mxu0
    %v421 = vadd.f32 0.0, %v420
    %422 = vmatprep.mubr.f32.mxu0 0.0
    %423 = vmatmul.mubr.f32.gmra.mrb[0].mxu0 %v262
    %v424 = vpop.f32.mrb[0].mxu0
    %v425 = vadd.f32 0.0, %v424
    %v426 = vpop.f32.mrb[0].mxu0
    %v427 = vadd.f32 0.0, %v426
    %428 = vmatprep.mubr.f32.mxu0 0.0
    %429 = vmatmul.mubr.f32.gmra.mrb[0].mxu0 %v265
    %v430 = vpop.f32.mrb[0].mxu0
    %v431 = vadd.f32 0.0, %v430
    %v432 = vpop.f32.mrb[0].mxu0
    %v433 = vadd.f32 0.0, %v432
    %434 = vdwg.mxu0
    %435 = vmatprep.subr.mxu0 %v165
    %436 = vmatpush1.msra.mxu0 %v164
    %437 = vmatprep.subr.mxu0 %v173
    %438 = vmatpush1.msra.mxu0 %v172
    %439 = vmatprep.subr.mxu0 %v181
    %440 = vmatpush1.msra.mxu0 %v180
    %441 = vmatprep.subr.mxu0 %v278
    %442 = vmatpush1.msra.mxu0 %v275
    %443 = vmatprep.subr.mxu0 0.0
    %444 = vmatpush1.msra.mxu0 0.0
    %445 = vmatprep.subr.mxu0 0.0
    %446 = vmatpush1.msra.mxu0 0.0
    %447 = vmatprep.subr.mxu0 0.0
    %448 = vmatpush1.msra.mxu0 0.0
    %449 = vmatprep.subr.mxu0 0.0
    %450 = vmatpush1.msra.mxu0 0.0
    %451 = vmatprep.subr.mxu0 0.0
    %452 = vmatpush1.msra.mxu0 0.0
    %453 = vmatprep.subr.mxu0 0.0
    %454 = vmatpush1.msra.mxu0 0.0
    %455 = vmatprep.subr.mxu0 0.0
    %456 = vmatpush1.msra.mxu0 0.0
    %457 = vmatprep.subr.mxu0 0.0
    %458 = vmatpush1.msra.mxu0 0.0
    %459 = vmatprep.subr.mxu0 0.0
    %460 = vmatpush1.msra.mxu0 0.0
    %461 = vmatprep.subr.mxu0 0.0
    %462 = vmatpush1.msra.mxu0 0.0
    %463 = vmatprep.subr.mxu0 0.0
    %464 = vmatpush1.msra.mxu0 0.0
    %465 = vmatprep.subr.mxu0 0.0
    %466 = vmatpush1.msra.mxu0 0.0
    %467 = vmatprep.subr.mxu0 0.0
    %468 = vmatpush1.msra.mxu0 0.0
    %469 = vmatprep.subr.mxu0 0.0
    %470 = vmatpush1.msra.mxu0 0.0
    %471 = vmatprep.subr.mxu0 0.0
    %472 = vmatpush1.msra.mxu0 0.0
    %473 = vmatprep.subr.mxu0 0.0
    %474 = vmatpush1.msra.mxu0 0.0
    %475 = vmatprep.subr.mxu0 0.0
    %476 = vmatpush1.msra.mxu0 0.0
    %477 = vmatprep.subr.mxu0 0.0
    %478 = vmatpush1.msra.mxu0 0.0
    %479 = vmatprep.subr.mxu0 0.0
    %480 = vmatpush1.msra.mxu0 0.0
    %481 = vmatprep.subr.mxu0 0.0
    %482 = vmatpush1.msra.mxu0 0.0
    %483 = vmatprep.subr.mxu0 0.0
    %484 = vmatpush1.msra.mxu0 0.0
    %485 = vmatprep.subr.mxu0 0.0
    %486 = vmatpush1.msra.mxu0 0.0
    %487 = vmatprep.subr.mxu0 0.0
    %488 = vmatpush1.msra.mxu0 0.0
    %489 = vmatprep.subr.mxu0 0.0
    %490 = vmatpush1.msra.mxu0 0.0
    %491 = vmatprep.subr.mxu0 0.0
    %492 = vmatpush1.msra.mxu0 0.0
    %493 = vmatprep.subr.mxu0 0.0
    %494 = vmatpush1.msra.mxu0 0.0
    %495 = vmatprep.subr.mxu0 0.0
    %496 = vmatpush1.msra.mxu0 0.0
    %497 = vmatprep.subr.mxu0 0.0
    %498 = vmatpush1.msra.mxu0 0.0
    %499 = vmatprep.mubr.f32.mxu0 0.0
    %500 = vmatmul.mubr.f32.gmra.mrb[0].mxu0 %v229
    %v501 = vpop.f32.mrb[0].mxu0
    %v502 = vadd.f32 0.0, %v501
    %v503 = vpop.f32.mrb[0].mxu0
    %v504 = vadd.f32 0.0, %v503
    %505 = vmatprep.mubr.f32.mxu0 0.0
    %506 = vmatmul.mubr.f32.gmra.mrb[0].mxu0 %v232
    %v507 = vpop.f32.mrb[0].mxu0
    %v508 = vadd.f32 0.0, %v507
    %v509 = vpop.f32.mrb[0].mxu0
    %v510 = vadd.f32 0.0, %v509
    %511 = vmatprep.mubr.f32.mxu0 0.0
    %512 = vmatmul.mubr.f32.gmra.mrb[0].mxu0 %v235
    %v513 = vpop.f32.mrb[0].mxu0
    %v514 = vadd.f32 0.0, %v513
    %v515 = vpop.f32.mrb[0].mxu0
    %v516 = vadd.f32 0.0, %v515
    %517 = vmatprep.mubr.f32.mxu0 0.0
    %518 = vmatmul.mubr.f32.gmra.mrb[0].mxu0 %v238
    %v519 = vpop.f32.mrb[0].mxu0
    %v520 = vadd.f32 0.0, %v519
    %v521 = vpop.f32.mrb[0].mxu0
    %v522 = vadd.f32 0.0, %v521
    %523 = vmatprep.mubr.f32.mxu0 0.0
    %524 = vmatmul.mubr.f32.gmra.mrb[0].mxu0 %v241
    %v525 = vpop.f32.mrb[0].mxu0
    %v526 = vadd.f32 0.0, %v525
    %v527 = vpop.f32.mrb[0].mxu0
    %v528 = vadd.f32 0.0, %v527
    %529 = vmatprep.mubr.f32.mxu0 0.0
    %530 = vmatmul.mubr.f32.gmra.mrb[0].mxu0 %v244
    %v531 = vpop.f32.mrb[0].mxu0
    %v532 = vadd.f32 0.0, %v531
    %v533 = vpop.f32.mrb[0].mxu0
    %v534 = vadd.f32 0.0, %v533
    %535 = vmatprep.mubr.f32.mxu0 0.0
    %536 = vmatmul.mubr.f32.gmra.mrb[0].mxu0 %v247
    %v537 = vpop.f32.mrb[0].mxu0
    %v538 = vadd.f32 0.0, %v537
    %v539 = vpop.f32.mrb[0].mxu0
    %v540 = vadd.f32 0.0, %v539
    %541 = vmatprep.mubr.f32.mxu0 0.0
    %542 = vmatmul.mubr.f32.gmra.mrb[0].mxu0 %v250
    %v543 = vpop.f32.mrb[0].mxu0
    %v544 = vadd.f32 0.0, %v543
    %v545 = vpop.f32.mrb[0].mxu0
    %v546 = vadd.f32 0.0, %v545
    %547 = vmatprep.mubr.f32.mxu0 0.0
    %548 = vmatmul.mubr.f32.gmra.mrb[0].mxu0 %v253
    %v549 = vpop.f32.mrb[0].mxu0
    %v550 = vadd.f32 0.0, %v549
    %v551 = vpop.f32.mrb[0].mxu0
    %v552 = vadd.f32 0.0, %v551
    %553 = vmatprep.mubr.f32.mxu0 0.0
    %554 = vmatmul.mubr.f32.gmra.mrb[0].mxu0 %v256
    %v555 = vpop.f32.mrb[0].mxu0
    %v556 = vadd.f32 0.0, %v555
    %v557 = vpop.f32.mrb[0].mxu0
    %v558 = vadd.f32 0.0, %v557
    %559 = vmatprep.mubr.f32.mxu0 0.0
    %560 = vmatmul.mubr.f32.gmra.mrb[0].mxu0 %v259
    %v561 = vpop.f32.mrb[0].mxu0
    %v562 = vadd.f32 0.0, %v561
    %v563 = vpop.f32.mrb[0].mxu0
    %v564 = vadd.f32 0.0, %v563
    %565 = vmatprep.mubr.f32.mxu0 0.0
    %566 = vmatmul.mubr.f32.gmra.mrb[0].mxu0 %v262
    %v567 = vpop.f32.mrb[0].mxu0
    %v568 = vadd.f32 0.0, %v567
    %v569 = vpop.f32.mrb[0].mxu0
    %v570 = vadd.f32 0.0, %v569
    %571 = vmatprep.mubr.f32.mxu0 0.0
    %572 = vmatmul.mubr.f32.gmra.mrb[0].mxu0 %v265
    %v573 = vpop.f32.mrb[0].mxu0
    %v574 = vadd.f32 0.0, %v573
    %v575 = vpop.f32.mrb[0].mxu0
    %v576 = vadd.f32 0.0, %v575
    %577 = vdwg.mxu0
    %578 = vmatprep.subr.mxu0 %v167
    %579 = vmatpush1.msra.mxu0 %v166
    %580 = vmatprep.subr.mxu0 %v175
    %581 = vmatpush1.msra.mxu0 %v174
    %582 = vmatprep.subr.mxu0 %v183
    %583 = vmatpush1.msra.mxu0 %v182
    %584 = vmatprep.subr.mxu0 %v284
    %585 = vmatpush1.msra.mxu0 %v281
    %586 = vmatprep.subr.mxu0 0.0
    %587 = vmatpush1.msra.mxu0 0.0
    %588 = vmatprep.subr.mxu0 0.0
    %589 = vmatpush1.msra.mxu0 0.0
    %590 = vmatprep.subr.mxu0 0.0
    %591 = vmatpush1.msra.mxu0 0.0
    %592 = vmatprep.subr.mxu0 0.0
    %593 = vmatpush1.msra.mxu0 0.0
    %594 = vmatprep.subr.mxu0 0.0
    %595 = vmatpush1.msra.mxu0 0.0
    %596 = vmatprep.subr.mxu0 0.0
    %597 = vmatpush1.msra.mxu0 0.0
    %598 = vmatprep.subr.mxu0 0.0
    %599 = vmatpush1.msra.mxu0 0.0
    %600 = vmatprep.subr.mxu0 0.0
    %601 = vmatpush1.msra.mxu0 0.0
    %602 = vmatprep.subr.mxu0 0.0
    %603 = vmatpush1.msra.mxu0 0.0
    %604 = vmatprep.subr.mxu0 0.0
    %605 = vmatpush1.msra.mxu0 0.0
    %606 = vmatprep.subr.mxu0 0.0
    %607 = vmatpush1.msra.mxu0 0.0
    %608 = vmatprep.subr.mxu0 0.0
    %609 = vmatpush1.msra.mxu0 0.0
    %610 = vmatprep.subr.mxu0 0.0
    %611 = vmatpush1.msra.mxu0 0.0
    %612 = vmatprep.subr.mxu0 0.0
    %613 = vmatpush1.msra.mxu0 0.0
    %614 = vmatprep.subr.mxu0 0.0
    %615 = vmatpush1.msra.mxu0 0.0
    %616 = vmatprep.subr.mxu0 0.0
    %617 = vmatpush1.msra.mxu0 0.0
    %618 = vmatprep.subr.mxu0 0.0
    %619 = vmatpush1.msra.mxu0 0.0
    %620 = vmatprep.subr.mxu0 0.0
    %621 = vmatpush1.msra.mxu0 0.0
    %622 = vmatprep.subr.mxu0 0.0
    %623 = vmatpush1.msra.mxu0 0.0
    %624 = vmatprep.subr.mxu0 0.0
    %625 = vmatpush1.msra.mxu0 0.0
    %626 = vmatprep.subr.mxu0 0.0
    %627 = vmatpush1.msra.mxu0 0.0
    %628 = vmatprep.subr.mxu0 0.0
    %629 = vmatpush1.msra.mxu0 0.0
    %630 = vmatprep.subr.mxu0 0.0
    %631 = vmatpush1.msra.mxu0 0.0
    %632 = vmatprep.subr.mxu0 0.0
    %633 = vmatpush1.msra.mxu0 0.0
    %634 = vmatprep.subr.mxu0 0.0
    %635 = vmatpush1.msra.mxu0 0.0
    %636 = vmatprep.subr.mxu0 0.0
    %637 = vmatpush1.msra.mxu0 0.0
    %638 = vmatprep.subr.mxu0 0.0
    %639 = vmatpush1.msra.mxu0 0.0
    %640 = vmatprep.subr.mxu0 0.0
    %641 = vmatpush1.msra.mxu0 0.0
    %642 = vmatprep.mubr.f32.mxu0 0.0
    %643 = vmatmul.mubr.f32.gmra.mrb[0].mxu0 %v229
    %v644 = vpop.f32.mrb[0].mxu0
    %v645 = vadd.f32 0.0, %v644
    %v646 = vpop.f32.mrb[0].mxu0
    %v647 = vadd.f32 0.0, %v646
    %648 = vmatprep.mubr.f32.mxu0 0.0
    %649 = vmatmul.mubr.f32.gmra.mrb[0].mxu0 %v232
    %v650 = vpop.f32.mrb[0].mxu0
    %v651 = vadd.f32 0.0, %v650
    %v652 = vpop.f32.mrb[0].mxu0
    %v653 = vadd.f32 0.0, %v652
    %654 = vmatprep.mubr.f32.mxu0 0.0
    %655 = vmatmul.mubr.f32.gmra.mrb[0].mxu0 %v235
    %v656 = vpop.f32.mrb[0].mxu0
    %v657 = vadd.f32 0.0, %v656
    %v658 = vpop.f32.mrb[0].mxu0
    %v659 = vadd.f32 0.0, %v658
    %660 = vmatprep.mubr.f32.mxu0 0.0
    %661 = vmatmul.mubr.f32.gmra.mrb[0].mxu0 %v238
    %v662 = vpop.f32.mrb[0].mxu0
    %v663 = vadd.f32 0.0, %v662
    %v664 = vpop.f32.mrb[0].mxu0
    %v665 = vadd.f32 0.0, %v664
    %666 = vmatprep.mubr.f32.mxu0 0.0
    %667 = vmatmul.mubr.f32.gmra.mrb[0].mxu0 %v241
    %v668 = vpop.f32.mrb[0].mxu0
    %v669 = vadd.f32 0.0, %v668
    %v670 = vpop.f32.mrb[0].mxu0
    %v671 = vadd.f32 0.0, %v670
    %672 = vmatprep.mubr.f32.mxu0 0.0
    %673 = vmatmul.mubr.f32.gmra.mrb[0].mxu0 %v244
    %v674 = vpop.f32.mrb[0].mxu0
    %v675 = vadd.f32 0.0, %v674
    %v676 = vpop.f32.mrb[0].mxu0
    %v677 = vadd.f32 0.0, %v676
    %678 = vmatprep.mubr.f32.mxu0 0.0
    %679 = vmatmul.mubr.f32.gmra.mrb[0].mxu0 %v247
    %v680 = vpop.f32.mrb[0].mxu0
    %v681 = vadd.f32 0.0, %v680
    %v682 = vpop.f32.mrb[0].mxu0
    %v683 = vadd.f32 0.0, %v682
    %684 = vmatprep.mubr.f32.mxu0 0.0
    %685 = vmatmul.mubr.f32.gmra.mrb[0].mxu0 %v250
    %v686 = vpop.f32.mrb[0].mxu0
    %v687 = vadd.f32 0.0, %v686
    %v688 = vpop.f32.mrb[0].mxu0
    %v689 = vadd.f32 0.0, %v688
    %690 = vmatprep.mubr.f32.mxu0 0.0
    %691 = vmatmul.mubr.f32.gmra.mrb[0].mxu0 %v253
    %v692 = vpop.f32.mrb[0].mxu0
    %v693 = vadd.f32 0.0, %v692
    %v694 = vpop.f32.mrb[0].mxu0
    %v695 = vadd.f32 0.0, %v694
    %696 = vmatprep.mubr.f32.mxu0 0.0
    %697 = vmatmul.mubr.f32.gmra.mrb[0].mxu0 %v256
    %v698 = vpop.f32.mrb[0].mxu0
    %v699 = vadd.f32 0.0, %v698
    %v700 = vpop.f32.mrb[0].mxu0
    %v701 = vadd.f32 0.0, %v700
    %702 = vmatprep.mubr.f32.mxu0 0.0
    %703 = vmatmul.mubr.f32.gmra.mrb[0].mxu0 %v259
    %v704 = vpop.f32.mrb[0].mxu0
    %v705 = vadd.f32 0.0, %v704
    %v706 = vpop.f32.mrb[0].mxu0
    %v707 = vadd.f32 0.0, %v706
    %708 = vmatprep.mubr.f32.mxu0 0.0
    %709 = vmatmul.mubr.f32.gmra.mrb[0].mxu0 %v262
    %v710 = vpop.f32.mrb[0].mxu0
    %v711 = vadd.f32 0.0, %v710
    %v712 = vpop.f32.mrb[0].mxu0
    %v713 = vadd.f32 0.0, %v712
    %714 = vmatprep.mubr.f32.mxu0 0.0
    %715 = vmatmul.mubr.f32.gmra.mrb[0].mxu0 %v265
    %v716 = vpop.f32.mrb[0].mxu0
    %v717 = vadd.f32 0.0, %v716
    %v718 = vpop.f32.mrb[0].mxu0
    %v719 = vadd.f32 0.0, %v718
    %720 = vdwg.mxu0
    %721 = vmatprep.subr.mxu0 %v169
    %722 = vmatpush1.msra.mxu0 %v168
    %723 = vmatprep.subr.mxu0 %v177
    %724 = vmatpush1.msra.mxu0 %v176
    %725 = vmatprep.subr.mxu0 %v185
    %726 = vmatpush1.msra.mxu0 %v184
    %727 = vmatprep.subr.mxu0 %v290
    %728 = vmatpush1.msra.mxu0 %v287
    %729 = vmatprep.subr.mxu0 0.0
    %730 = vmatpush1.msra.mxu0 0.0
    %731 = vmatprep.subr.mxu0 0.0
    %732 = vmatpush1.msra.mxu0 0.0
    %733 = vmatprep.subr.mxu0 0.0
    %734 = vmatpush1.msra.mxu0 0.0
    %735 = vmatprep.subr.mxu0 0.0
    %736 = vmatpush1.msra.mxu0 0.0
    %737 = vmatprep.subr.mxu0 0.0
    %738 = vmatpush1.msra.mxu0 0.0
    %739 = vmatprep.subr.mxu0 0.0
    %740 = vmatpush1.msra.mxu0 0.0
    %741 = vmatprep.subr.mxu0 0.0
    %742 = vmatpush1.msra.mxu0 0.0
    %743 = vmatprep.subr.mxu0 0.0
    %744 = vmatpush1.msra.mxu0 0.0
    %745 = vmatprep.subr.mxu0 0.0
    %746 = vmatpush1.msra.mxu0 0.0
    %747 = vmatprep.subr.mxu0 0.0
    %748 = vmatpush1.msra.mxu0 0.0
    %749 = vmatprep.subr.mxu0 0.0
    %750 = vmatpush1.msra.mxu0 0.0
    %751 = vmatprep.subr.mxu0 0.0
    %752 = vmatpush1.msra.mxu0 0.0
    %753 = vmatprep.subr.mxu0 0.0
    %754 = vmatpush1.msra.mxu0 0.0
    %755 = vmatprep.subr.mxu0 0.0
    %756 = vmatpush1.msra.mxu0 0.0
    %757 = vmatprep.subr.mxu0 0.0
    %758 = vmatpush1.msra.mxu0 0.0
    %759 = vmatprep.subr.mxu0 0.0
    %760 = vmatpush1.msra.mxu0 0.0
    %761 = vmatprep.subr.mxu0 0.0
    %762 = vmatpush1.msra.mxu0 0.0
    %763 = vmatprep.subr.mxu0 0.0
    %764 = vmatpush1.msra.mxu0 0.0
    %765 = vmatprep.subr.mxu0 0.0
    %766 = vmatpush1.msra.mxu0 0.0
    %767 = vmatprep.subr.mxu0 0.0
    %768 = vmatpush1.msra.mxu0 0.0
    %769 = vmatprep.subr.mxu0 0.0
    %770 = vmatpush1.msra.mxu0 0.0
    %771 = vmatprep.subr.mxu0 0.0
    %772 = vmatpush1.msra.mxu0 0.0
    %773 = vmatprep.subr.mxu0 0.0
    %774 = vmatpush1.msra.mxu0 0.0
    %775 = vmatprep.subr.mxu0 0.0
    %776 = vmatpush1.msra.mxu0 0.0
    %777 = vmatprep.subr.mxu0 0.0
    %778 = vmatpush1.msra.mxu0 0.0
    %779 = vmatprep.subr.mxu0 0.0
    %780 = vmatpush1.msra.mxu0 0.0
    %781 = vmatprep.subr.mxu0 0.0
    %782 = vmatpush1.msra.mxu0 0.0
    %783 = vmatprep.subr.mxu0 0.0
    %784 = vmatpush1.msra.mxu0 0.0
    %785 = vmatprep.mubr.f32.mxu0 0.0
    %786 = vmatmul.mubr.f32.gmra.mrb[0].mxu0 %v229
    %v787 = vpop.f32.mrb[0].mxu0
    %v788 = vadd.f32 0.0, %v787
    %v789 = vpop.f32.mrb[0].mxu0
    %v790 = vadd.f32 0.0, %v789
    %791 = vmatprep.mubr.f32.mxu0 0.0
    %792 = vmatmul.mubr.f32.gmra.mrb[0].mxu0 %v232
    %v793 = vpop.f32.mrb[0].mxu0
    %v794 = vadd.f32 0.0, %v793
    %v795 = vpop.f32.mrb[0].mxu0
    %v796 = vadd.f32 0.0, %v795
    %797 = vmatprep.mubr.f32.mxu0 0.0
    %798 = vmatmul.mubr.f32.gmra.mrb[0].mxu0 %v235
    %v799 = vpop.f32.mrb[0].mxu0
    %v800 = vadd.f32 0.0, %v799
    %v801 = vpop.f32.mrb[0].mxu0
    %v802 = vadd.f32 0.0, %v801
    %803 = vmatprep.mubr.f32.mxu0 0.0
    %804 = vmatmul.mubr.f32.gmra.mrb[0].mxu0 %v238
    %v805 = vpop.f32.mrb[0].mxu0
    %v806 = vadd.f32 0.0, %v805
    %v807 = vpop.f32.mrb[0].mxu0
    %v808 = vadd.f32 0.0, %v807
    %809 = vmatprep.mubr.f32.mxu0 0.0
    %810 = vmatmul.mubr.f32.gmra.mrb[0].mxu0 %v241
    %v811 = vpop.f32.mrb[0].mxu0
    %v812 = vadd.f32 0.0, %v811
    %v813 = vpop.f32.mrb[0].mxu0
    %v814 = vadd.f32 0.0, %v813
    %815 = vmatprep.mubr.f32.mxu0 0.0
    %816 = vmatmul.mubr.f32.gmra.mrb[0].mxu0 %v244
    %v817 = vpop.f32.mrb[0].mxu0
    %v818 = vadd.f32 0.0, %v817
    %v819 = vpop.f32.mrb[0].mxu0
    %v820 = vadd.f32 0.0, %v819
    %821 = vmatprep.mubr.f32.mxu0 0.0
    %822 = vmatmul.mubr.f32.gmra.mrb[0].mxu0 %v247
    %v823 = vpop.f32.mrb[0].mxu0
    %v824 = vadd.f32 0.0, %v823
    %v825 = vpop.f32.mrb[0].mxu0
    %v826 = vadd.f32 0.0, %v825
    %827 = vmatprep.mubr.f32.mxu0 0.0
    %828 = vmatmul.mubr.f32.gmra.mrb[0].mxu0 %v250
    %v829 = vpop.f32.mrb[0].mxu0
    %v830 = vadd.f32 0.0, %v829
    %v831 = vpop.f32.mrb[0].mxu0
    %v832 = vadd.f32 0.0, %v831
    %833 = vmatprep.mubr.f32.mxu0 0.0
    %834 = vmatmul.mubr.f32.gmra.mrb[0].mxu0 %v253
    %v835 = vpop.f32.mrb[0].mxu0
    %v836 = vadd.f32 0.0, %v835
    %v837 = vpop.f32.mrb[0].mxu0
    %v838 = vadd.f32 0.0, %v837
    %839 = vmatprep.mubr.f32.mxu0 0.0
    %840 = vmatmul.mubr.f32.gmra.mrb[0].mxu0 %v256
    %v841 = vpop.f32.mrb[0].mxu0
    %v842 = vadd.f32 0.0, %v841
    %v843 = vpop.f32.mrb[0].mxu0
    %v844 = vadd.f32 0.0, %v843
    %845 = vmatprep.mubr.f32.mxu0 0.0
    %846 = vmatmul.mubr.f32.gmra.mrb[0].mxu0 %v259
    %v847 = vpop.f32.mrb[0].mxu0
    %v848 = vadd.f32 0.0, %v847
    %v849 = vpop.f32.mrb[0].mxu0
    %v850 = vadd.f32 0.0, %v849
    %851 = vmatprep.mubr.f32.mxu0 0.0
    %852 = vmatmul.mubr.f32.gmra.mrb[0].mxu0 %v262
    %v853 = vpop.f32.mrb[0].mxu0
    %v854 = vadd.f32 0.0, %v853
    %v855 = vpop.f32.mrb[0].mxu0
    %v856 = vadd.f32 0.0, %v855
    %857 = vmatprep.mubr.f32.mxu0 0.0
    %858 = vmatmul.mubr.f32.gmra.mrb[0].mxu0 %v265
    %v859 = vpop.f32.mrb[0].mxu0
    %v860 = vadd.f32 0.0, %v859
    %v861 = vpop.f32.mrb[0].mxu0
    %v862 = vadd.f32 0.0, %v861
    %863 = vdwg.mxu0
    %v865 = vsel %vm227, %v102, 0
    %v868 = vsel %vm227, %v103, 0
    %v871 = vsel %vm227, %v104, 0
    %v874 = vsel %vm227, %v105, 0
    %v877 = vsel %vm227, %v106, 0
    %v880 = vsel %vm227, %v107, 0
    %v883 = vsel %vm227, %v108, 0
    %v886 = vsel %vm227, %v109, 0
    %v889 = vsel %vm227, %v110, 0
    %v892 = vsel %vm227, %v111, 0
    %v895 = vsel %vm227, %v112, 0
    %v898 = vsel %vm227, %v113, 0
    %v901 = vsel %vm227, %v114, 0
    %v904 = vsel %vm267, %v154, 0
    %v907 = vsel %vm267, %v155, 0
    %v910 = vsel %vm267, %v156, 0
    %v913 = vsel %vm267, %v157, 0
    %v916 = vsel %vm267, %v158, 0
    %v919 = vsel %vm267, %v159, 0
    %v922 = vsel %vm267, %v160, 0
    %v925 = vsel %vm267, %v161, 0
    %927 = vmatprep.subr.mxu0 %v131
    %928 = vmatpush1.msra.mxu0 %v130
    %929 = vmatprep.subr.mxu0 %v139
    %930 = vmatpush1.msra.mxu0 %v138
    %931 = vmatprep.subr.mxu0 %v147
    %932 = vmatpush1.msra.mxu0 %v146
    %933 = vmatprep.subr.mxu0 %v907
    %934 = vmatpush1.msra.mxu0 %v904
    %935 = vmatprep.subr.mxu0 0.0
    %936 = vmatpush1.msra.mxu0 0.0
    %937 = vmatprep.subr.mxu0 0.0
    %938 = vmatpush1.msra.mxu0 0.0
    %939 = vmatprep.subr.mxu0 0.0
    %940 = vmatpush1.msra.mxu0 0.0
    %941 = vmatprep.subr.mxu0 0.0
    %942 = vmatpush1.msra.mxu0 0.0
    %943 = vmatprep.subr.mxu0 0.0
    %944 = vmatpush1.msra.mxu0 0.0
    %945 = vmatprep.subr.mxu0 0.0
    %946 = vmatpush1.msra.mxu0 0.0
    %947 = vmatprep.subr.mxu0 0.0
    %948 = vmatpush1.msra.mxu0 0.0
    %949 = vmatprep.subr.mxu0 0.0
    %950 = vmatpush1.msra.mxu0 0.0
    %951 = vmatprep.subr.mxu0 0.0
    %952 = vmatpush1.msra.mxu0 0.0
    %953 = vmatprep.subr.mxu0 0.0
    %954 = vmatpush1.msra.mxu0 0.0
    %955 = vmatprep.subr.mxu0 0.0
    %956 = vmatpush1.msra.mxu0 0.0
    %957 = vmatprep.subr.mxu0 0.0
    %958 = vmatpush1.msra.mxu0 0.0
    %959 = vmatprep.subr.mxu0 0.0
    %960 = vmatpush1.msra.mxu0 0.0
    %961 = vmatprep.subr.mxu0 0.0
    %962 = vmatpush1.msra.mxu0 0.0
    %963 = vmatprep.subr.mxu0 0.0
    %964 = vmatpush1.msra.mxu0 0.0
    %965 = vmatprep.subr.mxu0 0.0
    %966 = vmatpush1.msra.mxu0 0.0
    %967 = vmatprep.subr.mxu0 0.0
    %968 = vmatpush1.msra.mxu0 0.0
    %969 = vmatprep.subr.mxu0 0.0
    %970 = vmatpush1.msra.mxu0 0.0
    %971 = vmatprep.subr.mxu0 0.0
    %972 = vmatpush1.msra.mxu0 0.0
    %973 = vmatprep.subr.mxu0 0.0
    %974 = vmatpush1.msra.mxu0 0.0
    %975 = vmatprep.subr.mxu0 0.0
    %976 = vmatpush1.msra.mxu0 0.0
    %977 = vmatprep.subr.mxu0 0.0
    %978 = vmatpush1.msra.mxu0 0.0
    %979 = vmatprep.subr.mxu0 0.0
    %980 = vmatpush1.msra.mxu0 0.0
    %981 = vmatprep.subr.mxu0 0.0
    %982 = vmatpush1.msra.mxu0 0.0
    %983 = vmatprep.subr.mxu0 0.0
    %984 = vmatpush1.msra.mxu0 0.0
    %985 = vmatprep.subr.mxu0 0.0
    %986 = vmatpush1.msra.mxu0 0.0
    %987 = vmatprep.subr.mxu0 0.0
    %988 = vmatpush1.msra.mxu0 0.0
    %989 = vmatprep.subr.mxu0 0.0
    %990 = vmatpush1.msra.mxu0 0.0
    %991 = vmatprep.mubr.f32.mxu0 0.0
    %992 = vmatmul.mubr.f32.gmra.mrb[0].mxu0 %v865
    %v993 = vpop.f32.mrb[0].mxu0
    %v994 = vadd.f32 %v359, %v993
    %v995 = vpop.f32.mrb[0].mxu0
    %v996 = vadd.f32 %v361, %v995
    %997 = vmatprep.mubr.f32.mxu0 0.0
    %998 = vmatmul.mubr.f32.gmra.mrb[0].mxu0 %v868
    %v999 = vpop.f32.mrb[0].mxu0
    %v1000 = vadd.f32 %v365, %v999
    %v1001 = vpop.f32.mrb[0].mxu0
    %v1002 = vadd.f32 %v367, %v1001
    %1003 = vmatprep.mubr.f32.mxu0 0.0
    %1004 = vmatmul.mubr.f32.gmra.mrb[0].mxu0 %v871
    %v1005 = vpop.f32.mrb[0].mxu0
    %v1006 = vadd.f32 %v371, %v1005
    %v1007 = vpop.f32.mrb[0].mxu0
    %v1008 = vadd.f32 %v373, %v1007
    %1009 = vmatprep.mubr.f32.mxu0 0.0
    %1010 = vmatmul.mubr.f32.gmra.mrb[0].mxu0 %v874
    %v1011 = vpop.f32.mrb[0].mxu0
    %v1012 = vadd.f32 %v377, %v1011
    %v1013 = vpop.f32.mrb[0].mxu0
    %v1014 = vadd.f32 %v379, %v1013
    %1015 = vmatprep.mubr.f32.mxu0 0.0
    %1016 = vmatmul.mubr.f32.gmra.mrb[0].mxu0 %v877
    %v1017 = vpop.f32.mrb[0].mxu0
    %v1018 = vadd.f32 %v383, %v1017
    %v1019 = vpop.f32.mrb[0].mxu0
    %v1020 = vadd.f32 %v385, %v1019
    %1021 = vmatprep.mubr.f32.mxu0 0.0
    %1022 = vmatmul.mubr.f32.gmra.mrb[0].mxu0 %v880
    %v1023 = vpop.f32.mrb[0].mxu0
    %v1024 = vadd.f32 %v389, %v1023
    %v1025 = vpop.f32.mrb[0].mxu0
    %v1026 = vadd.f32 %v391, %v1025
    %1027 = vmatprep.mubr.f32.mxu0 0.0
    %1028 = vmatmul.mubr.f32.gmra.mrb[0].mxu0 %v883
    %v1029 = vpop.f32.mrb[0].mxu0
    %v1030 = vadd.f32 %v395, %v1029
    %v1031 = vpop.f32.mrb[0].mxu0
    %v1032 = vadd.f32 %v397, %v1031
    %1033 = vmatprep.mubr.f32.mxu0 0.0
    %1034 = vmatmul.mubr.f32.gmra.mrb[0].mxu0 %v886
    %v1035 = vpop.f32.mrb[0].mxu0
    %v1036 = vadd.f32 %v401, %v1035
    %v1037 = vpop.f32.mrb[0].mxu0
    %v1038 = vadd.f32 %v403, %v1037
    %1039 = vmatprep.mubr.f32.mxu0 0.0
    %1040 = vmatmul.mubr.f32.gmra.mrb[0].mxu0 %v889
    %v1041 = vpop.f32.mrb[0].mxu0
    %v1042 = vadd.f32 %v407, %v1041
    %v1043 = vpop.f32.mrb[0].mxu0
    %v1044 = vadd.f32 %v409, %v1043
    %1045 = vmatprep.mubr.f32.mxu0 0.0
    %1046 = vmatmul.mubr.f32.gmra.mrb[0].mxu0 %v892
    %v1047 = vpop.f32.mrb[0].mxu0
    %v1048 = vadd.f32 %v413, %v1047
    %v1049 = vpop.f32.mrb[0].mxu0
    %v1050 = vadd.f32 %v415, %v1049
    %1051 = vmatprep.mubr.f32.mxu0 0.0
    %1052 = vmatmul.mubr.f32.gmra.mrb[0].mxu0 %v895
    %v1053 = vpop.f32.mrb[0].mxu0
    %v1054 = vadd.f32 %v419, %v1053
    %v1055 = vpop.f32.mrb[0].mxu0
    %v1056 = vadd.f32 %v421, %v1055
    %1057 = vmatprep.mubr.f32.mxu0 0.0
    %1058 = vmatmul.mubr.f32.gmra.mrb[0].mxu0 %v898
    %v1059 = vpop.f32.mrb[0].mxu0
    %v1060 = vadd.f32 %v425, %v1059
    %v1061 = vpop.f32.mrb[0].mxu0
    %v1062 = vadd.f32 %v427, %v1061
    %1063 = vmatprep.mubr.f32.mxu0 0.0
    %1064 = vmatmul.mubr.f32.gmra.mrb[0].mxu0 %v901
    %v1065 = vpop.f32.mrb[0].mxu0
    %v1066 = vadd.f32 %v431, %v1065
    %v1067 = vpop.f32.mrb[0].mxu0
    %v1068 = vadd.f32 %v433, %v1067
    %1069 = vdwg.mxu0
    %1070 = vmatprep.subr.mxu0 %v133
    %1071 = vmatpush1.msra.mxu0 %v132
    %1072 = vmatprep.subr.mxu0 %v141
    %1073 = vmatpush1.msra.mxu0 %v140
    %1074 = vmatprep.subr.mxu0 %v149
    %1075 = vmatpush1.msra.mxu0 %v148
    %1076 = vmatprep.subr.mxu0 %v913
    %1077 = vmatpush1.msra.mxu0 %v910
    %1078 = vmatprep.subr.mxu0 0.0
    %1079 = vmatpush1.msra.mxu0 0.0
    %1080 = vmatprep.subr.mxu0 0.0
    %1081 = vmatpush1.msra.mxu0 0.0
    %1082 = vmatprep.subr.mxu0 0.0
    %1083 = vmatpush1.msra.mxu0 0.0
    %1084 = vmatprep.subr.mxu0 0.0
    %1085 = vmatpush1.msra.mxu0 0.0
    %1086 = vmatprep.subr.mxu0 0.0
    %1087 = vmatpush1.msra.mxu0 0.0
    %1088 = vmatprep.subr.mxu0 0.0
    %1089 = vmatpush1.msra.mxu0 0.0
    %1090 = vmatprep.subr.mxu0 0.0
    %1091 = vmatpush1.msra.mxu0 0.0
    %1092 = vmatprep.subr.mxu0 0.0
    %1093 = vmatpush1.msra.mxu0 0.0
    %1094 = vmatprep.subr.mxu0 0.0
    %1095 = vmatpush1.msra.mxu0 0.0
    %1096 = vmatprep.subr.mxu0 0.0
    %1097 = vmatpush1.msra.mxu0 0.0
    %1098 = vmatprep.subr.mxu0 0.0
    %1099 = vmatpush1.msra.mxu0 0.0
    %1100 = vmatprep.subr.mxu0 0.0
    %1101 = vmatpush1.msra.mxu0 0.0
    %1102 = vmatprep.subr.mxu0 0.0
    %1103 = vmatpush1.msra.mxu0 0.0
    %1104 = vmatprep.subr.mxu0 0.0
    %1105 = vmatpush1.msra.mxu0 0.0
    %1106 = vmatprep.subr.mxu0 0.0
    %1107 = vmatpush1.msra.mxu0 0.0
    %1108 = vmatprep.subr.mxu0 0.0
    %1109 = vmatpush1.msra.mxu0 0.0
    %1110 = vmatprep.subr.mxu0 0.0
    %1111 = vmatpush1.msra.mxu0 0.0
    %1112 = vmatprep.subr.mxu0 0.0
    %1113 = vmatpush1.msra.mxu0 0.0
    %1114 = vmatprep.subr.mxu0 0.0
    %1115 = vmatpush1.msra.mxu0 0.0
    %1116 = vmatprep.subr.mxu0 0.0
    %1117 = vmatpush1.msra.mxu0 0.0
    %1118 = vmatprep.subr.mxu0 0.0
    %1119 = vmatpush1.msra.mxu0 0.0
    %1120 = vmatprep.subr.mxu0 0.0
    %1121 = vmatpush1.msra.mxu0 0.0
    %1122 = vmatprep.subr.mxu0 0.0
    %1123 = vmatpush1.msra.mxu0 0.0
    %1124 = vmatprep.subr.mxu0 0.0
    %1125 = vmatpush1.msra.mxu0 0.0
    %1126 = vmatprep.subr.mxu0 0.0
    %1127 = vmatpush1.msra.mxu0 0.0
    %1128 = vmatprep.subr.mxu0 0.0
    %1129 = vmatpush1.msra.mxu0 0.0
    %1130 = vmatprep.subr.mxu0 0.0
    %1131 = vmatpush1.msra.mxu0 0.0
    %1132 = vmatprep.subr.mxu0 0.0
    %1133 = vmatpush1.msra.mxu0 0.0
    %1134 = vmatprep.mubr.f32.mxu0 0.0
    %1135 = vmatmul.mubr.f32.gmra.mrb[0].mxu0 %v865
    %v1136 = vpop.f32.mrb[0].mxu0
    %v1137 = vadd.f32 %v502, %v1136
    %v1138 = vpop.f32.mrb[0].mxu0
    %v1139 = vadd.f32 %v504, %v1138
    %1140 = vmatprep.mubr.f32.mxu0 0.0
    %1141 = vmatmul.mubr.f32.gmra.mrb[0].mxu0 %v868
    %v1142 = vpop.f32.mrb[0].mxu0
    %v1143 = vadd.f32 %v508, %v1142
    %v1144 = vpop.f32.mrb[0].mxu0
    %v1145 = vadd.f32 %v510, %v1144
    %1146 = vmatprep.mubr.f32.mxu0 0.0
    %1147 = vmatmul.mubr.f32.gmra.mrb[0].mxu0 %v871
    %v1148 = vpop.f32.mrb[0].mxu0
    %v1149 = vadd.f32 %v514, %v1148
    %v1150 = vpop.f32.mrb[0].mxu0
    %v1151 = vadd.f32 %v516, %v1150
    %1152 = vmatprep.mubr.f32.mxu0 0.0
    %1153 = vmatmul.mubr.f32.gmra.mrb[0].mxu0 %v874
    %v1154 = vpop.f32.mrb[0].mxu0
    %v1155 = vadd.f32 %v520, %v1154
    %v1156 = vpop.f32.mrb[0].mxu0
    %v1157 = vadd.f32 %v522, %v1156
    %1158 = vmatprep.mubr.f32.mxu0 0.0
    %1159 = vmatmul.mubr.f32.gmra.mrb[0].mxu0 %v877
    %v1160 = vpop.f32.mrb[0].mxu0
    %v1161 = vadd.f32 %v526, %v1160
    %v1162 = vpop.f32.mrb[0].mxu0
    %v1163 = vadd.f32 %v528, %v1162
    %1164 = vmatprep.mubr.f32.mxu0 0.0
    %1165 = vmatmul.mubr.f32.gmra.mrb[0].mxu0 %v880
    %v1166 = vpop.f32.mrb[0].mxu0
    %v1167 = vadd.f32 %v532, %v1166
    %v1168 = vpop.f32.mrb[0].mxu0
    %v1169 = vadd.f32 %v534, %v1168
    %1170 = vmatprep.mubr.f32.mxu0 0.0
    %1171 = vmatmul.mubr.f32.gmra.mrb[0].mxu0 %v883
    %v1172 = vpop.f32.mrb[0].mxu0
    %v1173 = vadd.f32 %v538, %v1172
    %v1174 = vpop.f32.mrb[0].mxu0
    %v1175 = vadd.f32 %v540, %v1174
    %1176 = vmatprep.mubr.f32.mxu0 0.0
    %1177 = vmatmul.mubr.f32.gmra.mrb[0].mxu0 %v886
    %v1178 = vpop.f32.mrb[0].mxu0
    %v1179 = vadd.f32 %v544, %v1178
    %v1180 = vpop.f32.mrb[0].mxu0
    %v1181 = vadd.f32 %v546, %v1180
    %1182 = vmatprep.mubr.f32.mxu0 0.0
    %1183 = vmatmul.mubr.f32.gmra.mrb[0].mxu0 %v889
    %v1184 = vpop.f32.mrb[0].mxu0
    %v1185 = vadd.f32 %v550, %v1184
    %v1186 = vpop.f32.mrb[0].mxu0
    %v1187 = vadd.f32 %v552, %v1186
    %1188 = vmatprep.mubr.f32.mxu0 0.0
    %1189 = vmatmul.mubr.f32.gmra.mrb[0].mxu0 %v892
    %v1190 = vpop.f32.mrb[0].mxu0
    %v1191 = vadd.f32 %v556, %v1190
    %v1192 = vpop.f32.mrb[0].mxu0
    %v1193 = vadd.f32 %v558, %v1192
    %1194 = vmatprep.mubr.f32.mxu0 0.0
    %1195 = vmatmul.mubr.f32.gmra.mrb[0].mxu0 %v895
    %v1196 = vpop.f32.mrb[0].mxu0
    %v1197 = vadd.f32 %v562, %v1196
    %v1198 = vpop.f32.mrb[0].mxu0
    %v1199 = vadd.f32 %v564, %v1198
    %1200 = vmatprep.mubr.f32.mxu0 0.0
    %1201 = vmatmul.mubr.f32.gmra.mrb[0].mxu0 %v898
    %v1202 = vpop.f32.mrb[0].mxu0
    %v1203 = vadd.f32 %v568, %v1202
    %v1204 = vpop.f32.mrb[0].mxu0
    %v1205 = vadd.f32 %v570, %v1204
    %1206 = vmatprep.mubr.f32.mxu0 0.0
    %1207 = vmatmul.mubr.f32.gmra.mrb[0].mxu0 %v901
    %v1208 = vpop.f32.mrb[0].mxu0
    %v1209 = vadd.f32 %v574, %v1208
    %v1210 = vpop.f32.mrb[0].mxu0
    %v1211 = vadd.f32 %v576, %v1210
    %1212 = vdwg.mxu0
    %1213 = vmatprep.subr.mxu0 %v135
    %1214 = vmatpush1.msra.mxu0 %v134
    %1215 = vmatprep.subr.mxu0 %v143
    %1216 = vmatpush1.msra.mxu0 %v142
    %1217 = vmatprep.subr.mxu0 %v151
    %1218 = vmatpush1.msra.mxu0 %v150
    %1219 = vmatprep.subr.mxu0 %v919
    %1220 = vmatpush1.msra.mxu0 %v916
    %1221 = vmatprep.subr.mxu0 0.0
    %1222 = vmatpush1.msra.mxu0 0.0
    %1223 = vmatprep.subr.mxu0 0.0
    %1224 = vmatpush1.msra.mxu0 0.0
    %1225 = vmatprep.subr.mxu0 0.0
    %1226 = vmatpush1.msra.mxu0 0.0
    %1227 = vmatprep.subr.mxu0 0.0
    %1228 = vmatpush1.msra.mxu0 0.0
    %1229 = vmatprep.subr.mxu0 0.0
    %1230 = vmatpush1.msra.mxu0 0.0
    %1231 = vmatprep.subr.mxu0 0.0
    %1232 = vmatpush1.msra.mxu0 0.0
    %1233 = vmatprep.subr.mxu0 0.0
    %1234 = vmatpush1.msra.mxu0 0.0
    %1235 = vmatprep.subr.mxu0 0.0
    %1236 = vmatpush1.msra.mxu0 0.0
    %1237 = vmatprep.subr.mxu0 0.0
    %1238 = vmatpush1.msra.mxu0 0.0
    %1239 = vmatprep.subr.mxu0 0.0
    %1240 = vmatpush1.msra.mxu0 0.0
    %1241 = vmatprep.subr.mxu0 0.0
    %1242 = vmatpush1.msra.mxu0 0.0
    %1243 = vmatprep.subr.mxu0 0.0
    %1244 = vmatpush1.msra.mxu0 0.0
    %1245 = vmatprep.subr.mxu0 0.0
    %1246 = vmatpush1.msra.mxu0 0.0
    %1247 = vmatprep.subr.mxu0 0.0
    %1248 = vmatpush1.msra.mxu0 0.0
    %1249 = vmatprep.subr.mxu0 0.0
    %1250 = vmatpush1.msra.mxu0 0.0
    %1251 = vmatprep.subr.mxu0 0.0
    %1252 = vmatpush1.msra.mxu0 0.0
    %1253 = vmatprep.subr.mxu0 0.0
    %1254 = vmatpush1.msra.mxu0 0.0
    %1255 = vmatprep.subr.mxu0 0.0
    %1256 = vmatpush1.msra.mxu0 0.0
    %1257 = vmatprep.subr.mxu0 0.0
    %1258 = vmatpush1.msra.mxu0 0.0
    %1259 = vmatprep.subr.mxu0 0.0
    %1260 = vmatpush1.msra.mxu0 0.0
    %1261 = vmatprep.subr.mxu0 0.0
    %1262 = vmatpush1.msra.mxu0 0.0
    %1263 = vmatprep.subr.mxu0 0.0
    %1264 = vmatpush1.msra.mxu0 0.0
    %1265 = vmatprep.subr.mxu0 0.0
    %1266 = vmatpush1.msra.mxu0 0.0
    %1267 = vmatprep.subr.mxu0 0.0
    %1268 = vmatpush1.msra.mxu0 0.0
    %1269 = vmatprep.subr.mxu0 0.0
    %1270 = vmatpush1.msra.mxu0 0.0
    %1271 = vmatprep.subr.mxu0 0.0
    %1272 = vmatpush1.msra.mxu0 0.0
    %1273 = vmatprep.subr.mxu0 0.0
    %1274 = vmatpush1.msra.mxu0 0.0
    %1275 = vmatprep.subr.mxu0 0.0
    %1276 = vmatpush1.msra.mxu0 0.0
    %1277 = vmatprep.mubr.f32.mxu0 0.0
    %1278 = vmatmul.mubr.f32.gmra.mrb[0].mxu0 %v865
    %v1279 = vpop.f32.mrb[0].mxu0
    %v1280 = vadd.f32 %v645, %v1279
    %v1281 = vpop.f32.mrb[0].mxu0
    %v1282 = vadd.f32 %v647, %v1281
    %1283 = vmatprep.mubr.f32.mxu0 0.0
    %1284 = vmatmul.mubr.f32.gmra.mrb[0].mxu0 %v868
    %v1285 = vpop.f32.mrb[0].mxu0
    %v1286 = vadd.f32 %v651, %v1285
    %v1287 = vpop.f32.mrb[0].mxu0
    %v1288 = vadd.f32 %v653, %v1287
    %1289 = vmatprep.mubr.f32.mxu0 0.0
    %1290 = vmatmul.mubr.f32.gmra.mrb[0].mxu0 %v871
    %v1291 = vpop.f32.mrb[0].mxu0
    %v1292 = vadd.f32 %v657, %v1291
    %v1293 = vpop.f32.mrb[0].mxu0
    %v1294 = vadd.f32 %v659, %v1293
    %1295 = vmatprep.mubr.f32.mxu0 0.0
    %1296 = vmatmul.mubr.f32.gmra.mrb[0].mxu0 %v874
    %v1297 = vpop.f32.mrb[0].mxu0
    %v1298 = vadd.f32 %v663, %v1297
    %v1299 = vpop.f32.mrb[0].mxu0
    %v1300 = vadd.f32 %v665, %v1299
    %1301 = vmatprep.mubr.f32.mxu0 0.0
    %1302 = vmatmul.mubr.f32.gmra.mrb[0].mxu0 %v877
    %v1303 = vpop.f32.mrb[0].mxu0
    %v1304 = vadd.f32 %v669, %v1303
    %v1305 = vpop.f32.mrb[0].mxu0
    %v1306 = vadd.f32 %v671, %v1305
    %1307 = vmatprep.mubr.f32.mxu0 0.0
    %1308 = vmatmul.mubr.f32.gmra.mrb[0].mxu0 %v880
    %v1309 = vpop.f32.mrb[0].mxu0
    %v1310 = vadd.f32 %v675, %v1309
    %v1311 = vpop.f32.mrb[0].mxu0
    %v1312 = vadd.f32 %v677, %v1311
    %1313 = vmatprep.mubr.f32.mxu0 0.0
    %1314 = vmatmul.mubr.f32.gmra.mrb[0].mxu0 %v883
    %v1315 = vpop.f32.mrb[0].mxu0
    %v1316 = vadd.f32 %v681, %v1315
    %v1317 = vpop.f32.mrb[0].mxu0
    %v1318 = vadd.f32 %v683, %v1317
    %1319 = vmatprep.mubr.f32.mxu0 0.0
    %1320 = vmatmul.mubr.f32.gmra.mrb[0].mxu0 %v886
    %v1321 = vpop.f32.mrb[0].mxu0
    %v1322 = vadd.f32 %v687, %v1321
    %v1323 = vpop.f32.mrb[0].mxu0
    %v1324 = vadd.f32 %v689, %v1323
    %1325 = vmatprep.mubr.f32.mxu0 0.0
    %1326 = vmatmul.mubr.f32.gmra.mrb[0].mxu0 %v889
    %v1327 = vpop.f32.mrb[0].mxu0
    %v1328 = vadd.f32 %v693, %v1327
    %v1329 = vpop.f32.mrb[0].mxu0
    %v1330 = vadd.f32 %v695, %v1329
    %1331 = vmatprep.mubr.f32.mxu0 0.0
    %1332 = vmatmul.mubr.f32.gmra.mrb[0].mxu0 %v892
    %v1333 = vpop.f32.mrb[0].mxu0
    %v1334 = vadd.f32 %v699, %v1333
    %v1335 = vpop.f32.mrb[0].mxu0
    %v1336 = vadd.f32 %v701, %v1335
    %1337 = vmatprep.mubr.f32.mxu0 0.0
    %1338 = vmatmul.mubr.f32.gmra.mrb[0].mxu0 %v895
    %v1339 = vpop.f32.mrb[0].mxu0
    %v1340 = vadd.f32 %v705, %v1339
    %v1341 = vpop.f32.mrb[0].mxu0
    %v1342 = vadd.f32 %v707, %v1341
    %1343 = vmatprep.mubr.f32.mxu0 0.0
    %1344 = vmatmul.mubr.f32.gmra.mrb[0].mxu0 %v898
    %v1345 = vpop.f32.mrb[0].mxu0
    %v1346 = vadd.f32 %v711, %v1345
    %v1347 = vpop.f32.mrb[0].mxu0
    %v1348 = vadd.f32 %v713, %v1347
    %1349 = vmatprep.mubr.f32.mxu0 0.0
    %1350 = vmatmul.mubr.f32.gmra.mrb[0].mxu0 %v901
    %v1351 = vpop.f32.mrb[0].mxu0
    %v1352 = vadd.f32 %v717, %v1351
    %v1353 = vpop.f32.mrb[0].mxu0
    %v1354 = vadd.f32 %v719, %v1353
    %1355 = vdwg.mxu0
    %1356 = vmatprep.subr.mxu0 %v137
    %1357 = vmatpush1.msra.mxu0 %v136
    %1358 = vmatprep.subr.mxu0 %v145
    %1359 = vmatpush1.msra.mxu0 %v144
    %1360 = vmatprep.subr.mxu0 %v153
    %1361 = vmatpush1.msra.mxu0 %v152
    %1362 = vmatprep.subr.mxu0 %v925
    %1363 = vmatpush1.msra.mxu0 %v922
    %1364 = vmatprep.subr.mxu0 0.0
    %1365 = vmatpush1.msra.mxu0 0.0
    %1366 = vmatprep.subr.mxu0 0.0
    %1367 = vmatpush1.msra.mxu0 0.0
    %1368 = vmatprep.subr.mxu0 0.0
    %1369 = vmatpush1.msra.mxu0 0.0
    %1370 = vmatprep.subr.mxu0 0.0
    %1371 = vmatpush1.msra.mxu0 0.0
    %1372 = vmatprep.subr.mxu0 0.0
    %1373 = vmatpush1.msra.mxu0 0.0
    %1374 = vmatprep.subr.mxu0 0.0
    %1375 = vmatpush1.msra.mxu0 0.0
    %1376 = vmatprep.subr.mxu0 0.0
    %1377 = vmatpush1.msra.mxu0 0.0
    %1378 = vmatprep.subr.mxu0 0.0
    %1379 = vmatpush1.msra.mxu0 0.0
    %1380 = vmatprep.subr.mxu0 0.0
    %1381 = vmatpush1.msra.mxu0 0.0
    %1382 = vmatprep.subr.mxu0 0.0
    %1383 = vmatpush1.msra.mxu0 0.0
    %1384 = vmatprep.subr.mxu0 0.0
    %1385 = vmatpush1.msra.mxu0 0.0
    %1386 = vmatprep.subr.mxu0 0.0
    %1387 = vmatpush1.msra.mxu0 0.0
    %1388 = vmatprep.subr.mxu0 0.0
    %1389 = vmatpush1.msra.mxu0 0.0
    %1390 = vmatprep.subr.mxu0 0.0
    %1391 = vmatpush1.msra.mxu0 0.0
    %1392 = vmatprep.subr.mxu0 0.0
    %1393 = vmatpush1.msra.mxu0 0.0
    %1394 = vmatprep.subr.mxu0 0.0
    %1395 = vmatpush1.msra.mxu0 0.0
    %1396 = vmatprep.subr.mxu0 0.0
    %1397 = vmatpush1.msra.mxu0 0.0
    %1398 = vmatprep.subr.mxu0 0.0
    %1399 = vmatpush1.msra.mxu0 0.0
    %1400 = vmatprep.subr.mxu0 0.0
    %1401 = vmatpush1.msra.mxu0 0.0
    %1402 = vmatprep.subr.mxu0 0.0
    %1403 = vmatpush1.msra.mxu0 0.0
    %1404 = vmatprep.subr.mxu0 0.0
    %1405 = vmatpush1.msra.mxu0 0.0
    %1406 = vmatprep.subr.mxu0 0.0
    %1407 = vmatpush1.msra.mxu0 0.0
    %1408 = vmatprep.subr.mxu0 0.0
    %1409 = vmatpush1.msra.mxu0 0.0
    %1410 = vmatprep.subr.mxu0 0.0
    %1411 = vmatpush1.msra.mxu0 0.0
    %1412 = vmatprep.subr.mxu0 0.0
    %1413 = vmatpush1.msra.mxu0 0.0
    %1414 = vmatprep.subr.mxu0 0.0
    %1415 = vmatpush1.msra.mxu0 0.0
    %1416 = vmatprep.subr.mxu0 0.0
    %1417 = vmatpush1.msra.mxu0 0.0
    %1418 = vmatprep.subr.mxu0 0.0
    %1419 = vmatpush1.msra.mxu0 0.0
    %1420 = vmatprep.mubr.f32.mxu0 0.0
    %1421 = vmatmul.mubr.f32.gmra.mrb[0].mxu0 %v865
    %v1422 = vpop.f32.mrb[0].mxu0
    %v1423 = vadd.f32 %v788, %v1422
    %v1424 = vpop.f32.mrb[0].mxu0
    %v1425 = vadd.f32 %v790, %v1424
    %1426 = vmatprep.mubr.f32.mxu0 0.0
    %1427 = vmatmul.mubr.f32.gmra.mrb[0].mxu0 %v868
    %v1428 = vpop.f32.mrb[0].mxu0
    %v1429 = vadd.f32 %v794, %v1428
    %v1430 = vpop.f32.mrb[0].mxu0
    %v1431 = vadd.f32 %v796, %v1430
    %1432 = vmatprep.mubr.f32.mxu0 0.0
    %1433 = vmatmul.mubr.f32.gmra.mrb[0].mxu0 %v871
    %v1434 = vpop.f32.mrb[0].mxu0
    %v1435 = vadd.f32 %v800, %v1434
    %v1436 = vpop.f32.mrb[0].mxu0
    %v1437 = vadd.f32 %v802, %v1436
    %1438 = vmatprep.mubr.f32.mxu0 0.0
    %1439 = vmatmul.mubr.f32.gmra.mrb[0].mxu0 %v874
    %v1440 = vpop.f32.mrb[0].mxu0
    %v1441 = vadd.f32 %v806, %v1440
    %v1442 = vpop.f32.mrb[0].mxu0
    %v1443 = vadd.f32 %v808, %v1442
    %1444 = vmatprep.mubr.f32.mxu0 0.0
    %1445 = vmatmul.mubr.f32.gmra.mrb[0].mxu0 %v877
    %v1446 = vpop.f32.mrb[0].mxu0
    %v1447 = vadd.f32 %v812, %v1446
    %v1448 = vpop.f32.mrb[0].mxu0
    %v1449 = vadd.f32 %v814, %v1448
    %1450 = vmatprep.mubr.f32.mxu0 0.0
    %1451 = vmatmul.mubr.f32.gmra.mrb[0].mxu0 %v880
    %v1452 = vpop.f32.mrb[0].mxu0
    %v1453 = vadd.f32 %v818, %v1452
    %v1454 = vpop.f32.mrb[0].mxu0
    %v1455 = vadd.f32 %v820, %v1454
    %1456 = vmatprep.mubr.f32.mxu0 0.0
    %1457 = vmatmul.mubr.f32.gmra.mrb[0].mxu0 %v883
    %v1458 = vpop.f32.mrb[0].mxu0
    %v1459 = vadd.f32 %v824, %v1458
    %v1460 = vpop.f32.mrb[0].mxu0
    %v1461 = vadd.f32 %v826, %v1460
    %1462 = vmatprep.mubr.f32.mxu0 0.0
    %1463 = vmatmul.mubr.f32.gmra.mrb[0].mxu0 %v886
    %v1464 = vpop.f32.mrb[0].mxu0
    %v1465 = vadd.f32 %v830, %v1464
    %v1466 = vpop.f32.mrb[0].mxu0
    %v1467 = vadd.f32 %v832, %v1466
    %1468 = vmatprep.mubr.f32.mxu0 0.0
    %1469 = vmatmul.mubr.f32.gmra.mrb[0].mxu0 %v889
    %v1470 = vpop.f32.mrb[0].mxu0
    %v1471 = vadd.f32 %v836, %v1470
    %v1472 = vpop.f32.mrb[0].mxu0
    %v1473 = vadd.f32 %v838, %v1472
    %1474 = vmatprep.mubr.f32.mxu0 0.0
    %1475 = vmatmul.mubr.f32.gmra.mrb[0].mxu0 %v892
    %v1476 = vpop.f32.mrb[0].mxu0
    %v1477 = vadd.f32 %v842, %v1476
    %v1478 = vpop.f32.mrb[0].mxu0
    %v1479 = vadd.f32 %v844, %v1478
    %1480 = vmatprep.mubr.f32.mxu0 0.0
    %1481 = vmatmul.mubr.f32.gmra.mrb[0].mxu0 %v895
    %v1482 = vpop.f32.mrb[0].mxu0
    %v1483 = vadd.f32 %v848, %v1482
    %v1484 = vpop.f32.mrb[0].mxu0
    %v1485 = vadd.f32 %v850, %v1484
    %1486 = vmatprep.mubr.f32.mxu0 0.0
    %1487 = vmatmul.mubr.f32.gmra.mrb[0].mxu0 %v898
    %v1488 = vpop.f32.mrb[0].mxu0
    %v1489 = vadd.f32 %v854, %v1488
    %v1490 = vpop.f32.mrb[0].mxu0
    %v1491 = vadd.f32 %v856, %v1490
    %1492 = vmatprep.mubr.f32.mxu0 0.0
    %1493 = vmatmul.mubr.f32.gmra.mrb[0].mxu0 %v901
    %v1494 = vpop.f32.mrb[0].mxu0
    %v1495 = vadd.f32 %v860, %v1494
    %v1496 = vpop.f32.mrb[0].mxu0
    %v1497 = vadd.f32 %v862, %v1496
    %1498 = vdwg.mxu0
    %v1500 = vsel %vm227, %v115, 0
    %v1503 = vsel %vm267, %v218, 0
    %v1506 = vsel %vm267, %v219, 0
    %v1509 = vsel %vm267, %v220, 0
    %v1512 = vsel %vm267, %v221, 0
    %v1515 = vsel %vm267, %v222, 0
    %v1518 = vsel %vm267, %v223, 0
    %v1521 = vsel %vm267, %v224, 0
    %v1524 = vsel %vm267, %v225, 0
    %1526 = vmatprep.subr.mxu0 %v195
    %1527 = vmatpush1.msra.mxu0 %v194
    %1528 = vmatprep.subr.mxu0 %v203
    %1529 = vmatpush1.msra.mxu0 %v202
    %1530 = vmatprep.subr.mxu0 %v211
    %1531 = vmatpush1.msra.mxu0 %v210
    %1532 = vmatprep.subr.mxu0 %v1506
    %1533 = vmatpush1.msra.mxu0 %v1503
    %1534 = vmatprep.subr.mxu0 0.0
    %1535 = vmatpush1.msra.mxu0 0.0
    %1536 = vmatprep.subr.mxu0 0.0
    %1537 = vmatpush1.msra.mxu0 0.0
    %1538 = vmatprep.subr.mxu0 0.0
    %1539 = vmatpush1.msra.mxu0 0.0
    %1540 = vmatprep.subr.mxu0 0.0
    %1541 = vmatpush1.msra.mxu0 0.0
    %1542 = vmatprep.subr.mxu0 0.0
    %1543 = vmatpush1.msra.mxu0 0.0
    %1544 = vmatprep.subr.mxu0 0.0
    %1545 = vmatpush1.msra.mxu0 0.0
    %1546 = vmatprep.subr.mxu0 0.0
    %1547 = vmatpush1.msra.mxu0 0.0
    %1548 = vmatprep.subr.mxu0 0.0
    %1549 = vmatpush1.msra.mxu0 0.0
    %1550 = vmatprep.subr.mxu0 0.0
    %1551 = vmatpush1.msra.mxu0 0.0
    %1552 = vmatprep.subr.mxu0 0.0
    %1553 = vmatpush1.msra.mxu0 0.0
    %1554 = vmatprep.subr.mxu0 0.0
    %1555 = vmatpush1.msra.mxu0 0.0
    %1556 = vmatprep.subr.mxu0 0.0
    %1557 = vmatpush1.msra.mxu0 0.0
    %1558 = vmatprep.subr.mxu0 0.0
    %1559 = vmatpush1.msra.mxu0 0.0
    %1560 = vmatprep.subr.mxu0 0.0
    %1561 = vmatpush1.msra.mxu0 0.0
    %1562 = vmatprep.subr.mxu0 0.0
    %1563 = vmatpush1.msra.mxu0 0.0
    %1564 = vmatprep.subr.mxu0 0.0
    %1565 = vmatpush1.msra.mxu0 0.0
    %1566 = vmatprep.subr.mxu0 0.0
    %1567 = vmatpush1.msra.mxu0 0.0
    %1568 = vmatprep.subr.mxu0 0.0
    %1569 = vmatpush1.msra.mxu0 0.0
    %1570 = vmatprep.subr.mxu0 0.0
    %1571 = vmatpush1.msra.mxu0 0.0
    %1572 = vmatprep.subr.mxu0 0.0
    %1573 = vmatpush1.msra.mxu0 0.0
    %1574 = vmatprep.subr.mxu0 0.0
    %1575 = vmatpush1.msra.mxu0 0.0
    %1576 = vmatprep.subr.mxu0 0.0
    %1577 = vmatpush1.msra.mxu0 0.0
    %1578 = vmatprep.subr.mxu0 0.0
    %1579 = vmatpush1.msra.mxu0 0.0
    %1580 = vmatprep.subr.mxu0 0.0
    %1581 = vmatpush1.msra.mxu0 0.0
    %1582 = vmatprep.subr.mxu0 0.0
    %1583 = vmatpush1.msra.mxu0 0.0
    %1584 = vmatprep.subr.mxu0 0.0
    %1585 = vmatpush1.msra.mxu0 0.0
    %1586 = vmatprep.subr.mxu0 0.0
    %1587 = vmatpush1.msra.mxu0 0.0
    %1588 = vmatprep.subr.mxu0 0.0
    %1589 = vmatpush1.msra.mxu0 0.0
    %1590 = vmatprep.mubr.f32.mxu0 0.0
    %1591 = vmatmul.mubr.f32.gmra.mrb[0].mxu0 %v868
    %v1592 = vpop.f32.mrb[0].mxu0
    %v1593 = vadd.f32 0.0, %v1592
    %v1594 = vpop.f32.mrb[0].mxu0
    %v1595 = vadd.f32 0.0, %v1594
    %1596 = vmatprep.mubr.f32.mxu0 0.0
    %1597 = vmatmul.mubr.f32.gmra.mrb[0].mxu0 %v871
    %v1598 = vpop.f32.mrb[0].mxu0
    %v1599 = vadd.f32 0.0, %v1598
    %v1600 = vpop.f32.mrb[0].mxu0
    %v1601 = vadd.f32 0.0, %v1600
    %1602 = vmatprep.mubr.f32.mxu0 0.0
    %1603 = vmatmul.mubr.f32.gmra.mrb[0].mxu0 %v874
    %v1604 = vpop.f32.mrb[0].mxu0
    %v1605 = vadd.f32 0.0, %v1604
    %v1606 = vpop.f32.mrb[0].mxu0
    %v1607 = vadd.f32 0.0, %v1606
    %1608 = vmatprep.mubr.f32.mxu0 0.0
    %1609 = vmatmul.mubr.f32.gmra.mrb[0].mxu0 %v877
    %v1610 = vpop.f32.mrb[0].mxu0
    %v1611 = vadd.f32 0.0, %v1610
    %v1612 = vpop.f32.mrb[0].mxu0
    %v1613 = vadd.f32 0.0, %v1612
    %1614 = vmatprep.mubr.f32.mxu0 0.0
    %1615 = vmatmul.mubr.f32.gmra.mrb[0].mxu0 %v880
    %v1616 = vpop.f32.mrb[0].mxu0
    %v1617 = vadd.f32 0.0, %v1616
    %v1618 = vpop.f32.mrb[0].mxu0
    %v1619 = vadd.f32 0.0, %v1618
    %1620 = vmatprep.mubr.f32.mxu0 0.0
    %1621 = vmatmul.mubr.f32.gmra.mrb[0].mxu0 %v883
    %v1622 = vpop.f32.mrb[0].mxu0
    %v1623 = vadd.f32 0.0, %v1622
    %v1624 = vpop.f32.mrb[0].mxu0
    %v1625 = vadd.f32 0.0, %v1624
    %1626 = vmatprep.mubr.f32.mxu0 0.0
    %1627 = vmatmul.mubr.f32.gmra.mrb[0].mxu0 %v886
    %v1628 = vpop.f32.mrb[0].mxu0
    %v1629 = vadd.f32 0.0, %v1628
    %v1630 = vpop.f32.mrb[0].mxu0
    %v1631 = vadd.f32 0.0, %v1630
    %1632 = vmatprep.mubr.f32.mxu0 0.0
    %1633 = vmatmul.mubr.f32.gmra.mrb[0].mxu0 %v889
    %v1634 = vpop.f32.mrb[0].mxu0
    %v1635 = vadd.f32 0.0, %v1634
    %v1636 = vpop.f32.mrb[0].mxu0
    %v1637 = vadd.f32 0.0, %v1636
    %1638 = vmatprep.mubr.f32.mxu0 0.0
    %1639 = vmatmul.mubr.f32.gmra.mrb[0].mxu0 %v892
    %v1640 = vpop.f32.mrb[0].mxu0
    %v1641 = vadd.f32 0.0, %v1640
    %v1642 = vpop.f32.mrb[0].mxu0
    %v1643 = vadd.f32 0.0, %v1642
    %1644 = vmatprep.mubr.f32.mxu0 0.0
    %1645 = vmatmul.mubr.f32.gmra.mrb[0].mxu0 %v895
    %v1646 = vpop.f32.mrb[0].mxu0
    %v1647 = vadd.f32 0.0, %v1646
    %v1648 = vpop.f32.mrb[0].mxu0
    %v1649 = vadd.f32 0.0, %v1648
    %1650 = vmatprep.mubr.f32.mxu0 0.0
    %1651 = vmatmul.mubr.f32.gmra.mrb[0].mxu0 %v898
    %v1652 = vpop.f32.mrb[0].mxu0
    %v1653 = vadd.f32 0.0, %v1652
    %v1654 = vpop.f32.mrb[0].mxu0
    %v1655 = vadd.f32 0.0, %v1654
    %1656 = vmatprep.mubr.f32.mxu0 0.0
    %1657 = vmatmul.mubr.f32.gmra.mrb[0].mxu0 %v901
    %v1658 = vpop.f32.mrb[0].mxu0
    %v1659 = vadd.f32 0.0, %v1658
    %v1660 = vpop.f32.mrb[0].mxu0
    %v1661 = vadd.f32 0.0, %v1660
    %1662 = vmatprep.mubr.f32.mxu0 0.0
    %1663 = vmatmul.mubr.f32.gmra.mrb[0].mxu0 %v1500
    %v1664 = vpop.f32.mrb[0].mxu0
    %v1665 = vadd.f32 0.0, %v1664
    %v1666 = vpop.f32.mrb[0].mxu0
    %v1667 = vadd.f32 0.0, %v1666
    %1668 = vdwg.mxu0
    %1669 = vmatprep.subr.mxu0 %v197
    %1670 = vmatpush1.msra.mxu0 %v196
    %1671 = vmatprep.subr.mxu0 %v205
    %1672 = vmatpush1.msra.mxu0 %v204
    %1673 = vmatprep.subr.mxu0 %v213
    %1674 = vmatpush1.msra.mxu0 %v212
    %1675 = vmatprep.subr.mxu0 %v1512
    %1676 = vmatpush1.msra.mxu0 %v1509
    %1677 = vmatprep.subr.mxu0 0.0
    %1678 = vmatpush1.msra.mxu0 0.0
    %1679 = vmatprep.subr.mxu0 0.0
    %1680 = vmatpush1.msra.mxu0 0.0
    %1681 = vmatprep.subr.mxu0 0.0
    %1682 = vmatpush1.msra.mxu0 0.0
    %1683 = vmatprep.subr.mxu0 0.0
    %1684 = vmatpush1.msra.mxu0 0.0
    %1685 = vmatprep.subr.mxu0 0.0
    %1686 = vmatpush1.msra.mxu0 0.0
    %1687 = vmatprep.subr.mxu0 0.0
    %1688 = vmatpush1.msra.mxu0 0.0
    %1689 = vmatprep.subr.mxu0 0.0
    %1690 = vmatpush1.msra.mxu0 0.0
    %1691 = vmatprep.subr.mxu0 0.0
    %1692 = vmatpush1.msra.mxu0 0.0
    %1693 = vmatprep.subr.mxu0 0.0
    %1694 = vmatpush1.msra.mxu0 0.0
    %1695 = vmatprep.subr.mxu0 0.0
    %1696 = vmatpush1.msra.mxu0 0.0
    %1697 = vmatprep.subr.mxu0 0.0
    %1698 = vmatpush1.msra.mxu0 0.0
    %1699 = vmatprep.subr.mxu0 0.0
    %1700 = vmatpush1.msra.mxu0 0.0
    %1701 = vmatprep.subr.mxu0 0.0
    %1702 = vmatpush1.msra.mxu0 0.0
    %1703 = vmatprep.subr.mxu0 0.0
    %1704 = vmatpush1.msra.mxu0 0.0
    %1705 = vmatprep.subr.mxu0 0.0
    %1706 = vmatpush1.msra.mxu0 0.0
    %1707 = vmatprep.subr.mxu0 0.0
    %1708 = vmatpush1.msra.mxu0 0.0
    %1709 = vmatprep.subr.mxu0 0.0
    %1710 = vmatpush1.msra.mxu0 0.0
    %1711 = vmatprep.subr.mxu0 0.0
    %1712 = vmatpush1.msra.mxu0 0.0
    %1713 = vmatprep.subr.mxu0 0.0
    %1714 = vmatpush1.msra.mxu0 0.0
    %1715 = vmatprep.subr.mxu0 0.0
    %1716 = vmatpush1.msra.mxu0 0.0
    %1717 = vmatprep.subr.mxu0 0.0
    %1718 = vmatpush1.msra.mxu0 0.0
    %1719 = vmatprep.subr.mxu0 0.0
    %1720 = vmatpush1.msra.mxu0 0.0
    %1721 = vmatprep.subr.mxu0 0.0
    %1722 = vmatpush1.msra.mxu0 0.0
    %1723 = vmatprep.subr.mxu0 0.0
    %1724 = vmatpush1.msra.mxu0 0.0
    %1725 = vmatprep.subr.mxu0 0.0
    %1726 = vmatpush1.msra.mxu0 0.0
    %1727 = vmatprep.subr.mxu0 0.0
    %1728 = vmatpush1.msra.mxu0 0.0
    %1729 = vmatprep.subr.mxu0 0.0
    %1730 = vmatpush1.msra.mxu0 0.0
    %1731 = vmatprep.subr.mxu0 0.0
    %1732 = vmatpush1.msra.mxu0 0.0
    %1733 = vmatprep.mubr.f32.mxu0 0.0
    %1734 = vmatmul.mubr.f32.gmra.mrb[0].mxu0 %v868
    %v1735 = vpop.f32.mrb[0].mxu0
    %v1736 = vadd.f32 0.0, %v1735
    %v1737 = vpop.f32.mrb[0].mxu0
    %v1738 = vadd.f32 0.0, %v1737
    %1739 = vmatprep.mubr.f32.mxu0 0.0
    %1740 = vmatmul.mubr.f32.gmra.mrb[0].mxu0 %v871
    %v1741 = vpop.f32.mrb[0].mxu0
    %v1742 = vadd.f32 0.0, %v1741
    %v1743 = vpop.f32.mrb[0].mxu0
    %v1744 = vadd.f32 0.0, %v1743
    %1745 = vmatprep.mubr.f32.mxu0 0.0
    %1746 = vmatmul.mubr.f32.gmra.mrb[0].mxu0 %v874
    %v1747 = vpop.f32.mrb[0].mxu0
    %v1748 = vadd.f32 0.0, %v1747
    %v1749 = vpop.f32.mrb[0].mxu0
    %v1750 = vadd.f32 0.0, %v1749
    %1751 = vmatprep.mubr.f32.mxu0 0.0
    %1752 = vmatmul.mubr.f32.gmra.mrb[0].mxu0 %v877
    %v1753 = vpop.f32.mrb[0].mxu0
    %v1754 = vadd.f32 0.0, %v1753
    %v1755 = vpop.f32.mrb[0].mxu0
    %v1756 = vadd.f32 0.0, %v1755
    %1757 = vmatprep.mubr.f32.mxu0 0.0
    %1758 = vmatmul.mubr.f32.gmra.mrb[0].mxu0 %v880
    %v1759 = vpop.f32.mrb[0].mxu0
    %v1760 = vadd.f32 0.0, %v1759
    %v1761 = vpop.f32.mrb[0].mxu0
    %v1762 = vadd.f32 0.0, %v1761
    %1763 = vmatprep.mubr.f32.mxu0 0.0
    %1764 = vmatmul.mubr.f32.gmra.mrb[0].mxu0 %v883
    %v1765 = vpop.f32.mrb[0].mxu0
    %v1766 = vadd.f32 0.0, %v1765
    %v1767 = vpop.f32.mrb[0].mxu0
    %v1768 = vadd.f32 0.0, %v1767
    %1769 = vmatprep.mubr.f32.mxu0 0.0
    %1770 = vmatmul.mubr.f32.gmra.mrb[0].mxu0 %v886
    %v1771 = vpop.f32.mrb[0].mxu0
    %v1772 = vadd.f32 0.0, %v1771
    %v1773 = vpop.f32.mrb[0].mxu0
    %v1774 = vadd.f32 0.0, %v1773
    %1775 = vmatprep.mubr.f32.mxu0 0.0
    %1776 = vmatmul.mubr.f32.gmra.mrb[0].mxu0 %v889
    %v1777 = vpop.f32.mrb[0].mxu0
    %v1778 = vadd.f32 0.0, %v1777
    %v1779 = vpop.f32.mrb[0].mxu0
    %v1780 = vadd.f32 0.0, %v1779
    %1781 = vmatprep.mubr.f32.mxu0 0.0
    %1782 = vmatmul.mubr.f32.gmra.mrb[0].mxu0 %v892
    %v1783 = vpop.f32.mrb[0].mxu0
    %v1784 = vadd.f32 0.0, %v1783
    %v1785 = vpop.f32.mrb[0].mxu0
    %v1786 = vadd.f32 0.0, %v1785
    %1787 = vmatprep.mubr.f32.mxu0 0.0
    %1788 = vmatmul.mubr.f32.gmra.mrb[0].mxu0 %v895
    %v1789 = vpop.f32.mrb[0].mxu0
    %v1790 = vadd.f32 0.0, %v1789
    %v1791 = vpop.f32.mrb[0].mxu0
    %v1792 = vadd.f32 0.0, %v1791
    %1793 = vmatprep.mubr.f32.mxu0 0.0
    %1794 = vmatmul.mubr.f32.gmra.mrb[0].mxu0 %v898
    %v1795 = vpop.f32.mrb[0].mxu0
    %v1796 = vadd.f32 0.0, %v1795
    %v1797 = vpop.f32.mrb[0].mxu0
    %v1798 = vadd.f32 0.0, %v1797
    %1799 = vmatprep.mubr.f32.mxu0 0.0
    %1800 = vmatmul.mubr.f32.gmra.mrb[0].mxu0 %v901
    %v1801 = vpop.f32.mrb[0].mxu0
    %v1802 = vadd.f32 0.0, %v1801
    %v1803 = vpop.f32.mrb[0].mxu0
    %v1804 = vadd.f32 0.0, %v1803
    %1805 = vmatprep.mubr.f32.mxu0 0.0
    %1806 = vmatmul.mubr.f32.gmra.mrb[0].mxu0 %v1500
    %v1807 = vpop.f32.mrb[0].mxu0
    %v1808 = vadd.f32 0.0, %v1807
    %v1809 = vpop.f32.mrb[0].mxu0
    %v1810 = vadd.f32 0.0, %v1809
    %1811 = vdwg.mxu0
    %1812 = vmatprep.subr.mxu0 %v199
    %1813 = vmatpush1.msra.mxu0 %v198
    %1814 = vmatprep.subr.mxu0 %v207
    %1815 = vmatpush1.msra.mxu0 %v206
    %1816 = vmatprep.subr.mxu0 %v215
    %1817 = vmatpush1.msra.mxu0 %v214
    %1818 = vmatprep.subr.mxu0 %v1518
    %1819 = vmatpush1.msra.mxu0 %v1515
    %1820 = vmatprep.subr.mxu0 0.0
    %1821 = vmatpush1.msra.mxu0 0.0
    %1822 = vmatprep.subr.mxu0 0.0
    %1823 = vmatpush1.msra.mxu0 0.0
    %1824 = vmatprep.subr.mxu0 0.0
    %1825 = vmatpush1.msra.mxu0 0.0
    %1826 = vmatprep.subr.mxu0 0.0
    %1827 = vmatpush1.msra.mxu0 0.0
    %1828 = vmatprep.subr.mxu0 0.0
    %1829 = vmatpush1.msra.mxu0 0.0
    %1830 = vmatprep.subr.mxu0 0.0
    %1831 = vmatpush1.msra.mxu0 0.0
    %1832 = vmatprep.subr.mxu0 0.0
    %1833 = vmatpush1.msra.mxu0 0.0
    %1834 = vmatprep.subr.mxu0 0.0
    %1835 = vmatpush1.msra.mxu0 0.0
    %1836 = vmatprep.subr.mxu0 0.0
    %1837 = vmatpush1.msra.mxu0 0.0
    %1838 = vmatprep.subr.mxu0 0.0
    %1839 = vmatpush1.msra.mxu0 0.0
    %1840 = vmatprep.subr.mxu0 0.0
    %1841 = vmatpush1.msra.mxu0 0.0
    %1842 = vmatprep.subr.mxu0 0.0
    %1843 = vmatpush1.msra.mxu0 0.0
    %1844 = vmatprep.subr.mxu0 0.0
    %1845 = vmatpush1.msra.mxu0 0.0
    %1846 = vmatprep.subr.mxu0 0.0
    %1847 = vmatpush1.msra.mxu0 0.0
    %1848 = vmatprep.subr.mxu0 0.0
    %1849 = vmatpush1.msra.mxu0 0.0
    %1850 = vmatprep.subr.mxu0 0.0
    %1851 = vmatpush1.msra.mxu0 0.0
    %1852 = vmatprep.subr.mxu0 0.0
    %1853 = vmatpush1.msra.mxu0 0.0
    %1854 = vmatprep.subr.mxu0 0.0
    %1855 = vmatpush1.msra.mxu0 0.0
    %1856 = vmatprep.subr.mxu0 0.0
    %1857 = vmatpush1.msra.mxu0 0.0
    %1858 = vmatprep.subr.mxu0 0.0
    %1859 = vmatpush1.msra.mxu0 0.0
    %1860 = vmatprep.subr.mxu0 0.0
    %1861 = vmatpush1.msra.mxu0 0.0
    %1862 = vmatprep.subr.mxu0 0.0
    %1863 = vmatpush1.msra.mxu0 0.0
    %1864 = vmatprep.subr.mxu0 0.0
    %1865 = vmatpush1.msra.mxu0 0.0
    %1866 = vmatprep.subr.mxu0 0.0
    %1867 = vmatpush1.msra.mxu0 0.0
    %1868 = vmatprep.subr.mxu0 0.0
    %1869 = vmatpush1.msra.mxu0 0.0
    %1870 = vmatprep.subr.mxu0 0.0
    %1871 = vmatpush1.msra.mxu0 0.0
    %1872 = vmatprep.subr.mxu0 0.0
    %1873 = vmatpush1.msra.mxu0 0.0
    %1874 = vmatprep.subr.mxu0 0.0
    %1875 = vmatpush1.msra.mxu0 0.0
    %1876 = vmatprep.mubr.f32.mxu0 0.0
    %1877 = vmatmul.mubr.f32.gmra.mrb[0].mxu0 %v868
    %v1878 = vpop.f32.mrb[0].mxu0
    %v1879 = vadd.f32 0.0, %v1878
    %v1880 = vpop.f32.mrb[0].mxu0
    %v1881 = vadd.f32 0.0, %v1880
    %1882 = vmatprep.mubr.f32.mxu0 0.0
    %1883 = vmatmul.mubr.f32.gmra.mrb[0].mxu0 %v871
    %v1884 = vpop.f32.mrb[0].mxu0
    %v1885 = vadd.f32 0.0, %v1884
    %v1886 = vpop.f32.mrb[0].mxu0
    %v1887 = vadd.f32 0.0, %v1886
    %1888 = vmatprep.mubr.f32.mxu0 0.0
    %1889 = vmatmul.mubr.f32.gmra.mrb[0].mxu0 %v874
    %v1890 = vpop.f32.mrb[0].mxu0
    %v1891 = vadd.f32 0.0, %v1890
    %v1892 = vpop.f32.mrb[0].mxu0
    %v1893 = vadd.f32 0.0, %v1892
    %1894 = vmatprep.mubr.f32.mxu0 0.0
    %1895 = vmatmul.mubr.f32.gmra.mrb[0].mxu0 %v877
    %v1896 = vpop.f32.mrb[0].mxu0
    %v1897 = vadd.f32 0.0, %v1896
    %v1898 = vpop.f32.mrb[0].mxu0
    %v1899 = vadd.f32 0.0, %v1898
    %1900 = vmatprep.mubr.f32.mxu0 0.0
    %1901 = vmatmul.mubr.f32.gmra.mrb[0].mxu0 %v880
    %v1902 = vpop.f32.mrb[0].mxu0
    %v1903 = vadd.f32 0.0, %v1902
    %v1904 = vpop.f32.mrb[0].mxu0
    %v1905 = vadd.f32 0.0, %v1904
    %1906 = vmatprep.mubr.f32.mxu0 0.0
    %1907 = vmatmul.mubr.f32.gmra.mrb[0].mxu0 %v883
    %v1908 = vpop.f32.mrb[0].mxu0
    %v1909 = vadd.f32 0.0, %v1908
    %v1910 = vpop.f32.mrb[0].mxu0
    %v1911 = vadd.f32 0.0, %v1910
    %1912 = vmatprep.mubr.f32.mxu0 0.0
    %1913 = vmatmul.mubr.f32.gmra.mrb[0].mxu0 %v886
    %v1914 = vpop.f32.mrb[0].mxu0
    %v1915 = vadd.f32 0.0, %v1914
    %v1916 = vpop.f32.mrb[0].mxu0
    %v1917 = vadd.f32 0.0, %v1916
    %1918 = vmatprep.mubr.f32.mxu0 0.0
    %1919 = vmatmul.mubr.f32.gmra.mrb[0].mxu0 %v889
    %v1920 = vpop.f32.mrb[0].mxu0
    %v1921 = vadd.f32 0.0, %v1920
    %v1922 = vpop.f32.mrb[0].mxu0
    %v1923 = vadd.f32 0.0, %v1922
    %1924 = vmatprep.mubr.f32.mxu0 0.0
    %1925 = vmatmul.mubr.f32.gmra.mrb[0].mxu0 %v892
    %v1926 = vpop.f32.mrb[0].mxu0
    %v1927 = vadd.f32 0.0, %v1926
    %v1928 = vpop.f32.mrb[0].mxu0
    %v1929 = vadd.f32 0.0, %v1928
    %1930 = vmatprep.mubr.f32.mxu0 0.0
    %1931 = vmatmul.mubr.f32.gmra.mrb[0].mxu0 %v895
    %v1932 = vpop.f32.mrb[0].mxu0
    %v1933 = vadd.f32 0.0, %v1932
    %v1934 = vpop.f32.mrb[0].mxu0
    %v1935 = vadd.f32 0.0, %v1934
    %1936 = vmatprep.mubr.f32.mxu0 0.0
    %1937 = vmatmul.mubr.f32.gmra.mrb[0].mxu0 %v898
    %v1938 = vpop.f32.mrb[0].mxu0
    %v1939 = vadd.f32 0.0, %v1938
    %v1940 = vpop.f32.mrb[0].mxu0
    %v1941 = vadd.f32 0.0, %v1940
    %1942 = vmatprep.mubr.f32.mxu0 0.0
    %1943 = vmatmul.mubr.f32.gmra.mrb[0].mxu0 %v901
    %v1944 = vpop.f32.mrb[0].mxu0
    %v1945 = vadd.f32 0.0, %v1944
    %v1946 = vpop.f32.mrb[0].mxu0
    %v1947 = vadd.f32 0.0, %v1946
    %1948 = vmatprep.mubr.f32.mxu0 0.0
    %1949 = vmatmul.mubr.f32.gmra.mrb[0].mxu0 %v1500
    %v1950 = vpop.f32.mrb[0].mxu0
    %v1951 = vadd.f32 0.0, %v1950
    %v1952 = vpop.f32.mrb[0].mxu0
    %v1953 = vadd.f32 0.0, %v1952
    %1954 = vdwg.mxu0
    %1955 = vmatprep.subr.mxu0 %v201
    %1956 = vmatpush1.msra.mxu0 %v200
    %1957 = vmatprep.subr.mxu0 %v209
    %1958 = vmatpush1.msra.mxu0 %v208
    %1959 = vmatprep.subr.mxu0 %v217
    %1960 = vmatpush1.msra.mxu0 %v216
    %1961 = vmatprep.subr.mxu0 %v1524
    %1962 = vmatpush1.msra.mxu0 %v1521
    %1963 = vmatprep.subr.mxu0 0.0
    %1964 = vmatpush1.msra.mxu0 0.0
    %1965 = vmatprep.subr.mxu0 0.0
    %1966 = vmatpush1.msra.mxu0 0.0
    %1967 = vmatprep.subr.mxu0 0.0
    %1968 = vmatpush1.msra.mxu0 0.0
    %1969 = vmatprep.subr.mxu0 0.0
    %1970 = vmatpush1.msra.mxu0 0.0
    %1971 = vmatprep.subr.mxu0 0.0
    %1972 = vmatpush1.msra.mxu0 0.0
    %1973 = vmatprep.subr.mxu0 0.0
    %1974 = vmatpush1.msra.mxu0 0.0
    %1975 = vmatprep.subr.mxu0 0.0
    %1976 = vmatpush1.msra.mxu0 0.0
    %1977 = vmatprep.subr.mxu0 0.0
    %1978 = vmatpush1.msra.mxu0 0.0
    %1979 = vmatprep.subr.mxu0 0.0
    %1980 = vmatpush1.msra.mxu0 0.0
    %1981 = vmatprep.subr.mxu0 0.0
    %1982 = vmatpush1.msra.mxu0 0.0
    %1983 = vmatprep.subr.mxu0 0.0
    %1984 = vmatpush1.msra.mxu0 0.0
    %1985 = vmatprep.subr.mxu0 0.0
    %1986 = vmatpush1.msra.mxu0 0.0
    %1987 = vmatprep.subr.mxu0 0.0
    %1988 = vmatpush1.msra.mxu0 0.0
    %1989 = vmatprep.subr.mxu0 0.0
    %1990 = vmatpush1.msra.mxu0 0.0
    %1991 = vmatprep.subr.mxu0 0.0
    %1992 = vmatpush1.msra.mxu0 0.0
    %1993 = vmatprep.subr.mxu0 0.0
    %1994 = vmatpush1.msra.mxu0 0.0
    %1995 = vmatprep.subr.mxu0 0.0
    %1996 = vmatpush1.msra.mxu0 0.0
    %1997 = vmatprep.subr.mxu0 0.0
    %1998 = vmatpush1.msra.mxu0 0.0
    %1999 = vmatprep.subr.mxu0 0.0
    %2000 = vmatpush1.msra.mxu0 0.0
    %2001 = vmatprep.subr.mxu0 0.0
    %2002 = vmatpush1.msra.mxu0 0.0
    %2003 = vmatprep.subr.mxu0 0.0
    %2004 = vmatpush1.msra.mxu0 0.0
    %2005 = vmatprep.subr.mxu0 0.0
    %2006 = vmatpush1.msra.mxu0 0.0
    %2007 = vmatprep.subr.mxu0 0.0
    %2008 = vmatpush1.msra.mxu0 0.0
    %2009 = vmatprep.subr.mxu0 0.0
    %2010 = vmatpush1.msra.mxu0 0.0
    %2011 = vmatprep.subr.mxu0 0.0
    %2012 = vmatpush1.msra.mxu0 0.0
    %2013 = vmatprep.subr.mxu0 0.0
    %2014 = vmatpush1.msra.mxu0 0.0
    %2015 = vmatprep.subr.mxu0 0.0
    %2016 = vmatpush1.msra.mxu0 0.0
    %2017 = vmatprep.subr.mxu0 0.0
    %2018 = vmatpush1.msra.mxu0 0.0
    %2019 = vmatprep.mubr.f32.mxu0 0.0
    %2020 = vmatmul.mubr.f32.gmra.mrb[0].mxu0 %v868
    %v2021 = vpop.f32.mrb[0].mxu0
    %v2022 = vadd.f32 0.0, %v2021
    %v2023 = vpop.f32.mrb[0].mxu0
    %v2024 = vadd.f32 0.0, %v2023
    %2025 = vmatprep.mubr.f32.mxu0 0.0
    %2026 = vmatmul.mubr.f32.gmra.mrb[0].mxu0 %v871
    %v2027 = vpop.f32.mrb[0].mxu0
    %v2028 = vadd.f32 0.0, %v2027
    %v2029 = vpop.f32.mrb[0].mxu0
    %v2030 = vadd.f32 0.0, %v2029
    %2031 = vmatprep.mubr.f32.mxu0 0.0
    %2032 = vmatmul.mubr.f32.gmra.mrb[0].mxu0 %v874
    %v2033 = vpop.f32.mrb[0].mxu0
    %v2034 = vadd.f32 0.0, %v2033
    %v2035 = vpop.f32.mrb[0].mxu0
    %v2036 = vadd.f32 0.0, %v2035
    %2037 = vmatprep.mubr.f32.mxu0 0.0
    %2038 = vmatmul.mubr.f32.gmra.mrb[0].mxu0 %v877
    %v2039 = vpop.f32.mrb[0].mxu0
    %v2040 = vadd.f32 0.0, %v2039
    %v2041 = vpop.f32.mrb[0].mxu0
    %v2042 = vadd.f32 0.0, %v2041
    %2043 = vmatprep.mubr.f32.mxu0 0.0
    %2044 = vmatmul.mubr.f32.gmra.mrb[0].mxu0 %v880
    %v2045 = vpop.f32.mrb[0].mxu0
    %v2046 = vadd.f32 0.0, %v2045
    %v2047 = vpop.f32.mrb[0].mxu0
    %v2048 = vadd.f32 0.0, %v2047
    %2049 = vmatprep.mubr.f32.mxu0 0.0
    %2050 = vmatmul.mubr.f32.gmra.mrb[0].mxu0 %v883
    %v2051 = vpop.f32.mrb[0].mxu0
    %v2052 = vadd.f32 0.0, %v2051
    %v2053 = vpop.f32.mrb[0].mxu0
    %v2054 = vadd.f32 0.0, %v2053
    %2055 = vmatprep.mubr.f32.mxu0 0.0
    %2056 = vmatmul.mubr.f32.gmra.mrb[0].mxu0 %v886
    %v2057 = vpop.f32.mrb[0].mxu0
    %v2058 = vadd.f32 0.0, %v2057
    %v2059 = vpop.f32.mrb[0].mxu0
    %v2060 = vadd.f32 0.0, %v2059
    %2061 = vmatprep.mubr.f32.mxu0 0.0
    %2062 = vmatmul.mubr.f32.gmra.mrb[0].mxu0 %v889
    %v2063 = vpop.f32.mrb[0].mxu0
    %v2064 = vadd.f32 0.0, %v2063
    %v2065 = vpop.f32.mrb[0].mxu0
    %v2066 = vadd.f32 0.0, %v2065
    %2067 = vmatprep.mubr.f32.mxu0 0.0
    %2068 = vmatmul.mubr.f32.gmra.mrb[0].mxu0 %v892
    %v2069 = vpop.f32.mrb[0].mxu0
    %v2070 = vadd.f32 0.0, %v2069
    %v2071 = vpop.f32.mrb[0].mxu0
    %v2072 = vadd.f32 0.0, %v2071
    %2073 = vmatprep.mubr.f32.mxu0 0.0
    %2074 = vmatmul.mubr.f32.gmra.mrb[0].mxu0 %v895
    %v2075 = vpop.f32.mrb[0].mxu0
    %v2076 = vadd.f32 0.0, %v2075
    %v2077 = vpop.f32.mrb[0].mxu0
    %v2078 = vadd.f32 0.0, %v2077
    %2079 = vmatprep.mubr.f32.mxu0 0.0
    %2080 = vmatmul.mubr.f32.gmra.mrb[0].mxu0 %v898
    %v2081 = vpop.f32.mrb[0].mxu0
    %v2082 = vadd.f32 0.0, %v2081
    %v2083 = vpop.f32.mrb[0].mxu0
    %v2084 = vadd.f32 0.0, %v2083
    %2085 = vmatprep.mubr.f32.mxu0 0.0
    %2086 = vmatmul.mubr.f32.gmra.mrb[0].mxu0 %v901
    %v2087 = vpop.f32.mrb[0].mxu0
    %v2088 = vadd.f32 0.0, %v2087
    %v2089 = vpop.f32.mrb[0].mxu0
    %v2090 = vadd.f32 0.0, %v2089
    %2091 = vmatprep.mubr.f32.mxu0 0.0
    %2092 = vmatmul.mubr.f32.gmra.mrb[0].mxu0 %v1500
    %v2093 = vpop.f32.mrb[0].mxu0
    %v2094 = vadd.f32 0.0, %v2093
    %v2095 = vpop.f32.mrb[0].mxu0
    %v2096 = vadd.f32 0.0, %v2095
    %2097 = vdwg.mxu0
    %v2098 = vadd.f32 %v994, %v1593
    %v2099 = vadd.f32 %v996, %v1595
    %v2100 = vadd.f32 %v1137, %v1736
    %v2101 = vadd.f32 %v1139, %v1738
    %v2102 = vadd.f32 %v1280, %v1879
    %v2103 = vadd.f32 %v1282, %v1881
    %v2104 = vadd.f32 %v1423, %v2022
    %v2105 = vadd.f32 %v1425, %v2024
    %v2106 = vadd.f32 %v1000, %v1599
    %v2107 = vadd.f32 %v1002, %v1601
    %v2108 = vadd.f32 %v1143, %v1742
    %v2109 = vadd.f32 %v1145, %v1744
    %v2110 = vadd.f32 %v1286, %v1885
    %v2111 = vadd.f32 %v1288, %v1887
    %v2112 = vadd.f32 %v1429, %v2028
    %v2113 = vadd.f32 %v1431, %v2030
    %v2114 = vadd.f32 %v1006, %v1605
    %v2115 = vadd.f32 %v1008, %v1607
    %v2116 = vadd.f32 %v1149, %v1748
    %v2117 = vadd.f32 %v1151, %v1750
    %v2118 = vadd.f32 %v1292, %v1891
    %v2119 = vadd.f32 %v1294, %v1893
    %v2120 = vadd.f32 %v1435, %v2034
    %v2121 = vadd.f32 %v1437, %v2036
    %v2122 = vadd.f32 %v1012, %v1611
    %v2123 = vadd.f32 %v1014, %v1613
    %v2124 = vadd.f32 %v1155, %v1754
    %v2125 = vadd.f32 %v1157, %v1756
    %v2126 = vadd.f32 %v1298, %v1897
    %v2127 = vadd.f32 %v1300, %v1899
    %v2128 = vadd.f32 %v1441, %v2040
    %v2129 = vadd.f32 %v1443, %v2042
    %v2130 = vadd.f32 %v1018, %v1617
    %v2131 = vadd.f32 %v1020, %v1619
    %v2132 = vadd.f32 %v1161, %v1760
    %v2133 = vadd.f32 %v1163, %v1762
    %v2134 = vadd.f32 %v1304, %v1903
    %v2135 = vadd.f32 %v1306, %v1905
    %v2136 = vadd.f32 %v1447, %v2046
    %v2137 = vadd.f32 %v1449, %v2048
    %v2138 = vadd.f32 %v1024, %v1623
    %v2139 = vadd.f32 %v1026, %v1625
    %v2140 = vadd.f32 %v1167, %v1766
    %v2141 = vadd.f32 %v1169, %v1768
    %v2142 = vadd.f32 %v1310, %v1909
    %v2143 = vadd.f32 %v1312, %v1911
    %v2144 = vadd.f32 %v1453, %v2052
    %v2145 = vadd.f32 %v1455, %v2054
    %v2146 = vadd.f32 %v1030, %v1629
    %v2147 = vadd.f32 %v1032, %v1631
    %v2148 = vadd.f32 %v1173, %v1772
    %v2149 = vadd.f32 %v1175, %v1774
    %v2150 = vadd.f32 %v1316, %v1915
    %v2151 = vadd.f32 %v1318, %v1917
    %v2152 = vadd.f32 %v1459, %v2058
    %v2153 = vadd.f32 %v1461, %v2060
    %v2154 = vadd.f32 %v1036, %v1635
    %v2155 = vadd.f32 %v1038, %v1637
    %v2156 = vadd.f32 %v1179, %v1778
    %v2157 = vadd.f32 %v1181, %v1780
    %v2158 = vadd.f32 %v1322, %v1921
    %v2159 = vadd.f32 %v1324, %v1923
    %v2160 = vadd.f32 %v1465, %v2064
    %v2161 = vadd.f32 %v1467, %v2066
    %v2162 = vadd.f32 %v1042, %v1641
    %v2163 = vadd.f32 %v1044, %v1643
    %v2164 = vadd.f32 %v1185, %v1784
    %v2165 = vadd.f32 %v1187, %v1786
    %v2166 = vadd.f32 %v1328, %v1927
    %v2167 = vadd.f32 %v1330, %v1929
    %v2168 = vadd.f32 %v1471, %v2070
    %v2169 = vadd.f32 %v1473, %v2072
    %v2170 = vadd.f32 %v1048, %v1647
    %v2171 = vadd.f32 %v1050, %v1649
    %v2172 = vadd.f32 %v1191, %v1790
    %v2173 = vadd.f32 %v1193, %v1792
    %v2174 = vadd.f32 %v1334, %v1933
    %v2175 = vadd.f32 %v1336, %v1935
    %v2176 = vadd.f32 %v1477, %v2076
    %v2177 = vadd.f32 %v1479, %v2078
    %v2178 = vadd.f32 %v1054, %v1653
    %v2179 = vadd.f32 %v1056, %v1655
    %v2180 = vadd.f32 %v1197, %v1796
    %v2181 = vadd.f32 %v1199, %v1798
    %v2182 = vadd.f32 %v1340, %v1939
    %v2183 = vadd.f32 %v1342, %v1941
    %v2184 = vadd.f32 %v1483, %v2082
    %v2185 = vadd.f32 %v1485, %v2084
    %v2186 = vadd.f32 %v1060, %v1659
    %v2187 = vadd.f32 %v1062, %v1661
    %v2188 = vadd.f32 %v1203, %v1802
    %v2189 = vadd.f32 %v1205, %v1804
    %v2190 = vadd.f32 %v1346, %v1945
    %v2191 = vadd.f32 %v1348, %v1947
    %v2192 = vadd.f32 %v1489, %v2088
    %v2193 = vadd.f32 %v1491, %v2090
    %v2194 = vadd.f32 %v1066, %v1665
    %v2195 = vadd.f32 %v1068, %v1667
    %v2196 = vadd.f32 %v1209, %v1808
    %v2197 = vadd.f32 %v1211, %v1810
    %v2198 = vadd.f32 %v1352, %v1951
    %v2199 = vadd.f32 %v1354, %v1953
    %v2200 = vadd.f32 %v1495, %v2094
    %v2201 = vadd.f32 %v1497, %v2096
    %v2203 = vlaneseq
    %v2204 = vshrl.u32 %v2203, 7
    %v2205 = vsub.s32 0, %v2204
    %v2206 = vrot.slane %v226, %v2205
    %v2207 = vlaneseq
    %v2208 = vshrl.u32 %v2207, 7
    %v2209 = vsub.s32 1, %v2208
    %v2210 = vrot.slane %v226, %v2209
    %v2211 = vlaneseq
    %v2212 = vshrl.u32 %v2211, 7
    %v2213 = vsub.s32 2, %v2212
    %v2214 = vrot.slane %v226, %v2213
    %v2215 = vlaneseq
    %v2216 = vshrl.u32 %v2215, 7
    %v2217 = vsub.s32 3, %v2216
    %v2218 = vrot.slane %v226, %v2217
    %v2219 = vlaneseq
    %v2220 = vshrl.u32 %v2219, 7
    %v2221 = vsub.s32 4, %v2220
    %v2222 = vrot.slane %v226, %v2221
    %v2223 = vlaneseq
    %v2224 = vshrl.u32 %v2223, 7
    %v2225 = vsub.s32 5, %v2224
    %v2226 = vrot.slane %v226, %v2225
    %v2227 = vlaneseq
    %v2228 = vshrl.u32 %v2227, 7
    %v2229 = vsub.s32 6, %v2228
    %v2230 = vrot.slane %v226, %v2229
    %v2231 = vlaneseq
    %v2232 = vshrl.u32 %v2231, 7
    %v2233 = vsub.s32 7, %v2232
    %v2234 = vrot.slane %v226, %v2233
    %v2243 = vadd.f32 %v2098, %v2206
    %v2244 = vadd.f32 %v2099, %v2210
    %v2245 = vadd.f32 %v2100, %v2214
    %v2246 = vadd.f32 %v2101, %v2218
    %v2247 = vadd.f32 %v2102, %v2222
    %v2248 = vadd.f32 %v2103, %v2226
    %v2249 = vadd.f32 %v2104, %v2230
    %v2250 = vadd.f32 %v2105, %v2234
    %v2251 = vadd.f32 %v2106, %v2206
    %v2252 = vadd.f32 %v2107, %v2210
    %v2253 = vadd.f32 %v2108, %v2214
    %v2254 = vadd.f32 %v2109, %v2218
    %v2255 = vadd.f32 %v2110, %v2222
    %v2256 = vadd.f32 %v2111, %v2226
    %v2257 = vadd.f32 %v2112, %v2230
    %v2258 = vadd.f32 %v2113, %v2234
    %v2259 = vadd.f32 %v2114, %v2206
    %v2260 = vadd.f32 %v2115, %v2210
    %v2261 = vadd.f32 %v2116, %v2214
    %v2262 = vadd.f32 %v2117, %v2218
    %v2263 = vadd.f32 %v2118, %v2222
    %v2264 = vadd.f32 %v2119, %v2226
    %v2265 = vadd.f32 %v2120, %v2230
    %v2266 = vadd.f32 %v2121, %v2234
    %v2267 = vadd.f32 %v2122, %v2206
    %v2268 = vadd.f32 %v2123, %v2210
    %v2269 = vadd.f32 %v2124, %v2214
    %v2270 = vadd.f32 %v2125, %v2218
    %v2271 = vadd.f32 %v2126, %v2222
    %v2272 = vadd.f32 %v2127, %v2226
    %v2273 = vadd.f32 %v2128, %v2230
    %v2274 = vadd.f32 %v2129, %v2234
    %v2275 = vadd.f32 %v2130, %v2206
    %v2276 = vadd.f32 %v2131, %v2210
    %v2277 = vadd.f32 %v2132, %v2214
    %v2278 = vadd.f32 %v2133, %v2218
    %v2279 = vadd.f32 %v2134, %v2222
    %v2280 = vadd.f32 %v2135, %v2226
    %v2281 = vadd.f32 %v2136, %v2230
    %v2282 = vadd.f32 %v2137, %v2234
    %v2283 = vadd.f32 %v2138, %v2206
    %v2284 = vadd.f32 %v2139, %v2210
    %v2285 = vadd.f32 %v2140, %v2214
    %v2286 = vadd.f32 %v2141, %v2218
    %v2287 = vadd.f32 %v2142, %v2222
    %v2288 = vadd.f32 %v2143, %v2226
    %v2289 = vadd.f32 %v2144, %v2230
    %v2290 = vadd.f32 %v2145, %v2234
    %v2291 = vadd.f32 %v2146, %v2206
    %v2292 = vadd.f32 %v2147, %v2210
    %v2293 = vadd.f32 %v2148, %v2214
    %v2294 = vadd.f32 %v2149, %v2218
    %v2295 = vadd.f32 %v2150, %v2222
    %v2296 = vadd.f32 %v2151, %v2226
    %v2297 = vadd.f32 %v2152, %v2230
    %v2298 = vadd.f32 %v2153, %v2234
    %v2299 = vadd.f32 %v2154, %v2206
    %v2300 = vadd.f32 %v2155, %v2210
    %v2301 = vadd.f32 %v2156, %v2214
    %v2302 = vadd.f32 %v2157, %v2218
    %v2303 = vadd.f32 %v2158, %v2222
    %v2304 = vadd.f32 %v2159, %v2226
    %v2305 = vadd.f32 %v2160, %v2230
    %v2306 = vadd.f32 %v2161, %v2234
    %v2307 = vadd.f32 %v2162, %v2206
    %v2308 = vadd.f32 %v2163, %v2210
    %v2309 = vadd.f32 %v2164, %v2214
    %v2310 = vadd.f32 %v2165, %v2218
    %v2311 = vadd.f32 %v2166, %v2222
    %v2312 = vadd.f32 %v2167, %v2226
    %v2313 = vadd.f32 %v2168, %v2230
    %v2314 = vadd.f32 %v2169, %v2234
    %v2315 = vadd.f32 %v2170, %v2206
    %v2316 = vadd.f32 %v2171, %v2210
    %v2317 = vadd.f32 %v2172, %v2214
    %v2318 = vadd.f32 %v2173, %v2218
    %v2319 = vadd.f32 %v2174, %v2222
    %v2320 = vadd.f32 %v2175, %v2226
    %v2321 = vadd.f32 %v2176, %v2230
    %v2322 = vadd.f32 %v2177, %v2234
    %v2323 = vadd.f32 %v2178, %v2206
    %v2324 = vadd.f32 %v2179, %v2210
    %v2325 = vadd.f32 %v2180, %v2214
    %v2326 = vadd.f32 %v2181, %v2218
    %v2327 = vadd.f32 %v2182, %v2222
    %v2328 = vadd.f32 %v2183, %v2226
    %v2329 = vadd.f32 %v2184, %v2230
    %v2330 = vadd.f32 %v2185, %v2234
    %v2331 = vadd.f32 %v2186, %v2206
    %v2332 = vadd.f32 %v2187, %v2210
    %v2333 = vadd.f32 %v2188, %v2214
    %v2334 = vadd.f32 %v2189, %v2218
    %v2335 = vadd.f32 %v2190, %v2222
    %v2336 = vadd.f32 %v2191, %v2226
    %v2337 = vadd.f32 %v2192, %v2230
    %v2338 = vadd.f32 %v2193, %v2234
    %v2339 = vadd.f32 %v2194, %v2206
    %v2340 = vadd.f32 %v2195, %v2210
    %v2341 = vadd.f32 %v2196, %v2214
    %v2342 = vadd.f32 %v2197, %v2218
    %v2343 = vadd.f32 %v2198, %v2222
    %v2344 = vadd.f32 %v2199, %v2226
    %v2345 = vadd.f32 %v2200, %v2230
    %v2346 = vadd.f32 %v2201, %v2234
    %v2347 = vmax.f32 %v2243, 0.0
    %v2348 = vmax.f32 %v2244, 0.0
    %v2349 = vmax.f32 %v2245, 0.0
    %v2350 = vmax.f32 %v2246, 0.0
    %v2351 = vmax.f32 %v2247, 0.0
    %v2352 = vmax.f32 %v2248, 0.0
    %v2353 = vmax.f32 %v2249, 0.0
    %v2354 = vmax.f32 %v2250, 0.0
    %v2355 = vmax.f32 %v2251, 0.0
    %v2356 = vmax.f32 %v2252, 0.0
    %v2357 = vmax.f32 %v2253, 0.0
    %v2358 = vmax.f32 %v2254, 0.0
    %v2359 = vmax.f32 %v2255, 0.0
    %v2360 = vmax.f32 %v2256, 0.0
    %v2361 = vmax.f32 %v2257, 0.0
    %v2362 = vmax.f32 %v2258, 0.0
    %v2363 = vmax.f32 %v2259, 0.0
    %v2364 = vmax.f32 %v2260, 0.0
    %v2365 = vmax.f32 %v2261, 0.0
    %v2366 = vmax.f32 %v2262, 0.0
    %v2367 = vmax.f32 %v2263, 0.0
    %v2368 = vmax.f32 %v2264, 0.0
    %v2369 = vmax.f32 %v2265, 0.0
    %v2370 = vmax.f32 %v2266, 0.0
    %v2371 = vmax.f32 %v2267, 0.0
    %v2372 = vmax.f32 %v2268, 0.0
    %v2373 = vmax.f32 %v2269, 0.0
    %v2374 = vmax.f32 %v2270, 0.0
    %v2375 = vmax.f32 %v2271, 0.0
    %v2376 = vmax.f32 %v2272, 0.0
    %v2377 = vmax.f32 %v2273, 0.0
    %v2378 = vmax.f32 %v2274, 0.0
    %v2379 = vmax.f32 %v2275, 0.0
    %v2380 = vmax.f32 %v2276, 0.0
    %v2381 = vmax.f32 %v2277, 0.0
    %v2382 = vmax.f32 %v2278, 0.0
    %v2383 = vmax.f32 %v2279, 0.0
    %v2384 = vmax.f32 %v2280, 0.0
    %v2385 = vmax.f32 %v2281, 0.0
    %v2386 = vmax.f32 %v2282, 0.0
    %v2387 = vmax.f32 %v2283, 0.0
    %v2388 = vmax.f32 %v2284, 0.0
    %v2389 = vmax.f32 %v2285, 0.0
    %v2390 = vmax.f32 %v2286, 0.0
    %v2391 = vmax.f32 %v2287, 0.0
    %v2392 = vmax.f32 %v2288, 0.0
    %v2393 = vmax.f32 %v2289, 0.0
    %v2394 = vmax.f32 %v2290, 0.0
    %v2395 = vmax.f32 %v2291, 0.0
    %v2396 = vmax.f32 %v2292, 0.0
    %v2397 = vmax.f32 %v2293, 0.0
    %v2398 = vmax.f32 %v2294, 0.0
    %v2399 = vmax.f32 %v2295, 0.0
    %v2400 = vmax.f32 %v2296, 0.0
    %v2401 = vmax.f32 %v2297, 0.0
    %v2402 = vmax.f32 %v2298, 0.0
    %v2403 = vmax.f32 %v2299, 0.0
    %v2404 = vmax.f32 %v2300, 0.0
    %v2405 = vmax.f32 %v2301, 0.0
    %v2406 = vmax.f32 %v2302, 0.0
    %v2407 = vmax.f32 %v2303, 0.0
    %v2408 = vmax.f32 %v2304, 0.0
    %v2409 = vmax.f32 %v2305, 0.0
    %v2410 = vmax.f32 %v2306, 0.0
    %v2411 = vmax.f32 %v2307, 0.0
    %v2412 = vmax.f32 %v2308, 0.0
    %v2413 = vmax.f32 %v2309, 0.0
    %v2414 = vmax.f32 %v2310, 0.0
    %v2415 = vmax.f32 %v2311, 0.0
    %v2416 = vmax.f32 %v2312, 0.0
    %v2417 = vmax.f32 %v2313, 0.0
    %v2418 = vmax.f32 %v2314, 0.0
    %v2419 = vmax.f32 %v2315, 0.0
    %v2420 = vmax.f32 %v2316, 0.0
    %v2421 = vmax.f32 %v2317, 0.0
    %v2422 = vmax.f32 %v2318, 0.0
    %v2423 = vmax.f32 %v2319, 0.0
    %v2424 = vmax.f32 %v2320, 0.0
    %v2425 = vmax.f32 %v2321, 0.0
    %v2426 = vmax.f32 %v2322, 0.0
    %v2427 = vmax.f32 %v2323, 0.0
    %v2428 = vmax.f32 %v2324, 0.0
    %v2429 = vmax.f32 %v2325, 0.0
    %v2430 = vmax.f32 %v2326, 0.0
    %v2431 = vmax.f32 %v2327, 0.0
    %v2432 = vmax.f32 %v2328, 0.0
    %v2433 = vmax.f32 %v2329, 0.0
    %v2434 = vmax.f32 %v2330, 0.0
    %v2435 = vmax.f32 %v2331, 0.0
    %v2436 = vmax.f32 %v2332, 0.0
    %v2437 = vmax.f32 %v2333, 0.0
    %v2438 = vmax.f32 %v2334, 0.0
    %v2439 = vmax.f32 %v2335, 0.0
    %v2440 = vmax.f32 %v2336, 0.0
    %v2441 = vmax.f32 %v2337, 0.0
    %v2442 = vmax.f32 %v2338, 0.0
    %v2443 = vmax.f32 %v2339, 0.0
    %v2444 = vmax.f32 %v2340, 0.0
    %v2445 = vmax.f32 %v2341, 0.0
    %v2446 = vmax.f32 %v2342, 0.0
    %v2447 = vmax.f32 %v2343, 0.0
    %v2448 = vmax.f32 %v2344, 0.0
    %v2449 = vmax.f32 %v2345, 0.0
    %v2450 = vmax.f32 %v2346, 0.0
    %v2451 = vmax.f32 %v2347, %v2351
    %v2452 = vmax.f32 %v2348, %v2352
    %v2453 = vmax.f32 %v2349, %v2353
    %v2454 = vmax.f32 %v2350, %v2354
    %v2455 = vmax.f32 %v2355, %v2359
    %v2456 = vmax.f32 %v2356, %v2360
    %v2457 = vmax.f32 %v2357, %v2361
    %v2458 = vmax.f32 %v2358, %v2362
    %v2459 = vmax.f32 %v2363, %v2367
    %v2460 = vmax.f32 %v2364, %v2368
    %v2461 = vmax.f32 %v2365, %v2369
    %v2462 = vmax.f32 %v2366, %v2370
    %v2463 = vmax.f32 %v2371, %v2375
    %v2464 = vmax.f32 %v2372, %v2376
    %v2465 = vmax.f32 %v2373, %v2377
    %v2466 = vmax.f32 %v2374, %v2378
    %v2467 = vmax.f32 %v2379, %v2383
    %v2468 = vmax.f32 %v2380, %v2384
    %v2469 = vmax.f32 %v2381, %v2385
    %v2470 = vmax.f32 %v2382, %v2386
    %v2471 = vmax.f32 %v2387, %v2391
    %v2472 = vmax.f32 %v2388, %v2392
    %v2473 = vmax.f32 %v2389, %v2393
    %v2474 = vmax.f32 %v2390, %v2394
    %v2475 = vmax.f32 %v2395, %v2399
    %v2476 = vmax.f32 %v2396, %v2400
    %v2477 = vmax.f32 %v2397, %v2401
    %v2478 = vmax.f32 %v2398, %v2402
    %v2479 = vmax.f32 %v2403, %v2407
    %v2480 = vmax.f32 %v2404, %v2408
    %v2481 = vmax.f32 %v2405, %v2409
    %v2482 = vmax.f32 %v2406, %v2410
    %v2483 = vmax.f32 %v2411, %v2415
    %v2484 = vmax.f32 %v2412, %v2416
    %v2485 = vmax.f32 %v2413, %v2417
    %v2486 = vmax.f32 %v2414, %v2418
    %v2487 = vmax.f32 %v2419, %v2423
    %v2488 = vmax.f32 %v2420, %v2424
    %v2489 = vmax.f32 %v2421, %v2425
    %v2490 = vmax.f32 %v2422, %v2426
    %v2491 = vmax.f32 %v2427, %v2431
    %v2492 = vmax.f32 %v2428, %v2432
    %v2493 = vmax.f32 %v2429, %v2433
    %v2494 = vmax.f32 %v2430, %v2434
    %v2495 = vmax.f32 %v2435, %v2439
    %v2496 = vmax.f32 %v2436, %v2440
    %v2497 = vmax.f32 %v2437, %v2441
    %v2498 = vmax.f32 %v2438, %v2442
    %v2499 = vmax.f32 %v2443, %v2447
    %v2500 = vmax.f32 %v2444, %v2448
    %v2501 = vmax.f32 %v2445, %v2449
    %v2502 = vmax.f32 %v2446, %v2450
    %2503 = vmatprep.subr.mxu0 %v163
    %2504 = vmatpush1.msra.mxu0 %v162
    %2505 = vmatprep.subr.mxu0 %v171
    %2506 = vmatpush1.msra.mxu0 %v170
    %2507 = vmatprep.subr.mxu0 %v179
    %2508 = vmatpush1.msra.mxu0 %v178
    %2509 = vmatprep.subr.mxu0 %v272
    %2510 = vmatpush1.msra.mxu0 %v269
    %2511 = vmatprep.subr.mxu0 0.0
    %2512 = vmatpush1.msra.mxu0 0.0
    %2513 = vmatprep.subr.mxu0 0.0
    %2514 = vmatpush1.msra.mxu0 0.0
    %2515 = vmatprep.subr.mxu0 0.0
    %2516 = vmatpush1.msra.mxu0 0.0
    %2517 = vmatprep.subr.mxu0 0.0
    %2518 = vmatpush1.msra.mxu0 0.0
    %2519 = vmatprep.subr.mxu0 0.0
    %2520 = vmatpush1.msra.mxu0 0.0
    %2521 = vmatprep.subr.mxu0 0.0
    %2522 = vmatpush1.msra.mxu0 0.0
    %2523 = vmatprep.subr.mxu0 0.0
    %2524 = vmatpush1.msra.mxu0 0.0
    %2525 = vmatprep.subr.mxu0 0.0
    %2526 = vmatpush1.msra.mxu0 0.0
    %2527 = vmatprep.subr.mxu0 0.0
    %2528 = vmatpush1.msra.mxu0 0.0
    %2529 = vmatprep.subr.mxu0 0.0
    %2530 = vmatpush1.msra.mxu0 0.0
    %2531 = vmatprep.subr.mxu0 0.0
    %2532 = vmatpush1.msra.mxu0 0.0
    %2533 = vmatprep.subr.mxu0 0.0
    %2534 = vmatpush1.msra.mxu0 0.0
    %2535 = vmatprep.subr.mxu0 0.0
    %2536 = vmatpush1.msra.mxu0 0.0
    %2537 = vmatprep.subr.mxu0 0.0
    %2538 = vmatpush1.msra.mxu0 0.0
    %2539 = vmatprep.subr.mxu0 0.0
    %2540 = vmatpush1.msra.mxu0 0.0
    %2541 = vmatprep.subr.mxu0 0.0
    %2542 = vmatpush1.msra.mxu0 0.0
    %2543 = vmatprep.subr.mxu0 0.0
    %2544 = vmatpush1.msra.mxu0 0.0
    %2545 = vmatprep.subr.mxu0 0.0
    %2546 = vmatpush1.msra.mxu0 0.0
    %2547 = vmatprep.subr.mxu0 0.0
    %2548 = vmatpush1.msra.mxu0 0.0
    %2549 = vmatprep.subr.mxu0 0.0
    %2550 = vmatpush1.msra.mxu0 0.0
    %2551 = vmatprep.subr.mxu0 0.0
    %2552 = vmatpush1.msra.mxu0 0.0
    %2553 = vmatprep.subr.mxu0 0.0
    %2554 = vmatpush1.msra.mxu0 0.0
    %2555 = vmatprep.subr.mxu0 0.0
    %2556 = vmatpush1.msra.mxu0 0.0
    %2557 = vmatprep.subr.mxu0 0.0
    %2558 = vmatpush1.msra.mxu0 0.0
    %2559 = vmatprep.subr.mxu0 0.0
    %2560 = vmatpush1.msra.mxu0 0.0
    %2561 = vmatprep.subr.mxu0 0.0
    %2562 = vmatpush1.msra.mxu0 0.0
    %2563 = vmatprep.subr.mxu0 0.0
    %2564 = vmatpush1.msra.mxu0 0.0
    %2565 = vmatprep.subr.mxu0 0.0
    %2566 = vmatpush1.msra.mxu0 0.0
    %2567 = vmatprep.mubr.f32.mxu0 0.0
    %2568 = vmatmul.mubr.f32.gmra.mrb[0].mxu0 %v868
    %v2569 = vpop.f32.mrb[0].mxu0
    %v2570 = vadd.f32 0.0, %v2569
    %v2571 = vpop.f32.mrb[0].mxu0
    %v2572 = vadd.f32 0.0, %v2571
    %2573 = vmatprep.mubr.f32.mxu0 0.0
    %2574 = vmatmul.mubr.f32.gmra.mrb[0].mxu0 %v871
    %v2575 = vpop.f32.mrb[0].mxu0
    %v2576 = vadd.f32 0.0, %v2575
    %v2577 = vpop.f32.mrb[0].mxu0
    %v2578 = vadd.f32 0.0, %v2577
    %2579 = vmatprep.mubr.f32.mxu0 0.0
    %2580 = vmatmul.mubr.f32.gmra.mrb[0].mxu0 %v874
    %v2581 = vpop.f32.mrb[0].mxu0
    %v2582 = vadd.f32 0.0, %v2581
    %v2583 = vpop.f32.mrb[0].mxu0
    %v2584 = vadd.f32 0.0, %v2583
    %2585 = vmatprep.mubr.f32.mxu0 0.0
    %2586 = vmatmul.mubr.f32.gmra.mrb[0].mxu0 %v877
    %v2587 = vpop.f32.mrb[0].mxu0
    %v2588 = vadd.f32 0.0, %v2587
    %v2589 = vpop.f32.mrb[0].mxu0
    %v2590 = vadd.f32 0.0, %v2589
    %2591 = vmatprep.mubr.f32.mxu0 0.0
    %2592 = vmatmul.mubr.f32.gmra.mrb[0].mxu0 %v880
    %v2593 = vpop.f32.mrb[0].mxu0
    %v2594 = vadd.f32 0.0, %v2593
    %v2595 = vpop.f32.mrb[0].mxu0
    %v2596 = vadd.f32 0.0, %v2595
    %2597 = vmatprep.mubr.f32.mxu0 0.0
    %2598 = vmatmul.mubr.f32.gmra.mrb[0].mxu0 %v883
    %v2599 = vpop.f32.mrb[0].mxu0
    %v2600 = vadd.f32 0.0, %v2599
    %v2601 = vpop.f32.mrb[0].mxu0
    %v2602 = vadd.f32 0.0, %v2601
    %2603 = vmatprep.mubr.f32.mxu0 0.0
    %2604 = vmatmul.mubr.f32.gmra.mrb[0].mxu0 %v886
    %v2605 = vpop.f32.mrb[0].mxu0
    %v2606 = vadd.f32 0.0, %v2605
    %v2607 = vpop.f32.mrb[0].mxu0
    %v2608 = vadd.f32 0.0, %v2607
    %2609 = vmatprep.mubr.f32.mxu0 0.0
    %2610 = vmatmul.mubr.f32.gmra.mrb[0].mxu0 %v889
    %v2611 = vpop.f32.mrb[0].mxu0
    %v2612 = vadd.f32 0.0, %v2611
    %v2613 = vpop.f32.mrb[0].mxu0
    %v2614 = vadd.f32 0.0, %v2613
    %2615 = vmatprep.mubr.f32.mxu0 0.0
    %2616 = vmatmul.mubr.f32.gmra.mrb[0].mxu0 %v892
    %v2617 = vpop.f32.mrb[0].mxu0
    %v2618 = vadd.f32 0.0, %v2617
    %v2619 = vpop.f32.mrb[0].mxu0
    %v2620 = vadd.f32 0.0, %v2619
    %2621 = vmatprep.mubr.f32.mxu0 0.0
    %2622 = vmatmul.mubr.f32.gmra.mrb[0].mxu0 %v895
    %v2623 = vpop.f32.mrb[0].mxu0
    %v2624 = vadd.f32 0.0, %v2623
    %v2625 = vpop.f32.mrb[0].mxu0
    %v2626 = vadd.f32 0.0, %v2625
    %2627 = vmatprep.mubr.f32.mxu0 0.0
    %2628 = vmatmul.mubr.f32.gmra.mrb[0].mxu0 %v898
    %v2629 = vpop.f32.mrb[0].mxu0
    %v2630 = vadd.f32 0.0, %v2629
    %v2631 = vpop.f32.mrb[0].mxu0
    %v2632 = vadd.f32 0.0, %v2631
    %2633 = vmatprep.mubr.f32.mxu0 0.0
    %2634 = vmatmul.mubr.f32.gmra.mrb[0].mxu0 %v901
    %v2635 = vpop.f32.mrb[0].mxu0
    %v2636 = vadd.f32 0.0, %v2635
    %v2637 = vpop.f32.mrb[0].mxu0
    %v2638 = vadd.f32 0.0, %v2637
    %2639 = vmatprep.mubr.f32.mxu0 0.0
    %2640 = vmatmul.mubr.f32.gmra.mrb[0].mxu0 %v1500
    %v2641 = vpop.f32.mrb[0].mxu0
    %v2642 = vadd.f32 0.0, %v2641
    %v2643 = vpop.f32.mrb[0].mxu0
    %v2644 = vadd.f32 0.0, %v2643
    %2645 = vdwg.mxu0
    %2646 = vmatprep.subr.mxu0 %v165
    %2647 = vmatpush1.msra.mxu0 %v164
    %2648 = vmatprep.subr.mxu0 %v173
    %2649 = vmatpush1.msra.mxu0 %v172
    %2650 = vmatprep.subr.mxu0 %v181
    %2651 = vmatpush1.msra.mxu0 %v180
    %2652 = vmatprep.subr.mxu0 %v278
    %2653 = vmatpush1.msra.mxu0 %v275
    %2654 = vmatprep.subr.mxu0 0.0
    %2655 = vmatpush1.msra.mxu0 0.0
    %2656 = vmatprep.subr.mxu0 0.0
    %2657 = vmatpush1.msra.mxu0 0.0
    %2658 = vmatprep.subr.mxu0 0.0
    %2659 = vmatpush1.msra.mxu0 0.0
    %2660 = vmatprep.subr.mxu0 0.0
    %2661 = vmatpush1.msra.mxu0 0.0
    %2662 = vmatprep.subr.mxu0 0.0
    %2663 = vmatpush1.msra.mxu0 0.0
    %2664 = vmatprep.subr.mxu0 0.0
    %2665 = vmatpush1.msra.mxu0 0.0
    %2666 = vmatprep.subr.mxu0 0.0
    %2667 = vmatpush1.msra.mxu0 0.0
    %2668 = vmatprep.subr.mxu0 0.0
    %2669 = vmatpush1.msra.mxu0 0.0
    %2670 = vmatprep.subr.mxu0 0.0
    %2671 = vmatpush1.msra.mxu0 0.0
    %2672 = vmatprep.subr.mxu0 0.0
    %2673 = vmatpush1.msra.mxu0 0.0
    %2674 = vmatprep.subr.mxu0 0.0
    %2675 = vmatpush1.msra.mxu0 0.0
    %2676 = vmatprep.subr.mxu0 0.0
    %2677 = vmatpush1.msra.mxu0 0.0
    %2678 = vmatprep.subr.mxu0 0.0
    %2679 = vmatpush1.msra.mxu0 0.0
    %2680 = vmatprep.subr.mxu0 0.0
    %2681 = vmatpush1.msra.mxu0 0.0
    %2682 = vmatprep.subr.mxu0 0.0
    %2683 = vmatpush1.msra.mxu0 0.0
    %2684 = vmatprep.subr.mxu0 0.0
    %2685 = vmatpush1.msra.mxu0 0.0
    %2686 = vmatprep.subr.mxu0 0.0
    %2687 = vmatpush1.msra.mxu0 0.0
    %2688 = vmatprep.subr.mxu0 0.0
    %2689 = vmatpush1.msra.mxu0 0.0
    %2690 = vmatprep.subr.mxu0 0.0
    %2691 = vmatpush1.msra.mxu0 0.0
    %2692 = vmatprep.subr.mxu0 0.0
    %2693 = vmatpush1.msra.mxu0 0.0
    %2694 = vmatprep.subr.mxu0 0.0
    %2695 = vmatpush1.msra.mxu0 0.0
    %2696 = vmatprep.subr.mxu0 0.0
    %2697 = vmatpush1.msra.mxu0 0.0
    %2698 = vmatprep.subr.mxu0 0.0
    %2699 = vmatpush1.msra.mxu0 0.0
    %2700 = vmatprep.subr.mxu0 0.0
    %2701 = vmatpush1.msra.mxu0 0.0
    %2702 = vmatprep.subr.mxu0 0.0
    %2703 = vmatpush1.msra.mxu0 0.0
    %2704 = vmatprep.subr.mxu0 0.0
    %2705 = vmatpush1.msra.mxu0 0.0
    %2706 = vmatprep.subr.mxu0 0.0
    %2707 = vmatpush1.msra.mxu0 0.0
    %2708 = vmatprep.subr.mxu0 0.0
    %2709 = vmatpush1.msra.mxu0 0.0
    %2710 = vmatprep.mubr.f32.mxu0 0.0
    %2711 = vmatmul.mubr.f32.gmra.mrb[0].mxu0 %v868
    %v2712 = vpop.f32.mrb[0].mxu0
    %v2713 = vadd.f32 0.0, %v2712
    %v2714 = vpop.f32.mrb[0].mxu0
    %v2715 = vadd.f32 0.0, %v2714
    %2716 = vmatprep.mubr.f32.mxu0 0.0
    %2717 = vmatmul.mubr.f32.gmra.mrb[0].mxu0 %v871
    %v2718 = vpop.f32.mrb[0].mxu0
    %v2719 = vadd.f32 0.0, %v2718
    %v2720 = vpop.f32.mrb[0].mxu0
    %v2721 = vadd.f32 0.0, %v2720
    %2722 = vmatprep.mubr.f32.mxu0 0.0
    %2723 = vmatmul.mubr.f32.gmra.mrb[0].mxu0 %v874
    %v2724 = vpop.f32.mrb[0].mxu0
    %v2725 = vadd.f32 0.0, %v2724
    %v2726 = vpop.f32.mrb[0].mxu0
    %v2727 = vadd.f32 0.0, %v2726
    %2728 = vmatprep.mubr.f32.mxu0 0.0
    %2729 = vmatmul.mubr.f32.gmra.mrb[0].mxu0 %v877
    %v2730 = vpop.f32.mrb[0].mxu0
    %v2731 = vadd.f32 0.0, %v2730
    %v2732 = vpop.f32.mrb[0].mxu0
    %v2733 = vadd.f32 0.0, %v2732
    %2734 = vmatprep.mubr.f32.mxu0 0.0
    %2735 = vmatmul.mubr.f32.gmra.mrb[0].mxu0 %v880
    %v2736 = vpop.f32.mrb[0].mxu0
    %v2737 = vadd.f32 0.0, %v2736
    %v2738 = vpop.f32.mrb[0].mxu0
    %v2739 = vadd.f32 0.0, %v2738
    %2740 = vmatprep.mubr.f32.mxu0 0.0
    %2741 = vmatmul.mubr.f32.gmra.mrb[0].mxu0 %v883
    %v2742 = vpop.f32.mrb[0].mxu0
    %v2743 = vadd.f32 0.0, %v2742
    %v2744 = vpop.f32.mrb[0].mxu0
    %v2745 = vadd.f32 0.0, %v2744
    %2746 = vmatprep.mubr.f32.mxu0 0.0
    %2747 = vmatmul.mubr.f32.gmra.mrb[0].mxu0 %v886
    %v2748 = vpop.f32.mrb[0].mxu0
    %v2749 = vadd.f32 0.0, %v2748
    %v2750 = vpop.f32.mrb[0].mxu0
    %v2751 = vadd.f32 0.0, %v2750
    %2752 = vmatprep.mubr.f32.mxu0 0.0
    %2753 = vmatmul.mubr.f32.gmra.mrb[0].mxu0 %v889
    %v2754 = vpop.f32.mrb[0].mxu0
    %v2755 = vadd.f32 0.0, %v2754
    %v2756 = vpop.f32.mrb[0].mxu0
    %v2757 = vadd.f32 0.0, %v2756
    %2758 = vmatprep.mubr.f32.mxu0 0.0
    %2759 = vmatmul.mubr.f32.gmra.mrb[0].mxu0 %v892
    %v2760 = vpop.f32.mrb[0].mxu0
    %v2761 = vadd.f32 0.0, %v2760
    %v2762 = vpop.f32.mrb[0].mxu0
    %v2763 = vadd.f32 0.0, %v2762
    %2764 = vmatprep.mubr.f32.mxu0 0.0
    %2765 = vmatmul.mubr.f32.gmra.mrb[0].mxu0 %v895
    %v2766 = vpop.f32.mrb[0].mxu0
    %v2767 = vadd.f32 0.0, %v2766
    %v2768 = vpop.f32.mrb[0].mxu0
    %v2769 = vadd.f32 0.0, %v2768
    %2770 = vmatprep.mubr.f32.mxu0 0.0
    %2771 = vmatmul.mubr.f32.gmra.mrb[0].mxu0 %v898
    %v2772 = vpop.f32.mrb[0].mxu0
    %v2773 = vadd.f32 0.0, %v2772
    %v2774 = vpop.f32.mrb[0].mxu0
    %v2775 = vadd.f32 0.0, %v2774
    %2776 = vmatprep.mubr.f32.mxu0 0.0
    %2777 = vmatmul.mubr.f32.gmra.mrb[0].mxu0 %v901
    %v2778 = vpop.f32.mrb[0].mxu0
    %v2779 = vadd.f32 0.0, %v2778
    %v2780 = vpop.f32.mrb[0].mxu0
    %v2781 = vadd.f32 0.0, %v2780
    %2782 = vmatprep.mubr.f32.mxu0 0.0
    %2783 = vmatmul.mubr.f32.gmra.mrb[0].mxu0 %v1500
    %v2784 = vpop.f32.mrb[0].mxu0
    %v2785 = vadd.f32 0.0, %v2784
    %v2786 = vpop.f32.mrb[0].mxu0
    %v2787 = vadd.f32 0.0, %v2786
    %2788 = vdwg.mxu0
    %2789 = vmatprep.subr.mxu0 %v167
    %2790 = vmatpush1.msra.mxu0 %v166
    %2791 = vmatprep.subr.mxu0 %v175
    %2792 = vmatpush1.msra.mxu0 %v174
    %2793 = vmatprep.subr.mxu0 %v183
    %2794 = vmatpush1.msra.mxu0 %v182
    %2795 = vmatprep.subr.mxu0 %v284
    %2796 = vmatpush1.msra.mxu0 %v281
    %2797 = vmatprep.subr.mxu0 0.0
    %2798 = vmatpush1.msra.mxu0 0.0
    %2799 = vmatprep.subr.mxu0 0.0
    %2800 = vmatpush1.msra.mxu0 0.0
    %2801 = vmatprep.subr.mxu0 0.0
    %2802 = vmatpush1.msra.mxu0 0.0
    %2803 = vmatprep.subr.mxu0 0.0
    %2804 = vmatpush1.msra.mxu0 0.0
    %2805 = vmatprep.subr.mxu0 0.0
    %2806 = vmatpush1.msra.mxu0 0.0
    %2807 = vmatprep.subr.mxu0 0.0
    %2808 = vmatpush1.msra.mxu0 0.0
    %2809 = vmatprep.subr.mxu0 0.0
    %2810 = vmatpush1.msra.mxu0 0.0
    %2811 = vmatprep.subr.mxu0 0.0
    %2812 = vmatpush1.msra.mxu0 0.0
    %2813 = vmatprep.subr.mxu0 0.0
    %2814 = vmatpush1.msra.mxu0 0.0
    %2815 = vmatprep.subr.mxu0 0.0
    %2816 = vmatpush1.msra.mxu0 0.0
    %2817 = vmatprep.subr.mxu0 0.0
    %2818 = vmatpush1.msra.mxu0 0.0
    %2819 = vmatprep.subr.mxu0 0.0
    %2820 = vmatpush1.msra.mxu0 0.0
    %2821 = vmatprep.subr.mxu0 0.0
    %2822 = vmatpush1.msra.mxu0 0.0
    %2823 = vmatprep.subr.mxu0 0.0
    %2824 = vmatpush1.msra.mxu0 0.0
    %2825 = vmatprep.subr.mxu0 0.0
    %2826 = vmatpush1.msra.mxu0 0.0
    %2827 = vmatprep.subr.mxu0 0.0
    %2828 = vmatpush1.msra.mxu0 0.0
    %2829 = vmatprep.subr.mxu0 0.0
    %2830 = vmatpush1.msra.mxu0 0.0
    %2831 = vmatprep.subr.mxu0 0.0
    %2832 = vmatpush1.msra.mxu0 0.0
    %2833 = vmatprep.subr.mxu0 0.0
    %2834 = vmatpush1.msra.mxu0 0.0
    %2835 = vmatprep.subr.mxu0 0.0
    %2836 = vmatpush1.msra.mxu0 0.0
    %2837 = vmatprep.subr.mxu0 0.0
    %2838 = vmatpush1.msra.mxu0 0.0
    %2839 = vmatprep.subr.mxu0 0.0
    %2840 = vmatpush1.msra.mxu0 0.0
    %2841 = vmatprep.subr.mxu0 0.0
    %2842 = vmatpush1.msra.mxu0 0.0
    %2843 = vmatprep.subr.mxu0 0.0
    %2844 = vmatpush1.msra.mxu0 0.0
    %2845 = vmatprep.subr.mxu0 0.0
    %2846 = vmatpush1.msra.mxu0 0.0
    %2847 = vmatprep.subr.mxu0 0.0
    %2848 = vmatpush1.msra.mxu0 0.0
    %2849 = vmatprep.subr.mxu0 0.0
    %2850 = vmatpush1.msra.mxu0 0.0
    %2851 = vmatprep.subr.mxu0 0.0
    %2852 = vmatpush1.msra.mxu0 0.0
    %2853 = vmatprep.mubr.f32.mxu0 0.0
    %2854 = vmatmul.mubr.f32.gmra.mrb[0].mxu0 %v868
    %v2855 = vpop.f32.mrb[0].mxu0
    %v2856 = vadd.f32 0.0, %v2855
    %v2857 = vpop.f32.mrb[0].mxu0
    %v2858 = vadd.f32 0.0, %v2857
    %2859 = vmatprep.mubr.f32.mxu0 0.0
    %2860 = vmatmul.mubr.f32.gmra.mrb[0].mxu0 %v871
    %v2861 = vpop.f32.mrb[0].mxu0
    %v2862 = vadd.f32 0.0, %v2861
    %v2863 = vpop.f32.mrb[0].mxu0
    %v2864 = vadd.f32 0.0, %v2863
    %2865 = vmatprep.mubr.f32.mxu0 0.0
    %2866 = vmatmul.mubr.f32.gmra.mrb[0].mxu0 %v874
    %v2867 = vpop.f32.mrb[0].mxu0
    %v2868 = vadd.f32 0.0, %v2867
    %v2869 = vpop.f32.mrb[0].mxu0
    %v2870 = vadd.f32 0.0, %v2869
    %2871 = vmatprep.mubr.f32.mxu0 0.0
    %2872 = vmatmul.mubr.f32.gmra.mrb[0].mxu0 %v877
    %v2873 = vpop.f32.mrb[0].mxu0
    %v2874 = vadd.f32 0.0, %v2873
    %v2875 = vpop.f32.mrb[0].mxu0
    %v2876 = vadd.f32 0.0, %v2875
    %2877 = vmatprep.mubr.f32.mxu0 0.0
    %2878 = vmatmul.mubr.f32.gmra.mrb[0].mxu0 %v880
    %v2879 = vpop.f32.mrb[0].mxu0
    %v2880 = vadd.f32 0.0, %v2879
    %v2881 = vpop.f32.mrb[0].mxu0
    %v2882 = vadd.f32 0.0, %v2881
    %2883 = vmatprep.mubr.f32.mxu0 0.0
    %2884 = vmatmul.mubr.f32.gmra.mrb[0].mxu0 %v883
    %v2885 = vpop.f32.mrb[0].mxu0
    %v2886 = vadd.f32 0.0, %v2885
    %v2887 = vpop.f32.mrb[0].mxu0
    %v2888 = vadd.f32 0.0, %v2887
    %2889 = vmatprep.mubr.f32.mxu0 0.0
    %2890 = vmatmul.mubr.f32.gmra.mrb[0].mxu0 %v886
    %v2891 = vpop.f32.mrb[0].mxu0
    %v2892 = vadd.f32 0.0, %v2891
    %v2893 = vpop.f32.mrb[0].mxu0
    %v2894 = vadd.f32 0.0, %v2893
    %2895 = vmatprep.mubr.f32.mxu0 0.0
    %2896 = vmatmul.mubr.f32.gmra.mrb[0].mxu0 %v889
    %v2897 = vpop.f32.mrb[0].mxu0
    %v2898 = vadd.f32 0.0, %v2897
    %v2899 = vpop.f32.mrb[0].mxu0
    %v2900 = vadd.f32 0.0, %v2899
    %2901 = vmatprep.mubr.f32.mxu0 0.0
    %2902 = vmatmul.mubr.f32.gmra.mrb[0].mxu0 %v892
    %v2903 = vpop.f32.mrb[0].mxu0
    %v2904 = vadd.f32 0.0, %v2903
    %v2905 = vpop.f32.mrb[0].mxu0
    %v2906 = vadd.f32 0.0, %v2905
    %2907 = vmatprep.mubr.f32.mxu0 0.0
    %2908 = vmatmul.mubr.f32.gmra.mrb[0].mxu0 %v895
    %v2909 = vpop.f32.mrb[0].mxu0
    %v2910 = vadd.f32 0.0, %v2909
    %v2911 = vpop.f32.mrb[0].mxu0
    %v2912 = vadd.f32 0.0, %v2911
    %2913 = vmatprep.mubr.f32.mxu0 0.0
    %2914 = vmatmul.mubr.f32.gmra.mrb[0].mxu0 %v898
    %v2915 = vpop.f32.mrb[0].mxu0
    %v2916 = vadd.f32 0.0, %v2915
    %v2917 = vpop.f32.mrb[0].mxu0
    %v2918 = vadd.f32 0.0, %v2917
    %2919 = vmatprep.mubr.f32.mxu0 0.0
    %2920 = vmatmul.mubr.f32.gmra.mrb[0].mxu0 %v901
    %v2921 = vpop.f32.mrb[0].mxu0
    %v2922 = vadd.f32 0.0, %v2921
    %v2923 = vpop.f32.mrb[0].mxu0
    %v2924 = vadd.f32 0.0, %v2923
    %2925 = vmatprep.mubr.f32.mxu0 0.0
    %2926 = vmatmul.mubr.f32.gmra.mrb[0].mxu0 %v1500
    %v2927 = vpop.f32.mrb[0].mxu0
    %v2928 = vadd.f32 0.0, %v2927
    %v2929 = vpop.f32.mrb[0].mxu0
    %v2930 = vadd.f32 0.0, %v2929
    %2931 = vdwg.mxu0
    %2932 = vmatprep.subr.mxu0 %v169
    %2933 = vmatpush1.msra.mxu0 %v168
    %2934 = vmatprep.subr.mxu0 %v177
    %2935 = vmatpush1.msra.mxu0 %v176
    %2936 = vmatprep.subr.mxu0 %v185
    %2937 = vmatpush1.msra.mxu0 %v184
    %2938 = vmatprep.subr.mxu0 %v290
    %2939 = vmatpush1.msra.mxu0 %v287
    %2940 = vmatprep.subr.mxu0 0.0
    %2941 = vmatpush1.msra.mxu0 0.0
    %2942 = vmatprep.subr.mxu0 0.0
    %2943 = vmatpush1.msra.mxu0 0.0
    %2944 = vmatprep.subr.mxu0 0.0
    %2945 = vmatpush1.msra.mxu0 0.0
    %2946 = vmatprep.subr.mxu0 0.0
    %2947 = vmatpush1.msra.mxu0 0.0
    %2948 = vmatprep.subr.mxu0 0.0
    %2949 = vmatpush1.msra.mxu0 0.0
    %2950 = vmatprep.subr.mxu0 0.0
    %2951 = vmatpush1.msra.mxu0 0.0
    %2952 = vmatprep.subr.mxu0 0.0
    %2953 = vmatpush1.msra.mxu0 0.0
    %2954 = vmatprep.subr.mxu0 0.0
    %2955 = vmatpush1.msra.mxu0 0.0
    %2956 = vmatprep.subr.mxu0 0.0
    %2957 = vmatpush1.msra.mxu0 0.0
    %2958 = vmatprep.subr.mxu0 0.0
    %2959 = vmatpush1.msra.mxu0 0.0
    %2960 = vmatprep.subr.mxu0 0.0
    %2961 = vmatpush1.msra.mxu0 0.0
    %2962 = vmatprep.subr.mxu0 0.0
    %2963 = vmatpush1.msra.mxu0 0.0
    %2964 = vmatprep.subr.mxu0 0.0
    %2965 = vmatpush1.msra.mxu0 0.0
    %2966 = vmatprep.subr.mxu0 0.0
    %2967 = vmatpush1.msra.mxu0 0.0
    %2968 = vmatprep.subr.mxu0 0.0
    %2969 = vmatpush1.msra.mxu0 0.0
    %2970 = vmatprep.subr.mxu0 0.0
    %2971 = vmatpush1.msra.mxu0 0.0
    %2972 = vmatprep.subr.mxu0 0.0
    %2973 = vmatpush1.msra.mxu0 0.0
    %2974 = vmatprep.subr.mxu0 0.0
    %2975 = vmatpush1.msra.mxu0 0.0
    %2976 = vmatprep.subr.mxu0 0.0
    %2977 = vmatpush1.msra.mxu0 0.0
    %2978 = vmatprep.subr.mxu0 0.0
    %2979 = vmatpush1.msra.mxu0 0.0
    %2980 = vmatprep.subr.mxu0 0.0
    %2981 = vmatpush1.msra.mxu0 0.0
    %2982 = vmatprep.subr.mxu0 0.0
    %2983 = vmatpush1.msra.mxu0 0.0
    %2984 = vmatprep.subr.mxu0 0.0
    %2985 = vmatpush1.msra.mxu0 0.0
    %2986 = vmatprep.subr.mxu0 0.0
    %2987 = vmatpush1.msra.mxu0 0.0
    %2988 = vmatprep.subr.mxu0 0.0
    %2989 = vmatpush1.msra.mxu0 0.0
    %2990 = vmatprep.subr.mxu0 0.0
    %2991 = vmatpush1.msra.mxu0 0.0
    %2992 = vmatprep.subr.mxu0 0.0
    %2993 = vmatpush1.msra.mxu0 0.0
    %2994 = vmatprep.subr.mxu0 0.0
    %2995 = vmatpush1.msra.mxu0 0.0
    %2996 = vmatprep.mubr.f32.mxu0 0.0
    %2997 = vmatmul.mubr.f32.gmra.mrb[0].mxu0 %v868
    %v2998 = vpop.f32.mrb[0].mxu0
    %v2999 = vadd.f32 0.0, %v2998
    %v3000 = vpop.f32.mrb[0].mxu0
    %v3001 = vadd.f32 0.0, %v3000
    %3002 = vmatprep.mubr.f32.mxu0 0.0
    %3003 = vmatmul.mubr.f32.gmra.mrb[0].mxu0 %v871
    %v3004 = vpop.f32.mrb[0].mxu0
    %v3005 = vadd.f32 0.0, %v3004
    %v3006 = vpop.f32.mrb[0].mxu0
    %v3007 = vadd.f32 0.0, %v3006
    %3008 = vmatprep.mubr.f32.mxu0 0.0
    %3009 = vmatmul.mubr.f32.gmra.mrb[0].mxu0 %v874
    %v3010 = vpop.f32.mrb[0].mxu0
    %v3011 = vadd.f32 0.0, %v3010
    %v3012 = vpop.f32.mrb[0].mxu0
    %v3013 = vadd.f32 0.0, %v3012
    %3014 = vmatprep.mubr.f32.mxu0 0.0
    %3015 = vmatmul.mubr.f32.gmra.mrb[0].mxu0 %v877
    %v3016 = vpop.f32.mrb[0].mxu0
    %v3017 = vadd.f32 0.0, %v3016
    %v3018 = vpop.f32.mrb[0].mxu0
    %v3019 = vadd.f32 0.0, %v3018
    %3020 = vmatprep.mubr.f32.mxu0 0.0
    %3021 = vmatmul.mubr.f32.gmra.mrb[0].mxu0 %v880
    %v3022 = vpop.f32.mrb[0].mxu0
    %v3023 = vadd.f32 0.0, %v3022
    %v3024 = vpop.f32.mrb[0].mxu0
    %v3025 = vadd.f32 0.0, %v3024
    %3026 = vmatprep.mubr.f32.mxu0 0.0
    %3027 = vmatmul.mubr.f32.gmra.mrb[0].mxu0 %v883
    %v3028 = vpop.f32.mrb[0].mxu0
    %v3029 = vadd.f32 0.0, %v3028
    %v3030 = vpop.f32.mrb[0].mxu0
    %v3031 = vadd.f32 0.0, %v3030
    %3032 = vmatprep.mubr.f32.mxu0 0.0
    %3033 = vmatmul.mubr.f32.gmra.mrb[0].mxu0 %v886
    %v3034 = vpop.f32.mrb[0].mxu0
    %v3035 = vadd.f32 0.0, %v3034
    %v3036 = vpop.f32.mrb[0].mxu0
    %v3037 = vadd.f32 0.0, %v3036
    %3038 = vmatprep.mubr.f32.mxu0 0.0
    %3039 = vmatmul.mubr.f32.gmra.mrb[0].mxu0 %v889
    %v3040 = vpop.f32.mrb[0].mxu0
    %v3041 = vadd.f32 0.0, %v3040
    %v3042 = vpop.f32.mrb[0].mxu0
    %v3043 = vadd.f32 0.0, %v3042
    %3044 = vmatprep.mubr.f32.mxu0 0.0
    %3045 = vmatmul.mubr.f32.gmra.mrb[0].mxu0 %v892
    %v3046 = vpop.f32.mrb[0].mxu0
    %v3047 = vadd.f32 0.0, %v3046
    %v3048 = vpop.f32.mrb[0].mxu0
    %v3049 = vadd.f32 0.0, %v3048
    %3050 = vmatprep.mubr.f32.mxu0 0.0
    %3051 = vmatmul.mubr.f32.gmra.mrb[0].mxu0 %v895
    %v3052 = vpop.f32.mrb[0].mxu0
    %v3053 = vadd.f32 0.0, %v3052
    %v3054 = vpop.f32.mrb[0].mxu0
    %v3055 = vadd.f32 0.0, %v3054
    %3056 = vmatprep.mubr.f32.mxu0 0.0
    %3057 = vmatmul.mubr.f32.gmra.mrb[0].mxu0 %v898
    %v3058 = vpop.f32.mrb[0].mxu0
    %v3059 = vadd.f32 0.0, %v3058
    %v3060 = vpop.f32.mrb[0].mxu0
    %v3061 = vadd.f32 0.0, %v3060
    %3062 = vmatprep.mubr.f32.mxu0 0.0
    %3063 = vmatmul.mubr.f32.gmra.mrb[0].mxu0 %v901
    %v3064 = vpop.f32.mrb[0].mxu0
    %v3065 = vadd.f32 0.0, %v3064
    %v3066 = vpop.f32.mrb[0].mxu0
    %v3067 = vadd.f32 0.0, %v3066
    %3068 = vmatprep.mubr.f32.mxu0 0.0
    %3069 = vmatmul.mubr.f32.gmra.mrb[0].mxu0 %v1500
    %v3070 = vpop.f32.mrb[0].mxu0
    %v3071 = vadd.f32 0.0, %v3070
    %v3072 = vpop.f32.mrb[0].mxu0
    %v3073 = vadd.f32 0.0, %v3072
    %3074 = vdwg.mxu0
    %3075 = vmatprep.subr.mxu0 %v131
    %3076 = vmatpush1.msra.mxu0 %v130
    %3077 = vmatprep.subr.mxu0 %v139
    %3078 = vmatpush1.msra.mxu0 %v138
    %3079 = vmatprep.subr.mxu0 %v147
    %3080 = vmatpush1.msra.mxu0 %v146
    %3081 = vmatprep.subr.mxu0 %v907
    %3082 = vmatpush1.msra.mxu0 %v904
    %3083 = vmatprep.subr.mxu0 0.0
    %3084 = vmatpush1.msra.mxu0 0.0
    %3085 = vmatprep.subr.mxu0 0.0
    %3086 = vmatpush1.msra.mxu0 0.0
    %3087 = vmatprep.subr.mxu0 0.0
    %3088 = vmatpush1.msra.mxu0 0.0
    %3089 = vmatprep.subr.mxu0 0.0
    %3090 = vmatpush1.msra.mxu0 0.0
    %3091 = vmatprep.subr.mxu0 0.0
    %3092 = vmatpush1.msra.mxu0 0.0
    %3093 = vmatprep.subr.mxu0 0.0
    %3094 = vmatpush1.msra.mxu0 0.0
    %3095 = vmatprep.subr.mxu0 0.0
    %3096 = vmatpush1.msra.mxu0 0.0
    %3097 = vmatprep.subr.mxu0 0.0
    %3098 = vmatpush1.msra.mxu0 0.0
    %3099 = vmatprep.subr.mxu0 0.0
    %3100 = vmatpush1.msra.mxu0 0.0
    %3101 = vmatprep.subr.mxu0 0.0
    %3102 = vmatpush1.msra.mxu0 0.0
    %3103 = vmatprep.subr.mxu0 0.0
    %3104 = vmatpush1.msra.mxu0 0.0
    %3105 = vmatprep.subr.mxu0 0.0
    %3106 = vmatpush1.msra.mxu0 0.0
    %3107 = vmatprep.subr.mxu0 0.0
    %3108 = vmatpush1.msra.mxu0 0.0
    %3109 = vmatprep.subr.mxu0 0.0
    %3110 = vmatpush1.msra.mxu0 0.0
    %3111 = vmatprep.subr.mxu0 0.0
    %3112 = vmatpush1.msra.mxu0 0.0
    %3113 = vmatprep.subr.mxu0 0.0
    %3114 = vmatpush1.msra.mxu0 0.0
    %3115 = vmatprep.subr.mxu0 0.0
    %3116 = vmatpush1.msra.mxu0 0.0
    %3117 = vmatprep.subr.mxu0 0.0
    %3118 = vmatpush1.msra.mxu0 0.0
    %3119 = vmatprep.subr.mxu0 0.0
    %3120 = vmatpush1.msra.mxu0 0.0
    %3121 = vmatprep.subr.mxu0 0.0
    %3122 = vmatpush1.msra.mxu0 0.0
    %3123 = vmatprep.subr.mxu0 0.0
    %3124 = vmatpush1.msra.mxu0 0.0
    %3125 = vmatprep.subr.mxu0 0.0
    %3126 = vmatpush1.msra.mxu0 0.0
    %3127 = vmatprep.subr.mxu0 0.0
    %3128 = vmatpush1.msra.mxu0 0.0
    %3129 = vmatprep.subr.mxu0 0.0
    %3130 = vmatpush1.msra.mxu0 0.0
    %3131 = vmatprep.subr.mxu0 0.0
    %3132 = vmatpush1.msra.mxu0 0.0
    %3133 = vmatprep.subr.mxu0 0.0
    %3134 = vmatpush1.msra.mxu0 0.0
    %3135 = vmatprep.subr.mxu0 0.0
    %3136 = vmatpush1.msra.mxu0 0.0
    %3137 = vmatprep.subr.mxu0 0.0
    %3138 = vmatpush1.msra.mxu0 0.0
    %3139 = vmatprep.mubr.f32.mxu0 0.0
    %3140 = vmatmul.mubr.f32.gmra.mrb[0].mxu0 %v229
    %v3141 = vpop.f32.mrb[0].mxu0
    %v3142 = vadd.f32 %v2570, %v3141
    %v3143 = vpop.f32.mrb[0].mxu0
    %v3144 = vadd.f32 %v2572, %v3143
    %3145 = vmatprep.mubr.f32.mxu0 0.0
    %3146 = vmatmul.mubr.f32.gmra.mrb[0].mxu0 %v232
    %v3147 = vpop.f32.mrb[0].mxu0
    %v3148 = vadd.f32 %v2576, %v3147
    %v3149 = vpop.f32.mrb[0].mxu0
    %v3150 = vadd.f32 %v2578, %v3149
    %3151 = vmatprep.mubr.f32.mxu0 0.0
    %3152 = vmatmul.mubr.f32.gmra.mrb[0].mxu0 %v235
    %v3153 = vpop.f32.mrb[0].mxu0
    %v3154 = vadd.f32 %v2582, %v3153
    %v3155 = vpop.f32.mrb[0].mxu0
    %v3156 = vadd.f32 %v2584, %v3155
    %3157 = vmatprep.mubr.f32.mxu0 0.0
    %3158 = vmatmul.mubr.f32.gmra.mrb[0].mxu0 %v238
    %v3159 = vpop.f32.mrb[0].mxu0
    %v3160 = vadd.f32 %v2588, %v3159
    %v3161 = vpop.f32.mrb[0].mxu0
    %v3162 = vadd.f32 %v2590, %v3161
    %3163 = vmatprep.mubr.f32.mxu0 0.0
    %3164 = vmatmul.mubr.f32.gmra.mrb[0].mxu0 %v241
    %v3165 = vpop.f32.mrb[0].mxu0
    %v3166 = vadd.f32 %v2594, %v3165
    %v3167 = vpop.f32.mrb[0].mxu0
    %v3168 = vadd.f32 %v2596, %v3167
    %3169 = vmatprep.mubr.f32.mxu0 0.0
    %3170 = vmatmul.mubr.f32.gmra.mrb[0].mxu0 %v244
    %v3171 = vpop.f32.mrb[0].mxu0
    %v3172 = vadd.f32 %v2600, %v3171
    %v3173 = vpop.f32.mrb[0].mxu0
    %v3174 = vadd.f32 %v2602, %v3173
    %3175 = vmatprep.mubr.f32.mxu0 0.0
    %3176 = vmatmul.mubr.f32.gmra.mrb[0].mxu0 %v247
    %v3177 = vpop.f32.mrb[0].mxu0
    %v3178 = vadd.f32 %v2606, %v3177
    %v3179 = vpop.f32.mrb[0].mxu0
    %v3180 = vadd.f32 %v2608, %v3179
    %3181 = vmatprep.mubr.f32.mxu0 0.0
    %3182 = vmatmul.mubr.f32.gmra.mrb[0].mxu0 %v250
    %v3183 = vpop.f32.mrb[0].mxu0
    %v3184 = vadd.f32 %v2612, %v3183
    %v3185 = vpop.f32.mrb[0].mxu0
    %v3186 = vadd.f32 %v2614, %v3185
    %3187 = vmatprep.mubr.f32.mxu0 0.0
    %3188 = vmatmul.mubr.f32.gmra.mrb[0].mxu0 %v253
    %v3189 = vpop.f32.mrb[0].mxu0
    %v3190 = vadd.f32 %v2618, %v3189
    %v3191 = vpop.f32.mrb[0].mxu0
    %v3192 = vadd.f32 %v2620, %v3191
    %3193 = vmatprep.mubr.f32.mxu0 0.0
    %3194 = vmatmul.mubr.f32.gmra.mrb[0].mxu0 %v256
    %v3195 = vpop.f32.mrb[0].mxu0
    %v3196 = vadd.f32 %v2624, %v3195
    %v3197 = vpop.f32.mrb[0].mxu0
    %v3198 = vadd.f32 %v2626, %v3197
    %3199 = vmatprep.mubr.f32.mxu0 0.0
    %3200 = vmatmul.mubr.f32.gmra.mrb[0].mxu0 %v259
    %v3201 = vpop.f32.mrb[0].mxu0
    %v3202 = vadd.f32 %v2630, %v3201
    %v3203 = vpop.f32.mrb[0].mxu0
    %v3204 = vadd.f32 %v2632, %v3203
    %3205 = vmatprep.mubr.f32.mxu0 0.0
    %3206 = vmatmul.mubr.f32.gmra.mrb[0].mxu0 %v262
    %v3207 = vpop.f32.mrb[0].mxu0
    %v3208 = vadd.f32 %v2636, %v3207
    %v3209 = vpop.f32.mrb[0].mxu0
    %v3210 = vadd.f32 %v2638, %v3209
    %3211 = vmatprep.mubr.f32.mxu0 0.0
    %3212 = vmatmul.mubr.f32.gmra.mrb[0].mxu0 %v265
    %v3213 = vpop.f32.mrb[0].mxu0
    %v3214 = vadd.f32 %v2642, %v3213
    %v3215 = vpop.f32.mrb[0].mxu0
    %v3216 = vadd.f32 %v2644, %v3215
    %3217 = vdwg.mxu0
    %3218 = vmatprep.subr.mxu0 %v133
    %3219 = vmatpush1.msra.mxu0 %v132
    %3220 = vmatprep.subr.mxu0 %v141
    %3221 = vmatpush1.msra.mxu0 %v140
    %3222 = vmatprep.subr.mxu0 %v149
    %3223 = vmatpush1.msra.mxu0 %v148
    %3224 = vmatprep.subr.mxu0 %v913
    %3225 = vmatpush1.msra.mxu0 %v910
    %3226 = vmatprep.subr.mxu0 0.0
    %3227 = vmatpush1.msra.mxu0 0.0
    %3228 = vmatprep.subr.mxu0 0.0
    %3229 = vmatpush1.msra.mxu0 0.0
    %3230 = vmatprep.subr.mxu0 0.0
    %3231 = vmatpush1.msra.mxu0 0.0
    %3232 = vmatprep.subr.mxu0 0.0
    %3233 = vmatpush1.msra.mxu0 0.0
    %3234 = vmatprep.subr.mxu0 0.0
    %3235 = vmatpush1.msra.mxu0 0.0
    %3236 = vmatprep.subr.mxu0 0.0
    %3237 = vmatpush1.msra.mxu0 0.0
    %3238 = vmatprep.subr.mxu0 0.0
    %3239 = vmatpush1.msra.mxu0 0.0
    %3240 = vmatprep.subr.mxu0 0.0
    %3241 = vmatpush1.msra.mxu0 0.0
    %3242 = vmatprep.subr.mxu0 0.0
    %3243 = vmatpush1.msra.mxu0 0.0
    %3244 = vmatprep.subr.mxu0 0.0
    %3245 = vmatpush1.msra.mxu0 0.0
    %3246 = vmatprep.subr.mxu0 0.0
    %3247 = vmatpush1.msra.mxu0 0.0
    %3248 = vmatprep.subr.mxu0 0.0
    %3249 = vmatpush1.msra.mxu0 0.0
    %3250 = vmatprep.subr.mxu0 0.0
    %3251 = vmatpush1.msra.mxu0 0.0
    %3252 = vmatprep.subr.mxu0 0.0
    %3253 = vmatpush1.msra.mxu0 0.0
    %3254 = vmatprep.subr.mxu0 0.0
    %3255 = vmatpush1.msra.mxu0 0.0
    %3256 = vmatprep.subr.mxu0 0.0
    %3257 = vmatpush1.msra.mxu0 0.0
    %3258 = vmatprep.subr.mxu0 0.0
    %3259 = vmatpush1.msra.mxu0 0.0
    %3260 = vmatprep.subr.mxu0 0.0
    %3261 = vmatpush1.msra.mxu0 0.0
    %3262 = vmatprep.subr.mxu0 0.0
    %3263 = vmatpush1.msra.mxu0 0.0
    %3264 = vmatprep.subr.mxu0 0.0
    %3265 = vmatpush1.msra.mxu0 0.0
    %3266 = vmatprep.subr.mxu0 0.0
    %3267 = vmatpush1.msra.mxu0 0.0
    %3268 = vmatprep.subr.mxu0 0.0
    %3269 = vmatpush1.msra.mxu0 0.0
    %3270 = vmatprep.subr.mxu0 0.0
    %3271 = vmatpush1.msra.mxu0 0.0
    %3272 = vmatprep.subr.mxu0 0.0
    %3273 = vmatpush1.msra.mxu0 0.0
    %3274 = vmatprep.subr.mxu0 0.0
    %3275 = vmatpush1.msra.mxu0 0.0
    %3276 = vmatprep.subr.mxu0 0.0
    %3277 = vmatpush1.msra.mxu0 0.0
    %3278 = vmatprep.subr.mxu0 0.0
    %3279 = vmatpush1.msra.mxu0 0.0
    %3280 = vmatprep.subr.mxu0 0.0
    %3281 = vmatpush1.msra.mxu0 0.0
    %3282 = vmatprep.mubr.f32.mxu0 0.0
    %3283 = vmatmul.mubr.f32.gmra.mrb[0].mxu0 %v229
    %v3284 = vpop.f32.mrb[0].mxu0
    %v3285 = vadd.f32 %v2713, %v3284
    %v3286 = vpop.f32.mrb[0].mxu0
    %v3287 = vadd.f32 %v2715, %v3286
    %3288 = vmatprep.mubr.f32.mxu0 0.0
    %3289 = vmatmul.mubr.f32.gmra.mrb[0].mxu0 %v232
    %v3290 = vpop.f32.mrb[0].mxu0
    %v3291 = vadd.f32 %v2719, %v3290
    %v3292 = vpop.f32.mrb[0].mxu0
    %v3293 = vadd.f32 %v2721, %v3292
    %3294 = vmatprep.mubr.f32.mxu0 0.0
    %3295 = vmatmul.mubr.f32.gmra.mrb[0].mxu0 %v235
    %v3296 = vpop.f32.mrb[0].mxu0
    %v3297 = vadd.f32 %v2725, %v3296
    %v3298 = vpop.f32.mrb[0].mxu0
    %v3299 = vadd.f32 %v2727, %v3298
    %3300 = vmatprep.mubr.f32.mxu0 0.0
    %3301 = vmatmul.mubr.f32.gmra.mrb[0].mxu0 %v238
    %v3302 = vpop.f32.mrb[0].mxu0
    %v3303 = vadd.f32 %v2731, %v3302
    %v3304 = vpop.f32.mrb[0].mxu0
    %v3305 = vadd.f32 %v2733, %v3304
    %3306 = vmatprep.mubr.f32.mxu0 0.0
    %3307 = vmatmul.mubr.f32.gmra.mrb[0].mxu0 %v241
    %v3308 = vpop.f32.mrb[0].mxu0
    %v3309 = vadd.f32 %v2737, %v3308
    %v3310 = vpop.f32.mrb[0].mxu0
    %v3311 = vadd.f32 %v2739, %v3310
    %3312 = vmatprep.mubr.f32.mxu0 0.0
    %3313 = vmatmul.mubr.f32.gmra.mrb[0].mxu0 %v244
    %v3314 = vpop.f32.mrb[0].mxu0
    %v3315 = vadd.f32 %v2743, %v3314
    %v3316 = vpop.f32.mrb[0].mxu0
    %v3317 = vadd.f32 %v2745, %v3316
    %3318 = vmatprep.mubr.f32.mxu0 0.0
    %3319 = vmatmul.mubr.f32.gmra.mrb[0].mxu0 %v247
    %v3320 = vpop.f32.mrb[0].mxu0
    %v3321 = vadd.f32 %v2749, %v3320
    %v3322 = vpop.f32.mrb[0].mxu0
    %v3323 = vadd.f32 %v2751, %v3322
    %3324 = vmatprep.mubr.f32.mxu0 0.0
    %3325 = vmatmul.mubr.f32.gmra.mrb[0].mxu0 %v250
    %v3326 = vpop.f32.mrb[0].mxu0
    %v3327 = vadd.f32 %v2755, %v3326
    %v3328 = vpop.f32.mrb[0].mxu0
    %v3329 = vadd.f32 %v2757, %v3328
    %3330 = vmatprep.mubr.f32.mxu0 0.0
    %3331 = vmatmul.mubr.f32.gmra.mrb[0].mxu0 %v253
    %v3332 = vpop.f32.mrb[0].mxu0
    %v3333 = vadd.f32 %v2761, %v3332
    %v3334 = vpop.f32.mrb[0].mxu0
    %v3335 = vadd.f32 %v2763, %v3334
    %3336 = vmatprep.mubr.f32.mxu0 0.0
    %3337 = vmatmul.mubr.f32.gmra.mrb[0].mxu0 %v256
    %v3338 = vpop.f32.mrb[0].mxu0
    %v3339 = vadd.f32 %v2767, %v3338
    %v3340 = vpop.f32.mrb[0].mxu0
    %v3341 = vadd.f32 %v2769, %v3340
    %3342 = vmatprep.mubr.f32.mxu0 0.0
    %3343 = vmatmul.mubr.f32.gmra.mrb[0].mxu0 %v259
    %v3344 = vpop.f32.mrb[0].mxu0
    %v3345 = vadd.f32 %v2773, %v3344
    %v3346 = vpop.f32.mrb[0].mxu0
    %v3347 = vadd.f32 %v2775, %v3346
    %3348 = vmatprep.mubr.f32.mxu0 0.0
    %3349 = vmatmul.mubr.f32.gmra.mrb[0].mxu0 %v262
    %v3350 = vpop.f32.mrb[0].mxu0
    %v3351 = vadd.f32 %v2779, %v3350
    %v3352 = vpop.f32.mrb[0].mxu0
    %v3353 = vadd.f32 %v2781, %v3352
    %3354 = vmatprep.mubr.f32.mxu0 0.0
    %3355 = vmatmul.mubr.f32.gmra.mrb[0].mxu0 %v265
    %v3356 = vpop.f32.mrb[0].mxu0
    %v3357 = vadd.f32 %v2785, %v3356
    %v3358 = vpop.f32.mrb[0].mxu0
    %v3359 = vadd.f32 %v2787, %v3358
    %3360 = vdwg.mxu0
    %3361 = vmatprep.subr.mxu0 %v135
    %3362 = vmatpush1.msra.mxu0 %v134
    %3363 = vmatprep.subr.mxu0 %v143
    %3364 = vmatpush1.msra.mxu0 %v142
    %3365 = vmatprep.subr.mxu0 %v151
    %3366 = vmatpush1.msra.mxu0 %v150
    %3367 = vmatprep.subr.mxu0 %v919
    %3368 = vmatpush1.msra.mxu0 %v916
    %3369 = vmatprep.subr.mxu0 0.0
    %3370 = vmatpush1.msra.mxu0 0.0
    %3371 = vmatprep.subr.mxu0 0.0
    %3372 = vmatpush1.msra.mxu0 0.0
    %3373 = vmatprep.subr.mxu0 0.0
    %3374 = vmatpush1.msra.mxu0 0.0
    %3375 = vmatprep.subr.mxu0 0.0
    %3376 = vmatpush1.msra.mxu0 0.0
    %3377 = vmatprep.subr.mxu0 0.0
    %3378 = vmatpush1.msra.mxu0 0.0
    %3379 = vmatprep.subr.mxu0 0.0
    %3380 = vmatpush1.msra.mxu0 0.0
    %3381 = vmatprep.subr.mxu0 0.0
    %3382 = vmatpush1.msra.mxu0 0.0
    %3383 = vmatprep.subr.mxu0 0.0
    %3384 = vmatpush1.msra.mxu0 0.0
    %3385 = vmatprep.subr.mxu0 0.0
    %3386 = vmatpush1.msra.mxu0 0.0
    %3387 = vmatprep.subr.mxu0 0.0
    %3388 = vmatpush1.msra.mxu0 0.0
    %3389 = vmatprep.subr.mxu0 0.0
    %3390 = vmatpush1.msra.mxu0 0.0
    %3391 = vmatprep.subr.mxu0 0.0
    %3392 = vmatpush1.msra.mxu0 0.0
    %3393 = vmatprep.subr.mxu0 0.0
    %3394 = vmatpush1.msra.mxu0 0.0
    %3395 = vmatprep.subr.mxu0 0.0
    %3396 = vmatpush1.msra.mxu0 0.0
    %3397 = vmatprep.subr.mxu0 0.0
    %3398 = vmatpush1.msra.mxu0 0.0
    %3399 = vmatprep.subr.mxu0 0.0
    %3400 = vmatpush1.msra.mxu0 0.0
    %3401 = vmatprep.subr.mxu0 0.0
    %3402 = vmatpush1.msra.mxu0 0.0
    %3403 = vmatprep.subr.mxu0 0.0
    %3404 = vmatpush1.msra.mxu0 0.0
    %3405 = vmatprep.subr.mxu0 0.0
    %3406 = vmatpush1.msra.mxu0 0.0
    %3407 = vmatprep.subr.mxu0 0.0
    %3408 = vmatpush1.msra.mxu0 0.0
    %3409 = vmatprep.subr.mxu0 0.0
    %3410 = vmatpush1.msra.mxu0 0.0
    %3411 = vmatprep.subr.mxu0 0.0
    %3412 = vmatpush1.msra.mxu0 0.0
    %3413 = vmatprep.subr.mxu0 0.0
    %3414 = vmatpush1.msra.mxu0 0.0
    %3415 = vmatprep.subr.mxu0 0.0
    %3416 = vmatpush1.msra.mxu0 0.0
    %3417 = vmatprep.subr.mxu0 0.0
    %3418 = vmatpush1.msra.mxu0 0.0
    %3419 = vmatprep.subr.mxu0 0.0
    %3420 = vmatpush1.msra.mxu0 0.0
    %3421 = vmatprep.subr.mxu0 0.0
    %3422 = vmatpush1.msra.mxu0 0.0
    %3423 = vmatprep.subr.mxu0 0.0
    %3424 = vmatpush1.msra.mxu0 0.0
    %3425 = vmatprep.mubr.f32.mxu0 0.0
    %3426 = vmatmul.mubr.f32.gmra.mrb[0].mxu0 %v229
    %v3427 = vpop.f32.mrb[0].mxu0
    %v3428 = vadd.f32 %v2856, %v3427
    %v3429 = vpop.f32.mrb[0].mxu0
    %v3430 = vadd.f32 %v2858, %v3429
    %3431 = vmatprep.mubr.f32.mxu0 0.0
    %3432 = vmatmul.mubr.f32.gmra.mrb[0].mxu0 %v232
    %v3433 = vpop.f32.mrb[0].mxu0
    %v3434 = vadd.f32 %v2862, %v3433
    %v3435 = vpop.f32.mrb[0].mxu0
    %v3436 = vadd.f32 %v2864, %v3435
    %3437 = vmatprep.mubr.f32.mxu0 0.0
    %3438 = vmatmul.mubr.f32.gmra.mrb[0].mxu0 %v235
    %v3439 = vpop.f32.mrb[0].mxu0
    %v3440 = vadd.f32 %v2868, %v3439
    %v3441 = vpop.f32.mrb[0].mxu0
    %v3442 = vadd.f32 %v2870, %v3441
    %3443 = vmatprep.mubr.f32.mxu0 0.0
    %3444 = vmatmul.mubr.f32.gmra.mrb[0].mxu0 %v238
    %v3445 = vpop.f32.mrb[0].mxu0
    %v3446 = vadd.f32 %v2874, %v3445
    %v3447 = vpop.f32.mrb[0].mxu0
    %v3448 = vadd.f32 %v2876, %v3447
    %3449 = vmatprep.mubr.f32.mxu0 0.0
    %3450 = vmatmul.mubr.f32.gmra.mrb[0].mxu0 %v241
    %v3451 = vpop.f32.mrb[0].mxu0
    %v3452 = vadd.f32 %v2880, %v3451
    %v3453 = vpop.f32.mrb[0].mxu0
    %v3454 = vadd.f32 %v2882, %v3453
    %3455 = vmatprep.mubr.f32.mxu0 0.0
    %3456 = vmatmul.mubr.f32.gmra.mrb[0].mxu0 %v244
    %v3457 = vpop.f32.mrb[0].mxu0
    %v3458 = vadd.f32 %v2886, %v3457
    %v3459 = vpop.f32.mrb[0].mxu0
    %v3460 = vadd.f32 %v2888, %v3459
    %3461 = vmatprep.mubr.f32.mxu0 0.0
    %3462 = vmatmul.mubr.f32.gmra.mrb[0].mxu0 %v247
    %v3463 = vpop.f32.mrb[0].mxu0
    %v3464 = vadd.f32 %v2892, %v3463
    %v3465 = vpop.f32.mrb[0].mxu0
    %v3466 = vadd.f32 %v2894, %v3465
    %3467 = vmatprep.mubr.f32.mxu0 0.0
    %3468 = vmatmul.mubr.f32.gmra.mrb[0].mxu0 %v250
    %v3469 = vpop.f32.mrb[0].mxu0
    %v3470 = vadd.f32 %v2898, %v3469
    %v3471 = vpop.f32.mrb[0].mxu0
    %v3472 = vadd.f32 %v2900, %v3471
    %3473 = vmatprep.mubr.f32.mxu0 0.0
    %3474 = vmatmul.mubr.f32.gmra.mrb[0].mxu0 %v253
    %v3475 = vpop.f32.mrb[0].mxu0
    %v3476 = vadd.f32 %v2904, %v3475
    %v3477 = vpop.f32.mrb[0].mxu0
    %v3478 = vadd.f32 %v2906, %v3477
    %3479 = vmatprep.mubr.f32.mxu0 0.0
    %3480 = vmatmul.mubr.f32.gmra.mrb[0].mxu0 %v256
    %v3481 = vpop.f32.mrb[0].mxu0
    %v3482 = vadd.f32 %v2910, %v3481
    %v3483 = vpop.f32.mrb[0].mxu0
    %v3484 = vadd.f32 %v2912, %v3483
    %3485 = vmatprep.mubr.f32.mxu0 0.0
    %3486 = vmatmul.mubr.f32.gmra.mrb[0].mxu0 %v259
    %v3487 = vpop.f32.mrb[0].mxu0
    %v3488 = vadd.f32 %v2916, %v3487
    %v3489 = vpop.f32.mrb[0].mxu0
    %v3490 = vadd.f32 %v2918, %v3489
    %3491 = vmatprep.mubr.f32.mxu0 0.0
    %3492 = vmatmul.mubr.f32.gmra.mrb[0].mxu0 %v262
    %v3493 = vpop.f32.mrb[0].mxu0
    %v3494 = vadd.f32 %v2922, %v3493
    %v3495 = vpop.f32.mrb[0].mxu0
    %v3496 = vadd.f32 %v2924, %v3495
    %3497 = vmatprep.mubr.f32.mxu0 0.0
    %3498 = vmatmul.mubr.f32.gmra.mrb[0].mxu0 %v265
    %v3499 = vpop.f32.mrb[0].mxu0
    %v3500 = vadd.f32 %v2928, %v3499
    %v3501 = vpop.f32.mrb[0].mxu0
    %v3502 = vadd.f32 %v2930, %v3501
    %3503 = vdwg.mxu0
    %3504 = vmatprep.subr.mxu0 %v137
    %3505 = vmatpush1.msra.mxu0 %v136
    %3506 = vmatprep.subr.mxu0 %v145
    %3507 = vmatpush1.msra.mxu0 %v144
    %3508 = vmatprep.subr.mxu0 %v153
    %3509 = vmatpush1.msra.mxu0 %v152
    %3510 = vmatprep.subr.mxu0 %v925
    %3511 = vmatpush1.msra.mxu0 %v922
    %3512 = vmatprep.subr.mxu0 0.0
    %3513 = vmatpush1.msra.mxu0 0.0
    %3514 = vmatprep.subr.mxu0 0.0
    %3515 = vmatpush1.msra.mxu0 0.0
    %3516 = vmatprep.subr.mxu0 0.0
    %3517 = vmatpush1.msra.mxu0 0.0
    %3518 = vmatprep.subr.mxu0 0.0
    %3519 = vmatpush1.msra.mxu0 0.0
    %3520 = vmatprep.subr.mxu0 0.0
    %3521 = vmatpush1.msra.mxu0 0.0
    %3522 = vmatprep.subr.mxu0 0.0
    %3523 = vmatpush1.msra.mxu0 0.0
    %3524 = vmatprep.subr.mxu0 0.0
    %3525 = vmatpush1.msra.mxu0 0.0
    %3526 = vmatprep.subr.mxu0 0.0
    %3527 = vmatpush1.msra.mxu0 0.0
    %3528 = vmatprep.subr.mxu0 0.0
    %3529 = vmatpush1.msra.mxu0 0.0
    %3530 = vmatprep.subr.mxu0 0.0
    %3531 = vmatpush1.msra.mxu0 0.0
    %3532 = vmatprep.subr.mxu0 0.0
    %3533 = vmatpush1.msra.mxu0 0.0
    %3534 = vmatprep.subr.mxu0 0.0
    %3535 = vmatpush1.msra.mxu0 0.0
    %3536 = vmatprep.subr.mxu0 0.0
    %3537 = vmatpush1.msra.mxu0 0.0
    %3538 = vmatprep.subr.mxu0 0.0
    %3539 = vmatpush1.msra.mxu0 0.0
    %3540 = vmatprep.subr.mxu0 0.0
    %3541 = vmatpush1.msra.mxu0 0.0
    %3542 = vmatprep.subr.mxu0 0.0
    %3543 = vmatpush1.msra.mxu0 0.0
    %3544 = vmatprep.subr.mxu0 0.0
    %3545 = vmatpush1.msra.mxu0 0.0
    %3546 = vmatprep.subr.mxu0 0.0
    %3547 = vmatpush1.msra.mxu0 0.0
    %3548 = vmatprep.subr.mxu0 0.0
    %3549 = vmatpush1.msra.mxu0 0.0
    %3550 = vmatprep.subr.mxu0 0.0
    %3551 = vmatpush1.msra.mxu0 0.0
    %3552 = vmatprep.subr.mxu0 0.0
    %3553 = vmatpush1.msra.mxu0 0.0
    %3554 = vmatprep.subr.mxu0 0.0
    %3555 = vmatpush1.msra.mxu0 0.0
    %3556 = vmatprep.subr.mxu0 0.0
    %3557 = vmatpush1.msra.mxu0 0.0
    %3558 = vmatprep.subr.mxu0 0.0
    %3559 = vmatpush1.msra.mxu0 0.0
    %3560 = vmatprep.subr.mxu0 0.0
    %3561 = vmatpush1.msra.mxu0 0.0
    %3562 = vmatprep.subr.mxu0 0.0
    %3563 = vmatpush1.msra.mxu0 0.0
    %3564 = vmatprep.subr.mxu0 0.0
    %3565 = vmatpush1.msra.mxu0 0.0
    %3566 = vmatprep.subr.mxu0 0.0
    %3567 = vmatpush1.msra.mxu0 0.0
    %3568 = vmatprep.mubr.f32.mxu0 0.0
    %3569 = vmatmul.mubr.f32.gmra.mrb[0].mxu0 %v229
    %v3570 = vpop.f32.mrb[0].mxu0
    %v3571 = vadd.f32 %v2999, %v3570
    %v3572 = vpop.f32.mrb[0].mxu0
    %v3573 = vadd.f32 %v3001, %v3572
    %3574 = vmatprep.mubr.f32.mxu0 0.0
    %3575 = vmatmul.mubr.f32.gmra.mrb[0].mxu0 %v232
    %v3576 = vpop.f32.mrb[0].mxu0
    %v3577 = vadd.f32 %v3005, %v3576
    %v3578 = vpop.f32.mrb[0].mxu0
    %v3579 = vadd.f32 %v3007, %v3578
    %3580 = vmatprep.mubr.f32.mxu0 0.0
    %3581 = vmatmul.mubr.f32.gmra.mrb[0].mxu0 %v235
    %v3582 = vpop.f32.mrb[0].mxu0
    %v3583 = vadd.f32 %v3011, %v3582
    %v3584 = vpop.f32.mrb[0].mxu0
    %v3585 = vadd.f32 %v3013, %v3584
    %3586 = vmatprep.mubr.f32.mxu0 0.0
    %3587 = vmatmul.mubr.f32.gmra.mrb[0].mxu0 %v238
    %v3588 = vpop.f32.mrb[0].mxu0
    %v3589 = vadd.f32 %v3017, %v3588
    %v3590 = vpop.f32.mrb[0].mxu0
    %v3591 = vadd.f32 %v3019, %v3590
    %3592 = vmatprep.mubr.f32.mxu0 0.0
    %3593 = vmatmul.mubr.f32.gmra.mrb[0].mxu0 %v241
    %v3594 = vpop.f32.mrb[0].mxu0
    %v3595 = vadd.f32 %v3023, %v3594
    %v3596 = vpop.f32.mrb[0].mxu0
    %v3597 = vadd.f32 %v3025, %v3596
    %3598 = vmatprep.mubr.f32.mxu0 0.0
    %3599 = vmatmul.mubr.f32.gmra.mrb[0].mxu0 %v244
    %v3600 = vpop.f32.mrb[0].mxu0
    %v3601 = vadd.f32 %v3029, %v3600
    %v3602 = vpop.f32.mrb[0].mxu0
    %v3603 = vadd.f32 %v3031, %v3602
    %3604 = vmatprep.mubr.f32.mxu0 0.0
    %3605 = vmatmul.mubr.f32.gmra.mrb[0].mxu0 %v247
    %v3606 = vpop.f32.mrb[0].mxu0
    %v3607 = vadd.f32 %v3035, %v3606
    %v3608 = vpop.f32.mrb[0].mxu0
    %v3609 = vadd.f32 %v3037, %v3608
    %3610 = vmatprep.mubr.f32.mxu0 0.0
    %3611 = vmatmul.mubr.f32.gmra.mrb[0].mxu0 %v250
    %v3612 = vpop.f32.mrb[0].mxu0
    %v3613 = vadd.f32 %v3041, %v3612
    %v3614 = vpop.f32.mrb[0].mxu0
    %v3615 = vadd.f32 %v3043, %v3614
    %3616 = vmatprep.mubr.f32.mxu0 0.0
    %3617 = vmatmul.mubr.f32.gmra.mrb[0].mxu0 %v253
    %v3618 = vpop.f32.mrb[0].mxu0
    %v3619 = vadd.f32 %v3047, %v3618
    %v3620 = vpop.f32.mrb[0].mxu0
    %v3621 = vadd.f32 %v3049, %v3620
    %3622 = vmatprep.mubr.f32.mxu0 0.0
    %3623 = vmatmul.mubr.f32.gmra.mrb[0].mxu0 %v256
    %v3624 = vpop.f32.mrb[0].mxu0
    %v3625 = vadd.f32 %v3053, %v3624
    %v3626 = vpop.f32.mrb[0].mxu0
    %v3627 = vadd.f32 %v3055, %v3626
    %3628 = vmatprep.mubr.f32.mxu0 0.0
    %3629 = vmatmul.mubr.f32.gmra.mrb[0].mxu0 %v259
    %v3630 = vpop.f32.mrb[0].mxu0
    %v3631 = vadd.f32 %v3059, %v3630
    %v3632 = vpop.f32.mrb[0].mxu0
    %v3633 = vadd.f32 %v3061, %v3632
    %3634 = vmatprep.mubr.f32.mxu0 0.0
    %3635 = vmatmul.mubr.f32.gmra.mrb[0].mxu0 %v262
    %v3636 = vpop.f32.mrb[0].mxu0
    %v3637 = vadd.f32 %v3065, %v3636
    %v3638 = vpop.f32.mrb[0].mxu0
    %v3639 = vadd.f32 %v3067, %v3638
    %3640 = vmatprep.mubr.f32.mxu0 0.0
    %3641 = vmatmul.mubr.f32.gmra.mrb[0].mxu0 %v265
    %v3642 = vpop.f32.mrb[0].mxu0
    %v3643 = vadd.f32 %v3071, %v3642
    %v3644 = vpop.f32.mrb[0].mxu0
    %v3645 = vadd.f32 %v3073, %v3644
    %3646 = vdwg.mxu0
    %v3648 = vsel %vm227, %v129, 0
    %3650 = vmatprep.subr.mxu0 %v195
    %3651 = vmatpush1.msra.mxu0 %v194
    %3652 = vmatprep.subr.mxu0 %v203
    %3653 = vmatpush1.msra.mxu0 %v202
    %3654 = vmatprep.subr.mxu0 %v211
    %3655 = vmatpush1.msra.mxu0 %v210
    %3656 = vmatprep.subr.mxu0 %v1506
    %3657 = vmatpush1.msra.mxu0 %v1503
    %3658 = vmatprep.subr.mxu0 0.0
    %3659 = vmatpush1.msra.mxu0 0.0
    %3660 = vmatprep.subr.mxu0 0.0
    %3661 = vmatpush1.msra.mxu0 0.0
    %3662 = vmatprep.subr.mxu0 0.0
    %3663 = vmatpush1.msra.mxu0 0.0
    %3664 = vmatprep.subr.mxu0 0.0
    %3665 = vmatpush1.msra.mxu0 0.0
    %3666 = vmatprep.subr.mxu0 0.0
    %3667 = vmatpush1.msra.mxu0 0.0
    %3668 = vmatprep.subr.mxu0 0.0
    %3669 = vmatpush1.msra.mxu0 0.0
    %3670 = vmatprep.subr.mxu0 0.0
    %3671 = vmatpush1.msra.mxu0 0.0
    %3672 = vmatprep.subr.mxu0 0.0
    %3673 = vmatpush1.msra.mxu0 0.0
    %3674 = vmatprep.subr.mxu0 0.0
    %3675 = vmatpush1.msra.mxu0 0.0
    %3676 = vmatprep.subr.mxu0 0.0
    %3677 = vmatpush1.msra.mxu0 0.0
    %3678 = vmatprep.subr.mxu0 0.0
    %3679 = vmatpush1.msra.mxu0 0.0
    %3680 = vmatprep.subr.mxu0 0.0
    %3681 = vmatpush1.msra.mxu0 0.0
    %3682 = vmatprep.subr.mxu0 0.0
    %3683 = vmatpush1.msra.mxu0 0.0
    %3684 = vmatprep.subr.mxu0 0.0
    %3685 = vmatpush1.msra.mxu0 0.0
    %3686 = vmatprep.subr.mxu0 0.0
    %3687 = vmatpush1.msra.mxu0 0.0
    %3688 = vmatprep.subr.mxu0 0.0
    %3689 = vmatpush1.msra.mxu0 0.0
    %3690 = vmatprep.subr.mxu0 0.0
    %3691 = vmatpush1.msra.mxu0 0.0
    %3692 = vmatprep.subr.mxu0 0.0
    %3693 = vmatpush1.msra.mxu0 0.0
    %3694 = vmatprep.subr.mxu0 0.0
    %3695 = vmatpush1.msra.mxu0 0.0
    %3696 = vmatprep.subr.mxu0 0.0
    %3697 = vmatpush1.msra.mxu0 0.0
    %3698 = vmatprep.subr.mxu0 0.0
    %3699 = vmatpush1.msra.mxu0 0.0
    %3700 = vmatprep.subr.mxu0 0.0
    %3701 = vmatpush1.msra.mxu0 0.0
    %3702 = vmatprep.subr.mxu0 0.0
    %3703 = vmatpush1.msra.mxu0 0.0
    %3704 = vmatprep.subr.mxu0 0.0
    %3705 = vmatpush1.msra.mxu0 0.0
    %3706 = vmatprep.subr.mxu0 0.0
    %3707 = vmatpush1.msra.mxu0 0.0
    %3708 = vmatprep.subr.mxu0 0.0
    %3709 = vmatpush1.msra.mxu0 0.0
    %3710 = vmatprep.subr.mxu0 0.0
    %3711 = vmatpush1.msra.mxu0 0.0
    %3712 = vmatprep.subr.mxu0 0.0
    %3713 = vmatpush1.msra.mxu0 0.0
    %3714 = vmatprep.mubr.f32.mxu0 0.0
    %3715 = vmatmul.mubr.f32.gmra.mrb[0].mxu0 %v232
    %v3716 = vpop.f32.mrb[0].mxu0
    %v3717 = vadd.f32 0.0, %v3716
    %v3718 = vpop.f32.mrb[0].mxu0
    %v3719 = vadd.f32 0.0, %v3718
    %3720 = vmatprep.mubr.f32.mxu0 0.0
    %3721 = vmatmul.mubr.f32.gmra.mrb[0].mxu0 %v235
    %v3722 = vpop.f32.mrb[0].mxu0
    %v3723 = vadd.f32 0.0, %v3722
    %v3724 = vpop.f32.mrb[0].mxu0
    %v3725 = vadd.f32 0.0, %v3724
    %3726 = vmatprep.mubr.f32.mxu0 0.0
    %3727 = vmatmul.mubr.f32.gmra.mrb[0].mxu0 %v238
    %v3728 = vpop.f32.mrb[0].mxu0
    %v3729 = vadd.f32 0.0, %v3728
    %v3730 = vpop.f32.mrb[0].mxu0
    %v3731 = vadd.f32 0.0, %v3730
    %3732 = vmatprep.mubr.f32.mxu0 0.0
    %3733 = vmatmul.mubr.f32.gmra.mrb[0].mxu0 %v241
    %v3734 = vpop.f32.mrb[0].mxu0
    %v3735 = vadd.f32 0.0, %v3734
    %v3736 = vpop.f32.mrb[0].mxu0
    %v3737 = vadd.f32 0.0, %v3736
    %3738 = vmatprep.mubr.f32.mxu0 0.0
    %3739 = vmatmul.mubr.f32.gmra.mrb[0].mxu0 %v244
    %v3740 = vpop.f32.mrb[0].mxu0
    %v3741 = vadd.f32 0.0, %v3740
    %v3742 = vpop.f32.mrb[0].mxu0
    %v3743 = vadd.f32 0.0, %v3742
    %3744 = vmatprep.mubr.f32.mxu0 0.0
    %3745 = vmatmul.mubr.f32.gmra.mrb[0].mxu0 %v247
    %v3746 = vpop.f32.mrb[0].mxu0
    %v3747 = vadd.f32 0.0, %v3746
    %v3748 = vpop.f32.mrb[0].mxu0
    %v3749 = vadd.f32 0.0, %v3748
    %3750 = vmatprep.mubr.f32.mxu0 0.0
    %3751 = vmatmul.mubr.f32.gmra.mrb[0].mxu0 %v250
    %v3752 = vpop.f32.mrb[0].mxu0
    %v3753 = vadd.f32 0.0, %v3752
    %v3754 = vpop.f32.mrb[0].mxu0
    %v3755 = vadd.f32 0.0, %v3754
    %3756 = vmatprep.mubr.f32.mxu0 0.0
    %3757 = vmatmul.mubr.f32.gmra.mrb[0].mxu0 %v253
    %v3758 = vpop.f32.mrb[0].mxu0
    %v3759 = vadd.f32 0.0, %v3758
    %v3760 = vpop.f32.mrb[0].mxu0
    %v3761 = vadd.f32 0.0, %v3760
    %3762 = vmatprep.mubr.f32.mxu0 0.0
    %3763 = vmatmul.mubr.f32.gmra.mrb[0].mxu0 %v256
    %v3764 = vpop.f32.mrb[0].mxu0
    %v3765 = vadd.f32 0.0, %v3764
    %v3766 = vpop.f32.mrb[0].mxu0
    %v3767 = vadd.f32 0.0, %v3766
    %3768 = vmatprep.mubr.f32.mxu0 0.0
    %3769 = vmatmul.mubr.f32.gmra.mrb[0].mxu0 %v259
    %v3770 = vpop.f32.mrb[0].mxu0
    %v3771 = vadd.f32 0.0, %v3770
    %v3772 = vpop.f32.mrb[0].mxu0
    %v3773 = vadd.f32 0.0, %v3772
    %3774 = vmatprep.mubr.f32.mxu0 0.0
    %3775 = vmatmul.mubr.f32.gmra.mrb[0].mxu0 %v262
    %v3776 = vpop.f32.mrb[0].mxu0
    %v3777 = vadd.f32 0.0, %v3776
    %v3778 = vpop.f32.mrb[0].mxu0
    %v3779 = vadd.f32 0.0, %v3778
    %3780 = vmatprep.mubr.f32.mxu0 0.0
    %3781 = vmatmul.mubr.f32.gmra.mrb[0].mxu0 %v265
    %v3782 = vpop.f32.mrb[0].mxu0
    %v3783 = vadd.f32 0.0, %v3782
    %v3784 = vpop.f32.mrb[0].mxu0
    %v3785 = vadd.f32 0.0, %v3784
    %3786 = vmatprep.mubr.f32.mxu0 0.0
    %3787 = vmatmul.mubr.f32.gmra.mrb[0].mxu0 %v3648
    %v3788 = vpop.f32.mrb[0].mxu0
    %v3789 = vadd.f32 0.0, %v3788
    %v3790 = vpop.f32.mrb[0].mxu0
    %v3791 = vadd.f32 0.0, %v3790
    %3792 = vdwg.mxu0
    %3793 = vmatprep.subr.mxu0 %v197
    %3794 = vmatpush1.msra.mxu0 %v196
    %3795 = vmatprep.subr.mxu0 %v205
    %3796 = vmatpush1.msra.mxu0 %v204
    %3797 = vmatprep.subr.mxu0 %v213
    %3798 = vmatpush1.msra.mxu0 %v212
    %3799 = vmatprep.subr.mxu0 %v1512
    %3800 = vmatpush1.msra.mxu0 %v1509
    %3801 = vmatprep.subr.mxu0 0.0
    %3802 = vmatpush1.msra.mxu0 0.0
    %3803 = vmatprep.subr.mxu0 0.0
    %3804 = vmatpush1.msra.mxu0 0.0
    %3805 = vmatprep.subr.mxu0 0.0
    %3806 = vmatpush1.msra.mxu0 0.0
    %3807 = vmatprep.subr.mxu0 0.0
    %3808 = vmatpush1.msra.mxu0 0.0
    %3809 = vmatprep.subr.mxu0 0.0
    %3810 = vmatpush1.msra.mxu0 0.0
    %3811 = vmatprep.subr.mxu0 0.0
    %3812 = vmatpush1.msra.mxu0 0.0
    %3813 = vmatprep.subr.mxu0 0.0
    %3814 = vmatpush1.msra.mxu0 0.0
    %3815 = vmatprep.subr.mxu0 0.0
    %3816 = vmatpush1.msra.mxu0 0.0
    %3817 = vmatprep.subr.mxu0 0.0
    %3818 = vmatpush1.msra.mxu0 0.0
    %3819 = vmatprep.subr.mxu0 0.0
    %3820 = vmatpush1.msra.mxu0 0.0
    %3821 = vmatprep.subr.mxu0 0.0
    %3822 = vmatpush1.msra.mxu0 0.0
    %3823 = vmatprep.subr.mxu0 0.0
    %3824 = vmatpush1.msra.mxu0 0.0
    %3825 = vmatprep.subr.mxu0 0.0
    %3826 = vmatpush1.msra.mxu0 0.0
    %3827 = vmatprep.subr.mxu0 0.0
    %3828 = vmatpush1.msra.mxu0 0.0
    %3829 = vmatprep.subr.mxu0 0.0
    %3830 = vmatpush1.msra.mxu0 0.0
    %3831 = vmatprep.subr.mxu0 0.0
    %3832 = vmatpush1.msra.mxu0 0.0
    %3833 = vmatprep.subr.mxu0 0.0
    %3834 = vmatpush1.msra.mxu0 0.0
    %3835 = vmatprep.subr.mxu0 0.0
    %3836 = vmatpush1.msra.mxu0 0.0
    %3837 = vmatprep.subr.mxu0 0.0
    %3838 = vmatpush1.msra.mxu0 0.0
    %3839 = vmatprep.subr.mxu0 0.0
    %3840 = vmatpush1.msra.mxu0 0.0
    %3841 = vmatprep.subr.mxu0 0.0
    %3842 = vmatpush1.msra.mxu0 0.0
    %3843 = vmatprep.subr.mxu0 0.0
    %3844 = vmatpush1.msra.mxu0 0.0
    %3845 = vmatprep.subr.mxu0 0.0
    %3846 = vmatpush1.msra.mxu0 0.0
    %3847 = vmatprep.subr.mxu0 0.0
    %3848 = vmatpush1.msra.mxu0 0.0
    %3849 = vmatprep.subr.mxu0 0.0
    %3850 = vmatpush1.msra.mxu0 0.0
    %3851 = vmatprep.subr.mxu0 0.0
    %3852 = vmatpush1.msra.mxu0 0.0
    %3853 = vmatprep.subr.mxu0 0.0
    %3854 = vmatpush1.msra.mxu0 0.0
    %3855 = vmatprep.subr.mxu0 0.0
    %3856 = vmatpush1.msra.mxu0 0.0
    %3857 = vmatprep.mubr.f32.mxu0 0.0
    %3858 = vmatmul.mubr.f32.gmra.mrb[0].mxu0 %v232
    %v3859 = vpop.f32.mrb[0].mxu0
    %v3860 = vadd.f32 0.0, %v3859
    %v3861 = vpop.f32.mrb[0].mxu0
    %v3862 = vadd.f32 0.0, %v3861
    %3863 = vmatprep.mubr.f32.mxu0 0.0
    %3864 = vmatmul.mubr.f32.gmra.mrb[0].mxu0 %v235
    %v3865 = vpop.f32.mrb[0].mxu0
    %v3866 = vadd.f32 0.0, %v3865
    %v3867 = vpop.f32.mrb[0].mxu0
    %v3868 = vadd.f32 0.0, %v3867
    %3869 = vmatprep.mubr.f32.mxu0 0.0
    %3870 = vmatmul.mubr.f32.gmra.mrb[0].mxu0 %v238
    %v3871 = vpop.f32.mrb[0].mxu0
    %v3872 = vadd.f32 0.0, %v3871
    %v3873 = vpop.f32.mrb[0].mxu0
    %v3874 = vadd.f32 0.0, %v3873
    %3875 = vmatprep.mubr.f32.mxu0 0.0
    %3876 = vmatmul.mubr.f32.gmra.mrb[0].mxu0 %v241
    %v3877 = vpop.f32.mrb[0].mxu0
    %v3878 = vadd.f32 0.0, %v3877
    %v3879 = vpop.f32.mrb[0].mxu0
    %v3880 = vadd.f32 0.0, %v3879
    %3881 = vmatprep.mubr.f32.mxu0 0.0
    %3882 = vmatmul.mubr.f32.gmra.mrb[0].mxu0 %v244
    %v3883 = vpop.f32.mrb[0].mxu0
    %v3884 = vadd.f32 0.0, %v3883
    %v3885 = vpop.f32.mrb[0].mxu0
    %v3886 = vadd.f32 0.0, %v3885
    %3887 = vmatprep.mubr.f32.mxu0 0.0
    %3888 = vmatmul.mubr.f32.gmra.mrb[0].mxu0 %v247
    %v3889 = vpop.f32.mrb[0].mxu0
    %v3890 = vadd.f32 0.0, %v3889
    %v3891 = vpop.f32.mrb[0].mxu0
    %v3892 = vadd.f32 0.0, %v3891
    %3893 = vmatprep.mubr.f32.mxu0 0.0
    %3894 = vmatmul.mubr.f32.gmra.mrb[0].mxu0 %v250
    %v3895 = vpop.f32.mrb[0].mxu0
    %v3896 = vadd.f32 0.0, %v3895
    %v3897 = vpop.f32.mrb[0].mxu0
    %v3898 = vadd.f32 0.0, %v3897
    %3899 = vmatprep.mubr.f32.mxu0 0.0
    %3900 = vmatmul.mubr.f32.gmra.mrb[0].mxu0 %v253
    %v3901 = vpop.f32.mrb[0].mxu0
    %v3902 = vadd.f32 0.0, %v3901
    %v3903 = vpop.f32.mrb[0].mxu0
    %v3904 = vadd.f32 0.0, %v3903
    %3905 = vmatprep.mubr.f32.mxu0 0.0
    %3906 = vmatmul.mubr.f32.gmra.mrb[0].mxu0 %v256
    %v3907 = vpop.f32.mrb[0].mxu0
    %v3908 = vadd.f32 0.0, %v3907
    %v3909 = vpop.f32.mrb[0].mxu0
    %v3910 = vadd.f32 0.0, %v3909
    %3911 = vmatprep.mubr.f32.mxu0 0.0
    %3912 = vmatmul.mubr.f32.gmra.mrb[0].mxu0 %v259
    %v3913 = vpop.f32.mrb[0].mxu0
    %v3914 = vadd.f32 0.0, %v3913
    %v3915 = vpop.f32.mrb[0].mxu0
    %v3916 = vadd.f32 0.0, %v3915
    %3917 = vmatprep.mubr.f32.mxu0 0.0
    %3918 = vmatmul.mubr.f32.gmra.mrb[0].mxu0 %v262
    %v3919 = vpop.f32.mrb[0].mxu0
    %v3920 = vadd.f32 0.0, %v3919
    %v3921 = vpop.f32.mrb[0].mxu0
    %v3922 = vadd.f32 0.0, %v3921
    %3923 = vmatprep.mubr.f32.mxu0 0.0
    %3924 = vmatmul.mubr.f32.gmra.mrb[0].mxu0 %v265
    %v3925 = vpop.f32.mrb[0].mxu0
    %v3926 = vadd.f32 0.0, %v3925
    %v3927 = vpop.f32.mrb[0].mxu0
    %v3928 = vadd.f32 0.0, %v3927
    %3929 = vmatprep.mubr.f32.mxu0 0.0
    %3930 = vmatmul.mubr.f32.gmra.mrb[0].mxu0 %v3648
    %v3931 = vpop.f32.mrb[0].mxu0
    %v3932 = vadd.f32 0.0, %v3931
    %v3933 = vpop.f32.mrb[0].mxu0
    %v3934 = vadd.f32 0.0, %v3933
    %3935 = vdwg.mxu0
    %3936 = vmatprep.subr.mxu0 %v199
    %3937 = vmatpush1.msra.mxu0 %v198
    %3938 = vmatprep.subr.mxu0 %v207
    %3939 = vmatpush1.msra.mxu0 %v206
    %3940 = vmatprep.subr.mxu0 %v215
    %3941 = vmatpush1.msra.mxu0 %v214
    %3942 = vmatprep.subr.mxu0 %v1518
    %3943 = vmatpush1.msra.mxu0 %v1515
    %3944 = vmatprep.subr.mxu0 0.0
    %3945 = vmatpush1.msra.mxu0 0.0
    %3946 = vmatprep.subr.mxu0 0.0
    %3947 = vmatpush1.msra.mxu0 0.0
    %3948 = vmatprep.subr.mxu0 0.0
    %3949 = vmatpush1.msra.mxu0 0.0
    %3950 = vmatprep.subr.mxu0 0.0
    %3951 = vmatpush1.msra.mxu0 0.0
    %3952 = vmatprep.subr.mxu0 0.0
    %3953 = vmatpush1.msra.mxu0 0.0
    %3954 = vmatprep.subr.mxu0 0.0
    %3955 = vmatpush1.msra.mxu0 0.0
    %3956 = vmatprep.subr.mxu0 0.0
    %3957 = vmatpush1.msra.mxu0 0.0
    %3958 = vmatprep.subr.mxu0 0.0
    %3959 = vmatpush1.msra.mxu0 0.0
    %3960 = vmatprep.subr.mxu0 0.0
    %3961 = vmatpush1.msra.mxu0 0.0
    %3962 = vmatprep.subr.mxu0 0.0
    %3963 = vmatpush1.msra.mxu0 0.0
    %3964 = vmatprep.subr.mxu0 0.0
    %3965 = vmatpush1.msra.mxu0 0.0
    %3966 = vmatprep.subr.mxu0 0.0
    %3967 = vmatpush1.msra.mxu0 0.0
    %3968 = vmatprep.subr.mxu0 0.0
    %3969 = vmatpush1.msra.mxu0 0.0
    %3970 = vmatprep.subr.mxu0 0.0
    %3971 = vmatpush1.msra.mxu0 0.0
    %3972 = vmatprep.subr.mxu0 0.0
    %3973 = vmatpush1.msra.mxu0 0.0
    %3974 = vmatprep.subr.mxu0 0.0
    %3975 = vmatpush1.msra.mxu0 0.0
    %3976 = vmatprep.subr.mxu0 0.0
    %3977 = vmatpush1.msra.mxu0 0.0
    %3978 = vmatprep.subr.mxu0 0.0
    %3979 = vmatpush1.msra.mxu0 0.0
    %3980 = vmatprep.subr.mxu0 0.0
    %3981 = vmatpush1.msra.mxu0 0.0
    %3982 = vmatprep.subr.mxu0 0.0
    %3983 = vmatpush1.msra.mxu0 0.0
    %3984 = vmatprep.subr.mxu0 0.0
    %3985 = vmatpush1.msra.mxu0 0.0
    %3986 = vmatprep.subr.mxu0 0.0
    %3987 = vmatpush1.msra.mxu0 0.0
    %3988 = vmatprep.subr.mxu0 0.0
    %3989 = vmatpush1.msra.mxu0 0.0
    %3990 = vmatprep.subr.mxu0 0.0
    %3991 = vmatpush1.msra.mxu0 0.0
    %3992 = vmatprep.subr.mxu0 0.0
    %3993 = vmatpush1.msra.mxu0 0.0
    %3994 = vmatprep.subr.mxu0 0.0
    %3995 = vmatpush1.msra.mxu0 0.0
    %3996 = vmatprep.subr.mxu0 0.0
    %3997 = vmatpush1.msra.mxu0 0.0
    %3998 = vmatprep.subr.mxu0 0.0
    %3999 = vmatpush1.msra.mxu0 0.0
    %4000 = vmatprep.mubr.f32.mxu0 0.0
    %4001 = vmatmul.mubr.f32.gmra.mrb[0].mxu0 %v232
    %v4002 = vpop.f32.mrb[0].mxu0
    %v4003 = vadd.f32 0.0, %v4002
    %v4004 = vpop.f32.mrb[0].mxu0
    %v4005 = vadd.f32 0.0, %v4004
    %4006 = vmatprep.mubr.f32.mxu0 0.0
    %4007 = vmatmul.mubr.f32.gmra.mrb[0].mxu0 %v235
    %v4008 = vpop.f32.mrb[0].mxu0
    %v4009 = vadd.f32 0.0, %v4008
    %v4010 = vpop.f32.mrb[0].mxu0
    %v4011 = vadd.f32 0.0, %v4010
    %4012 = vmatprep.mubr.f32.mxu0 0.0
    %4013 = vmatmul.mubr.f32.gmra.mrb[0].mxu0 %v238
    %v4014 = vpop.f32.mrb[0].mxu0
    %v4015 = vadd.f32 0.0, %v4014
    %v4016 = vpop.f32.mrb[0].mxu0
    %v4017 = vadd.f32 0.0, %v4016
    %4018 = vmatprep.mubr.f32.mxu0 0.0
    %4019 = vmatmul.mubr.f32.gmra.mrb[0].mxu0 %v241
    %v4020 = vpop.f32.mrb[0].mxu0
    %v4021 = vadd.f32 0.0, %v4020
    %v4022 = vpop.f32.mrb[0].mxu0
    %v4023 = vadd.f32 0.0, %v4022
    %4024 = vmatprep.mubr.f32.mxu0 0.0
    %4025 = vmatmul.mubr.f32.gmra.mrb[0].mxu0 %v244
    %v4026 = vpop.f32.mrb[0].mxu0
    %v4027 = vadd.f32 0.0, %v4026
    %v4028 = vpop.f32.mrb[0].mxu0
    %v4029 = vadd.f32 0.0, %v4028
    %4030 = vmatprep.mubr.f32.mxu0 0.0
    %4031 = vmatmul.mubr.f32.gmra.mrb[0].mxu0 %v247
    %v4032 = vpop.f32.mrb[0].mxu0
    %v4033 = vadd.f32 0.0, %v4032
    %v4034 = vpop.f32.mrb[0].mxu0
    %v4035 = vadd.f32 0.0, %v4034
    %4036 = vmatprep.mubr.f32.mxu0 0.0
    %4037 = vmatmul.mubr.f32.gmra.mrb[0].mxu0 %v250
    %v4038 = vpop.f32.mrb[0].mxu0
    %v4039 = vadd.f32 0.0, %v4038
    %v4040 = vpop.f32.mrb[0].mxu0
    %v4041 = vadd.f32 0.0, %v4040
    %4042 = vmatprep.mubr.f32.mxu0 0.0
    %4043 = vmatmul.mubr.f32.gmra.mrb[0].mxu0 %v253
    %v4044 = vpop.f32.mrb[0].mxu0
    %v4045 = vadd.f32 0.0, %v4044
    %v4046 = vpop.f32.mrb[0].mxu0
    %v4047 = vadd.f32 0.0, %v4046
    %4048 = vmatprep.mubr.f32.mxu0 0.0
    %4049 = vmatmul.mubr.f32.gmra.mrb[0].mxu0 %v256
    %v4050 = vpop.f32.mrb[0].mxu0
    %v4051 = vadd.f32 0.0, %v4050
    %v4052 = vpop.f32.mrb[0].mxu0
    %v4053 = vadd.f32 0.0, %v4052
    %4054 = vmatprep.mubr.f32.mxu0 0.0
    %4055 = vmatmul.mubr.f32.gmra.mrb[0].mxu0 %v259
    %v4056 = vpop.f32.mrb[0].mxu0
    %v4057 = vadd.f32 0.0, %v4056
    %v4058 = vpop.f32.mrb[0].mxu0
    %v4059 = vadd.f32 0.0, %v4058
    %4060 = vmatprep.mubr.f32.mxu0 0.0
    %4061 = vmatmul.mubr.f32.gmra.mrb[0].mxu0 %v262
    %v4062 = vpop.f32.mrb[0].mxu0
    %v4063 = vadd.f32 0.0, %v4062
    %v4064 = vpop.f32.mrb[0].mxu0
    %v4065 = vadd.f32 0.0, %v4064
    %4066 = vmatprep.mubr.f32.mxu0 0.0
    %4067 = vmatmul.mubr.f32.gmra.mrb[0].mxu0 %v265
    %v4068 = vpop.f32.mrb[0].mxu0
    %v4069 = vadd.f32 0.0, %v4068
    %v4070 = vpop.f32.mrb[0].mxu0
    %v4071 = vadd.f32 0.0, %v4070
    %4072 = vmatprep.mubr.f32.mxu0 0.0
    %4073 = vmatmul.mubr.f32.gmra.mrb[0].mxu0 %v3648
    %v4074 = vpop.f32.mrb[0].mxu0
    %v4075 = vadd.f32 0.0, %v4074
    %v4076 = vpop.f32.mrb[0].mxu0
    %v4077 = vadd.f32 0.0, %v4076
    %4078 = vdwg.mxu0
    %4079 = vmatprep.subr.mxu0 %v201
    %4080 = vmatpush1.msra.mxu0 %v200
    %4081 = vmatprep.subr.mxu0 %v209
    %4082 = vmatpush1.msra.mxu0 %v208
    %4083 = vmatprep.subr.mxu0 %v217
    %4084 = vmatpush1.msra.mxu0 %v216
    %4085 = vmatprep.subr.mxu0 %v1524
    %4086 = vmatpush1.msra.mxu0 %v1521
    %4087 = vmatprep.subr.mxu0 0.0
    %4088 = vmatpush1.msra.mxu0 0.0
    %4089 = vmatprep.subr.mxu0 0.0
    %4090 = vmatpush1.msra.mxu0 0.0
    %4091 = vmatprep.subr.mxu0 0.0
    %4092 = vmatpush1.msra.mxu0 0.0
    %4093 = vmatprep.subr.mxu0 0.0
    %4094 = vmatpush1.msra.mxu0 0.0
    %4095 = vmatprep.subr.mxu0 0.0
    %4096 = vmatpush1.msra.mxu0 0.0
    %4097 = vmatprep.subr.mxu0 0.0
    %4098 = vmatpush1.msra.mxu0 0.0
    %4099 = vmatprep.subr.mxu0 0.0
    %4100 = vmatpush1.msra.mxu0 0.0
    %4101 = vmatprep.subr.mxu0 0.0
    %4102 = vmatpush1.msra.mxu0 0.0
    %4103 = vmatprep.subr.mxu0 0.0
    %4104 = vmatpush1.msra.mxu0 0.0
    %4105 = vmatprep.subr.mxu0 0.0
    %4106 = vmatpush1.msra.mxu0 0.0
    %4107 = vmatprep.subr.mxu0 0.0
    %4108 = vmatpush1.msra.mxu0 0.0
    %4109 = vmatprep.subr.mxu0 0.0
    %4110 = vmatpush1.msra.mxu0 0.0
    %4111 = vmatprep.subr.mxu0 0.0
    %4112 = vmatpush1.msra.mxu0 0.0
    %4113 = vmatprep.subr.mxu0 0.0
    %4114 = vmatpush1.msra.mxu0 0.0
    %4115 = vmatprep.subr.mxu0 0.0
    %4116 = vmatpush1.msra.mxu0 0.0
    %4117 = vmatprep.subr.mxu0 0.0
    %4118 = vmatpush1.msra.mxu0 0.0
    %4119 = vmatprep.subr.mxu0 0.0
    %4120 = vmatpush1.msra.mxu0 0.0
    %4121 = vmatprep.subr.mxu0 0.0
    %4122 = vmatpush1.msra.mxu0 0.0
    %4123 = vmatprep.subr.mxu0 0.0
    %4124 = vmatpush1.msra.mxu0 0.0
    %4125 = vmatprep.subr.mxu0 0.0
    %4126 = vmatpush1.msra.mxu0 0.0
    %4127 = vmatprep.subr.mxu0 0.0
    %4128 = vmatpush1.msra.mxu0 0.0
    %4129 = vmatprep.subr.mxu0 0.0
    %4130 = vmatpush1.msra.mxu0 0.0
    %4131 = vmatprep.subr.mxu0 0.0
    %4132 = vmatpush1.msra.mxu0 0.0
    %4133 = vmatprep.subr.mxu0 0.0
    %4134 = vmatpush1.msra.mxu0 0.0
    %4135 = vmatprep.subr.mxu0 0.0
    %4136 = vmatpush1.msra.mxu0 0.0
    %4137 = vmatprep.subr.mxu0 0.0
    %4138 = vmatpush1.msra.mxu0 0.0
    %4139 = vmatprep.subr.mxu0 0.0
    %4140 = vmatpush1.msra.mxu0 0.0
    %4141 = vmatprep.subr.mxu0 0.0
    %4142 = vmatpush1.msra.mxu0 0.0
    %4143 = vmatprep.mubr.f32.mxu0 0.0
    %4144 = vmatmul.mubr.f32.gmra.mrb[0].mxu0 %v232
    %v4145 = vpop.f32.mrb[0].mxu0
    %v4146 = vadd.f32 0.0, %v4145
    %v4147 = vpop.f32.mrb[0].mxu0
    %v4148 = vadd.f32 0.0, %v4147
    %4149 = vmatprep.mubr.f32.mxu0 0.0
    %4150 = vmatmul.mubr.f32.gmra.mrb[0].mxu0 %v235
    %v4151 = vpop.f32.mrb[0].mxu0
    %v4152 = vadd.f32 0.0, %v4151
    %v4153 = vpop.f32.mrb[0].mxu0
    %v4154 = vadd.f32 0.0, %v4153
    %4155 = vmatprep.mubr.f32.mxu0 0.0
    %4156 = vmatmul.mubr.f32.gmra.mrb[0].mxu0 %v238
    %v4157 = vpop.f32.mrb[0].mxu0
    %v4158 = vadd.f32 0.0, %v4157
    %v4159 = vpop.f32.mrb[0].mxu0
    %v4160 = vadd.f32 0.0, %v4159
    %4161 = vmatprep.mubr.f32.mxu0 0.0
    %4162 = vmatmul.mubr.f32.gmra.mrb[0].mxu0 %v241
    %v4163 = vpop.f32.mrb[0].mxu0
    %v4164 = vadd.f32 0.0, %v4163
    %v4165 = vpop.f32.mrb[0].mxu0
    %v4166 = vadd.f32 0.0, %v4165
    %4167 = vmatprep.mubr.f32.mxu0 0.0
    %4168 = vmatmul.mubr.f32.gmra.mrb[0].mxu0 %v244
    %v4169 = vpop.f32.mrb[0].mxu0
    %v4170 = vadd.f32 0.0, %v4169
    %v4171 = vpop.f32.mrb[0].mxu0
    %v4172 = vadd.f32 0.0, %v4171
    %4173 = vmatprep.mubr.f32.mxu0 0.0
    %4174 = vmatmul.mubr.f32.gmra.mrb[0].mxu0 %v247
    %v4175 = vpop.f32.mrb[0].mxu0
    %v4176 = vadd.f32 0.0, %v4175
    %v4177 = vpop.f32.mrb[0].mxu0
    %v4178 = vadd.f32 0.0, %v4177
    %4179 = vmatprep.mubr.f32.mxu0 0.0
    %4180 = vmatmul.mubr.f32.gmra.mrb[0].mxu0 %v250
    %v4181 = vpop.f32.mrb[0].mxu0
    %v4182 = vadd.f32 0.0, %v4181
    %v4183 = vpop.f32.mrb[0].mxu0
    %v4184 = vadd.f32 0.0, %v4183
    %4185 = vmatprep.mubr.f32.mxu0 0.0
    %4186 = vmatmul.mubr.f32.gmra.mrb[0].mxu0 %v253
    %v4187 = vpop.f32.mrb[0].mxu0
    %v4188 = vadd.f32 0.0, %v4187
    %v4189 = vpop.f32.mrb[0].mxu0
    %v4190 = vadd.f32 0.0, %v4189
    %4191 = vmatprep.mubr.f32.mxu0 0.0
    %4192 = vmatmul.mubr.f32.gmra.mrb[0].mxu0 %v256
    %v4193 = vpop.f32.mrb[0].mxu0
    %v4194 = vadd.f32 0.0, %v4193
    %v4195 = vpop.f32.mrb[0].mxu0
    %v4196 = vadd.f32 0.0, %v4195
    %4197 = vmatprep.mubr.f32.mxu0 0.0
    %4198 = vmatmul.mubr.f32.gmra.mrb[0].mxu0 %v259
    %v4199 = vpop.f32.mrb[0].mxu0
    %v4200 = vadd.f32 0.0, %v4199
    %v4201 = vpop.f32.mrb[0].mxu0
    %v4202 = vadd.f32 0.0, %v4201
    %4203 = vmatprep.mubr.f32.mxu0 0.0
    %4204 = vmatmul.mubr.f32.gmra.mrb[0].mxu0 %v262
    %v4205 = vpop.f32.mrb[0].mxu0
    %v4206 = vadd.f32 0.0, %v4205
    %v4207 = vpop.f32.mrb[0].mxu0
    %v4208 = vadd.f32 0.0, %v4207
    %4209 = vmatprep.mubr.f32.mxu0 0.0
    %4210 = vmatmul.mubr.f32.gmra.mrb[0].mxu0 %v265
    %v4211 = vpop.f32.mrb[0].mxu0
    %v4212 = vadd.f32 0.0, %v4211
    %v4213 = vpop.f32.mrb[0].mxu0
    %v4214 = vadd.f32 0.0, %v4213
    %4215 = vmatprep.mubr.f32.mxu0 0.0
    %4216 = vmatmul.mubr.f32.gmra.mrb[0].mxu0 %v3648
    %v4217 = vpop.f32.mrb[0].mxu0
    %v4218 = vadd.f32 0.0, %v4217
    %v4219 = vpop.f32.mrb[0].mxu0
    %v4220 = vadd.f32 0.0, %v4219
    %4221 = vdwg.mxu0
    %v4222 = vadd.f32 %v3142, %v3717
    %v4223 = vadd.f32 %v3144, %v3719
    %v4224 = vadd.f32 %v3285, %v3860
    %v4225 = vadd.f32 %v3287, %v3862
    %v4226 = vadd.f32 %v3428, %v4003
    %v4227 = vadd.f32 %v3430, %v4005
    %v4228 = vadd.f32 %v3571, %v4146
    %v4229 = vadd.f32 %v3573, %v4148
    %v4230 = vadd.f32 %v3148, %v3723
    %v4231 = vadd.f32 %v3150, %v3725
    %v4232 = vadd.f32 %v3291, %v3866
    %v4233 = vadd.f32 %v3293, %v3868
    %v4234 = vadd.f32 %v3434, %v4009
    %v4235 = vadd.f32 %v3436, %v4011
    %v4236 = vadd.f32 %v3577, %v4152
    %v4237 = vadd.f32 %v3579, %v4154
    %v4238 = vadd.f32 %v3154, %v3729
    %v4239 = vadd.f32 %v3156, %v3731
    %v4240 = vadd.f32 %v3297, %v3872
    %v4241 = vadd.f32 %v3299, %v3874
    %v4242 = vadd.f32 %v3440, %v4015
    %v4243 = vadd.f32 %v3442, %v4017
    %v4244 = vadd.f32 %v3583, %v4158
    %v4245 = vadd.f32 %v3585, %v4160
    %v4246 = vadd.f32 %v3160, %v3735
    %v4247 = vadd.f32 %v3162, %v3737
    %v4248 = vadd.f32 %v3303, %v3878
    %v4249 = vadd.f32 %v3305, %v3880
    %v4250 = vadd.f32 %v3446, %v4021
    %v4251 = vadd.f32 %v3448, %v4023
    %v4252 = vadd.f32 %v3589, %v4164
    %v4253 = vadd.f32 %v3591, %v4166
    %v4254 = vadd.f32 %v3166, %v3741
    %v4255 = vadd.f32 %v3168, %v3743
    %v4256 = vadd.f32 %v3309, %v3884
    %v4257 = vadd.f32 %v3311, %v3886
    %v4258 = vadd.f32 %v3452, %v4027
    %v4259 = vadd.f32 %v3454, %v4029
    %v4260 = vadd.f32 %v3595, %v4170
    %v4261 = vadd.f32 %v3597, %v4172
    %v4262 = vadd.f32 %v3172, %v3747
    %v4263 = vadd.f32 %v3174, %v3749
    %v4264 = vadd.f32 %v3315, %v3890
    %v4265 = vadd.f32 %v3317, %v3892
    %v4266 = vadd.f32 %v3458, %v4033
    %v4267 = vadd.f32 %v3460, %v4035
    %v4268 = vadd.f32 %v3601, %v4176
    %v4269 = vadd.f32 %v3603, %v4178
    %v4270 = vadd.f32 %v3178, %v3753
    %v4271 = vadd.f32 %v3180, %v3755
    %v4272 = vadd.f32 %v3321, %v3896
    %v4273 = vadd.f32 %v3323, %v3898
    %v4274 = vadd.f32 %v3464, %v4039
    %v4275 = vadd.f32 %v3466, %v4041
    %v4276 = vadd.f32 %v3607, %v4182
    %v4277 = vadd.f32 %v3609, %v4184
    %v4278 = vadd.f32 %v3184, %v3759
    %v4279 = vadd.f32 %v3186, %v3761
    %v4280 = vadd.f32 %v3327, %v3902
    %v4281 = vadd.f32 %v3329, %v3904
    %v4282 = vadd.f32 %v3470, %v4045
    %v4283 = vadd.f32 %v3472, %v4047
    %v4284 = vadd.f32 %v3613, %v4188
    %v4285 = vadd.f32 %v3615, %v4190
    %v4286 = vadd.f32 %v3190, %v3765
    %v4287 = vadd.f32 %v3192, %v3767
    %v4288 = vadd.f32 %v3333, %v3908
    %v4289 = vadd.f32 %v3335, %v3910
    %v4290 = vadd.f32 %v3476, %v4051
    %v4291 = vadd.f32 %v3478, %v4053
    %v4292 = vadd.f32 %v3619, %v4194
    %v4293 = vadd.f32 %v3621, %v4196
    %v4294 = vadd.f32 %v3196, %v3771
    %v4295 = vadd.f32 %v3198, %v3773
    %v4296 = vadd.f32 %v3339, %v3914
    %v4297 = vadd.f32 %v3341, %v3916
    %v4298 = vadd.f32 %v3482, %v4057
    %v4299 = vadd.f32 %v3484, %v4059
    %v4300 = vadd.f32 %v3625, %v4200
    %v4301 = vadd.f32 %v3627, %v4202
    %v4302 = vadd.f32 %v3202, %v3777
    %v4303 = vadd.f32 %v3204, %v3779
    %v4304 = vadd.f32 %v3345, %v3920
    %v4305 = vadd.f32 %v3347, %v3922
    %v4306 = vadd.f32 %v3488, %v4063
    %v4307 = vadd.f32 %v3490, %v4065
    %v4308 = vadd.f32 %v3631, %v4206
    %v4309 = vadd.f32 %v3633, %v4208
    %v4310 = vadd.f32 %v3208, %v3783
    %v4311 = vadd.f32 %v3210, %v3785
    %v4312 = vadd.f32 %v3351, %v3926
    %v4313 = vadd.f32 %v3353, %v3928
    %v4314 = vadd.f32 %v3494, %v4069
    %v4315 = vadd.f32 %v3496, %v4071
    %v4316 = vadd.f32 %v3637, %v4212
    %v4317 = vadd.f32 %v3639, %v4214
    %v4318 = vadd.f32 %v3214, %v3789
    %v4319 = vadd.f32 %v3216, %v3791
    %v4320 = vadd.f32 %v3357, %v3932
    %v4321 = vadd.f32 %v3359, %v3934
    %v4322 = vadd.f32 %v3500, %v4075
    %v4323 = vadd.f32 %v3502, %v4077
    %v4324 = vadd.f32 %v3643, %v4218
    %v4325 = vadd.f32 %v3645, %v4220
    %v4326 = vadd.f32 %v4222, %v2206
    %v4327 = vadd.f32 %v4223, %v2210
    %v4328 = vadd.f32 %v4224, %v2214
    %v4329 = vadd.f32 %v4225, %v2218
    %v4330 = vadd.f32 %v4226, %v2222
    %v4331 = vadd.f32 %v4227, %v2226
    %v4332 = vadd.f32 %v4228, %v2230
    %v4333 = vadd.f32 %v4229, %v2234
    %v4334 = vadd.f32 %v4230, %v2206
    %v4335 = vadd.f32 %v4231, %v2210
    %v4336 = vadd.f32 %v4232, %v2214
    %v4337 = vadd.f32 %v4233, %v2218
    %v4338 = vadd.f32 %v4234, %v2222
    %v4339 = vadd.f32 %v4235, %v2226
    %v4340 = vadd.f32 %v4236, %v2230
    %v4341 = vadd.f32 %v4237, %v2234
    %v4342 = vadd.f32 %v4238, %v2206
    %v4343 = vadd.f32 %v4239, %v2210
    %v4344 = vadd.f32 %v4240, %v2214
    %v4345 = vadd.f32 %v4241, %v2218
    %v4346 = vadd.f32 %v4242, %v2222
    %v4347 = vadd.f32 %v4243, %v2226
    %v4348 = vadd.f32 %v4244, %v2230
    %v4349 = vadd.f32 %v4245, %v2234
    %v4350 = vadd.f32 %v4246, %v2206
    %v4351 = vadd.f32 %v4247, %v2210
    %v4352 = vadd.f32 %v4248, %v2214
    %v4353 = vadd.f32 %v4249, %v2218
    %v4354 = vadd.f32 %v4250, %v2222
    %v4355 = vadd.f32 %v4251, %v2226
    %v4356 = vadd.f32 %v4252, %v2230
    %v4357 = vadd.f32 %v4253, %v2234
    %v4358 = vadd.f32 %v4254, %v2206
    %v4359 = vadd.f32 %v4255, %v2210
    %v4360 = vadd.f32 %v4256, %v2214
    %v4361 = vadd.f32 %v4257, %v2218
    %v4362 = vadd.f32 %v4258, %v2222
    %v4363 = vadd.f32 %v4259, %v2226
    %v4364 = vadd.f32 %v4260, %v2230
    %v4365 = vadd.f32 %v4261, %v2234
    %v4366 = vadd.f32 %v4262, %v2206
    %v4367 = vadd.f32 %v4263, %v2210
    %v4368 = vadd.f32 %v4264, %v2214
    %v4369 = vadd.f32 %v4265, %v2218
    %v4370 = vadd.f32 %v4266, %v2222
    %v4371 = vadd.f32 %v4267, %v2226
    %v4372 = vadd.f32 %v4268, %v2230
    %v4373 = vadd.f32 %v4269, %v2234
    %v4374 = vadd.f32 %v4270, %v2206
    %v4375 = vadd.f32 %v4271, %v2210
    %v4376 = vadd.f32 %v4272, %v2214
    %v4377 = vadd.f32 %v4273, %v2218
    %v4378 = vadd.f32 %v4274, %v2222
    %v4379 = vadd.f32 %v4275, %v2226
    %v4380 = vadd.f32 %v4276, %v2230
    %v4381 = vadd.f32 %v4277, %v2234
    %v4382 = vadd.f32 %v4278, %v2206
    %v4383 = vadd.f32 %v4279, %v2210
    %v4384 = vadd.f32 %v4280, %v2214
    %v4385 = vadd.f32 %v4281, %v2218
    %v4386 = vadd.f32 %v4282, %v2222
    %v4387 = vadd.f32 %v4283, %v2226
    %v4388 = vadd.f32 %v4284, %v2230
    %v4389 = vadd.f32 %v4285, %v2234
    %v4390 = vadd.f32 %v4286, %v2206
    %v4391 = vadd.f32 %v4287, %v2210
    %v4392 = vadd.f32 %v4288, %v2214
    %v4393 = vadd.f32 %v4289, %v2218
    %v4394 = vadd.f32 %v4290, %v2222
    %v4395 = vadd.f32 %v4291, %v2226
    %v4396 = vadd.f32 %v4292, %v2230
    %v4397 = vadd.f32 %v4293, %v2234
    %v4398 = vadd.f32 %v4294, %v2206
    %v4399 = vadd.f32 %v4295, %v2210
    %v4400 = vadd.f32 %v4296, %v2214
    %v4401 = vadd.f32 %v4297, %v2218
    %v4402 = vadd.f32 %v4298, %v2222
    %v4403 = vadd.f32 %v4299, %v2226
    %v4404 = vadd.f32 %v4300, %v2230
    %v4405 = vadd.f32 %v4301, %v2234
    %v4406 = vadd.f32 %v4302, %v2206
    %v4407 = vadd.f32 %v4303, %v2210
    %v4408 = vadd.f32 %v4304, %v2214
    %v4409 = vadd.f32 %v4305, %v2218
    %v4410 = vadd.f32 %v4306, %v2222
    %v4411 = vadd.f32 %v4307, %v2226
    %v4412 = vadd.f32 %v4308, %v2230
    %v4413 = vadd.f32 %v4309, %v2234
    %v4414 = vadd.f32 %v4310, %v2206
    %v4415 = vadd.f32 %v4311, %v2210
    %v4416 = vadd.f32 %v4312, %v2214
    %v4417 = vadd.f32 %v4313, %v2218
    %v4418 = vadd.f32 %v4314, %v2222
    %v4419 = vadd.f32 %v4315, %v2226
    %v4420 = vadd.f32 %v4316, %v2230
    %v4421 = vadd.f32 %v4317, %v2234
    %v4422 = vadd.f32 %v4318, %v2206
    %v4423 = vadd.f32 %v4319, %v2210
    %v4424 = vadd.f32 %v4320, %v2214
    %v4425 = vadd.f32 %v4321, %v2218
    %v4426 = vadd.f32 %v4322, %v2222
    %v4427 = vadd.f32 %v4323, %v2226
    %v4428 = vadd.f32 %v4324, %v2230
    %v4429 = vadd.f32 %v4325, %v2234
    %v4430 = vmax.f32 %v4326, 0.0
    %v4431 = vmax.f32 %v4327, 0.0
    %v4432 = vmax.f32 %v4328, 0.0
    %v4433 = vmax.f32 %v4329, 0.0
    %v4434 = vmax.f32 %v4330, 0.0
    %v4435 = vmax.f32 %v4331, 0.0
    %v4436 = vmax.f32 %v4332, 0.0
    %v4437 = vmax.f32 %v4333, 0.0
    %v4438 = vmax.f32 %v4334, 0.0
    %v4439 = vmax.f32 %v4335, 0.0
    %v4440 = vmax.f32 %v4336, 0.0
    %v4441 = vmax.f32 %v4337, 0.0
    %v4442 = vmax.f32 %v4338, 0.0
    %v4443 = vmax.f32 %v4339, 0.0
    %v4444 = vmax.f32 %v4340, 0.0
    %v4445 = vmax.f32 %v4341, 0.0
    %v4446 = vmax.f32 %v4342, 0.0
    %v4447 = vmax.f32 %v4343, 0.0
    %v4448 = vmax.f32 %v4344, 0.0
    %v4449 = vmax.f32 %v4345, 0.0
    %v4450 = vmax.f32 %v4346, 0.0
    %v4451 = vmax.f32 %v4347, 0.0
    %v4452 = vmax.f32 %v4348, 0.0
    %v4453 = vmax.f32 %v4349, 0.0
    %v4454 = vmax.f32 %v4350, 0.0
    %v4455 = vmax.f32 %v4351, 0.0
    %v4456 = vmax.f32 %v4352, 0.0
    %v4457 = vmax.f32 %v4353, 0.0
    %v4458 = vmax.f32 %v4354, 0.0
    %v4459 = vmax.f32 %v4355, 0.0
    %v4460 = vmax.f32 %v4356, 0.0
    %v4461 = vmax.f32 %v4357, 0.0
    %v4462 = vmax.f32 %v4358, 0.0
    %v4463 = vmax.f32 %v4359, 0.0
    %v4464 = vmax.f32 %v4360, 0.0
    %v4465 = vmax.f32 %v4361, 0.0
    %v4466 = vmax.f32 %v4362, 0.0
    %v4467 = vmax.f32 %v4363, 0.0
    %v4468 = vmax.f32 %v4364, 0.0
    %v4469 = vmax.f32 %v4365, 0.0
    %v4470 = vmax.f32 %v4366, 0.0
    %v4471 = vmax.f32 %v4367, 0.0
    %v4472 = vmax.f32 %v4368, 0.0
    %v4473 = vmax.f32 %v4369, 0.0
    %v4474 = vmax.f32 %v4370, 0.0
    %v4475 = vmax.f32 %v4371, 0.0
    %v4476 = vmax.f32 %v4372, 0.0
    %v4477 = vmax.f32 %v4373, 0.0
    %v4478 = vmax.f32 %v4374, 0.0
    %v4479 = vmax.f32 %v4375, 0.0
    %v4480 = vmax.f32 %v4376, 0.0
    %v4481 = vmax.f32 %v4377, 0.0
    %v4482 = vmax.f32 %v4378, 0.0
    %v4483 = vmax.f32 %v4379, 0.0
    %v4484 = vmax.f32 %v4380, 0.0
    %v4485 = vmax.f32 %v4381, 0.0
    %v4486 = vmax.f32 %v4382, 0.0
    %v4487 = vmax.f32 %v4383, 0.0
    %v4488 = vmax.f32 %v4384, 0.0
    %v4489 = vmax.f32 %v4385, 0.0
    %v4490 = vmax.f32 %v4386, 0.0
    %v4491 = vmax.f32 %v4387, 0.0
    %v4492 = vmax.f32 %v4388, 0.0
    %v4493 = vmax.f32 %v4389, 0.0
    %v4494 = vmax.f32 %v4390, 0.0
    %v4495 = vmax.f32 %v4391, 0.0
    %v4496 = vmax.f32 %v4392, 0.0
    %v4497 = vmax.f32 %v4393, 0.0
    %v4498 = vmax.f32 %v4394, 0.0
    %v4499 = vmax.f32 %v4395, 0.0
    %v4500 = vmax.f32 %v4396, 0.0
    %v4501 = vmax.f32 %v4397, 0.0
    %v4502 = vmax.f32 %v4398, 0.0
    %v4503 = vmax.f32 %v4399, 0.0
    %v4504 = vmax.f32 %v4400, 0.0
    %v4505 = vmax.f32 %v4401, 0.0
    %v4506 = vmax.f32 %v4402, 0.0
    %v4507 = vmax.f32 %v4403, 0.0
    %v4508 = vmax.f32 %v4404, 0.0
    %v4509 = vmax.f32 %v4405, 0.0
    %v4510 = vmax.f32 %v4406, 0.0
    %v4511 = vmax.f32 %v4407, 0.0
    %v4512 = vmax.f32 %v4408, 0.0
    %v4513 = vmax.f32 %v4409, 0.0
    %v4514 = vmax.f32 %v4410, 0.0
    %v4515 = vmax.f32 %v4411, 0.0
    %v4516 = vmax.f32 %v4412, 0.0
    %v4517 = vmax.f32 %v4413, 0.0
    %v4518 = vmax.f32 %v4414, 0.0
    %v4519 = vmax.f32 %v4415, 0.0
    %v4520 = vmax.f32 %v4416, 0.0
    %v4521 = vmax.f32 %v4417, 0.0
    %v4522 = vmax.f32 %v4418, 0.0
    %v4523 = vmax.f32 %v4419, 0.0
    %v4524 = vmax.f32 %v4420, 0.0
    %v4525 = vmax.f32 %v4421, 0.0
    %v4526 = vmax.f32 %v4422, 0.0
    %v4527 = vmax.f32 %v4423, 0.0
    %v4528 = vmax.f32 %v4424, 0.0
    %v4529 = vmax.f32 %v4425, 0.0
    %v4530 = vmax.f32 %v4426, 0.0
    %v4531 = vmax.f32 %v4427, 0.0
    %v4532 = vmax.f32 %v4428, 0.0
    %v4533 = vmax.f32 %v4429, 0.0
    %v4534 = vmax.f32 %v4430, %v4434
    %v4535 = vmax.f32 %v4431, %v4435
    %v4536 = vmax.f32 %v4432, %v4436
    %v4537 = vmax.f32 %v4433, %v4437
    %v4538 = vmax.f32 %v4438, %v4442
    %v4539 = vmax.f32 %v4439, %v4443
    %v4540 = vmax.f32 %v4440, %v4444
    %v4541 = vmax.f32 %v4441, %v4445
    %v4542 = vmax.f32 %v4446, %v4450
    %v4543 = vmax.f32 %v4447, %v4451
    %v4544 = vmax.f32 %v4448, %v4452
    %v4545 = vmax.f32 %v4449, %v4453
    %v4546 = vmax.f32 %v4454, %v4458
    %v4547 = vmax.f32 %v4455, %v4459
    %v4548 = vmax.f32 %v4456, %v4460
    %v4549 = vmax.f32 %v4457, %v4461
    %v4550 = vmax.f32 %v4462, %v4466
    %v4551 = vmax.f32 %v4463, %v4467
    %v4552 = vmax.f32 %v4464, %v4468
    %v4553 = vmax.f32 %v4465, %v4469
    %v4554 = vmax.f32 %v4470, %v4474
    %v4555 = vmax.f32 %v4471, %v4475
    %v4556 = vmax.f32 %v4472, %v4476
    %v4557 = vmax.f32 %v4473, %v4477
    %v4558 = vmax.f32 %v4478, %v4482
    %v4559 = vmax.f32 %v4479, %v4483
    %v4560 = vmax.f32 %v4480, %v4484
    %v4561 = vmax.f32 %v4481, %v4485
    %v4562 = vmax.f32 %v4486, %v4490
    %v4563 = vmax.f32 %v4487, %v4491
    %v4564 = vmax.f32 %v4488, %v4492
    %v4565 = vmax.f32 %v4489, %v4493
    %v4566 = vmax.f32 %v4494, %v4498
    %v4567 = vmax.f32 %v4495, %v4499
    %v4568 = vmax.f32 %v4496, %v4500
    %v4569 = vmax.f32 %v4497, %v4501
    %v4570 = vmax.f32 %v4502, %v4506
    %v4571 = vmax.f32 %v4503, %v4507
    %v4572 = vmax.f32 %v4504, %v4508
    %v4573 = vmax.f32 %v4505, %v4509
    %v4574 = vmax.f32 %v4510, %v4514
    %v4575 = vmax.f32 %v4511, %v4515
    %v4576 = vmax.f32 %v4512, %v4516
    %v4577 = vmax.f32 %v4513, %v4517
    %v4578 = vmax.f32 %v4518, %v4522
    %v4579 = vmax.f32 %v4519, %v4523
    %v4580 = vmax.f32 %v4520, %v4524
    %v4581 = vmax.f32 %v4521, %v4525
    %v4582 = vmax.f32 %v4526, %v4530
    %v4583 = vmax.f32 %v4527, %v4531
    %v4584 = vmax.f32 %v4528, %v4532
    %v4585 = vmax.f32 %v4529, %v4533
    %v4586 = vmax.f32 %v2451, %v4534
    %v4587 = vmax.f32 %v2452, %v4535
    %v4588 = vmax.f32 %v2453, %v4536
    %v4589 = vmax.f32 %v2454, %v4537
    %v4590 = vmax.f32 %v2455, %v4538
    %v4591 = vmax.f32 %v2456, %v4539
    %v4592 = vmax.f32 %v2457, %v4540
    %v4593 = vmax.f32 %v2458, %v4541
    %v4594 = vmax.f32 %v2459, %v4542
    %v4595 = vmax.f32 %v2460, %v4543
    %v4596 = vmax.f32 %v2461, %v4544
    %v4597 = vmax.f32 %v2462, %v4545
    %v4598 = vmax.f32 %v2463, %v4546
    %v4599 = vmax.f32 %v2464, %v4547
    %v4600 = vmax.f32 %v2465, %v4548
    %v4601 = vmax.f32 %v2466, %v4549
    %v4602 = vmax.f32 %v2467, %v4550
    %v4603 = vmax.f32 %v2468, %v4551
    %v4604 = vmax.f32 %v2469, %v4552
    %v4605 = vmax.f32 %v2470, %v4553
    %v4606 = vmax.f32 %v2471, %v4554
    %v4607 = vmax.f32 %v2472, %v4555
    %v4608 = vmax.f32 %v2473, %v4556
    %v4609 = vmax.f32 %v2474, %v4557
    %v4610 = vmax.f32 %v2475, %v4558
    %v4611 = vmax.f32 %v2476, %v4559
    %v4612 = vmax.f32 %v2477, %v4560
    %v4613 = vmax.f32 %v2478, %v4561
    %v4614 = vmax.f32 %v2479, %v4562
    %v4615 = vmax.f32 %v2480, %v4563
    %v4616 = vmax.f32 %v2481, %v4564
    %v4617 = vmax.f32 %v2482, %v4565
    %v4618 = vmax.f32 %v2483, %v4566
    %v4619 = vmax.f32 %v2484, %v4567
    %v4620 = vmax.f32 %v2485, %v4568
    %v4621 = vmax.f32 %v2486, %v4569
    %v4622 = vmax.f32 %v2487, %v4570
    %v4623 = vmax.f32 %v2488, %v4571
    %v4624 = vmax.f32 %v2489, %v4572
    %v4625 = vmax.f32 %v2490, %v4573
    %v4626 = vmax.f32 %v2491, %v4574
    %v4627 = vmax.f32 %v2492, %v4575
    %v4628 = vmax.f32 %v2493, %v4576
    %v4629 = vmax.f32 %v2494, %v4577
    %v4630 = vmax.f32 %v2495, %v4578
    %v4631 = vmax.f32 %v2496, %v4579
    %v4632 = vmax.f32 %v2497, %v4580
    %v4633 = vmax.f32 %v2498, %v4581
    %v4634 = vmax.f32 %v2499, %v4582
    %v4635 = vmax.f32 %v2500, %v4583
    %v4636 = vmax.f32 %v2501, %v4584
    %v4637 = vmax.f32 %v2502, %v4585
    %v4638 = vld [vmem:[#allocation6] sm:$0xff]
    %v4639 = vld [vmem:[#allocation6 + $0x8] sm:$0xff]
    %v4640 = vld [vmem:[#allocation6 + $0x10] sm:$0xff]
    %v4641 = vld [vmem:[#allocation6 + $0x18] sm:$0xff]
    %v4642 = vld [vmem:[#allocation6 + $0x20] sm:$0xff]
    %v4643 = vld [vmem:[#allocation6 + $0x28] sm:$0xff]
    %v4644 = vld [vmem:[#allocation6 + $0x30] sm:$0xff]
    %v4645 = vld [vmem:[#allocation6 + $0x38] sm:$0xff]
    %v4646 = vld [vmem:[#allocation6 + $0x40] sm:$0xff]
    %v4647 = vld [vmem:[#allocation6 + $0x48] sm:$0xff]
    %v4648 = vld [vmem:[#allocation6 + $0x50] sm:$0xff]
    %v4649 = vld [vmem:[#allocation6 + $0x58] sm:$0xff]
    %v4650 = vld [vmem:[#allocation6 + $0x60] sm:$0xff]
    %v4651 = vld [vmem:[#allocation6 + $0x68] sm:$0xff]
    %v4652 = vld [vmem:[#allocation6 + $0x70] sm:$0xff]
    %v4653 = vld [vmem:[#allocation6 + $0x78] sm:$0xff]
    %v4654 = vld [vmem:[#allocation6 + $0x80] sm:$0xff]
    %v4655 = vld [vmem:[#allocation6 + $0x88] sm:$0xff]
    %v4656 = vld [vmem:[#allocation6 + $0x90] sm:$0xff]
    %v4657 = vld [vmem:[#allocation6 + $0x98] sm:$0xff]
    %v4658 = vld [vmem:[#allocation6 + $0xa0] sm:$0xff]
    %v4659 = vld [vmem:[#allocation6 + $0xa8] sm:$0xff]
    %v4660 = vld [vmem:[#allocation6 + $0xb0] sm:$0xff]
    %v4661 = vld [vmem:[#allocation6 + $0xb8] sm:$0xff]
    %v4662 = vld [vmem:[#allocation6 + $0xc0] sm:$0xff]
    %v4663 = vld [vmem:[#allocation6 + $0xc8] sm:$0xff]
    %v4664 = vld [vmem:[#allocation6 + $0xd0] sm:$0xff]
    %v4665 = vld [vmem:[#allocation6 + $0xd8] sm:$0xff]
    %v4666 = vld [vmem:[#allocation6 + $0xe0] sm:$0xff]
    %v4667 = vld [vmem:[#allocation6 + $0xe8] sm:$0xff]
    %v4668 = vld [vmem:[#allocation6 + $0xf0] sm:$0xff]
    %v4669 = vld [vmem:[#allocation6 + $0xf8] sm:$0xff]
    %v4670 = vld [vmem:[#allocation6 + $0x100] sm:$0xff]
    %v4671 = vld [vmem:[#allocation6 + $0x108] sm:$0xff]
    %v4672 = vld [vmem:[#allocation6 + $0x110] sm:$0xff]
    %v4673 = vld [vmem:[#allocation6 + $0x118] sm:$0xff]
    %v4674 = vld [vmem:[#allocation6 + $0x120] sm:$0xff]
    %v4675 = vld [vmem:[#allocation6 + $0x128] sm:$0xff]
    %v4676 = vld [vmem:[#allocation6 + $0x130] sm:$0xff]
    %v4677 = vld [vmem:[#allocation6 + $0x138] sm:$0xff]
    %v4678 = vld [vmem:[#allocation6 + $0x140] sm:$0xff]
    %v4679 = vld [vmem:[#allocation6 + $0x148] sm:$0xff]
    %v4680 = vld [vmem:[#allocation6 + $0x150] sm:$0xff]
    %v4681 = vld [vmem:[#allocation6 + $0x158] sm:$0xff]
    %v4682 = vld [vmem:[#allocation6 + $0x160] sm:$0xff]
    %v4683 = vld [vmem:[#allocation6 + $0x168] sm:$0xff]
    %v4684 = vld [vmem:[#allocation6 + $0x170] sm:$0xff]
    %v4685 = vld [vmem:[#allocation6 + $0x178] sm:$0xff]
    %v4686 = vld [vmem:[#allocation6 + $0x180] sm:$0xff]
    %v4687 = vld [vmem:[#allocation6 + $0x188] sm:$0xff]
    %v4688 = vld [vmem:[#allocation6 + $0x190] sm:$0xff]
    %v4689 = vld [vmem:[#allocation6 + $0x198] sm:$0xff]
    %v4690 = vld [vmem:[#allocation6 + $0x1a0] sm:$0xff]
    %v4691 = vld [vmem:[#allocation6 + $0x1a8] sm:$0xff]
    %v4692 = vld [vmem:[#allocation6 + $0x1b0] sm:$0xff]
    %v4693 = vld [vmem:[#allocation6 + $0x1b8] sm:$0xff]
    %v4694 = vld [vmem:[#allocation6 + $0x1c0] sm:$0xff]
    %v4695 = vld [vmem:[#allocation6 + $0x1c8] sm:$0xff]
    %v4696 = vld [vmem:[#allocation6 + $0x1d0] sm:$0xff]
    %v4697 = vld [vmem:[#allocation6 + $0x1d8] sm:$0xff]
    %v4698 = vld [vmem:[#allocation6 + $0x1e0] sm:$0xff]
    %v4699 = vld [vmem:[#allocation6 + $0x1e8] sm:$0xff]
    %v4700 = vld [vmem:[#allocation6 + $0x1f0] sm:$0xff]
    %v4701 = vld [vmem:[#allocation6 + $0x1f8] sm:$0xff]
    %v4702 = vld [vmem:[#allocation6 + $0x200] sm:$0xff]
    %v4703 = vld [vmem:[#allocation6 + $0x208] sm:$0xff]
    %v4704 = vld [vmem:[#allocation6 + $0x210] sm:$0xff]
    %v4705 = vld [vmem:[#allocation6 + $0x218] sm:$0xff]
    %v4706 = vld [vmem:[#allocation6 + $0x220] sm:$0xff]
    %v4707 = vld [vmem:[#allocation6 + $0x228] sm:$0xff]
    %v4708 = vld [vmem:[#allocation6 + $0x230] sm:$0xff]
    %v4709 = vld [vmem:[#allocation6 + $0x238] sm:$0xff]
    %v4710 = vld [vmem:[#allocation6 + $0x240] sm:$0xff]
    %v4711 = vld [vmem:[#allocation6 + $0x248] sm:$0xff]
    %v4712 = vld [vmem:[#allocation6 + $0x250] sm:$0xff]
    %v4713 = vld [vmem:[#allocation6 + $0x258] sm:$0xff]
    %v4714 = vld [vmem:[#allocation6 + $0x260] sm:$0xff]
    %v4715 = vld [vmem:[#allocation6 + $0x268] sm:$0xff]
    %v4716 = vld [vmem:[#allocation6 + $0x270] sm:$0xff]
    %v4717 = vld [vmem:[#allocation6 + $0x278] sm:$0xff]
    %v4718 = vld [vmem:[#allocation6 + $0x280] sm:$0xff]
    %v4719 = vld [vmem:[#allocation6 + $0x288] sm:$0xff]
    %v4720 = vld [vmem:[#allocation6 + $0x290] sm:$0xff]
    %v4721 = vld [vmem:[#allocation6 + $0x298] sm:$0xff]
    %v4722 = vld [vmem:[#allocation6 + $0x2a0] sm:$0xff]
    %v4723 = vld [vmem:[#allocation6 + $0x2a8] sm:$0xff]
    %v4724 = vld [vmem:[#allocation6 + $0x2b0] sm:$0xff]
    %v4725 = vld [vmem:[#allocation6 + $0x2b8] sm:$0xff]
    %v4726 = vld [vmem:[#allocation6 + $0x2c0] sm:$0xff]
    %v4727 = vld [vmem:[#allocation6 + $0x2c8] sm:$0xff]
    %v4728 = vld [vmem:[#allocation6 + $0x2d0] sm:$0xff]
    %v4729 = vld [vmem:[#allocation6 + $0x2d8] sm:$0xff]
    %v4730 = vld [vmem:[#allocation6 + $0x2e0] sm:$0xff]
    %v4731 = vld [vmem:[#allocation6 + $0x2e8] sm:$0xff]
    %v4732 = vld [vmem:[#allocation6 + $0x2f0] sm:$0xff]
    %v4733 = vld [vmem:[#allocation6 + $0x2f8] sm:$0xff]
    %v4734 = vld [vmem:[#allocation6 + $0x300] sm:$0xff]
    %v4735 = vld [vmem:[#allocation6 + $0x308] sm:$0xff]
    %v4736 = vld [vmem:[#allocation6 + $0x310] sm:$0xff]
    %v4737 = vld [vmem:[#allocation6 + $0x318] sm:$0xff]
    %v4738 = vld [vmem:[#allocation6 + $0x320] sm:$0xff]
    %v4739 = vld [vmem:[#allocation6 + $0x328] sm:$0xff]
    %v4740 = vld [vmem:[#allocation6 + $0x330] sm:$0xff]
    %v4741 = vld [vmem:[#allocation6 + $0x338] sm:$0xff]
    %v4742 = vld [vmem:[#allocation6 + $0x340] sm:$0xff]
    %v4743 = vld [vmem:[#allocation6 + $0x348] sm:$0xff]
    %v4744 = vld [vmem:[#allocation6 + $0x350] sm:$0xff]
    %v4745 = vld [vmem:[#allocation6 + $0x358] sm:$0xff]
    %v4746 = vld [vmem:[#allocation6 + $0x360] sm:$0xff]
    %v4747 = vld [vmem:[#allocation6 + $0x368] sm:$0xff]
    %v4748 = vld [vmem:[#allocation6 + $0x370] sm:$0xff]
    %v4749 = vld [vmem:[#allocation6 + $0x378] sm:$0xff]
    %v4750 = vld [vmem:[#allocation6 + $0x380] sm:$0xff]
    %v4751 = vld [vmem:[#allocation6 + $0x388] sm:$0xff]
    %v4752 = vld [vmem:[#allocation6 + $0x390] sm:$0xff]
    %v4753 = vld [vmem:[#allocation6 + $0x398] sm:$0xff]
    %v4754 = vld [vmem:[#allocation6 + $0x3a0] sm:$0xff]
    %v4755 = vld [vmem:[#allocation6 + $0x3a8] sm:$0xff]
    %v4756 = vld [vmem:[#allocation6 + $0x3b0] sm:$0xff]
    %v4757 = vld [vmem:[#allocation6 + $0x3b8] sm:$0xff]
    %v4758 = vld [vmem:[#allocation6 + $0x3c0] sm:$0xff]
    %v4759 = vld [vmem:[#allocation6 + $0x3c8] sm:$0xff]
    %v4760 = vld [vmem:[#allocation6 + $0x3d0] sm:$0xff]
    %v4761 = vld [vmem:[#allocation6 + $0x3d8] sm:$0xff]
    %v4762 = vld [vmem:[#allocation6 + $0x3e0] sm:$0xff]
    %v4763 = vld [vmem:[#allocation6 + $0x3e8] sm:$0xff]
    %v4764 = vld [vmem:[#allocation6 + $0x3f0] sm:$0xff]
    %v4765 = vld [vmem:[#allocation6 + $0x3f8] sm:$0xff]
    %v4766 = vld [vmem:[#allocation6 + $0x400] sm:$0xff]
    %v4767 = vld [vmem:[#allocation6 + $0x408] sm:$0xff]
    %v4768 = vld [vmem:[#allocation6 + $0x410] sm:$0xff]
    %v4769 = vld [vmem:[#allocation6 + $0x418] sm:$0xff]
    %v4770 = vld [vmem:[#allocation6 + $0x420] sm:$0xff]
    %v4771 = vld [vmem:[#allocation6 + $0x428] sm:$0xff]
    %v4772 = vld [vmem:[#allocation6 + $0x430] sm:$0xff]
    %v4773 = vld [vmem:[#allocation6 + $0x438] sm:$0xff]
    %v4774 = vld [vmem:[#allocation6 + $0x440] sm:$0xff]
    %v4775 = vld [vmem:[#allocation6 + $0x448] sm:$0xff]
    %v4776 = vld [vmem:[#allocation6 + $0x450] sm:$0xff]
    %v4777 = vld [vmem:[#allocation6 + $0x458] sm:$0xff]
    %v4778 = vld [vmem:[#allocation6 + $0x460] sm:$0xff]
    %v4779 = vld [vmem:[#allocation6 + $0x468] sm:$0xff]
    %v4780 = vld [vmem:[#allocation6 + $0x470] sm:$0xff]
    %v4781 = vld [vmem:[#allocation6 + $0x478] sm:$0xff]
    %v4782 = vld [vmem:[#allocation6 + $0x480] sm:$0xff]
    %v4783 = vld [vmem:[#allocation6 + $0x488] sm:$0xff]
    %v4784 = vld [vmem:[#allocation6 + $0x490] sm:$0xff]
    %v4785 = vld [vmem:[#allocation6 + $0x498] sm:$0xff]
    %v4786 = vld [vmem:[#allocation6 + $0x4a0] sm:$0xff]
    %v4787 = vld [vmem:[#allocation6 + $0x4a8] sm:$0xff]
    %v4788 = vld [vmem:[#allocation6 + $0x4b0] sm:$0xff]
    %v4789 = vld [vmem:[#allocation6 + $0x4b8] sm:$0xff]
    %v4790 = vld [vmem:[#allocation6 + $0x4c0] sm:$0xff]
    %v4791 = vld [vmem:[#allocation6 + $0x4c8] sm:$0xff]
    %v4792 = vld [vmem:[#allocation6 + $0x4d0] sm:$0xff]
    %v4793 = vld [vmem:[#allocation6 + $0x4d8] sm:$0xff]
    %v4794 = vld [vmem:[#allocation6 + $0x4e0] sm:$0xff]
    %v4795 = vld [vmem:[#allocation6 + $0x4e8] sm:$0xff]
    %v4796 = vld [vmem:[#allocation6 + $0x4f0] sm:$0xff]
    %v4797 = vld [vmem:[#allocation6 + $0x4f8] sm:$0xff]
    %v4798 = vld [vmem:[#allocation6 + $0x500] sm:$0xff]
    %v4799 = vld [vmem:[#allocation6 + $0x508] sm:$0xff]
    %v4800 = vld [vmem:[#allocation6 + $0x510] sm:$0xff]
    %v4801 = vld [vmem:[#allocation6 + $0x518] sm:$0xff]
    %v4802 = vld [vmem:[#allocation6 + $0x520] sm:$0xff]
    %v4803 = vld [vmem:[#allocation6 + $0x528] sm:$0xff]
    %v4804 = vld [vmem:[#allocation6 + $0x530] sm:$0xff]
    %v4805 = vld [vmem:[#allocation6 + $0x538] sm:$0xff]
    %v4806 = vld [vmem:[#allocation6 + $0x540] sm:$0xff]
    %v4807 = vld [vmem:[#allocation6 + $0x548] sm:$0xff]
    %v4808 = vld [vmem:[#allocation6 + $0x550] sm:$0xff]
    %v4809 = vld [vmem:[#allocation6 + $0x558] sm:$0xff]
    %v4810 = vld [vmem:[#allocation6 + $0x560] sm:$0xff]
    %v4811 = vld [vmem:[#allocation6 + $0x568] sm:$0xff]
    %v4812 = vld [vmem:[#allocation6 + $0x570] sm:$0xff]
    %v4813 = vld [vmem:[#allocation6 + $0x578] sm:$0xff]
    %v4814 = vld [vmem:[#allocation6 + $0x580] sm:$0xff]
    %v4815 = vld [vmem:[#allocation6 + $0x588] sm:$0xff]
    %v4816 = vld [vmem:[#allocation6 + $0x590] sm:$0xff]
    %v4817 = vld [vmem:[#allocation6 + $0x598] sm:$0xff]
    %v4818 = vld [vmem:[#allocation6 + $0x5a0] sm:$0xff]
    %v4819 = vld [vmem:[#allocation6 + $0x5a8] sm:$0xff]
    %v4820 = vld [vmem:[#allocation6 + $0x5b0] sm:$0xff]
    %v4821 = vld [vmem:[#allocation6 + $0x5b8] sm:$0xff]
    %v4822 = vld [vmem:[#allocation6 + $0x5c0] sm:$0xff]
    %v4823 = vld [vmem:[#allocation6 + $0x5c8] sm:$0xff]
    %v4824 = vld [vmem:[#allocation6 + $0x5d0] sm:$0xff]
    %v4825 = vld [vmem:[#allocation6 + $0x5d8] sm:$0xff]
    %v4826 = vld [vmem:[#allocation6 + $0x5e0] sm:$0xff]
    %v4827 = vld [vmem:[#allocation6 + $0x5e8] sm:$0xff]
    %v4828 = vld [vmem:[#allocation6 + $0x5f0] sm:$0xff]
    %v4829 = vld [vmem:[#allocation6 + $0x5f8] sm:$0xff]
    %v4830 = vld [vmem:[#allocation6 + $0x600] sm:$0xff]
    %v4831 = vld [vmem:[#allocation6 + $0x608] sm:$0xff]
    %v4832 = vld [vmem:[#allocation6 + $0x610] sm:$0xff]
    %v4833 = vld [vmem:[#allocation6 + $0x618] sm:$0xff]
    %v4834 = vld [vmem:[#allocation6 + $0x620] sm:$0xff]
    %v4835 = vld [vmem:[#allocation6 + $0x628] sm:$0xff]
    %v4836 = vld [vmem:[#allocation6 + $0x630] sm:$0xff]
    %v4837 = vld [vmem:[#allocation6 + $0x638] sm:$0xff]
    %v4838 = vld [vmem:[#allocation6 + $0x640] sm:$0xff]
    %v4839 = vld [vmem:[#allocation6 + $0x648] sm:$0xff]
    %v4840 = vld [vmem:[#allocation6 + $0x650] sm:$0xff]
    %v4841 = vld [vmem:[#allocation6 + $0x658] sm:$0xff]
    %v4842 = vld [vmem:[#allocation6 + $0x660] sm:$0xff]
    %v4843 = vld [vmem:[#allocation6 + $0x668] sm:$0xff]
    %v4844 = vld [vmem:[#allocation6 + $0x670] sm:$0xff]
    %v4845 = vld [vmem:[#allocation6 + $0x678] sm:$0xff]
    %v4846 = vld [vmem:[#allocation6 + $0x680] sm:$0xff]
    %v4847 = vld [vmem:[#allocation6 + $0x688] sm:$0xff]
    %v4848 = vld [vmem:[#allocation6 + $0x690] sm:$0xff]
    %v4849 = vld [vmem:[#allocation6 + $0x698] sm:$0xff]
    %v4850 = vld [vmem:[#allocation6 + $0x6a0] sm:$0xff]
    %v4851 = vld [vmem:[#allocation6 + $0x6a8] sm:$0xff]
    %v4852 = vld [vmem:[#allocation6 + $0x6b0] sm:$0xff]
    %v4853 = vld [vmem:[#allocation6 + $0x6b8] sm:$0xff]
    %v4854 = vld [vmem:[#allocation6 + $0x6c0] sm:$0xff]
    %v4855 = vld [vmem:[#allocation6 + $0x6c8] sm:$0xff]
    %v4856 = vld [vmem:[#allocation6 + $0x6d0] sm:$0xff]
    %v4857 = vld [vmem:[#allocation6 + $0x6d8] sm:$0xff]
    %v4858 = vld [vmem:[#allocation6 + $0x6e0] sm:$0xff]
    %v4859 = vld [vmem:[#allocation6 + $0x6e8] sm:$0xff]
    %v4860 = vld [vmem:[#allocation6 + $0x6f0] sm:$0xff]
    %v4861 = vld [vmem:[#allocation6 + $0x6f8] sm:$0xff]
    %v4862 = vld [vmem:[#allocation6 + $0x700] sm:$0xff]
    %v4863 = vld [vmem:[#allocation6 + $0x708] sm:$0xff]
    %v4864 = vld [vmem:[#allocation6 + $0x710] sm:$0xff]
    %v4865 = vld [vmem:[#allocation6 + $0x718] sm:$0xff]
    %v4866 = vld [vmem:[#allocation6 + $0x720] sm:$0xff]
    %v4867 = vld [vmem:[#allocation6 + $0x728] sm:$0xff]
    %v4868 = vld [vmem:[#allocation6 + $0x730] sm:$0xff]
    %v4869 = vld [vmem:[#allocation6 + $0x738] sm:$0xff]
    %v4870 = vld [vmem:[#allocation6 + $0x740] sm:$0xff]
    %v4871 = vld [vmem:[#allocation6 + $0x748] sm:$0xff]
    %v4872 = vld [vmem:[#allocation6 + $0x750] sm:$0xff]
    %v4873 = vld [vmem:[#allocation6 + $0x758] sm:$0xff]
    %v4874 = vld [vmem:[#allocation6 + $0x760] sm:$0xff]
    %v4875 = vld [vmem:[#allocation6 + $0x768] sm:$0xff]
    %v4876 = vld [vmem:[#allocation6 + $0x770] sm:$0xff]
    %v4877 = vld [vmem:[#allocation6 + $0x778] sm:$0xff]
    %v4878 = vld [vmem:[#allocation6 + $0x780] sm:$0xff]
    %v4879 = vld [vmem:[#allocation6 + $0x788] sm:$0xff]
    %v4880 = vld [vmem:[#allocation6 + $0x790] sm:$0xff]
    %v4881 = vld [vmem:[#allocation6 + $0x798] sm:$0xff]
    %v4882 = vld [vmem:[#allocation6 + $0x7a0] sm:$0xff]
    %v4883 = vld [vmem:[#allocation6 + $0x7a8] sm:$0xff]
    %v4884 = vld [vmem:[#allocation6 + $0x7b0] sm:$0xff]
    %v4885 = vld [vmem:[#allocation6 + $0x7b8] sm:$0xff]
    %v4886 = vld [vmem:[#allocation6 + $0x7c0] sm:$0xff]
    %v4887 = vld [vmem:[#allocation6 + $0x7c8] sm:$0xff]
    %v4888 = vld [vmem:[#allocation6 + $0x7d0] sm:$0xff]
    %v4889 = vld [vmem:[#allocation6 + $0x7d8] sm:$0xff]
    %v4890 = vld [vmem:[#allocation6 + $0x7e0] sm:$0xff]
    %v4891 = vld [vmem:[#allocation6 + $0x7e8] sm:$0xff]
    %v4892 = vld [vmem:[#allocation6 + $0x7f0] sm:$0xff]
    %v4893 = vld [vmem:[#allocation6 + $0x7f8] sm:$0xff]
    %v4894 = vld [vmem:[#allocation6 + $0x800] sm:$0xff]
    %v4895 = vld [vmem:[#allocation6 + $0x808] sm:$0xff]
    %v4896 = vld [vmem:[#allocation6 + $0x810] sm:$0xff]
    %v4897 = vld [vmem:[#allocation6 + $0x818] sm:$0xff]
    %v4898 = vld [vmem:[#allocation6 + $0x820] sm:$0xff]
    %v4899 = vld [vmem:[#allocation6 + $0x828] sm:$0xff]
    %v4900 = vld [vmem:[#allocation6 + $0x830] sm:$0xff]
    %v4901 = vld [vmem:[#allocation6 + $0x838] sm:$0xff]
    %v4902 = vld [vmem:[#allocation6 + $0x840] sm:$0xff]
    %v4903 = vld [vmem:[#allocation6 + $0x848] sm:$0xff]
    %v4904 = vld [vmem:[#allocation6 + $0x850] sm:$0xff]
    %v4905 = vld [vmem:[#allocation6 + $0x858] sm:$0xff]
    %v4906 = vld [vmem:[#allocation6 + $0x860] sm:$0xff]
    %v4907 = vld [vmem:[#allocation6 + $0x868] sm:$0xff]
    %v4908 = vld [vmem:[#allocation6 + $0x870] sm:$0xff]
    %v4909 = vld [vmem:[#allocation6 + $0x878] sm:$0xff]
    %v4910 = vld [vmem:[#allocation6 + $0x880] sm:$0xff]
    %v4911 = vld [vmem:[#allocation6 + $0x888] sm:$0xff]
    %v4912 = vld [vmem:[#allocation6 + $0x890] sm:$0xff]
    %v4913 = vld [vmem:[#allocation6 + $0x898] sm:$0xff]
    %v4914 = vld [vmem:[#allocation6 + $0x8a0] sm:$0xff]
    %v4915 = vld [vmem:[#allocation6 + $0x8a8] sm:$0xff]
    %v4916 = vld [vmem:[#allocation6 + $0x8b0] sm:$0xff]
    %v4917 = vld [vmem:[#allocation6 + $0x8b8] sm:$0xff]
    %v4918 = vld [vmem:[#allocation6 + $0x8c0] sm:$0xff]
    %v4919 = vld [vmem:[#allocation6 + $0x8c8] sm:$0xff]
    %v4920 = vld [vmem:[#allocation6 + $0x8d0] sm:$0xff]
    %v4921 = vld [vmem:[#allocation6 + $0x8d8] sm:$0xff]
    %v4922 = vld [vmem:[#allocation6 + $0x8e0] sm:$0xff]
    %v4923 = vld [vmem:[#allocation6 + $0x8e8] sm:$0xff]
    %v4924 = vld [vmem:[#allocation6 + $0x8f0] sm:$0xff]
    %v4925 = vld [vmem:[#allocation6 + $0x8f8] sm:$0xff]
    %v4926 = vld [vmem:[#allocation6 + $0x900] sm:$0xff]
    %v4927 = vld [vmem:[#allocation6 + $0x908] sm:$0xff]
    %v4928 = vld [vmem:[#allocation6 + $0x910] sm:$0xff]
    %v4929 = vld [vmem:[#allocation6 + $0x918] sm:$0xff]
    %v4930 = vld [vmem:[#allocation6 + $0x920] sm:$0xff]
    %v4931 = vld [vmem:[#allocation6 + $0x928] sm:$0xff]
    %v4932 = vld [vmem:[#allocation6 + $0x930] sm:$0xff]
    %v4933 = vld [vmem:[#allocation6 + $0x938] sm:$0xff]
    %v4934 = vld [vmem:[#allocation6 + $0x940] sm:$0xff]
    %v4935 = vld [vmem:[#allocation6 + $0x948] sm:$0xff]
    %v4936 = vld [vmem:[#allocation6 + $0x950] sm:$0xff]
    %v4937 = vld [vmem:[#allocation6 + $0x958] sm:$0xff]
    %v4938 = vld [vmem:[#allocation6 + $0x960] sm:$0xff]
    %v4939 = vld [vmem:[#allocation6 + $0x968] sm:$0xff]
    %v4940 = vld [vmem:[#allocation6 + $0x970] sm:$0xff]
    %v4941 = vld [vmem:[#allocation6 + $0x978] sm:$0xff]
    %v4942 = vld [vmem:[#allocation6 + $0x980] sm:$0xff]
    %v4943 = vld [vmem:[#allocation6 + $0x988] sm:$0xff]
    %v4944 = vld [vmem:[#allocation6 + $0x990] sm:$0xff]
    %v4945 = vld [vmem:[#allocation6 + $0x998] sm:$0xff]
    %v4946 = vld [vmem:[#allocation6 + $0x9a0] sm:$0xff]
    %v4947 = vld [vmem:[#allocation6 + $0x9a8] sm:$0xff]
    %v4948 = vld [vmem:[#allocation6 + $0x9b0] sm:$0xff]
    %v4949 = vld [vmem:[#allocation6 + $0x9b8] sm:$0xff]
    %v4950 = vld [vmem:[#allocation6 + $0x9c0] sm:$0xff]
    %v4951 = vld [vmem:[#allocation6 + $0x9c8] sm:$0xff]
    %v4952 = vld [vmem:[#allocation6 + $0x9d0] sm:$0xff]
    %v4953 = vld [vmem:[#allocation6 + $0x9d8] sm:$0xff]
    %v4954 = vld [vmem:[#allocation6 + $0x9e0] sm:$0xff]
    %v4955 = vld [vmem:[#allocation6 + $0x9e8] sm:$0xff]
    %v4956 = vld [vmem:[#allocation6 + $0x9f0] sm:$0xff]
    %v4957 = vld [vmem:[#allocation6 + $0x9f8] sm:$0xff]
    %v4958 = vld [vmem:[#allocation6 + $0xa00] sm:$0xff]
    %v4959 = vld [vmem:[#allocation6 + $0xa08] sm:$0xff]
    %v4960 = vld [vmem:[#allocation6 + $0xa10] sm:$0xff]
    %v4961 = vld [vmem:[#allocation6 + $0xa18] sm:$0xff]
    %v4962 = vld [vmem:[#allocation6 + $0xa20] sm:$0xff]
    %v4963 = vld [vmem:[#allocation6 + $0xa28] sm:$0xff]
    %v4964 = vld [vmem:[#allocation6 + $0xa30] sm:$0xff]
    %v4965 = vld [vmem:[#allocation6 + $0xa38] sm:$0xff]
    %v4966 = vld [vmem:[#allocation6 + $0xa40] sm:$0xff]
    %v4967 = vld [vmem:[#allocation6 + $0xa48] sm:$0xff]
    %v4968 = vld [vmem:[#allocation6 + $0xa50] sm:$0xff]
    %v4969 = vld [vmem:[#allocation6 + $0xa58] sm:$0xff]
    %v4970 = vld [vmem:[#allocation6 + $0xa60] sm:$0xff]
    %v4971 = vld [vmem:[#allocation6 + $0xa68] sm:$0xff]
    %v4972 = vld [vmem:[#allocation6 + $0xa70] sm:$0xff]
    %v4973 = vld [vmem:[#allocation6 + $0xa78] sm:$0xff]
    %v4974 = vld [vmem:[#allocation6 + $0xa80] sm:$0xff]
    %v4975 = vld [vmem:[#allocation6 + $0xa88] sm:$0xff]
    %v4976 = vld [vmem:[#allocation6 + $0xa90] sm:$0xff]
    %v4977 = vld [vmem:[#allocation6 + $0xa98] sm:$0xff]
    %v4978 = vld [vmem:[#allocation6 + $0xaa0] sm:$0xff]
    %v4979 = vld [vmem:[#allocation6 + $0xaa8] sm:$0xff]
    %v4980 = vld [vmem:[#allocation6 + $0xab0] sm:$0xff]
    %v4981 = vld [vmem:[#allocation6 + $0xab8] sm:$0xff]
    %v4982 = vld [vmem:[#allocation6 + $0xac0] sm:$0xff]
    %v4983 = vld [vmem:[#allocation6 + $0xac8] sm:$0xff]
    %v4984 = vld [vmem:[#allocation6 + $0xad0] sm:$0xff]
    %v4985 = vld [vmem:[#allocation6 + $0xad8] sm:$0xff]
    %v4986 = vld [vmem:[#allocation6 + $0xae0] sm:$0xff]
    %v4987 = vld [vmem:[#allocation6 + $0xae8] sm:$0xff]
    %v4988 = vld [vmem:[#allocation6 + $0xaf0] sm:$0xff]
    %v4989 = vld [vmem:[#allocation6 + $0xaf8] sm:$0xff]
    %v4990 = vld [vmem:[#allocation6 + $0xb00] sm:$0xff]
    %v4991 = vld [vmem:[#allocation6 + $0xb08] sm:$0xff]
    %v4992 = vld [vmem:[#allocation6 + $0xb10] sm:$0xff]
    %v4993 = vld [vmem:[#allocation6 + $0xb18] sm:$0xff]
    %v4994 = vld [vmem:[#allocation6 + $0xb20] sm:$0xff]
    %v4995 = vld [vmem:[#allocation6 + $0xb28] sm:$0xff]
    %v4996 = vld [vmem:[#allocation6 + $0xb30] sm:$0xff]
    %v4997 = vld [vmem:[#allocation6 + $0xb38] sm:$0xff]
    %v4998 = vld [vmem:[#allocation6 + $0xb40] sm:$0xff]
    %v4999 = vld [vmem:[#allocation6 + $0xb48] sm:$0xff]
    %v5000 = vld [vmem:[#allocation6 + $0xb50] sm:$0xff]
    %v5001 = vld [vmem:[#allocation6 + $0xb58] sm:$0xff]
    %v5002 = vld [vmem:[#allocation6 + $0xb60] sm:$0xff]
    %v5003 = vld [vmem:[#allocation6 + $0xb68] sm:$0xff]
    %v5004 = vld [vmem:[#allocation6 + $0xb70] sm:$0xff]
    %v5005 = vld [vmem:[#allocation6 + $0xb78] sm:$0xff]
    %v5006 = vld [vmem:[#allocation6 + $0xb80] sm:$0xff]
    %v5007 = vld [vmem:[#allocation6 + $0xb88] sm:$0xff]
    %v5008 = vld [vmem:[#allocation6 + $0xb90] sm:$0xff]
    %v5009 = vld [vmem:[#allocation6 + $0xb98] sm:$0xff]
    %v5010 = vld [vmem:[#allocation6 + $0xba0] sm:$0xff]
    %v5011 = vld [vmem:[#allocation6 + $0xba8] sm:$0xff]
    %v5012 = vld [vmem:[#allocation6 + $0xbb0] sm:$0xff]
    %v5013 = vld [vmem:[#allocation6 + $0xbb8] sm:$0xff]
    %v5014 = vld [vmem:[#allocation6 + $0xbc0] sm:$0xff]
    %v5015 = vld [vmem:[#allocation6 + $0xbc8] sm:$0xff]
    %v5016 = vld [vmem:[#allocation6 + $0xbd0] sm:$0xff]
    %v5017 = vld [vmem:[#allocation6 + $0xbd8] sm:$0xff]
    %v5018 = vld [vmem:[#allocation6 + $0xbe0] sm:$0xff]
    %v5019 = vld [vmem:[#allocation6 + $0xbe8] sm:$0xff]
    %v5020 = vld [vmem:[#allocation6 + $0xbf0] sm:$0xff]
    %v5021 = vld [vmem:[#allocation6 + $0xbf8] sm:$0xff]
    %v5022 = vld [vmem:[#allocation6 + $0xc00] sm:$0xff]
    %v5023 = vld [vmem:[#allocation6 + $0xc08] sm:$0xff]
    %v5024 = vld [vmem:[#allocation6 + $0xc10] sm:$0xff]
    %v5025 = vld [vmem:[#allocation6 + $0xc18] sm:$0xff]
    %v5026 = vld [vmem:[#allocation6 + $0xc20] sm:$0xff]
    %v5027 = vld [vmem:[#allocation6 + $0xc28] sm:$0xff]
    %v5028 = vld [vmem:[#allocation6 + $0xc30] sm:$0xff]
    %v5029 = vld [vmem:[#allocation6 + $0xc38] sm:$0xff]
    %v5030 = vld [vmem:[#allocation6 + $0xc40] sm:$0xff]
    %v5031 = vld [vmem:[#allocation6 + $0xc48] sm:$0xff]
    %v5032 = vld [vmem:[#allocation6 + $0xc50] sm:$0xff]
    %v5033 = vld [vmem:[#allocation6 + $0xc58] sm:$0xff]
    %v5034 = vld [vmem:[#allocation6 + $0xc60] sm:$0xff]
    %v5035 = vld [vmem:[#allocation6 + $0xc68] sm:$0xff]
    %v5036 = vld [vmem:[#allocation6 + $0xc70] sm:$0xff]
    %v5037 = vld [vmem:[#allocation6 + $0xc78] sm:$0xff]
    %v5038 = vld [vmem:[#allocation6 + $0xc80] sm:$0xff]
    %v5039 = vld [vmem:[#allocation6 + $0xc88] sm:$0xff]
    %v5040 = vld [vmem:[#allocation6 + $0xc90] sm:$0xff]
    %v5041 = vld [vmem:[#allocation6 + $0xc98] sm:$0xff]
    %v5042 = vld [vmem:[#allocation6 + $0xca0] sm:$0xff]
    %v5043 = vld [vmem:[#allocation6 + $0xca8] sm:$0xff]
    %v5044 = vld [vmem:[#allocation6 + $0xcb0] sm:$0xff]
    %v5045 = vld [vmem:[#allocation6 + $0xcb8] sm:$0xff]
    %v5046 = vld [vmem:[#allocation6 + $0xcc0] sm:$0xff]
    %v5047 = vld [vmem:[#allocation6 + $0xcc8] sm:$0xff]
    %v5048 = vld [vmem:[#allocation6 + $0xcd0] sm:$0xff]
    %v5049 = vld [vmem:[#allocation6 + $0xcd8] sm:$0xff]
    %v5050 = vld [vmem:[#allocation6 + $0xce0] sm:$0xff]
    %v5051 = vld [vmem:[#allocation6 + $0xce8] sm:$0xff]
    %v5052 = vld [vmem:[#allocation6 + $0xcf0] sm:$0xff]
    %v5053 = vld [vmem:[#allocation6 + $0xcf8] sm:$0xff]
    %v5054 = vld [vmem:[#allocation6 + $0xd00] sm:$0xff]
    %v5055 = vld [vmem:[#allocation6 + $0xd08] sm:$0xff]
    %v5056 = vld [vmem:[#allocation6 + $0xd10] sm:$0xff]
    %v5057 = vld [vmem:[#allocation6 + $0xd18] sm:$0xff]
    %v5058 = vld [vmem:[#allocation6 + $0xd20] sm:$0xff]
    %v5059 = vld [vmem:[#allocation6 + $0xd28] sm:$0xff]
    %v5060 = vld [vmem:[#allocation6 + $0xd30] sm:$0xff]
    %v5061 = vld [vmem:[#allocation6 + $0xd38] sm:$0xff]
    %v5062 = vld [vmem:[#allocation6 + $0xd40] sm:$0xff]
    %v5063 = vld [vmem:[#allocation6 + $0xd48] sm:$0xff]
    %v5064 = vld [vmem:[#allocation6 + $0xd50] sm:$0xff]
    %v5065 = vld [vmem:[#allocation6 + $0xd58] sm:$0xff]
    %v5066 = vld [vmem:[#allocation6 + $0xd60] sm:$0xff]
    %v5067 = vld [vmem:[#allocation6 + $0xd68] sm:$0xff]
    %v5068 = vld [vmem:[#allocation6 + $0xd70] sm:$0xff]
    %v5069 = vld [vmem:[#allocation6 + $0xd78] sm:$0xff]
    %v5070 = vld [vmem:[#allocation6 + $0xd80] sm:$0xff]
    %v5071 = vld [vmem:[#allocation6 + $0xd88] sm:$0xff]
    %v5072 = vld [vmem:[#allocation6 + $0xd90] sm:$0xff]
    %v5073 = vld [vmem:[#allocation6 + $0xd98] sm:$0xff]
    %v5074 = vld [vmem:[#allocation6 + $0xda0] sm:$0xff]
    %v5075 = vld [vmem:[#allocation6 + $0xda8] sm:$0xff]
    %v5076 = vld [vmem:[#allocation6 + $0xdb0] sm:$0xff]
    %v5077 = vld [vmem:[#allocation6 + $0xdb8] sm:$0xff]
    %v5078 = vld [vmem:[#allocation6 + $0xdc0] sm:$0xff]
    %v5079 = vld [vmem:[#allocation6 + $0xdc8] sm:$0xff]
    %v5080 = vld [vmem:[#allocation6 + $0xdd0] sm:$0xff]
    %v5081 = vld [vmem:[#allocation6 + $0xdd8] sm:$0xff]
    %v5082 = vld [vmem:[#allocation6 + $0xde0] sm:$0xff]
    %v5083 = vld [vmem:[#allocation6 + $0xde8] sm:$0xff]
    %v5084 = vld [vmem:[#allocation6 + $0xdf0] sm:$0xff]
    %v5085 = vld [vmem:[#allocation6 + $0xdf8] sm:$0xff]
    %v5086 = vld [vmem:[#allocation6 + $0xe00] sm:$0xff]
    %v5087 = vld [vmem:[#allocation6 + $0xe08] sm:$0xff]
    %v5088 = vld [vmem:[#allocation6 + $0xe10] sm:$0xff]
    %v5089 = vld [vmem:[#allocation6 + $0xe18] sm:$0xff]
    %v5090 = vld [vmem:[#allocation6 + $0xe20] sm:$0xff]
    %v5091 = vld [vmem:[#allocation6 + $0xe28] sm:$0xff]
    %v5092 = vld [vmem:[#allocation6 + $0xe30] sm:$0xff]
    %v5093 = vld [vmem:[#allocation6 + $0xe38] sm:$0xff]
    %v5094 = vld [vmem:[#allocation6 + $0xe40] sm:$0xff]
    %v5095 = vld [vmem:[#allocation6 + $0xe48] sm:$0xff]
    %v5096 = vld [vmem:[#allocation6 + $0xe50] sm:$0xff]
    %v5097 = vld [vmem:[#allocation6 + $0xe58] sm:$0xff]
    %v5098 = vld [vmem:[#allocation6 + $0xe60] sm:$0xff]
    %v5099 = vld [vmem:[#allocation6 + $0xe68] sm:$0xff]
    %v5100 = vld [vmem:[#allocation6 + $0xe70] sm:$0xff]
    %v5101 = vld [vmem:[#allocation6 + $0xe78] sm:$0xff]
    %v5102 = vld [vmem:[#allocation6 + $0xe80] sm:$0xff]
    %v5103 = vld [vmem:[#allocation6 + $0xe88] sm:$0xff]
    %v5104 = vld [vmem:[#allocation6 + $0xe90] sm:$0xff]
    %v5105 = vld [vmem:[#allocation6 + $0xe98] sm:$0xff]
    %v5106 = vld [vmem:[#allocation6 + $0xea0] sm:$0xff]
    %v5107 = vld [vmem:[#allocation6 + $0xea8] sm:$0xff]
    %v5108 = vld [vmem:[#allocation6 + $0xeb0] sm:$0xff]
    %v5109 = vld [vmem:[#allocation6 + $0xeb8] sm:$0xff]
    %v5110 = vld [vmem:[#allocation6 + $0xec0] sm:$0xff]
    %v5111 = vld [vmem:[#allocation6 + $0xec8] sm:$0xff]
    %v5112 = vld [vmem:[#allocation6 + $0xed0] sm:$0xff]
    %v5113 = vld [vmem:[#allocation6 + $0xed8] sm:$0xff]
    %v5114 = vld [vmem:[#allocation6 + $0xee0] sm:$0xff]
    %v5115 = vld [vmem:[#allocation6 + $0xee8] sm:$0xff]
    %v5116 = vld [vmem:[#allocation6 + $0xef0] sm:$0xff]
    %v5117 = vld [vmem:[#allocation6 + $0xef8] sm:$0xff]
    %v5118 = vld [vmem:[#allocation6 + $0xf00] sm:$0xff]
    %v5119 = vld [vmem:[#allocation6 + $0xf08] sm:$0xff]
    %v5120 = vld [vmem:[#allocation6 + $0xf10] sm:$0xff]
    %v5121 = vld [vmem:[#allocation6 + $0xf18] sm:$0xff]
    %v5122 = vld [vmem:[#allocation6 + $0xf20] sm:$0xff]
    %v5123 = vld [vmem:[#allocation6 + $0xf28] sm:$0xff]
    %v5124 = vld [vmem:[#allocation6 + $0xf30] sm:$0xff]
    %v5125 = vld [vmem:[#allocation6 + $0xf38] sm:$0xff]
    %v5126 = vld [vmem:[#allocation6 + $0xf40] sm:$0xff]
    %v5127 = vld [vmem:[#allocation6 + $0xf48] sm:$0xff]
    %v5128 = vld [vmem:[#allocation6 + $0xf50] sm:$0xff]
    %v5129 = vld [vmem:[#allocation6 + $0xf58] sm:$0xff]
    %v5130 = vld [vmem:[#allocation6 + $0xf60] sm:$0xff]
    %v5131 = vld [vmem:[#allocation6 + $0xf68] sm:$0xff]
    %v5132 = vld [vmem:[#allocation6 + $0xf70] sm:$0xff]
    %v5133 = vld [vmem:[#allocation6 + $0xf78] sm:$0xff]
    %v5134 = vld [vmem:[#allocation6 + $0xf80] sm:$0xff]
    %v5135 = vld [vmem:[#allocation6 + $0xf88] sm:$0xff]
    %v5136 = vld [vmem:[#allocation6 + $0xf90] sm:$0xff]
    %v5137 = vld [vmem:[#allocation6 + $0xf98] sm:$0xff]
    %v5138 = vld [vmem:[#allocation6 + $0xfa0] sm:$0xff]
    %v5139 = vld [vmem:[#allocation6 + $0xfa8] sm:$0xff]
    %v5140 = vld [vmem:[#allocation6 + $0xfb0] sm:$0xff]
    %v5141 = vld [vmem:[#allocation6 + $0xfb8] sm:$0xff]
    %v5142 = vld [vmem:[#allocation6 + $0xfc0] sm:$0xff]
    %v5143 = vld [vmem:[#allocation6 + $0xfc8] sm:$0xff]
    %v5144 = vld [vmem:[#allocation6 + $0xfd0] sm:$0xff]
    %v5145 = vld [vmem:[#allocation6 + $0xfd8] sm:$0xff]
    %v5146 = vld [vmem:[#allocation6 + $0xfe0] sm:$0xff]
    %v5147 = vld [vmem:[#allocation6 + $0xfe8] sm:$0xff]
    %v5148 = vld [vmem:[#allocation6 + $0xff0] sm:$0xff]
    %v5149 = vld [vmem:[#allocation6 + $0xff8] sm:$0xff]
    %v5150 = vld [vmem:[#allocation6 + $0x1000] sm:$0xff]
    %v5151 = vld [vmem:[#allocation6 + $0x1008] sm:$0xff]
    %v5152 = vld [vmem:[#allocation6 + $0x1010] sm:$0xff]
    %v5153 = vld [vmem:[#allocation6 + $0x1018] sm:$0xff]
    %v5154 = vld [vmem:[#allocation6 + $0x1020] sm:$0xff]
    %v5155 = vld [vmem:[#allocation6 + $0x1028] sm:$0xff]
    %v5156 = vld [vmem:[#allocation6 + $0x1030] sm:$0xff]
    %v5157 = vld [vmem:[#allocation6 + $0x1038] sm:$0xff]
    %v5158 = vld [vmem:[#allocation6 + $0x1040] sm:$0xff]
    %v5159 = vld [vmem:[#allocation6 + $0x1048] sm:$0xff]
    %v5160 = vld [vmem:[#allocation6 + $0x1050] sm:$0xff]
    %v5161 = vld [vmem:[#allocation6 + $0x1058] sm:$0xff]
    %v5162 = vld [vmem:[#allocation6 + $0x1060] sm:$0xff]
    %v5163 = vld [vmem:[#allocation6 + $0x1068] sm:$0xff]
    %v5164 = vld [vmem:[#allocation6 + $0x1070] sm:$0xff]
    %v5165 = vld [vmem:[#allocation6 + $0x1078] sm:$0xff]
    %v5166 = vld [vmem:[#allocation6 + $0x1080] sm:$0xff]
    %v5167 = vld [vmem:[#allocation6 + $0x1088] sm:$0xff]
    %v5168 = vld [vmem:[#allocation6 + $0x1090] sm:$0xff]
    %v5169 = vld [vmem:[#allocation6 + $0x1098] sm:$0xff]
    %v5170 = vld [vmem:[#allocation6 + $0x10a0] sm:$0xff]
    %v5171 = vld [vmem:[#allocation6 + $0x10a8] sm:$0xff]
    %v5172 = vld [vmem:[#allocation6 + $0x10b0] sm:$0xff]
    %v5173 = vld [vmem:[#allocation6 + $0x10b8] sm:$0xff]
    %v5174 = vld [vmem:[#allocation6 + $0x10c0] sm:$0xff]
    %v5175 = vld [vmem:[#allocation6 + $0x10c8] sm:$0xff]
    %v5176 = vld [vmem:[#allocation6 + $0x10d0] sm:$0xff]
    %v5177 = vld [vmem:[#allocation6 + $0x10d8] sm:$0xff]
    %v5178 = vld [vmem:[#allocation6 + $0x10e0] sm:$0xff]
    %v5179 = vld [vmem:[#allocation6 + $0x10e8] sm:$0xff]
    %v5180 = vld [vmem:[#allocation6 + $0x10f0] sm:$0xff]
    %v5181 = vld [vmem:[#allocation6 + $0x10f8] sm:$0xff]
    %v5182 = vld [vmem:[#allocation6 + $0x1100] sm:$0xff]
    %v5183 = vld [vmem:[#allocation6 + $0x1108] sm:$0xff]
    %v5184 = vld [vmem:[#allocation6 + $0x1110] sm:$0xff]
    %v5185 = vld [vmem:[#allocation6 + $0x1118] sm:$0xff]
    %v5186 = vld [vmem:[#allocation6 + $0x1120] sm:$0xff]
    %v5187 = vld [vmem:[#allocation6 + $0x1128] sm:$0xff]
    %v5188 = vld [vmem:[#allocation6 + $0x1130] sm:$0xff]
    %v5189 = vld [vmem:[#allocation6 + $0x1138] sm:$0xff]
    %v5190 = vld [vmem:[#allocation6 + $0x1140] sm:$0xff]
    %v5191 = vld [vmem:[#allocation6 + $0x1148] sm:$0xff]
    %v5192 = vld [vmem:[#allocation6 + $0x1150] sm:$0xff]
    %v5193 = vld [vmem:[#allocation6 + $0x1158] sm:$0xff]
    %v5194 = vld [vmem:[#allocation6 + $0x1160] sm:$0xff]
    %v5195 = vld [vmem:[#allocation6 + $0x1168] sm:$0xff]
    %v5196 = vld [vmem:[#allocation6 + $0x1170] sm:$0xff]
    %v5197 = vld [vmem:[#allocation6 + $0x1178] sm:$0xff]
    %v5198 = vld [vmem:[#allocation6 + $0x1180] sm:$0xff]
    %v5199 = vld [vmem:[#allocation6 + $0x1188] sm:$0xff]
    %v5200 = vld [vmem:[#allocation6 + $0x1190] sm:$0xff]
    %v5201 = vld [vmem:[#allocation6 + $0x1198] sm:$0xff]
    %v5202 = vld [vmem:[#allocation6 + $0x11a0] sm:$0xff]
    %v5203 = vld [vmem:[#allocation6 + $0x11a8] sm:$0xff]
    %v5204 = vld [vmem:[#allocation6 + $0x11b0] sm:$0xff]
    %v5205 = vld [vmem:[#allocation6 + $0x11b8] sm:$0xff]
    %v5206 = vld [vmem:[#allocation6 + $0x11c0] sm:$0xff]
    %v5207 = vld [vmem:[#allocation6 + $0x11c8] sm:$0xff]
    %v5208 = vld [vmem:[#allocation6 + $0x11d0] sm:$0xff]
    %v5209 = vld [vmem:[#allocation6 + $0x11d8] sm:$0xff]
    %v5210 = vld [vmem:[#allocation6 + $0x11e0] sm:$0xff]
    %v5211 = vld [vmem:[#allocation6 + $0x11e8] sm:$0xff]
    %v5212 = vld [vmem:[#allocation6 + $0x11f0] sm:$0xff]
    %v5213 = vld [vmem:[#allocation6 + $0x11f8] sm:$0xff]
    %v5214 = vld [vmem:[#allocation6 + $0x1200] sm:$0xff]
    %v5215 = vld [vmem:[#allocation6 + $0x1208] sm:$0xff]
    %v5216 = vld [vmem:[#allocation6 + $0x1210] sm:$0xff]
    %v5217 = vld [vmem:[#allocation6 + $0x1218] sm:$0xff]
    %v5218 = vld [vmem:[#allocation6 + $0x1220] sm:$0xff]
    %v5219 = vld [vmem:[#allocation6 + $0x1228] sm:$0xff]
    %v5220 = vld [vmem:[#allocation6 + $0x1230] sm:$0xff]
    %v5221 = vld [vmem:[#allocation6 + $0x1238] sm:$0xff]
    %v5222 = vld [vmem:[#allocation6 + $0x1240] sm:$0xff]
    %v5223 = vld [vmem:[#allocation6 + $0x1248] sm:$0xff]
    %v5224 = vld [vmem:[#allocation6 + $0x1250] sm:$0xff]
    %v5225 = vld [vmem:[#allocation6 + $0x1258] sm:$0xff]
    %v5226 = vld [vmem:[#allocation6 + $0x1260] sm:$0xff]
    %v5227 = vld [vmem:[#allocation6 + $0x1268] sm:$0xff]
    %v5228 = vld [vmem:[#allocation6 + $0x1270] sm:$0xff]
    %v5229 = vld [vmem:[#allocation6 + $0x1278] sm:$0xff]
    %v5230 = vld [vmem:[#allocation6 + $0x1280] sm:$0xff]
    %v5231 = vld [vmem:[#allocation6 + $0x1288] sm:$0xff]
    %v5232 = vld [vmem:[#allocation6 + $0x1290] sm:$0xff]
    %v5233 = vld [vmem:[#allocation6 + $0x1298] sm:$0xff]
    %v5234 = vld [vmem:[#allocation6 + $0x12a0] sm:$0xff]
    %v5235 = vld [vmem:[#allocation6 + $0x12a8] sm:$0xff]
    %v5236 = vld [vmem:[#allocation6 + $0x12b0] sm:$0xff]
    %v5237 = vld [vmem:[#allocation6 + $0x12b8] sm:$0xff]
    %v5238 = vld [vmem:[#allocation6 + $0x12c0] sm:$0xff]
    %v5239 = vld [vmem:[#allocation6 + $0x12c8] sm:$0xff]
    %v5240 = vld [vmem:[#allocation6 + $0x12d0] sm:$0xff]
    %v5241 = vld [vmem:[#allocation6 + $0x12d8] sm:$0xff]
    %v5242 = vld [vmem:[#allocation6 + $0x12e0] sm:$0xff]
    %v5243 = vld [vmem:[#allocation6 + $0x12e8] sm:$0xff]
    %v5244 = vld [vmem:[#allocation6 + $0x12f0] sm:$0xff]
    %v5245 = vld [vmem:[#allocation6 + $0x12f8] sm:$0xff]
    %v5246 = vld [vmem:[#allocation6 + $0x1300] sm:$0xff]
    %v5247 = vld [vmem:[#allocation6 + $0x1308] sm:$0xff]
    %v5248 = vld [vmem:[#allocation6 + $0x1310] sm:$0xff]
    %v5249 = vld [vmem:[#allocation6 + $0x1318] sm:$0xff]
    %v5250 = vld [vmem:[#allocation6 + $0x1320] sm:$0xff]
    %v5251 = vld [vmem:[#allocation6 + $0x1328] sm:$0xff]
    %v5252 = vld [vmem:[#allocation6 + $0x1330] sm:$0xff]
    %v5253 = vld [vmem:[#allocation6 + $0x1338] sm:$0xff]
    %v5254 = vld [vmem:[#allocation6 + $0x1340] sm:$0xff]
    %v5255 = vld [vmem:[#allocation6 + $0x1348] sm:$0xff]
    %v5256 = vld [vmem:[#allocation6 + $0x1350] sm:$0xff]
    %v5257 = vld [vmem:[#allocation6 + $0x1358] sm:$0xff]
    %v5258 = vld [vmem:[#allocation6 + $0x1360] sm:$0xff]
    %v5259 = vld [vmem:[#allocation6 + $0x1368] sm:$0xff]
    %v5260 = vld [vmem:[#allocation6 + $0x1370] sm:$0xff]
    %v5261 = vld [vmem:[#allocation6 + $0x1378] sm:$0xff]
    %v5262 = vld [vmem:[#allocation6 + $0x1380] sm:$0xff]
    %v5263 = vld [vmem:[#allocation6 + $0x1388] sm:$0xff]
    %v5264 = vld [vmem:[#allocation6 + $0x1390] sm:$0xff]
    %v5265 = vld [vmem:[#allocation6 + $0x1398] sm:$0xff]
    %v5266 = vld [vmem:[#allocation6 + $0x13a0] sm:$0xff]
    %v5267 = vld [vmem:[#allocation6 + $0x13a8] sm:$0xff]
    %v5268 = vld [vmem:[#allocation6 + $0x13b0] sm:$0xff]
    %v5269 = vld [vmem:[#allocation6 + $0x13b8] sm:$0xff]
    %v5270 = vld [vmem:[#allocation6 + $0x13c0] sm:$0xff]
    %v5271 = vld [vmem:[#allocation6 + $0x13c8] sm:$0xff]
    %v5272 = vld [vmem:[#allocation6 + $0x13d0] sm:$0xff]
    %v5273 = vld [vmem:[#allocation6 + $0x13d8] sm:$0xff]
    %v5274 = vld [vmem:[#allocation6 + $0x13e0] sm:$0xff]
    %v5275 = vld [vmem:[#allocation6 + $0x13e8] sm:$0xff]
    %v5276 = vld [vmem:[#allocation6 + $0x13f0] sm:$0xff]
    %v5277 = vld [vmem:[#allocation6 + $0x13f8] sm:$0xff]
    %v5278 = vld [vmem:[#allocation6 + $0x1400] sm:$0xff]
    %v5279 = vld [vmem:[#allocation6 + $0x1408] sm:$0xff]
    %v5280 = vld [vmem:[#allocation6 + $0x1410] sm:$0xff]
    %v5281 = vld [vmem:[#allocation6 + $0x1418] sm:$0xff]
    %v5282 = vld [vmem:[#allocation6 + $0x1420] sm:$0xff]
    %v5283 = vld [vmem:[#allocation6 + $0x1428] sm:$0xff]
    %v5284 = vld [vmem:[#allocation6 + $0x1430] sm:$0xff]
    %v5285 = vld [vmem:[#allocation6 + $0x1438] sm:$0xff]
    %v5286 = vld [vmem:[#allocation6 + $0x1440] sm:$0xff]
    %v5287 = vld [vmem:[#allocation6 + $0x1448] sm:$0xff]
    %v5288 = vld [vmem:[#allocation6 + $0x1450] sm:$0xff]
    %v5289 = vld [vmem:[#allocation6 + $0x1458] sm:$0xff]
    %v5290 = vld [vmem:[#allocation6 + $0x1460] sm:$0xff]
    %v5291 = vld [vmem:[#allocation6 + $0x1468] sm:$0xff]
    %v5292 = vld [vmem:[#allocation6 + $0x1470] sm:$0xff]
    %v5293 = vld [vmem:[#allocation6 + $0x1478] sm:$0xff]
    %v5294 = vld [vmem:[#allocation6 + $0x1480] sm:$0xff]
    %v5295 = vld [vmem:[#allocation6 + $0x1488] sm:$0xff]
    %v5296 = vld [vmem:[#allocation6 + $0x1490] sm:$0xff]
    %v5297 = vld [vmem:[#allocation6 + $0x1498] sm:$0xff]
    %v5298 = vld [vmem:[#allocation6 + $0x14a0] sm:$0xff]
    %v5299 = vld [vmem:[#allocation6 + $0x14a8] sm:$0xff]
    %v5300 = vld [vmem:[#allocation6 + $0x14b0] sm:$0xff]
    %v5301 = vld [vmem:[#allocation6 + $0x14b8] sm:$0xff]
    %v5302 = vld [vmem:[#allocation6 + $0x14c0] sm:$0xff]
    %v5303 = vld [vmem:[#allocation6 + $0x14c8] sm:$0xff]
    %v5304 = vld [vmem:[#allocation6 + $0x14d0] sm:$0xff]
    %v5305 = vld [vmem:[#allocation6 + $0x14d8] sm:$0xff]
    %v5306 = vld [vmem:[#allocation6 + $0x14e0] sm:$0xff]
    %v5307 = vld [vmem:[#allocation6 + $0x14e8] sm:$0xff]
    %v5308 = vld [vmem:[#allocation6 + $0x14f0] sm:$0xff]
    %v5309 = vld [vmem:[#allocation6 + $0x14f8] sm:$0xff]
    %v5310 = vld [vmem:[#allocation6 + $0x1500] sm:$0xff]
    %v5311 = vld [vmem:[#allocation6 + $0x1508] sm:$0xff]
    %v5312 = vld [vmem:[#allocation6 + $0x1510] sm:$0xff]
    %v5313 = vld [vmem:[#allocation6 + $0x1518] sm:$0xff]
    %v5314 = vld [vmem:[#allocation6 + $0x1520] sm:$0xff]
    %v5315 = vld [vmem:[#allocation6 + $0x1528] sm:$0xff]
    %v5316 = vld [vmem:[#allocation6 + $0x1530] sm:$0xff]
    %v5317 = vld [vmem:[#allocation6 + $0x1538] sm:$0xff]
    %v5318 = vld [vmem:[#allocation6 + $0x1540] sm:$0xff]
    %v5319 = vld [vmem:[#allocation6 + $0x1548] sm:$0xff]
    %v5320 = vld [vmem:[#allocation6 + $0x1550] sm:$0xff]
    %v5321 = vld [vmem:[#allocation6 + $0x1558] sm:$0xff]
    %v5322 = vld [vmem:[#allocation6 + $0x1560] sm:$0xff]
    %v5323 = vld [vmem:[#allocation6 + $0x1568] sm:$0xff]
    %v5324 = vld [vmem:[#allocation6 + $0x1570] sm:$0xff]
    %v5325 = vld [vmem:[#allocation6 + $0x1578] sm:$0xff]
    %v5326 = vld [vmem:[#allocation6 + $0x1580] sm:$0xff]
    %v5327 = vld [vmem:[#allocation6 + $0x1588] sm:$0xff]
    %v5328 = vld [vmem:[#allocation6 + $0x1590] sm:$0xff]
    %v5329 = vld [vmem:[#allocation6 + $0x1598] sm:$0xff]
    %v5330 = vld [vmem:[#allocation6 + $0x15a0] sm:$0xff]
    %v5331 = vld [vmem:[#allocation6 + $0x15a8] sm:$0xff]
    %v5332 = vld [vmem:[#allocation6 + $0x15b0] sm:$0xff]
    %v5333 = vld [vmem:[#allocation6 + $0x15b8] sm:$0xff]
    %v5334 = vld [vmem:[#allocation6 + $0x15c0] sm:$0xff]
    %v5335 = vld [vmem:[#allocation6 + $0x15c8] sm:$0xff]
    %v5336 = vld [vmem:[#allocation6 + $0x15d0] sm:$0xff]
    %v5337 = vld [vmem:[#allocation6 + $0x15d8] sm:$0xff]
    %v5338 = vld [vmem:[#allocation6 + $0x15e0] sm:$0xff]
    %v5339 = vld [vmem:[#allocation6 + $0x15e8] sm:$0xff]
    %v5340 = vld [vmem:[#allocation6 + $0x15f0] sm:$0xff]
    %v5341 = vld [vmem:[#allocation6 + $0x15f8] sm:$0xff]
    %v5342 = vld [vmem:[#allocation6 + $0x1600] sm:$0xff]
    %v5343 = vld [vmem:[#allocation6 + $0x1608] sm:$0xff]
    %v5344 = vld [vmem:[#allocation6 + $0x1610] sm:$0xff]
    %v5345 = vld [vmem:[#allocation6 + $0x1618] sm:$0xff]
    %v5346 = vld [vmem:[#allocation6 + $0x1620] sm:$0xff]
    %v5347 = vld [vmem:[#allocation6 + $0x1628] sm:$0xff]
    %v5348 = vld [vmem:[#allocation6 + $0x1630] sm:$0xff]
    %v5349 = vld [vmem:[#allocation6 + $0x1638] sm:$0xff]
    %v5350 = vld [vmem:[#allocation6 + $0x1640] sm:$0xff]
    %v5351 = vld [vmem:[#allocation6 + $0x1648] sm:$0xff]
    %v5352 = vld [vmem:[#allocation6 + $0x1650] sm:$0xff]
    %v5353 = vld [vmem:[#allocation6 + $0x1658] sm:$0xff]
    %v5354 = vld [vmem:[#allocation6 + $0x1660] sm:$0xff]
    %v5355 = vld [vmem:[#allocation6 + $0x1668] sm:$0xff]
    %v5356 = vld [vmem:[#allocation6 + $0x1670] sm:$0xff]
    %v5357 = vld [vmem:[#allocation6 + $0x1678] sm:$0xff]
    %v5358 = vld [vmem:[#allocation6 + $0x1680] sm:$0xff]
    %v5359 = vld [vmem:[#allocation6 + $0x1688] sm:$0xff]
    %v5360 = vld [vmem:[#allocation6 + $0x1690] sm:$0xff]
    %v5361 = vld [vmem:[#allocation6 + $0x1698] sm:$0xff]
    %v5362 = vld [vmem:[#allocation6 + $0x16a0] sm:$0xff]
    %v5363 = vld [vmem:[#allocation6 + $0x16a8] sm:$0xff]
    %v5364 = vld [vmem:[#allocation6 + $0x16b0] sm:$0xff]
    %v5365 = vld [vmem:[#allocation6 + $0x16b8] sm:$0xff]
    %v5366 = vld [vmem:[#allocation6 + $0x16c0] sm:$0xff]
    %v5367 = vld [vmem:[#allocation6 + $0x16c8] sm:$0xff]
    %v5368 = vld [vmem:[#allocation6 + $0x16d0] sm:$0xff]
    %v5369 = vld [vmem:[#allocation6 + $0x16d8] sm:$0xff]
    %v5370 = vld [vmem:[#allocation6 + $0x16e0] sm:$0xff]
    %v5371 = vld [vmem:[#allocation6 + $0x16e8] sm:$0xff]
    %v5372 = vld [vmem:[#allocation6 + $0x16f0] sm:$0xff]
    %v5373 = vld [vmem:[#allocation6 + $0x16f8] sm:$0xff]
    %v5374 = vld [vmem:[#allocation6 + $0x1700] sm:$0xff]
    %v5375 = vld [vmem:[#allocation6 + $0x1708] sm:$0xff]
    %v5376 = vld [vmem:[#allocation6 + $0x1710] sm:$0xff]
    %v5377 = vld [vmem:[#allocation6 + $0x1718] sm:$0xff]
    %v5378 = vld [vmem:[#allocation6 + $0x1720] sm:$0xff]
    %v5379 = vld [vmem:[#allocation6 + $0x1728] sm:$0xff]
    %v5380 = vld [vmem:[#allocation6 + $0x1730] sm:$0xff]
    %v5381 = vld [vmem:[#allocation6 + $0x1738] sm:$0xff]
    %v5382 = vld [vmem:[#allocation6 + $0x1740] sm:$0xff]
    %v5383 = vld [vmem:[#allocation6 + $0x1748] sm:$0xff]
    %v5384 = vld [vmem:[#allocation6 + $0x1750] sm:$0xff]
    %v5385 = vld [vmem:[#allocation6 + $0x1758] sm:$0xff]
    %v5386 = vld [vmem:[#allocation6 + $0x1760] sm:$0xff]
    %v5387 = vld [vmem:[#allocation6 + $0x1768] sm:$0xff]
    %v5388 = vld [vmem:[#allocation6 + $0x1770] sm:$0xff]
    %v5389 = vld [vmem:[#allocation6 + $0x1778] sm:$0xff]
    %v5390 = vld [vmem:[#allocation6 + $0x1780] sm:$0xff]
    %v5391 = vld [vmem:[#allocation6 + $0x1788] sm:$0xff]
    %v5392 = vld [vmem:[#allocation6 + $0x1790] sm:$0xff]
    %v5393 = vld [vmem:[#allocation6 + $0x1798] sm:$0xff]
    %v5394 = vld [vmem:[#allocation6 + $0x17a0] sm:$0xff]
    %v5395 = vld [vmem:[#allocation6 + $0x17a8] sm:$0xff]
    %v5396 = vld [vmem:[#allocation6 + $0x17b0] sm:$0xff]
    %v5397 = vld [vmem:[#allocation6 + $0x17b8] sm:$0xff]
    %v5398 = vld [vmem:[#allocation6 + $0x17c0] sm:$0xff]
    %v5399 = vld [vmem:[#allocation6 + $0x17c8] sm:$0xff]
    %v5400 = vld [vmem:[#allocation6 + $0x17d0] sm:$0xff]
    %v5401 = vld [vmem:[#allocation6 + $0x17d8] sm:$0xff]
    %v5402 = vld [vmem:[#allocation6 + $0x17e0] sm:$0xff]
    %v5403 = vld [vmem:[#allocation6 + $0x17e8] sm:$0xff]
    %v5404 = vld [vmem:[#allocation6 + $0x17f0] sm:$0xff]
    %v5405 = vld [vmem:[#allocation6 + $0x17f8] sm:$0xff]
    %v5406 = vld [vmem:[#allocation6 + $0x1800] sm:$0xff]
    %v5407 = vld [vmem:[#allocation6 + $0x1808] sm:$0xff]
    %v5408 = vld [vmem:[#allocation6 + $0x1810] sm:$0xff]
    %v5409 = vld [vmem:[#allocation6 + $0x1818] sm:$0xff]
    %v5410 = vld [vmem:[#allocation6 + $0x1820] sm:$0xff]
    %v5411 = vld [vmem:[#allocation6 + $0x1828] sm:$0xff]
    %v5412 = vld [vmem:[#allocation6 + $0x1830] sm:$0xff]
    %v5413 = vld [vmem:[#allocation6 + $0x1838] sm:$0xff]
    %v5414 = vld [vmem:[#allocation6 + $0x1840] sm:$0xff]
    %v5415 = vld [vmem:[#allocation6 + $0x1848] sm:$0xff]
    %v5416 = vld [vmem:[#allocation6 + $0x1850] sm:$0xff]
    %v5417 = vld [vmem:[#allocation6 + $0x1858] sm:$0xff]
    %v5418 = vld [vmem:[#allocation6 + $0x1860] sm:$0xff]
    %v5419 = vld [vmem:[#allocation6 + $0x1868] sm:$0xff]
    %v5420 = vld [vmem:[#allocation6 + $0x1870] sm:$0xff]
    %v5421 = vld [vmem:[#allocation6 + $0x1878] sm:$0xff]
    %v5422 = vld [vmem:[#allocation6 + $0x1880] sm:$0xff]
    %v5423 = vld [vmem:[#allocation6 + $0x1888] sm:$0xff]
    %v5424 = vld [vmem:[#allocation6 + $0x1890] sm:$0xff]
    %v5425 = vld [vmem:[#allocation6 + $0x1898] sm:$0xff]
    %v5426 = vld [vmem:[#allocation6 + $0x18a0] sm:$0xff]
    %v5427 = vld [vmem:[#allocation6 + $0x18a8] sm:$0xff]
    %v5428 = vld [vmem:[#allocation6 + $0x18b0] sm:$0xff]
    %v5429 = vld [vmem:[#allocation6 + $0x18b8] sm:$0xff]
    %v5430 = vld [vmem:[#allocation6 + $0x18c0] sm:$0xff]
    %v5431 = vld [vmem:[#allocation6 + $0x18c8] sm:$0xff]
    %v5432 = vld [vmem:[#allocation6 + $0x18d0] sm:$0xff]
    %v5433 = vld [vmem:[#allocation6 + $0x18d8] sm:$0xff]
    %v5434 = vld [vmem:[#allocation6 + $0x18e0] sm:$0xff]
    %v5435 = vld [vmem:[#allocation6 + $0x18e8] sm:$0xff]
    %v5436 = vld [vmem:[#allocation6 + $0x18f0] sm:$0xff]
    %v5437 = vld [vmem:[#allocation6 + $0x18f8] sm:$0xff]
    %v5438 = vld [vmem:[#allocation6 + $0x1900] sm:$0xff]
    %v5439 = vld [vmem:[#allocation6 + $0x1908] sm:$0xff]
    %v5440 = vld [vmem:[#allocation6 + $0x1910] sm:$0xff]
    %v5441 = vld [vmem:[#allocation6 + $0x1918] sm:$0xff]
    %v5442 = vld [vmem:[#allocation6 + $0x1920] sm:$0xff]
    %v5443 = vld [vmem:[#allocation6 + $0x1928] sm:$0xff]
    %v5444 = vld [vmem:[#allocation6 + $0x1930] sm:$0xff]
    %v5445 = vld [vmem:[#allocation6 + $0x1938] sm:$0xff]
    %v5446 = vld [vmem:[#allocation6 + $0x1940] sm:$0xff]
    %v5447 = vld [vmem:[#allocation6 + $0x1948] sm:$0xff]
    %v5448 = vld [vmem:[#allocation6 + $0x1950] sm:$0xff]
    %v5449 = vld [vmem:[#allocation6 + $0x1958] sm:$0xff]
    %v5450 = vld [vmem:[#allocation6 + $0x1960] sm:$0xff]
    %v5451 = vld [vmem:[#allocation6 + $0x1968] sm:$0xff]
    %v5452 = vld [vmem:[#allocation6 + $0x1970] sm:$0xff]
    %v5453 = vld [vmem:[#allocation6 + $0x1978] sm:$0xff]
    %v5454 = vld [vmem:[#allocation6 + $0x1980] sm:$0xff]
    %v5455 = vld [vmem:[#allocation6 + $0x1988] sm:$0xff]
    %v5456 = vld [vmem:[#allocation6 + $0x1990] sm:$0xff]
    %v5457 = vld [vmem:[#allocation6 + $0x1998] sm:$0xff]
    %v5458 = vld [vmem:[#allocation6 + $0x19a0] sm:$0xff]
    %v5459 = vld [vmem:[#allocation6 + $0x19a8] sm:$0xff]
    %v5460 = vld [vmem:[#allocation6 + $0x19b0] sm:$0xff]
    %v5461 = vld [vmem:[#allocation6 + $0x19b8] sm:$0xff]
    %v5462 = vld [vmem:[#allocation6 + $0x19c0] sm:$0xff]
    %v5463 = vld [vmem:[#allocation6 + $0x19c8] sm:$0xff]
    %v5464 = vld [vmem:[#allocation6 + $0x19d0] sm:$0xff]
    %v5465 = vld [vmem:[#allocation6 + $0x19d8] sm:$0xff]
    %v5466 = vld [vmem:[#allocation6 + $0x19e0] sm:$0xff]
    %v5467 = vld [vmem:[#allocation6 + $0x19e8] sm:$0xff]
    %v5468 = vld [vmem:[#allocation6 + $0x19f0] sm:$0xff]
    %v5469 = vld [vmem:[#allocation6 + $0x19f8] sm:$0xff]
    %v5470 = vld [vmem:[#allocation7] sm:$0x1]
    %v5472 = vlaneseq
    %v5473 = vshrl.u32 %v5472, 7
    %v5474 = vsub.s32 0, %v5473
    %v5475 = vrot.slane %v5470, %v5474
    %5477 = vmatprep.subr.mxu0 0.0
    %5478 = vmatpush1.msra.mxu0 %v4638
    %5479 = vmatprep.subr.mxu0 0.0
    %5480 = vmatpush1.msra.mxu0 %v4639
    %5481 = vmatprep.subr.mxu0 0.0
    %5482 = vmatpush1.msra.mxu0 %v4640
    %5483 = vmatprep.subr.mxu0 0.0
    %5484 = vmatpush1.msra.mxu0 %v4641
    %5485 = vmatprep.subr.mxu0 0.0
    %5486 = vmatpush1.msra.mxu0 %v4642
    %5487 = vmatprep.subr.mxu0 0.0
    %5488 = vmatpush1.msra.mxu0 %v4643
    %5489 = vmatprep.subr.mxu0 0.0
    %5490 = vmatpush1.msra.mxu0 %v4644
    %5491 = vmatprep.subr.mxu0 0.0
    %5492 = vmatpush1.msra.mxu0 %v4645
    %5493 = vmatprep.subr.mxu0 0.0
    %5494 = vmatpush1.msra.mxu0 %v4646
    %5495 = vmatprep.subr.mxu0 0.0
    %5496 = vmatpush1.msra.mxu0 %v4647
    %5497 = vmatprep.subr.mxu0 0.0
    %5498 = vmatpush1.msra.mxu0 %v4648
    %5499 = vmatprep.subr.mxu0 0.0
    %5500 = vmatpush1.msra.mxu0 %v4649
    %5501 = vmatprep.subr.mxu0 0.0
    %5502 = vmatpush1.msra.mxu0 %v4650
    %5503 = vmatprep.subr.mxu0 0.0
    %5504 = vmatpush1.msra.mxu0 %v4651
    %5505 = vmatprep.subr.mxu0 0.0
    %5506 = vmatpush1.msra.mxu0 %v4652
    %5507 = vmatprep.subr.mxu0 0.0
    %5508 = vmatpush1.msra.mxu0 %v4653
    %5509 = vmatprep.subr.mxu0 0.0
    %5510 = vmatpush1.msra.mxu0 %v4654
    %5511 = vmatprep.subr.mxu0 0.0
    %5512 = vmatpush1.msra.mxu0 %v4655
    %5513 = vmatprep.subr.mxu0 0.0
    %5514 = vmatpush1.msra.mxu0 %v4656
    %5515 = vmatprep.subr.mxu0 0.0
    %5516 = vmatpush1.msra.mxu0 %v4657
    %5517 = vmatprep.subr.mxu0 0.0
    %5518 = vmatpush1.msra.mxu0 %v4658
    %5519 = vmatprep.subr.mxu0 0.0
    %5520 = vmatpush1.msra.mxu0 %v4659
    %5521 = vmatprep.subr.mxu0 0.0
    %5522 = vmatpush1.msra.mxu0 %v4660
    %5523 = vmatprep.subr.mxu0 0.0
    %5524 = vmatpush1.msra.mxu0 %v4661
    %5525 = vmatprep.subr.mxu0 0.0
    %5526 = vmatpush1.msra.mxu0 %v4662
    %5527 = vmatprep.subr.mxu0 0.0
    %5528 = vmatpush1.msra.mxu0 %v4663
    %5529 = vmatprep.subr.mxu0 0.0
    %5530 = vmatpush1.msra.mxu0 %v4664
    %5531 = vmatprep.subr.mxu0 0.0
    %5532 = vmatpush1.msra.mxu0 %v4665
    %5533 = vmatprep.subr.mxu0 0.0
    %5534 = vmatpush1.msra.mxu0 %v4666
    %5535 = vmatprep.subr.mxu0 0.0
    %5536 = vmatpush1.msra.mxu0 %v4667
    %5537 = vmatprep.subr.mxu0 0.0
    %5538 = vmatpush1.msra.mxu0 %v4668
    %5539 = vmatprep.subr.mxu0 0.0
    %5540 = vmatpush1.msra.mxu0 %v4669
    %5541 = vmatprep.mubr.f32.mxu0 %v4587
    %5542 = vmatmul.mubr.f32.gmra.mrb[0].mxu0 %v4586
    %v5543 = vpop.f32.mrb[0].mxu0
    %v5544 = vadd.f32 %v5475, %v5543
    %v5545 = vpop.f32.mrb[0].mxu0
    %5546 = vdwg.mxu0
    %5547 = vmatprep.subr.mxu0 0.0
    %5548 = vmatpush1.msra.mxu0 %v4670
    %5549 = vmatprep.subr.mxu0 0.0
    %5550 = vmatpush1.msra.mxu0 %v4671
    %5551 = vmatprep.subr.mxu0 0.0
    %5552 = vmatpush1.msra.mxu0 %v4672
    %5553 = vmatprep.subr.mxu0 0.0
    %5554 = vmatpush1.msra.mxu0 %v4673
    %5555 = vmatprep.subr.mxu0 0.0
    %5556 = vmatpush1.msra.mxu0 %v4674
    %5557 = vmatprep.subr.mxu0 0.0
    %5558 = vmatpush1.msra.mxu0 %v4675
    %5559 = vmatprep.subr.mxu0 0.0
    %5560 = vmatpush1.msra.mxu0 %v4676
    %5561 = vmatprep.subr.mxu0 0.0
    %5562 = vmatpush1.msra.mxu0 %v4677
    %5563 = vmatprep.subr.mxu0 0.0
    %5564 = vmatpush1.msra.mxu0 %v4678
    %5565 = vmatprep.subr.mxu0 0.0
    %5566 = vmatpush1.msra.mxu0 %v4679
    %5567 = vmatprep.subr.mxu0 0.0
    %5568 = vmatpush1.msra.mxu0 %v4680
    %5569 = vmatprep.subr.mxu0 0.0
    %5570 = vmatpush1.msra.mxu0 %v4681
    %5571 = vmatprep.subr.mxu0 0.0
    %5572 = vmatpush1.msra.mxu0 %v4682
    %5573 = vmatprep.subr.mxu0 0.0
    %5574 = vmatpush1.msra.mxu0 %v4683
    %5575 = vmatprep.subr.mxu0 0.0
    %5576 = vmatpush1.msra.mxu0 %v4684
    %5577 = vmatprep.subr.mxu0 0.0
    %5578 = vmatpush1.msra.mxu0 %v4685
    %5579 = vmatprep.subr.mxu0 0.0
    %5580 = vmatpush1.msra.mxu0 %v4686
    %5581 = vmatprep.subr.mxu0 0.0
    %5582 = vmatpush1.msra.mxu0 %v4687
    %5583 = vmatprep.subr.mxu0 0.0
    %5584 = vmatpush1.msra.mxu0 %v4688
    %5585 = vmatprep.subr.mxu0 0.0
    %5586 = vmatpush1.msra.mxu0 %v4689
    %5587 = vmatprep.subr.mxu0 0.0
    %5588 = vmatpush1.msra.mxu0 %v4690
    %5589 = vmatprep.subr.mxu0 0.0
    %5590 = vmatpush1.msra.mxu0 %v4691
    %5591 = vmatprep.subr.mxu0 0.0
    %5592 = vmatpush1.msra.mxu0 %v4692
    %5593 = vmatprep.subr.mxu0 0.0
    %5594 = vmatpush1.msra.mxu0 %v4693
    %5595 = vmatprep.subr.mxu0 0.0
    %5596 = vmatpush1.msra.mxu0 %v4694
    %5597 = vmatprep.subr.mxu0 0.0
    %5598 = vmatpush1.msra.mxu0 %v4695
    %5599 = vmatprep.subr.mxu0 0.0
    %5600 = vmatpush1.msra.mxu0 %v4696
    %5601 = vmatprep.subr.mxu0 0.0
    %5602 = vmatpush1.msra.mxu0 %v4697
    %5603 = vmatprep.subr.mxu0 0.0
    %5604 = vmatpush1.msra.mxu0 %v4698
    %5605 = vmatprep.subr.mxu0 0.0
    %5606 = vmatpush1.msra.mxu0 %v4699
    %5607 = vmatprep.subr.mxu0 0.0
    %5608 = vmatpush1.msra.mxu0 %v4700
    %5609 = vmatprep.subr.mxu0 0.0
    %5610 = vmatpush1.msra.mxu0 %v4701
    %5611 = vmatprep.mubr.f32.mxu0 %v4589
    %5612 = vmatmul.mubr.f32.gmra.mrb[0].mxu0 %v4588
    %v5613 = vpop.f32.mrb[0].mxu0
    %v5614 = vadd.f32 %v5544, %v5613
    %v5615 = vpop.f32.mrb[0].mxu0
    %5616 = vdwg.mxu0
    %5617 = vmatprep.subr.mxu0 0.0
    %5618 = vmatpush1.msra.mxu0 %v4702
    %5619 = vmatprep.subr.mxu0 0.0
    %5620 = vmatpush1.msra.mxu0 %v4703
    %5621 = vmatprep.subr.mxu0 0.0
    %5622 = vmatpush1.msra.mxu0 %v4704
    %5623 = vmatprep.subr.mxu0 0.0
    %5624 = vmatpush1.msra.mxu0 %v4705
    %5625 = vmatprep.subr.mxu0 0.0
    %5626 = vmatpush1.msra.mxu0 %v4706
    %5627 = vmatprep.subr.mxu0 0.0
    %5628 = vmatpush1.msra.mxu0 %v4707
    %5629 = vmatprep.subr.mxu0 0.0
    %5630 = vmatpush1.msra.mxu0 %v4708
    %5631 = vmatprep.subr.mxu0 0.0
    %5632 = vmatpush1.msra.mxu0 %v4709
    %5633 = vmatprep.subr.mxu0 0.0
    %5634 = vmatpush1.msra.mxu0 %v4710
    %5635 = vmatprep.subr.mxu0 0.0
    %5636 = vmatpush1.msra.mxu0 %v4711
    %5637 = vmatprep.subr.mxu0 0.0
    %5638 = vmatpush1.msra.mxu0 %v4712
    %5639 = vmatprep.subr.mxu0 0.0
    %5640 = vmatpush1.msra.mxu0 %v4713
    %5641 = vmatprep.subr.mxu0 0.0
    %5642 = vmatpush1.msra.mxu0 %v4714
    %5643 = vmatprep.subr.mxu0 0.0
    %5644 = vmatpush1.msra.mxu0 %v4715
    %5645 = vmatprep.subr.mxu0 0.0
    %5646 = vmatpush1.msra.mxu0 %v4716
    %5647 = vmatprep.subr.mxu0 0.0
    %5648 = vmatpush1.msra.mxu0 %v4717
    %5649 = vmatprep.subr.mxu0 0.0
    %5650 = vmatpush1.msra.mxu0 %v4718
    %5651 = vmatprep.subr.mxu0 0.0
    %5652 = vmatpush1.msra.mxu0 %v4719
    %5653 = vmatprep.subr.mxu0 0.0
    %5654 = vmatpush1.msra.mxu0 %v4720
    %5655 = vmatprep.subr.mxu0 0.0
    %5656 = vmatpush1.msra.mxu0 %v4721
    %5657 = vmatprep.subr.mxu0 0.0
    %5658 = vmatpush1.msra.mxu0 %v4722
    %5659 = vmatprep.subr.mxu0 0.0
    %5660 = vmatpush1.msra.mxu0 %v4723
    %5661 = vmatprep.subr.mxu0 0.0
    %5662 = vmatpush1.msra.mxu0 %v4724
    %5663 = vmatprep.subr.mxu0 0.0
    %5664 = vmatpush1.msra.mxu0 %v4725
    %5665 = vmatprep.subr.mxu0 0.0
    %5666 = vmatpush1.msra.mxu0 %v4726
    %5667 = vmatprep.subr.mxu0 0.0
    %5668 = vmatpush1.msra.mxu0 %v4727
    %5669 = vmatprep.subr.mxu0 0.0
    %5670 = vmatpush1.msra.mxu0 %v4728
    %5671 = vmatprep.subr.mxu0 0.0
    %5672 = vmatpush1.msra.mxu0 %v4729
    %5673 = vmatprep.subr.mxu0 0.0
    %5674 = vmatpush1.msra.mxu0 %v4730
    %5675 = vmatprep.subr.mxu0 0.0
    %5676 = vmatpush1.msra.mxu0 %v4731
    %5677 = vmatprep.subr.mxu0 0.0
    %5678 = vmatpush1.msra.mxu0 %v4732
    %5679 = vmatprep.subr.mxu0 0.0
    %5680 = vmatpush1.msra.mxu0 %v4733
    %5681 = vmatprep.mubr.f32.mxu0 %v4591
    %5682 = vmatmul.mubr.f32.gmra.mrb[0].mxu0 %v4590
    %v5683 = vpop.f32.mrb[0].mxu0
    %v5684 = vadd.f32 %v5614, %v5683
    %v5685 = vpop.f32.mrb[0].mxu0
    %5686 = vdwg.mxu0
    %5687 = vmatprep.subr.mxu0 0.0
    %5688 = vmatpush1.msra.mxu0 %v4734
    %5689 = vmatprep.subr.mxu0 0.0
    %5690 = vmatpush1.msra.mxu0 %v4735
    %5691 = vmatprep.subr.mxu0 0.0
    %5692 = vmatpush1.msra.mxu0 %v4736
    %5693 = vmatprep.subr.mxu0 0.0
    %5694 = vmatpush1.msra.mxu0 %v4737
    %5695 = vmatprep.subr.mxu0 0.0
    %5696 = vmatpush1.msra.mxu0 %v4738
    %5697 = vmatprep.subr.mxu0 0.0
    %5698 = vmatpush1.msra.mxu0 %v4739
    %5699 = vmatprep.subr.mxu0 0.0
    %5700 = vmatpush1.msra.mxu0 %v4740
    %5701 = vmatprep.subr.mxu0 0.0
    %5702 = vmatpush1.msra.mxu0 %v4741
    %5703 = vmatprep.subr.mxu0 0.0
    %5704 = vmatpush1.msra.mxu0 %v4742
    %5705 = vmatprep.subr.mxu0 0.0
    %5706 = vmatpush1.msra.mxu0 %v4743
    %5707 = vmatprep.subr.mxu0 0.0
    %5708 = vmatpush1.msra.mxu0 %v4744
    %5709 = vmatprep.subr.mxu0 0.0
    %5710 = vmatpush1.msra.mxu0 %v4745
    %5711 = vmatprep.subr.mxu0 0.0
    %5712 = vmatpush1.msra.mxu0 %v4746
    %5713 = vmatprep.subr.mxu0 0.0
    %5714 = vmatpush1.msra.mxu0 %v4747
    %5715 = vmatprep.subr.mxu0 0.0
    %5716 = vmatpush1.msra.mxu0 %v4748
    %5717 = vmatprep.subr.mxu0 0.0
    %5718 = vmatpush1.msra.mxu0 %v4749
    %5719 = vmatprep.subr.mxu0 0.0
    %5720 = vmatpush1.msra.mxu0 %v4750
    %5721 = vmatprep.subr.mxu0 0.0
    %5722 = vmatpush1.msra.mxu0 %v4751
    %5723 = vmatprep.subr.mxu0 0.0
    %5724 = vmatpush1.msra.mxu0 %v4752
    %5725 = vmatprep.subr.mxu0 0.0
    %5726 = vmatpush1.msra.mxu0 %v4753
    %5727 = vmatprep.subr.mxu0 0.0
    %5728 = vmatpush1.msra.mxu0 %v4754
    %5729 = vmatprep.subr.mxu0 0.0
    %5730 = vmatpush1.msra.mxu0 %v4755
    %5731 = vmatprep.subr.mxu0 0.0
    %5732 = vmatpush1.msra.mxu0 %v4756
    %5733 = vmatprep.subr.mxu0 0.0
    %5734 = vmatpush1.msra.mxu0 %v4757
    %5735 = vmatprep.subr.mxu0 0.0
    %5736 = vmatpush1.msra.mxu0 %v4758
    %5737 = vmatprep.subr.mxu0 0.0
    %5738 = vmatpush1.msra.mxu0 %v4759
    %5739 = vmatprep.subr.mxu0 0.0
    %5740 = vmatpush1.msra.mxu0 %v4760
    %5741 = vmatprep.subr.mxu0 0.0
    %5742 = vmatpush1.msra.mxu0 %v4761
    %5743 = vmatprep.subr.mxu0 0.0
    %5744 = vmatpush1.msra.mxu0 %v4762
    %5745 = vmatprep.subr.mxu0 0.0
    %5746 = vmatpush1.msra.mxu0 %v4763
    %5747 = vmatprep.subr.mxu0 0.0
    %5748 = vmatpush1.msra.mxu0 %v4764
    %5749 = vmatprep.subr.mxu0 0.0
    %5750 = vmatpush1.msra.mxu0 %v4765
    %5751 = vmatprep.mubr.f32.mxu0 %v4593
    %5752 = vmatmul.mubr.f32.gmra.mrb[0].mxu0 %v4592
    %v5753 = vpop.f32.mrb[0].mxu0
    %v5754 = vadd.f32 %v5684, %v5753
    %v5755 = vpop.f32.mrb[0].mxu0
    %5756 = vdwg.mxu0
    %5757 = vmatprep.subr.mxu0 0.0
    %5758 = vmatpush1.msra.mxu0 %v4766
    %5759 = vmatprep.subr.mxu0 0.0
    %5760 = vmatpush1.msra.mxu0 %v4767
    %5761 = vmatprep.subr.mxu0 0.0
    %5762 = vmatpush1.msra.mxu0 %v4768
    %5763 = vmatprep.subr.mxu0 0.0
    %5764 = vmatpush1.msra.mxu0 %v4769
    %5765 = vmatprep.subr.mxu0 0.0
    %5766 = vmatpush1.msra.mxu0 %v4770
    %5767 = vmatprep.subr.mxu0 0.0
    %5768 = vmatpush1.msra.mxu0 %v4771
    %5769 = vmatprep.subr.mxu0 0.0
    %5770 = vmatpush1.msra.mxu0 %v4772
    %5771 = vmatprep.subr.mxu0 0.0
    %5772 = vmatpush1.msra.mxu0 %v4773
    %5773 = vmatprep.subr.mxu0 0.0
    %5774 = vmatpush1.msra.mxu0 %v4774
    %5775 = vmatprep.subr.mxu0 0.0
    %5776 = vmatpush1.msra.mxu0 %v4775
    %5777 = vmatprep.subr.mxu0 0.0
    %5778 = vmatpush1.msra.mxu0 %v4776
    %5779 = vmatprep.subr.mxu0 0.0
    %5780 = vmatpush1.msra.mxu0 %v4777
    %5781 = vmatprep.subr.mxu0 0.0
    %5782 = vmatpush1.msra.mxu0 %v4778
    %5783 = vmatprep.subr.mxu0 0.0
    %5784 = vmatpush1.msra.mxu0 %v4779
    %5785 = vmatprep.subr.mxu0 0.0
    %5786 = vmatpush1.msra.mxu0 %v4780
    %5787 = vmatprep.subr.mxu0 0.0
    %5788 = vmatpush1.msra.mxu0 %v4781
    %5789 = vmatprep.subr.mxu0 0.0
    %5790 = vmatpush1.msra.mxu0 %v4782
    %5791 = vmatprep.subr.mxu0 0.0
    %5792 = vmatpush1.msra.mxu0 %v4783
    %5793 = vmatprep.subr.mxu0 0.0
    %5794 = vmatpush1.msra.mxu0 %v4784
    %5795 = vmatprep.subr.mxu0 0.0
    %5796 = vmatpush1.msra.mxu0 %v4785
    %5797 = vmatprep.subr.mxu0 0.0
    %5798 = vmatpush1.msra.mxu0 %v4786
    %5799 = vmatprep.subr.mxu0 0.0
    %5800 = vmatpush1.msra.mxu0 %v4787
    %5801 = vmatprep.subr.mxu0 0.0
    %5802 = vmatpush1.msra.mxu0 %v4788
    %5803 = vmatprep.subr.mxu0 0.0
    %5804 = vmatpush1.msra.mxu0 %v4789
    %5805 = vmatprep.subr.mxu0 0.0
    %5806 = vmatpush1.msra.mxu0 %v4790
    %5807 = vmatprep.subr.mxu0 0.0
    %5808 = vmatpush1.msra.mxu0 %v4791
    %5809 = vmatprep.subr.mxu0 0.0
    %5810 = vmatpush1.msra.mxu0 %v4792
    %5811 = vmatprep.subr.mxu0 0.0
    %5812 = vmatpush1.msra.mxu0 %v4793
    %5813 = vmatprep.subr.mxu0 0.0
    %5814 = vmatpush1.msra.mxu0 %v4794
    %5815 = vmatprep.subr.mxu0 0.0
    %5816 = vmatpush1.msra.mxu0 %v4795
    %5817 = vmatprep.subr.mxu0 0.0
    %5818 = vmatpush1.msra.mxu0 %v4796
    %5819 = vmatprep.subr.mxu0 0.0
    %5820 = vmatpush1.msra.mxu0 %v4797
    %5821 = vmatprep.mubr.f32.mxu0 %v4595
    %5822 = vmatmul.mubr.f32.gmra.mrb[0].mxu0 %v4594
    %v5823 = vpop.f32.mrb[0].mxu0
    %v5824 = vadd.f32 %v5754, %v5823
    %v5825 = vpop.f32.mrb[0].mxu0
    %5826 = vdwg.mxu0
    %5827 = vmatprep.subr.mxu0 0.0
    %5828 = vmatpush1.msra.mxu0 %v4798
    %5829 = vmatprep.subr.mxu0 0.0
    %5830 = vmatpush1.msra.mxu0 %v4799
    %5831 = vmatprep.subr.mxu0 0.0
    %5832 = vmatpush1.msra.mxu0 %v4800
    %5833 = vmatprep.subr.mxu0 0.0
    %5834 = vmatpush1.msra.mxu0 %v4801
    %5835 = vmatprep.subr.mxu0 0.0
    %5836 = vmatpush1.msra.mxu0 %v4802
    %5837 = vmatprep.subr.mxu0 0.0
    %5838 = vmatpush1.msra.mxu0 %v4803
    %5839 = vmatprep.subr.mxu0 0.0
    %5840 = vmatpush1.msra.mxu0 %v4804
    %5841 = vmatprep.subr.mxu0 0.0
    %5842 = vmatpush1.msra.mxu0 %v4805
    %5843 = vmatprep.subr.mxu0 0.0
    %5844 = vmatpush1.msra.mxu0 %v4806
    %5845 = vmatprep.subr.mxu0 0.0
    %5846 = vmatpush1.msra.mxu0 %v4807
    %5847 = vmatprep.subr.mxu0 0.0
    %5848 = vmatpush1.msra.mxu0 %v4808
    %5849 = vmatprep.subr.mxu0 0.0
    %5850 = vmatpush1.msra.mxu0 %v4809
    %5851 = vmatprep.subr.mxu0 0.0
    %5852 = vmatpush1.msra.mxu0 %v4810
    %5853 = vmatprep.subr.mxu0 0.0
    %5854 = vmatpush1.msra.mxu0 %v4811
    %5855 = vmatprep.subr.mxu0 0.0
    %5856 = vmatpush1.msra.mxu0 %v4812
    %5857 = vmatprep.subr.mxu0 0.0
    %5858 = vmatpush1.msra.mxu0 %v4813
    %5859 = vmatprep.subr.mxu0 0.0
    %5860 = vmatpush1.msra.mxu0 %v4814
    %5861 = vmatprep.subr.mxu0 0.0
    %5862 = vmatpush1.msra.mxu0 %v4815
    %5863 = vmatprep.subr.mxu0 0.0
    %5864 = vmatpush1.msra.mxu0 %v4816
    %5865 = vmatprep.subr.mxu0 0.0
    %5866 = vmatpush1.msra.mxu0 %v4817
    %5867 = vmatprep.subr.mxu0 0.0
    %5868 = vmatpush1.msra.mxu0 %v4818
    %5869 = vmatprep.subr.mxu0 0.0
    %5870 = vmatpush1.msra.mxu0 %v4819
    %5871 = vmatprep.subr.mxu0 0.0
    %5872 = vmatpush1.msra.mxu0 %v4820
    %5873 = vmatprep.subr.mxu0 0.0
    %5874 = vmatpush1.msra.mxu0 %v4821
    %5875 = vmatprep.subr.mxu0 0.0
    %5876 = vmatpush1.msra.mxu0 %v4822
    %5877 = vmatprep.subr.mxu0 0.0
    %5878 = vmatpush1.msra.mxu0 %v4823
    %5879 = vmatprep.subr.mxu0 0.0
    %5880 = vmatpush1.msra.mxu0 %v4824
    %5881 = vmatprep.subr.mxu0 0.0
    %5882 = vmatpush1.msra.mxu0 %v4825
    %5883 = vmatprep.subr.mxu0 0.0
    %5884 = vmatpush1.msra.mxu0 %v4826
    %5885 = vmatprep.subr.mxu0 0.0
    %5886 = vmatpush1.msra.mxu0 %v4827
    %5887 = vmatprep.subr.mxu0 0.0
    %5888 = vmatpush1.msra.mxu0 %v4828
    %5889 = vmatprep.subr.mxu0 0.0
    %5890 = vmatpush1.msra.mxu0 %v4829
    %5891 = vmatprep.mubr.f32.mxu0 %v4597
    %5892 = vmatmul.mubr.f32.gmra.mrb[0].mxu0 %v4596
    %v5893 = vpop.f32.mrb[0].mxu0
    %v5894 = vadd.f32 %v5824, %v5893
    %v5895 = vpop.f32.mrb[0].mxu0
    %5896 = vdwg.mxu0
    %5897 = vmatprep.subr.mxu0 0.0
    %5898 = vmatpush1.msra.mxu0 %v4830
    %5899 = vmatprep.subr.mxu0 0.0
    %5900 = vmatpush1.msra.mxu0 %v4831
    %5901 = vmatprep.subr.mxu0 0.0
    %5902 = vmatpush1.msra.mxu0 %v4832
    %5903 = vmatprep.subr.mxu0 0.0
    %5904 = vmatpush1.msra.mxu0 %v4833
    %5905 = vmatprep.subr.mxu0 0.0
    %5906 = vmatpush1.msra.mxu0 %v4834
    %5907 = vmatprep.subr.mxu0 0.0
    %5908 = vmatpush1.msra.mxu0 %v4835
    %5909 = vmatprep.subr.mxu0 0.0
    %5910 = vmatpush1.msra.mxu0 %v4836
    %5911 = vmatprep.subr.mxu0 0.0
    %5912 = vmatpush1.msra.mxu0 %v4837
    %5913 = vmatprep.subr.mxu0 0.0
    %5914 = vmatpush1.msra.mxu0 %v4838
    %5915 = vmatprep.subr.mxu0 0.0
    %5916 = vmatpush1.msra.mxu0 %v4839
    %5917 = vmatprep.subr.mxu0 0.0
    %5918 = vmatpush1.msra.mxu0 %v4840
    %5919 = vmatprep.subr.mxu0 0.0
    %5920 = vmatpush1.msra.mxu0 %v4841
    %5921 = vmatprep.subr.mxu0 0.0
    %5922 = vmatpush1.msra.mxu0 %v4842
    %5923 = vmatprep.subr.mxu0 0.0
    %5924 = vmatpush1.msra.mxu0 %v4843
    %5925 = vmatprep.subr.mxu0 0.0
    %5926 = vmatpush1.msra.mxu0 %v4844
    %5927 = vmatprep.subr.mxu0 0.0
    %5928 = vmatpush1.msra.mxu0 %v4845
    %5929 = vmatprep.subr.mxu0 0.0
    %5930 = vmatpush1.msra.mxu0 %v4846
    %5931 = vmatprep.subr.mxu0 0.0
    %5932 = vmatpush1.msra.mxu0 %v4847
    %5933 = vmatprep.subr.mxu0 0.0
    %5934 = vmatpush1.msra.mxu0 %v4848
    %5935 = vmatprep.subr.mxu0 0.0
    %5936 = vmatpush1.msra.mxu0 %v4849
    %5937 = vmatprep.subr.mxu0 0.0
    %5938 = vmatpush1.msra.mxu0 %v4850
    %5939 = vmatprep.subr.mxu0 0.0
    %5940 = vmatpush1.msra.mxu0 %v4851
    %5941 = vmatprep.subr.mxu0 0.0
    %5942 = vmatpush1.msra.mxu0 %v4852
    %5943 = vmatprep.subr.mxu0 0.0
    %5944 = vmatpush1.msra.mxu0 %v4853
    %5945 = vmatprep.subr.mxu0 0.0
    %5946 = vmatpush1.msra.mxu0 %v4854
    %5947 = vmatprep.subr.mxu0 0.0
    %5948 = vmatpush1.msra.mxu0 %v4855
    %5949 = vmatprep.subr.mxu0 0.0
    %5950 = vmatpush1.msra.mxu0 %v4856
    %5951 = vmatprep.subr.mxu0 0.0
    %5952 = vmatpush1.msra.mxu0 %v4857
    %5953 = vmatprep.subr.mxu0 0.0
    %5954 = vmatpush1.msra.mxu0 %v4858
    %5955 = vmatprep.subr.mxu0 0.0
    %5956 = vmatpush1.msra.mxu0 %v4859
    %5957 = vmatprep.subr.mxu0 0.0
    %5958 = vmatpush1.msra.mxu0 %v4860
    %5959 = vmatprep.subr.mxu0 0.0
    %5960 = vmatpush1.msra.mxu0 %v4861
    %5961 = vmatprep.mubr.f32.mxu0 %v4599
    %5962 = vmatmul.mubr.f32.gmra.mrb[0].mxu0 %v4598
    %v5963 = vpop.f32.mrb[0].mxu0
    %v5964 = vadd.f32 %v5894, %v5963
    %v5965 = vpop.f32.mrb[0].mxu0
    %5966 = vdwg.mxu0
    %5967 = vmatprep.subr.mxu0 0.0
    %5968 = vmatpush1.msra.mxu0 %v4862
    %5969 = vmatprep.subr.mxu0 0.0
    %5970 = vmatpush1.msra.mxu0 %v4863
    %5971 = vmatprep.subr.mxu0 0.0
    %5972 = vmatpush1.msra.mxu0 %v4864
    %5973 = vmatprep.subr.mxu0 0.0
    %5974 = vmatpush1.msra.mxu0 %v4865
    %5975 = vmatprep.subr.mxu0 0.0
    %5976 = vmatpush1.msra.mxu0 %v4866
    %5977 = vmatprep.subr.mxu0 0.0
    %5978 = vmatpush1.msra.mxu0 %v4867
    %5979 = vmatprep.subr.mxu0 0.0
    %5980 = vmatpush1.msra.mxu0 %v4868
    %5981 = vmatprep.subr.mxu0 0.0
    %5982 = vmatpush1.msra.mxu0 %v4869
    %5983 = vmatprep.subr.mxu0 0.0
    %5984 = vmatpush1.msra.mxu0 %v4870
    %5985 = vmatprep.subr.mxu0 0.0
    %5986 = vmatpush1.msra.mxu0 %v4871
    %5987 = vmatprep.subr.mxu0 0.0
    %5988 = vmatpush1.msra.mxu0 %v4872
    %5989 = vmatprep.subr.mxu0 0.0
    %5990 = vmatpush1.msra.mxu0 %v4873
    %5991 = vmatprep.subr.mxu0 0.0
    %5992 = vmatpush1.msra.mxu0 %v4874
    %5993 = vmatprep.subr.mxu0 0.0
    %5994 = vmatpush1.msra.mxu0 %v4875
    %5995 = vmatprep.subr.mxu0 0.0
    %5996 = vmatpush1.msra.mxu0 %v4876
    %5997 = vmatprep.subr.mxu0 0.0
    %5998 = vmatpush1.msra.mxu0 %v4877
    %5999 = vmatprep.subr.mxu0 0.0
    %6000 = vmatpush1.msra.mxu0 %v4878
    %6001 = vmatprep.subr.mxu0 0.0
    %6002 = vmatpush1.msra.mxu0 %v4879
    %6003 = vmatprep.subr.mxu0 0.0
    %6004 = vmatpush1.msra.mxu0 %v4880
    %6005 = vmatprep.subr.mxu0 0.0
    %6006 = vmatpush1.msra.mxu0 %v4881
    %6007 = vmatprep.subr.mxu0 0.0
    %6008 = vmatpush1.msra.mxu0 %v4882
    %6009 = vmatprep.subr.mxu0 0.0
    %6010 = vmatpush1.msra.mxu0 %v4883
    %6011 = vmatprep.subr.mxu0 0.0
    %6012 = vmatpush1.msra.mxu0 %v4884
    %6013 = vmatprep.subr.mxu0 0.0
    %6014 = vmatpush1.msra.mxu0 %v4885
    %6015 = vmatprep.subr.mxu0 0.0
    %6016 = vmatpush1.msra.mxu0 %v4886
    %6017 = vmatprep.subr.mxu0 0.0
    %6018 = vmatpush1.msra.mxu0 %v4887
    %6019 = vmatprep.subr.mxu0 0.0
    %6020 = vmatpush1.msra.mxu0 %v4888
    %6021 = vmatprep.subr.mxu0 0.0
    %6022 = vmatpush1.msra.mxu0 %v4889
    %6023 = vmatprep.subr.mxu0 0.0
    %6024 = vmatpush1.msra.mxu0 %v4890
    %6025 = vmatprep.subr.mxu0 0.0
    %6026 = vmatpush1.msra.mxu0 %v4891
    %6027 = vmatprep.subr.mxu0 0.0
    %6028 = vmatpush1.msra.mxu0 %v4892
    %6029 = vmatprep.subr.mxu0 0.0
    %6030 = vmatpush1.msra.mxu0 %v4893
    %6031 = vmatprep.mubr.f32.mxu0 %v4601
    %6032 = vmatmul.mubr.f32.gmra.mrb[0].mxu0 %v4600
    %v6033 = vpop.f32.mrb[0].mxu0
    %v6034 = vadd.f32 %v5964, %v6033
    %v6035 = vpop.f32.mrb[0].mxu0
    %6036 = vdwg.mxu0
    %6037 = vmatprep.subr.mxu0 0.0
    %6038 = vmatpush1.msra.mxu0 %v4894
    %6039 = vmatprep.subr.mxu0 0.0
    %6040 = vmatpush1.msra.mxu0 %v4895
    %6041 = vmatprep.subr.mxu0 0.0
    %6042 = vmatpush1.msra.mxu0 %v4896
    %6043 = vmatprep.subr.mxu0 0.0
    %6044 = vmatpush1.msra.mxu0 %v4897
    %6045 = vmatprep.subr.mxu0 0.0
    %6046 = vmatpush1.msra.mxu0 %v4898
    %6047 = vmatprep.subr.mxu0 0.0
    %6048 = vmatpush1.msra.mxu0 %v4899
    %6049 = vmatprep.subr.mxu0 0.0
    %6050 = vmatpush1.msra.mxu0 %v4900
    %6051 = vmatprep.subr.mxu0 0.0
    %6052 = vmatpush1.msra.mxu0 %v4901
    %6053 = vmatprep.subr.mxu0 0.0
    %6054 = vmatpush1.msra.mxu0 %v4902
    %6055 = vmatprep.subr.mxu0 0.0
    %6056 = vmatpush1.msra.mxu0 %v4903
    %6057 = vmatprep.subr.mxu0 0.0
    %6058 = vmatpush1.msra.mxu0 %v4904
    %6059 = vmatprep.subr.mxu0 0.0
    %6060 = vmatpush1.msra.mxu0 %v4905
    %6061 = vmatprep.subr.mxu0 0.0
    %6062 = vmatpush1.msra.mxu0 %v4906
    %6063 = vmatprep.subr.mxu0 0.0
    %6064 = vmatpush1.msra.mxu0 %v4907
    %6065 = vmatprep.subr.mxu0 0.0
    %6066 = vmatpush1.msra.mxu0 %v4908
    %6067 = vmatprep.subr.mxu0 0.0
    %6068 = vmatpush1.msra.mxu0 %v4909
    %6069 = vmatprep.subr.mxu0 0.0
    %6070 = vmatpush1.msra.mxu0 %v4910
    %6071 = vmatprep.subr.mxu0 0.0
    %6072 = vmatpush1.msra.mxu0 %v4911
    %6073 = vmatprep.subr.mxu0 0.0
    %6074 = vmatpush1.msra.mxu0 %v4912
    %6075 = vmatprep.subr.mxu0 0.0
    %6076 = vmatpush1.msra.mxu0 %v4913
    %6077 = vmatprep.subr.mxu0 0.0
    %6078 = vmatpush1.msra.mxu0 %v4914
    %6079 = vmatprep.subr.mxu0 0.0
    %6080 = vmatpush1.msra.mxu0 %v4915
    %6081 = vmatprep.subr.mxu0 0.0
    %6082 = vmatpush1.msra.mxu0 %v4916
    %6083 = vmatprep.subr.mxu0 0.0
    %6084 = vmatpush1.msra.mxu0 %v4917
    %6085 = vmatprep.subr.mxu0 0.0
    %6086 = vmatpush1.msra.mxu0 %v4918
    %6087 = vmatprep.subr.mxu0 0.0
    %6088 = vmatpush1.msra.mxu0 %v4919
    %6089 = vmatprep.subr.mxu0 0.0
    %6090 = vmatpush1.msra.mxu0 %v4920
    %6091 = vmatprep.subr.mxu0 0.0
    %6092 = vmatpush1.msra.mxu0 %v4921
    %6093 = vmatprep.subr.mxu0 0.0
    %6094 = vmatpush1.msra.mxu0 %v4922
    %6095 = vmatprep.subr.mxu0 0.0
    %6096 = vmatpush1.msra.mxu0 %v4923
    %6097 = vmatprep.subr.mxu0 0.0
    %6098 = vmatpush1.msra.mxu0 %v4924
    %6099 = vmatprep.subr.mxu0 0.0
    %6100 = vmatpush1.msra.mxu0 %v4925
    %6101 = vmatprep.mubr.f32.mxu0 %v4603
    %6102 = vmatmul.mubr.f32.gmra.mrb[0].mxu0 %v4602
    %v6103 = vpop.f32.mrb[0].mxu0
    %v6104 = vadd.f32 %v6034, %v6103
    %v6105 = vpop.f32.mrb[0].mxu0
    %6106 = vdwg.mxu0
    %6107 = vmatprep.subr.mxu0 0.0
    %6108 = vmatpush1.msra.mxu0 %v4926
    %6109 = vmatprep.subr.mxu0 0.0
    %6110 = vmatpush1.msra.mxu0 %v4927
    %6111 = vmatprep.subr.mxu0 0.0
    %6112 = vmatpush1.msra.mxu0 %v4928
    %6113 = vmatprep.subr.mxu0 0.0
    %6114 = vmatpush1.msra.mxu0 %v4929
    %6115 = vmatprep.subr.mxu0 0.0
    %6116 = vmatpush1.msra.mxu0 %v4930
    %6117 = vmatprep.subr.mxu0 0.0
    %6118 = vmatpush1.msra.mxu0 %v4931
    %6119 = vmatprep.subr.mxu0 0.0
    %6120 = vmatpush1.msra.mxu0 %v4932
    %6121 = vmatprep.subr.mxu0 0.0
    %6122 = vmatpush1.msra.mxu0 %v4933
    %6123 = vmatprep.subr.mxu0 0.0
    %6124 = vmatpush1.msra.mxu0 %v4934
    %6125 = vmatprep.subr.mxu0 0.0
    %6126 = vmatpush1.msra.mxu0 %v4935
    %6127 = vmatprep.subr.mxu0 0.0
    %6128 = vmatpush1.msra.mxu0 %v4936
    %6129 = vmatprep.subr.mxu0 0.0
    %6130 = vmatpush1.msra.mxu0 %v4937
    %6131 = vmatprep.subr.mxu0 0.0
    %6132 = vmatpush1.msra.mxu0 %v4938
    %6133 = vmatprep.subr.mxu0 0.0
    %6134 = vmatpush1.msra.mxu0 %v4939
    %6135 = vmatprep.subr.mxu0 0.0
    %6136 = vmatpush1.msra.mxu0 %v4940
    %6137 = vmatprep.subr.mxu0 0.0
    %6138 = vmatpush1.msra.mxu0 %v4941
    %6139 = vmatprep.subr.mxu0 0.0
    %6140 = vmatpush1.msra.mxu0 %v4942
    %6141 = vmatprep.subr.mxu0 0.0
    %6142 = vmatpush1.msra.mxu0 %v4943
    %6143 = vmatprep.subr.mxu0 0.0
    %6144 = vmatpush1.msra.mxu0 %v4944
    %6145 = vmatprep.subr.mxu0 0.0
    %6146 = vmatpush1.msra.mxu0 %v4945
    %6147 = vmatprep.subr.mxu0 0.0
    %6148 = vmatpush1.msra.mxu0 %v4946
    %6149 = vmatprep.subr.mxu0 0.0
    %6150 = vmatpush1.msra.mxu0 %v4947
    %6151 = vmatprep.subr.mxu0 0.0
    %6152 = vmatpush1.msra.mxu0 %v4948
    %6153 = vmatprep.subr.mxu0 0.0
    %6154 = vmatpush1.msra.mxu0 %v4949
    %6155 = vmatprep.subr.mxu0 0.0
    %6156 = vmatpush1.msra.mxu0 %v4950
    %6157 = vmatprep.subr.mxu0 0.0
    %6158 = vmatpush1.msra.mxu0 %v4951
    %6159 = vmatprep.subr.mxu0 0.0
    %6160 = vmatpush1.msra.mxu0 %v4952
    %6161 = vmatprep.subr.mxu0 0.0
    %6162 = vmatpush1.msra.mxu0 %v4953
    %6163 = vmatprep.subr.mxu0 0.0
    %6164 = vmatpush1.msra.mxu0 %v4954
    %6165 = vmatprep.subr.mxu0 0.0
    %6166 = vmatpush1.msra.mxu0 %v4955
    %6167 = vmatprep.subr.mxu0 0.0
    %6168 = vmatpush1.msra.mxu0 %v4956
    %6169 = vmatprep.subr.mxu0 0.0
    %6170 = vmatpush1.msra.mxu0 %v4957
    %6171 = vmatprep.mubr.f32.mxu0 %v4605
    %6172 = vmatmul.mubr.f32.gmra.mrb[0].mxu0 %v4604
    %v6173 = vpop.f32.mrb[0].mxu0
    %v6174 = vadd.f32 %v6104, %v6173
    %v6175 = vpop.f32.mrb[0].mxu0
    %6176 = vdwg.mxu0
    %6177 = vmatprep.subr.mxu0 0.0
    %6178 = vmatpush1.msra.mxu0 %v4958
    %6179 = vmatprep.subr.mxu0 0.0
    %6180 = vmatpush1.msra.mxu0 %v4959
    %6181 = vmatprep.subr.mxu0 0.0
    %6182 = vmatpush1.msra.mxu0 %v4960
    %6183 = vmatprep.subr.mxu0 0.0
    %6184 = vmatpush1.msra.mxu0 %v4961
    %6185 = vmatprep.subr.mxu0 0.0
    %6186 = vmatpush1.msra.mxu0 %v4962
    %6187 = vmatprep.subr.mxu0 0.0
    %6188 = vmatpush1.msra.mxu0 %v4963
    %6189 = vmatprep.subr.mxu0 0.0
    %6190 = vmatpush1.msra.mxu0 %v4964
    %6191 = vmatprep.subr.mxu0 0.0
    %6192 = vmatpush1.msra.mxu0 %v4965
    %6193 = vmatprep.subr.mxu0 0.0
    %6194 = vmatpush1.msra.mxu0 %v4966
    %6195 = vmatprep.subr.mxu0 0.0
    %6196 = vmatpush1.msra.mxu0 %v4967
    %6197 = vmatprep.subr.mxu0 0.0
    %6198 = vmatpush1.msra.mxu0 %v4968
    %6199 = vmatprep.subr.mxu0 0.0
    %6200 = vmatpush1.msra.mxu0 %v4969
    %6201 = vmatprep.subr.mxu0 0.0
    %6202 = vmatpush1.msra.mxu0 %v4970
    %6203 = vmatprep.subr.mxu0 0.0
    %6204 = vmatpush1.msra.mxu0 %v4971
    %6205 = vmatprep.subr.mxu0 0.0
    %6206 = vmatpush1.msra.mxu0 %v4972
    %6207 = vmatprep.subr.mxu0 0.0
    %6208 = vmatpush1.msra.mxu0 %v4973
    %6209 = vmatprep.subr.mxu0 0.0
    %6210 = vmatpush1.msra.mxu0 %v4974
    %6211 = vmatprep.subr.mxu0 0.0
    %6212 = vmatpush1.msra.mxu0 %v4975
    %6213 = vmatprep.subr.mxu0 0.0
    %6214 = vmatpush1.msra.mxu0 %v4976
    %6215 = vmatprep.subr.mxu0 0.0
    %6216 = vmatpush1.msra.mxu0 %v4977
    %6217 = vmatprep.subr.mxu0 0.0
    %6218 = vmatpush1.msra.mxu0 %v4978
    %6219 = vmatprep.subr.mxu0 0.0
    %6220 = vmatpush1.msra.mxu0 %v4979
    %6221 = vmatprep.subr.mxu0 0.0
    %6222 = vmatpush1.msra.mxu0 %v4980
    %6223 = vmatprep.subr.mxu0 0.0
    %6224 = vmatpush1.msra.mxu0 %v4981
    %6225 = vmatprep.subr.mxu0 0.0
    %6226 = vmatpush1.msra.mxu0 %v4982
    %6227 = vmatprep.subr.mxu0 0.0
    %6228 = vmatpush1.msra.mxu0 %v4983
    %6229 = vmatprep.subr.mxu0 0.0
    %6230 = vmatpush1.msra.mxu0 %v4984
    %6231 = vmatprep.subr.mxu0 0.0
    %6232 = vmatpush1.msra.mxu0 %v4985
    %6233 = vmatprep.subr.mxu0 0.0
    %6234 = vmatpush1.msra.mxu0 %v4986
    %6235 = vmatprep.subr.mxu0 0.0
    %6236 = vmatpush1.msra.mxu0 %v4987
    %6237 = vmatprep.subr.mxu0 0.0
    %6238 = vmatpush1.msra.mxu0 %v4988
    %6239 = vmatprep.subr.mxu0 0.0
    %6240 = vmatpush1.msra.mxu0 %v4989
    %6241 = vmatprep.mubr.f32.mxu0 %v4607
    %6242 = vmatmul.mubr.f32.gmra.mrb[0].mxu0 %v4606
    %v6243 = vpop.f32.mrb[0].mxu0
    %v6244 = vadd.f32 %v6174, %v6243
    %v6245 = vpop.f32.mrb[0].mxu0
    %6246 = vdwg.mxu0
    %6247 = vmatprep.subr.mxu0 0.0
    %6248 = vmatpush1.msra.mxu0 %v4990
    %6249 = vmatprep.subr.mxu0 0.0
    %6250 = vmatpush1.msra.mxu0 %v4991
    %6251 = vmatprep.subr.mxu0 0.0
    %6252 = vmatpush1.msra.mxu0 %v4992
    %6253 = vmatprep.subr.mxu0 0.0
    %6254 = vmatpush1.msra.mxu0 %v4993
    %6255 = vmatprep.subr.mxu0 0.0
    %6256 = vmatpush1.msra.mxu0 %v4994
    %6257 = vmatprep.subr.mxu0 0.0
    %6258 = vmatpush1.msra.mxu0 %v4995
    %6259 = vmatprep.subr.mxu0 0.0
    %6260 = vmatpush1.msra.mxu0 %v4996
    %6261 = vmatprep.subr.mxu0 0.0
    %6262 = vmatpush1.msra.mxu0 %v4997
    %6263 = vmatprep.subr.mxu0 0.0
    %6264 = vmatpush1.msra.mxu0 %v4998
    %6265 = vmatprep.subr.mxu0 0.0
    %6266 = vmatpush1.msra.mxu0 %v4999
    %6267 = vmatprep.subr.mxu0 0.0
    %6268 = vmatpush1.msra.mxu0 %v5000
    %6269 = vmatprep.subr.mxu0 0.0
    %6270 = vmatpush1.msra.mxu0 %v5001
    %6271 = vmatprep.subr.mxu0 0.0
    %6272 = vmatpush1.msra.mxu0 %v5002
    %6273 = vmatprep.subr.mxu0 0.0
    %6274 = vmatpush1.msra.mxu0 %v5003
    %6275 = vmatprep.subr.mxu0 0.0
    %6276 = vmatpush1.msra.mxu0 %v5004
    %6277 = vmatprep.subr.mxu0 0.0
    %6278 = vmatpush1.msra.mxu0 %v5005
    %6279 = vmatprep.subr.mxu0 0.0
    %6280 = vmatpush1.msra.mxu0 %v5006
    %6281 = vmatprep.subr.mxu0 0.0
    %6282 = vmatpush1.msra.mxu0 %v5007
    %6283 = vmatprep.subr.mxu0 0.0
    %6284 = vmatpush1.msra.mxu0 %v5008
    %6285 = vmatprep.subr.mxu0 0.0
    %6286 = vmatpush1.msra.mxu0 %v5009
    %6287 = vmatprep.subr.mxu0 0.0
    %6288 = vmatpush1.msra.mxu0 %v5010
    %6289 = vmatprep.subr.mxu0 0.0
    %6290 = vmatpush1.msra.mxu0 %v5011
    %6291 = vmatprep.subr.mxu0 0.0
    %6292 = vmatpush1.msra.mxu0 %v5012
    %6293 = vmatprep.subr.mxu0 0.0
    %6294 = vmatpush1.msra.mxu0 %v5013
    %6295 = vmatprep.subr.mxu0 0.0
    %6296 = vmatpush1.msra.mxu0 %v5014
    %6297 = vmatprep.subr.mxu0 0.0
    %6298 = vmatpush1.msra.mxu0 %v5015
    %6299 = vmatprep.subr.mxu0 0.0
    %6300 = vmatpush1.msra.mxu0 %v5016
    %6301 = vmatprep.subr.mxu0 0.0
    %6302 = vmatpush1.msra.mxu0 %v5017
    %6303 = vmatprep.subr.mxu0 0.0
    %6304 = vmatpush1.msra.mxu0 %v5018
    %6305 = vmatprep.subr.mxu0 0.0
    %6306 = vmatpush1.msra.mxu0 %v5019
    %6307 = vmatprep.subr.mxu0 0.0
    %6308 = vmatpush1.msra.mxu0 %v5020
    %6309 = vmatprep.subr.mxu0 0.0
    %6310 = vmatpush1.msra.mxu0 %v5021
    %6311 = vmatprep.mubr.f32.mxu0 %v4609
    %6312 = vmatmul.mubr.f32.gmra.mrb[0].mxu0 %v4608
    %v6313 = vpop.f32.mrb[0].mxu0
    %v6314 = vadd.f32 %v6244, %v6313
    %v6315 = vpop.f32.mrb[0].mxu0
    %6316 = vdwg.mxu0
    %6317 = vmatprep.subr.mxu0 0.0
    %6318 = vmatpush1.msra.mxu0 %v5022
    %6319 = vmatprep.subr.mxu0 0.0
    %6320 = vmatpush1.msra.mxu0 %v5023
    %6321 = vmatprep.subr.mxu0 0.0
    %6322 = vmatpush1.msra.mxu0 %v5024
    %6323 = vmatprep.subr.mxu0 0.0
    %6324 = vmatpush1.msra.mxu0 %v5025
    %6325 = vmatprep.subr.mxu0 0.0
    %6326 = vmatpush1.msra.mxu0 %v5026
    %6327 = vmatprep.subr.mxu0 0.0
    %6328 = vmatpush1.msra.mxu0 %v5027
    %6329 = vmatprep.subr.mxu0 0.0
    %6330 = vmatpush1.msra.mxu0 %v5028
    %6331 = vmatprep.subr.mxu0 0.0
    %6332 = vmatpush1.msra.mxu0 %v5029
    %6333 = vmatprep.subr.mxu0 0.0
    %6334 = vmatpush1.msra.mxu0 %v5030
    %6335 = vmatprep.subr.mxu0 0.0
    %6336 = vmatpush1.msra.mxu0 %v5031
    %6337 = vmatprep.subr.mxu0 0.0
    %6338 = vmatpush1.msra.mxu0 %v5032
    %6339 = vmatprep.subr.mxu0 0.0
    %6340 = vmatpush1.msra.mxu0 %v5033
    %6341 = vmatprep.subr.mxu0 0.0
    %6342 = vmatpush1.msra.mxu0 %v5034
    %6343 = vmatprep.subr.mxu0 0.0
    %6344 = vmatpush1.msra.mxu0 %v5035
    %6345 = vmatprep.subr.mxu0 0.0
    %6346 = vmatpush1.msra.mxu0 %v5036
    %6347 = vmatprep.subr.mxu0 0.0
    %6348 = vmatpush1.msra.mxu0 %v5037
    %6349 = vmatprep.subr.mxu0 0.0
    %6350 = vmatpush1.msra.mxu0 %v5038
    %6351 = vmatprep.subr.mxu0 0.0
    %6352 = vmatpush1.msra.mxu0 %v5039
    %6353 = vmatprep.subr.mxu0 0.0
    %6354 = vmatpush1.msra.mxu0 %v5040
    %6355 = vmatprep.subr.mxu0 0.0
    %6356 = vmatpush1.msra.mxu0 %v5041
    %6357 = vmatprep.subr.mxu0 0.0
    %6358 = vmatpush1.msra.mxu0 %v5042
    %6359 = vmatprep.subr.mxu0 0.0
    %6360 = vmatpush1.msra.mxu0 %v5043
    %6361 = vmatprep.subr.mxu0 0.0
    %6362 = vmatpush1.msra.mxu0 %v5044
    %6363 = vmatprep.subr.mxu0 0.0
    %6364 = vmatpush1.msra.mxu0 %v5045
    %6365 = vmatprep.subr.mxu0 0.0
    %6366 = vmatpush1.msra.mxu0 %v5046
    %6367 = vmatprep.subr.mxu0 0.0
    %6368 = vmatpush1.msra.mxu0 %v5047
    %6369 = vmatprep.subr.mxu0 0.0
    %6370 = vmatpush1.msra.mxu0 %v5048
    %6371 = vmatprep.subr.mxu0 0.0
    %6372 = vmatpush1.msra.mxu0 %v5049
    %6373 = vmatprep.subr.mxu0 0.0
    %6374 = vmatpush1.msra.mxu0 %v5050
    %6375 = vmatprep.subr.mxu0 0.0
    %6376 = vmatpush1.msra.mxu0 %v5051
    %6377 = vmatprep.subr.mxu0 0.0
    %6378 = vmatpush1.msra.mxu0 %v5052
    %6379 = vmatprep.subr.mxu0 0.0
    %6380 = vmatpush1.msra.mxu0 %v5053
    %6381 = vmatprep.mubr.f32.mxu0 %v4611
    %6382 = vmatmul.mubr.f32.gmra.mrb[0].mxu0 %v4610
    %v6383 = vpop.f32.mrb[0].mxu0
    %v6384 = vadd.f32 %v6314, %v6383
    %v6385 = vpop.f32.mrb[0].mxu0
    %6386 = vdwg.mxu0
    %6387 = vmatprep.subr.mxu0 0.0
    %6388 = vmatpush1.msra.mxu0 %v5054
    %6389 = vmatprep.subr.mxu0 0.0
    %6390 = vmatpush1.msra.mxu0 %v5055
    %6391 = vmatprep.subr.mxu0 0.0
    %6392 = vmatpush1.msra.mxu0 %v5056
    %6393 = vmatprep.subr.mxu0 0.0
    %6394 = vmatpush1.msra.mxu0 %v5057
    %6395 = vmatprep.subr.mxu0 0.0
    %6396 = vmatpush1.msra.mxu0 %v5058
    %6397 = vmatprep.subr.mxu0 0.0
    %6398 = vmatpush1.msra.mxu0 %v5059
    %6399 = vmatprep.subr.mxu0 0.0
    %6400 = vmatpush1.msra.mxu0 %v5060
    %6401 = vmatprep.subr.mxu0 0.0
    %6402 = vmatpush1.msra.mxu0 %v5061
    %6403 = vmatprep.subr.mxu0 0.0
    %6404 = vmatpush1.msra.mxu0 %v5062
    %6405 = vmatprep.subr.mxu0 0.0
    %6406 = vmatpush1.msra.mxu0 %v5063
    %6407 = vmatprep.subr.mxu0 0.0
    %6408 = vmatpush1.msra.mxu0 %v5064
    %6409 = vmatprep.subr.mxu0 0.0
    %6410 = vmatpush1.msra.mxu0 %v5065
    %6411 = vmatprep.subr.mxu0 0.0
    %6412 = vmatpush1.msra.mxu0 %v5066
    %6413 = vmatprep.subr.mxu0 0.0
    %6414 = vmatpush1.msra.mxu0 %v5067
    %6415 = vmatprep.subr.mxu0 0.0
    %6416 = vmatpush1.msra.mxu0 %v5068
    %6417 = vmatprep.subr.mxu0 0.0
    %6418 = vmatpush1.msra.mxu0 %v5069
    %6419 = vmatprep.subr.mxu0 0.0
    %6420 = vmatpush1.msra.mxu0 %v5070
    %6421 = vmatprep.subr.mxu0 0.0
    %6422 = vmatpush1.msra.mxu0 %v5071
    %6423 = vmatprep.subr.mxu0 0.0
    %6424 = vmatpush1.msra.mxu0 %v5072
    %6425 = vmatprep.subr.mxu0 0.0
    %6426 = vmatpush1.msra.mxu0 %v5073
    %6427 = vmatprep.subr.mxu0 0.0
    %6428 = vmatpush1.msra.mxu0 %v5074
    %6429 = vmatprep.subr.mxu0 0.0
    %6430 = vmatpush1.msra.mxu0 %v5075
    %6431 = vmatprep.subr.mxu0 0.0
    %6432 = vmatpush1.msra.mxu0 %v5076
    %6433 = vmatprep.subr.mxu0 0.0
    %6434 = vmatpush1.msra.mxu0 %v5077
    %6435 = vmatprep.subr.mxu0 0.0
    %6436 = vmatpush1.msra.mxu0 %v5078
    %6437 = vmatprep.subr.mxu0 0.0
    %6438 = vmatpush1.msra.mxu0 %v5079
    %6439 = vmatprep.subr.mxu0 0.0
    %6440 = vmatpush1.msra.mxu0 %v5080
    %6441 = vmatprep.subr.mxu0 0.0
    %6442 = vmatpush1.msra.mxu0 %v5081
    %6443 = vmatprep.subr.mxu0 0.0
    %6444 = vmatpush1.msra.mxu0 %v5082
    %6445 = vmatprep.subr.mxu0 0.0
    %6446 = vmatpush1.msra.mxu0 %v5083
    %6447 = vmatprep.subr.mxu0 0.0
    %6448 = vmatpush1.msra.mxu0 %v5084
    %6449 = vmatprep.subr.mxu0 0.0
    %6450 = vmatpush1.msra.mxu0 %v5085
    %6451 = vmatprep.mubr.f32.mxu0 %v4613
    %6452 = vmatmul.mubr.f32.gmra.mrb[0].mxu0 %v4612
    %v6453 = vpop.f32.mrb[0].mxu0
    %v6454 = vadd.f32 %v6384, %v6453
    %v6455 = vpop.f32.mrb[0].mxu0
    %6456 = vdwg.mxu0
    %6457 = vmatprep.subr.mxu0 0.0
    %6458 = vmatpush1.msra.mxu0 %v5086
    %6459 = vmatprep.subr.mxu0 0.0
    %6460 = vmatpush1.msra.mxu0 %v5087
    %6461 = vmatprep.subr.mxu0 0.0
    %6462 = vmatpush1.msra.mxu0 %v5088
    %6463 = vmatprep.subr.mxu0 0.0
    %6464 = vmatpush1.msra.mxu0 %v5089
    %6465 = vmatprep.subr.mxu0 0.0
    %6466 = vmatpush1.msra.mxu0 %v5090
    %6467 = vmatprep.subr.mxu0 0.0
    %6468 = vmatpush1.msra.mxu0 %v5091
    %6469 = vmatprep.subr.mxu0 0.0
    %6470 = vmatpush1.msra.mxu0 %v5092
    %6471 = vmatprep.subr.mxu0 0.0
    %6472 = vmatpush1.msra.mxu0 %v5093
    %6473 = vmatprep.subr.mxu0 0.0
    %6474 = vmatpush1.msra.mxu0 %v5094
    %6475 = vmatprep.subr.mxu0 0.0
    %6476 = vmatpush1.msra.mxu0 %v5095
    %6477 = vmatprep.subr.mxu0 0.0
    %6478 = vmatpush1.msra.mxu0 %v5096
    %6479 = vmatprep.subr.mxu0 0.0
    %6480 = vmatpush1.msra.mxu0 %v5097
    %6481 = vmatprep.subr.mxu0 0.0
    %6482 = vmatpush1.msra.mxu0 %v5098
    %6483 = vmatprep.subr.mxu0 0.0
    %6484 = vmatpush1.msra.mxu0 %v5099
    %6485 = vmatprep.subr.mxu0 0.0
    %6486 = vmatpush1.msra.mxu0 %v5100
    %6487 = vmatprep.subr.mxu0 0.0
    %6488 = vmatpush1.msra.mxu0 %v5101
    %6489 = vmatprep.subr.mxu0 0.0
    %6490 = vmatpush1.msra.mxu0 %v5102
    %6491 = vmatprep.subr.mxu0 0.0
    %6492 = vmatpush1.msra.mxu0 %v5103
    %6493 = vmatprep.subr.mxu0 0.0
    %6494 = vmatpush1.msra.mxu0 %v5104
    %6495 = vmatprep.subr.mxu0 0.0
    %6496 = vmatpush1.msra.mxu0 %v5105
    %6497 = vmatprep.subr.mxu0 0.0
    %6498 = vmatpush1.msra.mxu0 %v5106
    %6499 = vmatprep.subr.mxu0 0.0
    %6500 = vmatpush1.msra.mxu0 %v5107
    %6501 = vmatprep.subr.mxu0 0.0
    %6502 = vmatpush1.msra.mxu0 %v5108
    %6503 = vmatprep.subr.mxu0 0.0
    %6504 = vmatpush1.msra.mxu0 %v5109
    %6505 = vmatprep.subr.mxu0 0.0
    %6506 = vmatpush1.msra.mxu0 %v5110
    %6507 = vmatprep.subr.mxu0 0.0
    %6508 = vmatpush1.msra.mxu0 %v5111
    %6509 = vmatprep.subr.mxu0 0.0
    %6510 = vmatpush1.msra.mxu0 %v5112
    %6511 = vmatprep.subr.mxu0 0.0
    %6512 = vmatpush1.msra.mxu0 %v5113
    %6513 = vmatprep.subr.mxu0 0.0
    %6514 = vmatpush1.msra.mxu0 %v5114
    %6515 = vmatprep.subr.mxu0 0.0
    %6516 = vmatpush1.msra.mxu0 %v5115
    %6517 = vmatprep.subr.mxu0 0.0
    %6518 = vmatpush1.msra.mxu0 %v5116
    %6519 = vmatprep.subr.mxu0 0.0
    %6520 = vmatpush1.msra.mxu0 %v5117
    %6521 = vmatprep.mubr.f32.mxu0 %v4615
    %6522 = vmatmul.mubr.f32.gmra.mrb[0].mxu0 %v4614
    %v6523 = vpop.f32.mrb[0].mxu0
    %v6524 = vadd.f32 %v6454, %v6523
    %v6525 = vpop.f32.mrb[0].mxu0
    %6526 = vdwg.mxu0
    %6527 = vmatprep.subr.mxu0 0.0
    %6528 = vmatpush1.msra.mxu0 %v5118
    %6529 = vmatprep.subr.mxu0 0.0
    %6530 = vmatpush1.msra.mxu0 %v5119
    %6531 = vmatprep.subr.mxu0 0.0
    %6532 = vmatpush1.msra.mxu0 %v5120
    %6533 = vmatprep.subr.mxu0 0.0
    %6534 = vmatpush1.msra.mxu0 %v5121
    %6535 = vmatprep.subr.mxu0 0.0
    %6536 = vmatpush1.msra.mxu0 %v5122
    %6537 = vmatprep.subr.mxu0 0.0
    %6538 = vmatpush1.msra.mxu0 %v5123
    %6539 = vmatprep.subr.mxu0 0.0
    %6540 = vmatpush1.msra.mxu0 %v5124
    %6541 = vmatprep.subr.mxu0 0.0
    %6542 = vmatpush1.msra.mxu0 %v5125
    %6543 = vmatprep.subr.mxu0 0.0
    %6544 = vmatpush1.msra.mxu0 %v5126
    %6545 = vmatprep.subr.mxu0 0.0
    %6546 = vmatpush1.msra.mxu0 %v5127
    %6547 = vmatprep.subr.mxu0 0.0
    %6548 = vmatpush1.msra.mxu0 %v5128
    %6549 = vmatprep.subr.mxu0 0.0
    %6550 = vmatpush1.msra.mxu0 %v5129
    %6551 = vmatprep.subr.mxu0 0.0
    %6552 = vmatpush1.msra.mxu0 %v5130
    %6553 = vmatprep.subr.mxu0 0.0
    %6554 = vmatpush1.msra.mxu0 %v5131
    %6555 = vmatprep.subr.mxu0 0.0
    %6556 = vmatpush1.msra.mxu0 %v5132
    %6557 = vmatprep.subr.mxu0 0.0
    %6558 = vmatpush1.msra.mxu0 %v5133
    %6559 = vmatprep.subr.mxu0 0.0
    %6560 = vmatpush1.msra.mxu0 %v5134
    %6561 = vmatprep.subr.mxu0 0.0
    %6562 = vmatpush1.msra.mxu0 %v5135
    %6563 = vmatprep.subr.mxu0 0.0
    %6564 = vmatpush1.msra.mxu0 %v5136
    %6565 = vmatprep.subr.mxu0 0.0
    %6566 = vmatpush1.msra.mxu0 %v5137
    %6567 = vmatprep.subr.mxu0 0.0
    %6568 = vmatpush1.msra.mxu0 %v5138
    %6569 = vmatprep.subr.mxu0 0.0
    %6570 = vmatpush1.msra.mxu0 %v5139
    %6571 = vmatprep.subr.mxu0 0.0
    %6572 = vmatpush1.msra.mxu0 %v5140
    %6573 = vmatprep.subr.mxu0 0.0
    %6574 = vmatpush1.msra.mxu0 %v5141
    %6575 = vmatprep.subr.mxu0 0.0
    %6576 = vmatpush1.msra.mxu0 %v5142
    %6577 = vmatprep.subr.mxu0 0.0
    %6578 = vmatpush1.msra.mxu0 %v5143
    %6579 = vmatprep.subr.mxu0 0.0
    %6580 = vmatpush1.msra.mxu0 %v5144
    %6581 = vmatprep.subr.mxu0 0.0
    %6582 = vmatpush1.msra.mxu0 %v5145
    %6583 = vmatprep.subr.mxu0 0.0
    %6584 = vmatpush1.msra.mxu0 %v5146
    %6585 = vmatprep.subr.mxu0 0.0
    %6586 = vmatpush1.msra.mxu0 %v5147
    %6587 = vmatprep.subr.mxu0 0.0
    %6588 = vmatpush1.msra.mxu0 %v5148
    %6589 = vmatprep.subr.mxu0 0.0
    %6590 = vmatpush1.msra.mxu0 %v5149
    %6591 = vmatprep.mubr.f32.mxu0 %v4617
    %6592 = vmatmul.mubr.f32.gmra.mrb[0].mxu0 %v4616
    %v6593 = vpop.f32.mrb[0].mxu0
    %v6594 = vadd.f32 %v6524, %v6593
    %v6595 = vpop.f32.mrb[0].mxu0
    %6596 = vdwg.mxu0
    %6597 = vmatprep.subr.mxu0 0.0
    %6598 = vmatpush1.msra.mxu0 %v5150
    %6599 = vmatprep.subr.mxu0 0.0
    %6600 = vmatpush1.msra.mxu0 %v5151
    %6601 = vmatprep.subr.mxu0 0.0
    %6602 = vmatpush1.msra.mxu0 %v5152
    %6603 = vmatprep.subr.mxu0 0.0
    %6604 = vmatpush1.msra.mxu0 %v5153
    %6605 = vmatprep.subr.mxu0 0.0
    %6606 = vmatpush1.msra.mxu0 %v5154
    %6607 = vmatprep.subr.mxu0 0.0
    %6608 = vmatpush1.msra.mxu0 %v5155
    %6609 = vmatprep.subr.mxu0 0.0
    %6610 = vmatpush1.msra.mxu0 %v5156
    %6611 = vmatprep.subr.mxu0 0.0
    %6612 = vmatpush1.msra.mxu0 %v5157
    %6613 = vmatprep.subr.mxu0 0.0
    %6614 = vmatpush1.msra.mxu0 %v5158
    %6615 = vmatprep.subr.mxu0 0.0
    %6616 = vmatpush1.msra.mxu0 %v5159
    %6617 = vmatprep.subr.mxu0 0.0
    %6618 = vmatpush1.msra.mxu0 %v5160
    %6619 = vmatprep.subr.mxu0 0.0
    %6620 = vmatpush1.msra.mxu0 %v5161
    %6621 = vmatprep.subr.mxu0 0.0
    %6622 = vmatpush1.msra.mxu0 %v5162
    %6623 = vmatprep.subr.mxu0 0.0
    %6624 = vmatpush1.msra.mxu0 %v5163
    %6625 = vmatprep.subr.mxu0 0.0
    %6626 = vmatpush1.msra.mxu0 %v5164
    %6627 = vmatprep.subr.mxu0 0.0
    %6628 = vmatpush1.msra.mxu0 %v5165
    %6629 = vmatprep.subr.mxu0 0.0
    %6630 = vmatpush1.msra.mxu0 %v5166
    %6631 = vmatprep.subr.mxu0 0.0
    %6632 = vmatpush1.msra.mxu0 %v5167
    %6633 = vmatprep.subr.mxu0 0.0
    %6634 = vmatpush1.msra.mxu0 %v5168
    %6635 = vmatprep.subr.mxu0 0.0
    %6636 = vmatpush1.msra.mxu0 %v5169
    %6637 = vmatprep.subr.mxu0 0.0
    %6638 = vmatpush1.msra.mxu0 %v5170
    %6639 = vmatprep.subr.mxu0 0.0
    %6640 = vmatpush1.msra.mxu0 %v5171
    %6641 = vmatprep.subr.mxu0 0.0
    %6642 = vmatpush1.msra.mxu0 %v5172
    %6643 = vmatprep.subr.mxu0 0.0
    %6644 = vmatpush1.msra.mxu0 %v5173
    %6645 = vmatprep.subr.mxu0 0.0
    %6646 = vmatpush1.msra.mxu0 %v5174
    %6647 = vmatprep.subr.mxu0 0.0
    %6648 = vmatpush1.msra.mxu0 %v5175
    %6649 = vmatprep.subr.mxu0 0.0
    %6650 = vmatpush1.msra.mxu0 %v5176
    %6651 = vmatprep.subr.mxu0 0.0
    %6652 = vmatpush1.msra.mxu0 %v5177
    %6653 = vmatprep.subr.mxu0 0.0
    %6654 = vmatpush1.msra.mxu0 %v5178
    %6655 = vmatprep.subr.mxu0 0.0
    %6656 = vmatpush1.msra.mxu0 %v5179
    %6657 = vmatprep.subr.mxu0 0.0
    %6658 = vmatpush1.msra.mxu0 %v5180
    %6659 = vmatprep.subr.mxu0 0.0
    %6660 = vmatpush1.msra.mxu0 %v5181
    %6661 = vmatprep.mubr.f32.mxu0 %v4619
    %6662 = vmatmul.mubr.f32.gmra.mrb[0].mxu0 %v4618
    %v6663 = vpop.f32.mrb[0].mxu0
    %v6664 = vadd.f32 %v6594, %v6663
    %v6665 = vpop.f32.mrb[0].mxu0
    %6666 = vdwg.mxu0
    %6667 = vmatprep.subr.mxu0 0.0
    %6668 = vmatpush1.msra.mxu0 %v5182
    %6669 = vmatprep.subr.mxu0 0.0
    %6670 = vmatpush1.msra.mxu0 %v5183
    %6671 = vmatprep.subr.mxu0 0.0
    %6672 = vmatpush1.msra.mxu0 %v5184
    %6673 = vmatprep.subr.mxu0 0.0
    %6674 = vmatpush1.msra.mxu0 %v5185
    %6675 = vmatprep.subr.mxu0 0.0
    %6676 = vmatpush1.msra.mxu0 %v5186
    %6677 = vmatprep.subr.mxu0 0.0
    %6678 = vmatpush1.msra.mxu0 %v5187
    %6679 = vmatprep.subr.mxu0 0.0
    %6680 = vmatpush1.msra.mxu0 %v5188
    %6681 = vmatprep.subr.mxu0 0.0
    %6682 = vmatpush1.msra.mxu0 %v5189
    %6683 = vmatprep.subr.mxu0 0.0
    %6684 = vmatpush1.msra.mxu0 %v5190
    %6685 = vmatprep.subr.mxu0 0.0
    %6686 = vmatpush1.msra.mxu0 %v5191
    %6687 = vmatprep.subr.mxu0 0.0
    %6688 = vmatpush1.msra.mxu0 %v5192
    %6689 = vmatprep.subr.mxu0 0.0
    %6690 = vmatpush1.msra.mxu0 %v5193
    %6691 = vmatprep.subr.mxu0 0.0
    %6692 = vmatpush1.msra.mxu0 %v5194
    %6693 = vmatprep.subr.mxu0 0.0
    %6694 = vmatpush1.msra.mxu0 %v5195
    %6695 = vmatprep.subr.mxu0 0.0
    %6696 = vmatpush1.msra.mxu0 %v5196
    %6697 = vmatprep.subr.mxu0 0.0
    %6698 = vmatpush1.msra.mxu0 %v5197
    %6699 = vmatprep.subr.mxu0 0.0
    %6700 = vmatpush1.msra.mxu0 %v5198
    %6701 = vmatprep.subr.mxu0 0.0
    %6702 = vmatpush1.msra.mxu0 %v5199
    %6703 = vmatprep.subr.mxu0 0.0
    %6704 = vmatpush1.msra.mxu0 %v5200
    %6705 = vmatprep.subr.mxu0 0.0
    %6706 = vmatpush1.msra.mxu0 %v5201
    %6707 = vmatprep.subr.mxu0 0.0
    %6708 = vmatpush1.msra.mxu0 %v5202
    %6709 = vmatprep.subr.mxu0 0.0
    %6710 = vmatpush1.msra.mxu0 %v5203
    %6711 = vmatprep.subr.mxu0 0.0
    %6712 = vmatpush1.msra.mxu0 %v5204
    %6713 = vmatprep.subr.mxu0 0.0
    %6714 = vmatpush1.msra.mxu0 %v5205
    %6715 = vmatprep.subr.mxu0 0.0
    %6716 = vmatpush1.msra.mxu0 %v5206
    %6717 = vmatprep.subr.mxu0 0.0
    %6718 = vmatpush1.msra.mxu0 %v5207
    %6719 = vmatprep.subr.mxu0 0.0
    %6720 = vmatpush1.msra.mxu0 %v5208
    %6721 = vmatprep.subr.mxu0 0.0
    %6722 = vmatpush1.msra.mxu0 %v5209
    %6723 = vmatprep.subr.mxu0 0.0
    %6724 = vmatpush1.msra.mxu0 %v5210
    %6725 = vmatprep.subr.mxu0 0.0
    %6726 = vmatpush1.msra.mxu0 %v5211
    %6727 = vmatprep.subr.mxu0 0.0
    %6728 = vmatpush1.msra.mxu0 %v5212
    %6729 = vmatprep.subr.mxu0 0.0
    %6730 = vmatpush1.msra.mxu0 %v5213
    %6731 = vmatprep.mubr.f32.mxu0 %v4621
    %6732 = vmatmul.mubr.f32.gmra.mrb[0].mxu0 %v4620
    %v6733 = vpop.f32.mrb[0].mxu0
    %v6734 = vadd.f32 %v6664, %v6733
    %v6735 = vpop.f32.mrb[0].mxu0
    %6736 = vdwg.mxu0
    %6737 = vmatprep.subr.mxu0 0.0
    %6738 = vmatpush1.msra.mxu0 %v5214
    %6739 = vmatprep.subr.mxu0 0.0
    %6740 = vmatpush1.msra.mxu0 %v5215
    %6741 = vmatprep.subr.mxu0 0.0
    %6742 = vmatpush1.msra.mxu0 %v5216
    %6743 = vmatprep.subr.mxu0 0.0
    %6744 = vmatpush1.msra.mxu0 %v5217
    %6745 = vmatprep.subr.mxu0 0.0
    %6746 = vmatpush1.msra.mxu0 %v5218
    %6747 = vmatprep.subr.mxu0 0.0
    %6748 = vmatpush1.msra.mxu0 %v5219
    %6749 = vmatprep.subr.mxu0 0.0
    %6750 = vmatpush1.msra.mxu0 %v5220
    %6751 = vmatprep.subr.mxu0 0.0
    %6752 = vmatpush1.msra.mxu0 %v5221
    %6753 = vmatprep.subr.mxu0 0.0
    %6754 = vmatpush1.msra.mxu0 %v5222
    %6755 = vmatprep.subr.mxu0 0.0
    %6756 = vmatpush1.msra.mxu0 %v5223
    %6757 = vmatprep.subr.mxu0 0.0
    %6758 = vmatpush1.msra.mxu0 %v5224
    %6759 = vmatprep.subr.mxu0 0.0
    %6760 = vmatpush1.msra.mxu0 %v5225
    %6761 = vmatprep.subr.mxu0 0.0
    %6762 = vmatpush1.msra.mxu0 %v5226
    %6763 = vmatprep.subr.mxu0 0.0
    %6764 = vmatpush1.msra.mxu0 %v5227
    %6765 = vmatprep.subr.mxu0 0.0
    %6766 = vmatpush1.msra.mxu0 %v5228
    %6767 = vmatprep.subr.mxu0 0.0
    %6768 = vmatpush1.msra.mxu0 %v5229
    %6769 = vmatprep.subr.mxu0 0.0
    %6770 = vmatpush1.msra.mxu0 %v5230
    %6771 = vmatprep.subr.mxu0 0.0
    %6772 = vmatpush1.msra.mxu0 %v5231
    %6773 = vmatprep.subr.mxu0 0.0
    %6774 = vmatpush1.msra.mxu0 %v5232
    %6775 = vmatprep.subr.mxu0 0.0
    %6776 = vmatpush1.msra.mxu0 %v5233
    %6777 = vmatprep.subr.mxu0 0.0
    %6778 = vmatpush1.msra.mxu0 %v5234
    %6779 = vmatprep.subr.mxu0 0.0
    %6780 = vmatpush1.msra.mxu0 %v5235
    %6781 = vmatprep.subr.mxu0 0.0
    %6782 = vmatpush1.msra.mxu0 %v5236
    %6783 = vmatprep.subr.mxu0 0.0
    %6784 = vmatpush1.msra.mxu0 %v5237
    %6785 = vmatprep.subr.mxu0 0.0
    %6786 = vmatpush1.msra.mxu0 %v5238
    %6787 = vmatprep.subr.mxu0 0.0
    %6788 = vmatpush1.msra.mxu0 %v5239
    %6789 = vmatprep.subr.mxu0 0.0
    %6790 = vmatpush1.msra.mxu0 %v5240
    %6791 = vmatprep.subr.mxu0 0.0
    %6792 = vmatpush1.msra.mxu0 %v5241
    %6793 = vmatprep.subr.mxu0 0.0
    %6794 = vmatpush1.msra.mxu0 %v5242
    %6795 = vmatprep.subr.mxu0 0.0
    %6796 = vmatpush1.msra.mxu0 %v5243
    %6797 = vmatprep.subr.mxu0 0.0
    %6798 = vmatpush1.msra.mxu0 %v5244
    %6799 = vmatprep.subr.mxu0 0.0
    %6800 = vmatpush1.msra.mxu0 %v5245
    %6801 = vmatprep.mubr.f32.mxu0 %v4623
    %6802 = vmatmul.mubr.f32.gmra.mrb[0].mxu0 %v4622
    %v6803 = vpop.f32.mrb[0].mxu0
    %v6804 = vadd.f32 %v6734, %v6803
    %v6805 = vpop.f32.mrb[0].mxu0
    %6806 = vdwg.mxu0
    %6807 = vmatprep.subr.mxu0 0.0
    %6808 = vmatpush1.msra.mxu0 %v5246
    %6809 = vmatprep.subr.mxu0 0.0
    %6810 = vmatpush1.msra.mxu0 %v5247
    %6811 = vmatprep.subr.mxu0 0.0
    %6812 = vmatpush1.msra.mxu0 %v5248
    %6813 = vmatprep.subr.mxu0 0.0
    %6814 = vmatpush1.msra.mxu0 %v5249
    %6815 = vmatprep.subr.mxu0 0.0
    %6816 = vmatpush1.msra.mxu0 %v5250
    %6817 = vmatprep.subr.mxu0 0.0
    %6818 = vmatpush1.msra.mxu0 %v5251
    %6819 = vmatprep.subr.mxu0 0.0
    %6820 = vmatpush1.msra.mxu0 %v5252
    %6821 = vmatprep.subr.mxu0 0.0
    %6822 = vmatpush1.msra.mxu0 %v5253
    %6823 = vmatprep.subr.mxu0 0.0
    %6824 = vmatpush1.msra.mxu0 %v5254
    %6825 = vmatprep.subr.mxu0 0.0
    %6826 = vmatpush1.msra.mxu0 %v5255
    %6827 = vmatprep.subr.mxu0 0.0
    %6828 = vmatpush1.msra.mxu0 %v5256
    %6829 = vmatprep.subr.mxu0 0.0
    %6830 = vmatpush1.msra.mxu0 %v5257
    %6831 = vmatprep.subr.mxu0 0.0
    %6832 = vmatpush1.msra.mxu0 %v5258
    %6833 = vmatprep.subr.mxu0 0.0
    %6834 = vmatpush1.msra.mxu0 %v5259
    %6835 = vmatprep.subr.mxu0 0.0
    %6836 = vmatpush1.msra.mxu0 %v5260
    %6837 = vmatprep.subr.mxu0 0.0
    %6838 = vmatpush1.msra.mxu0 %v5261
    %6839 = vmatprep.subr.mxu0 0.0
    %6840 = vmatpush1.msra.mxu0 %v5262
    %6841 = vmatprep.subr.mxu0 0.0
    %6842 = vmatpush1.msra.mxu0 %v5263
    %6843 = vmatprep.subr.mxu0 0.0
    %6844 = vmatpush1.msra.mxu0 %v5264
    %6845 = vmatprep.subr.mxu0 0.0
    %6846 = vmatpush1.msra.mxu0 %v5265
    %6847 = vmatprep.subr.mxu0 0.0
    %6848 = vmatpush1.msra.mxu0 %v5266
    %6849 = vmatprep.subr.mxu0 0.0
    %6850 = vmatpush1.msra.mxu0 %v5267
    %6851 = vmatprep.subr.mxu0 0.0
    %6852 = vmatpush1.msra.mxu0 %v5268
    %6853 = vmatprep.subr.mxu0 0.0
    %6854 = vmatpush1.msra.mxu0 %v5269
    %6855 = vmatprep.subr.mxu0 0.0
    %6856 = vmatpush1.msra.mxu0 %v5270
    %6857 = vmatprep.subr.mxu0 0.0
    %6858 = vmatpush1.msra.mxu0 %v5271
    %6859 = vmatprep.subr.mxu0 0.0
    %6860 = vmatpush1.msra.mxu0 %v5272
    %6861 = vmatprep.subr.mxu0 0.0
    %6862 = vmatpush1.msra.mxu0 %v5273
    %6863 = vmatprep.subr.mxu0 0.0
    %6864 = vmatpush1.msra.mxu0 %v5274
    %6865 = vmatprep.subr.mxu0 0.0
    %6866 = vmatpush1.msra.mxu0 %v5275
    %6867 = vmatprep.subr.mxu0 0.0
    %6868 = vmatpush1.msra.mxu0 %v5276
    %6869 = vmatprep.subr.mxu0 0.0
    %6870 = vmatpush1.msra.mxu0 %v5277
    %6871 = vmatprep.mubr.f32.mxu0 %v4625
    %6872 = vmatmul.mubr.f32.gmra.mrb[0].mxu0 %v4624
    %v6873 = vpop.f32.mrb[0].mxu0
    %v6874 = vadd.f32 %v6804, %v6873
    %v6875 = vpop.f32.mrb[0].mxu0
    %6876 = vdwg.mxu0
    %6877 = vmatprep.subr.mxu0 0.0
    %6878 = vmatpush1.msra.mxu0 %v5278
    %6879 = vmatprep.subr.mxu0 0.0
    %6880 = vmatpush1.msra.mxu0 %v5279
    %6881 = vmatprep.subr.mxu0 0.0
    %6882 = vmatpush1.msra.mxu0 %v5280
    %6883 = vmatprep.subr.mxu0 0.0
    %6884 = vmatpush1.msra.mxu0 %v5281
    %6885 = vmatprep.subr.mxu0 0.0
    %6886 = vmatpush1.msra.mxu0 %v5282
    %6887 = vmatprep.subr.mxu0 0.0
    %6888 = vmatpush1.msra.mxu0 %v5283
    %6889 = vmatprep.subr.mxu0 0.0
    %6890 = vmatpush1.msra.mxu0 %v5284
    %6891 = vmatprep.subr.mxu0 0.0
    %6892 = vmatpush1.msra.mxu0 %v5285
    %6893 = vmatprep.subr.mxu0 0.0
    %6894 = vmatpush1.msra.mxu0 %v5286
    %6895 = vmatprep.subr.mxu0 0.0
    %6896 = vmatpush1.msra.mxu0 %v5287
    %6897 = vmatprep.subr.mxu0 0.0
    %6898 = vmatpush1.msra.mxu0 %v5288
    %6899 = vmatprep.subr.mxu0 0.0
    %6900 = vmatpush1.msra.mxu0 %v5289
    %6901 = vmatprep.subr.mxu0 0.0
    %6902 = vmatpush1.msra.mxu0 %v5290
    %6903 = vmatprep.subr.mxu0 0.0
    %6904 = vmatpush1.msra.mxu0 %v5291
    %6905 = vmatprep.subr.mxu0 0.0
    %6906 = vmatpush1.msra.mxu0 %v5292
    %6907 = vmatprep.subr.mxu0 0.0
    %6908 = vmatpush1.msra.mxu0 %v5293
    %6909 = vmatprep.subr.mxu0 0.0
    %6910 = vmatpush1.msra.mxu0 %v5294
    %6911 = vmatprep.subr.mxu0 0.0
    %6912 = vmatpush1.msra.mxu0 %v5295
    %6913 = vmatprep.subr.mxu0 0.0
    %6914 = vmatpush1.msra.mxu0 %v5296
    %6915 = vmatprep.subr.mxu0 0.0
    %6916 = vmatpush1.msra.mxu0 %v5297
    %6917 = vmatprep.subr.mxu0 0.0
    %6918 = vmatpush1.msra.mxu0 %v5298
    %6919 = vmatprep.subr.mxu0 0.0
    %6920 = vmatpush1.msra.mxu0 %v5299
    %6921 = vmatprep.subr.mxu0 0.0
    %6922 = vmatpush1.msra.mxu0 %v5300
    %6923 = vmatprep.subr.mxu0 0.0
    %6924 = vmatpush1.msra.mxu0 %v5301
    %6925 = vmatprep.subr.mxu0 0.0
    %6926 = vmatpush1.msra.mxu0 %v5302
    %6927 = vmatprep.subr.mxu0 0.0
    %6928 = vmatpush1.msra.mxu0 %v5303
    %6929 = vmatprep.subr.mxu0 0.0
    %6930 = vmatpush1.msra.mxu0 %v5304
    %6931 = vmatprep.subr.mxu0 0.0
    %6932 = vmatpush1.msra.mxu0 %v5305
    %6933 = vmatprep.subr.mxu0 0.0
    %6934 = vmatpush1.msra.mxu0 %v5306
    %6935 = vmatprep.subr.mxu0 0.0
    %6936 = vmatpush1.msra.mxu0 %v5307
    %6937 = vmatprep.subr.mxu0 0.0
    %6938 = vmatpush1.msra.mxu0 %v5308
    %6939 = vmatprep.subr.mxu0 0.0
    %6940 = vmatpush1.msra.mxu0 %v5309
    %6941 = vmatprep.mubr.f32.mxu0 %v4627
    %6942 = vmatmul.mubr.f32.gmra.mrb[0].mxu0 %v4626
    %v6943 = vpop.f32.mrb[0].mxu0
    %v6944 = vadd.f32 %v6874, %v6943
    %v6945 = vpop.f32.mrb[0].mxu0
    %6946 = vdwg.mxu0
    %6947 = vmatprep.subr.mxu0 0.0
    %6948 = vmatpush1.msra.mxu0 %v5310
    %6949 = vmatprep.subr.mxu0 0.0
    %6950 = vmatpush1.msra.mxu0 %v5311
    %6951 = vmatprep.subr.mxu0 0.0
    %6952 = vmatpush1.msra.mxu0 %v5312
    %6953 = vmatprep.subr.mxu0 0.0
    %6954 = vmatpush1.msra.mxu0 %v5313
    %6955 = vmatprep.subr.mxu0 0.0
    %6956 = vmatpush1.msra.mxu0 %v5314
    %6957 = vmatprep.subr.mxu0 0.0
    %6958 = vmatpush1.msra.mxu0 %v5315
    %6959 = vmatprep.subr.mxu0 0.0
    %6960 = vmatpush1.msra.mxu0 %v5316
    %6961 = vmatprep.subr.mxu0 0.0
    %6962 = vmatpush1.msra.mxu0 %v5317
    %6963 = vmatprep.subr.mxu0 0.0
    %6964 = vmatpush1.msra.mxu0 %v5318
    %6965 = vmatprep.subr.mxu0 0.0
    %6966 = vmatpush1.msra.mxu0 %v5319
    %6967 = vmatprep.subr.mxu0 0.0
    %6968 = vmatpush1.msra.mxu0 %v5320
    %6969 = vmatprep.subr.mxu0 0.0
    %6970 = vmatpush1.msra.mxu0 %v5321
    %6971 = vmatprep.subr.mxu0 0.0
    %6972 = vmatpush1.msra.mxu0 %v5322
    %6973 = vmatprep.subr.mxu0 0.0
    %6974 = vmatpush1.msra.mxu0 %v5323
    %6975 = vmatprep.subr.mxu0 0.0
    %6976 = vmatpush1.msra.mxu0 %v5324
    %6977 = vmatprep.subr.mxu0 0.0
    %6978 = vmatpush1.msra.mxu0 %v5325
    %6979 = vmatprep.subr.mxu0 0.0
    %6980 = vmatpush1.msra.mxu0 %v5326
    %6981 = vmatprep.subr.mxu0 0.0
    %6982 = vmatpush1.msra.mxu0 %v5327
    %6983 = vmatprep.subr.mxu0 0.0
    %6984 = vmatpush1.msra.mxu0 %v5328
    %6985 = vmatprep.subr.mxu0 0.0
    %6986 = vmatpush1.msra.mxu0 %v5329
    %6987 = vmatprep.subr.mxu0 0.0
    %6988 = vmatpush1.msra.mxu0 %v5330
    %6989 = vmatprep.subr.mxu0 0.0
    %6990 = vmatpush1.msra.mxu0 %v5331
    %6991 = vmatprep.subr.mxu0 0.0
    %6992 = vmatpush1.msra.mxu0 %v5332
    %6993 = vmatprep.subr.mxu0 0.0
    %6994 = vmatpush1.msra.mxu0 %v5333
    %6995 = vmatprep.subr.mxu0 0.0
    %6996 = vmatpush1.msra.mxu0 %v5334
    %6997 = vmatprep.subr.mxu0 0.0
    %6998 = vmatpush1.msra.mxu0 %v5335
    %6999 = vmatprep.subr.mxu0 0.0
    %7000 = vmatpush1.msra.mxu0 %v5336
    %7001 = vmatprep.subr.mxu0 0.0
    %7002 = vmatpush1.msra.mxu0 %v5337
    %7003 = vmatprep.subr.mxu0 0.0
    %7004 = vmatpush1.msra.mxu0 %v5338
    %7005 = vmatprep.subr.mxu0 0.0
    %7006 = vmatpush1.msra.mxu0 %v5339
    %7007 = vmatprep.subr.mxu0 0.0
    %7008 = vmatpush1.msra.mxu0 %v5340
    %7009 = vmatprep.subr.mxu0 0.0
    %7010 = vmatpush1.msra.mxu0 %v5341
    %7011 = vmatprep.mubr.f32.mxu0 %v4629
    %7012 = vmatmul.mubr.f32.gmra.mrb[0].mxu0 %v4628
    %v7013 = vpop.f32.mrb[0].mxu0
    %v7014 = vadd.f32 %v6944, %v7013
    %v7015 = vpop.f32.mrb[0].mxu0
    %7016 = vdwg.mxu0
    %7017 = vmatprep.subr.mxu0 0.0
    %7018 = vmatpush1.msra.mxu0 %v5342
    %7019 = vmatprep.subr.mxu0 0.0
    %7020 = vmatpush1.msra.mxu0 %v5343
    %7021 = vmatprep.subr.mxu0 0.0
    %7022 = vmatpush1.msra.mxu0 %v5344
    %7023 = vmatprep.subr.mxu0 0.0
    %7024 = vmatpush1.msra.mxu0 %v5345
    %7025 = vmatprep.subr.mxu0 0.0
    %7026 = vmatpush1.msra.mxu0 %v5346
    %7027 = vmatprep.subr.mxu0 0.0
    %7028 = vmatpush1.msra.mxu0 %v5347
    %7029 = vmatprep.subr.mxu0 0.0
    %7030 = vmatpush1.msra.mxu0 %v5348
    %7031 = vmatprep.subr.mxu0 0.0
    %7032 = vmatpush1.msra.mxu0 %v5349
    %7033 = vmatprep.subr.mxu0 0.0
    %7034 = vmatpush1.msra.mxu0 %v5350
    %7035 = vmatprep.subr.mxu0 0.0
    %7036 = vmatpush1.msra.mxu0 %v5351
    %7037 = vmatprep.subr.mxu0 0.0
    %7038 = vmatpush1.msra.mxu0 %v5352
    %7039 = vmatprep.subr.mxu0 0.0
    %7040 = vmatpush1.msra.mxu0 %v5353
    %7041 = vmatprep.subr.mxu0 0.0
    %7042 = vmatpush1.msra.mxu0 %v5354
    %7043 = vmatprep.subr.mxu0 0.0
    %7044 = vmatpush1.msra.mxu0 %v5355
    %7045 = vmatprep.subr.mxu0 0.0
    %7046 = vmatpush1.msra.mxu0 %v5356
    %7047 = vmatprep.subr.mxu0 0.0
    %7048 = vmatpush1.msra.mxu0 %v5357
    %7049 = vmatprep.subr.mxu0 0.0
    %7050 = vmatpush1.msra.mxu0 %v5358
    %7051 = vmatprep.subr.mxu0 0.0
    %7052 = vmatpush1.msra.mxu0 %v5359
    %7053 = vmatprep.subr.mxu0 0.0
    %7054 = vmatpush1.msra.mxu0 %v5360
    %7055 = vmatprep.subr.mxu0 0.0
    %7056 = vmatpush1.msra.mxu0 %v5361
    %7057 = vmatprep.subr.mxu0 0.0
    %7058 = vmatpush1.msra.mxu0 %v5362
    %7059 = vmatprep.subr.mxu0 0.0
    %7060 = vmatpush1.msra.mxu0 %v5363
    %7061 = vmatprep.subr.mxu0 0.0
    %7062 = vmatpush1.msra.mxu0 %v5364
    %7063 = vmatprep.subr.mxu0 0.0
    %7064 = vmatpush1.msra.mxu0 %v5365
    %7065 = vmatprep.subr.mxu0 0.0
    %7066 = vmatpush1.msra.mxu0 %v5366
    %7067 = vmatprep.subr.mxu0 0.0
    %7068 = vmatpush1.msra.mxu0 %v5367
    %7069 = vmatprep.subr.mxu0 0.0
    %7070 = vmatpush1.msra.mxu0 %v5368
    %7071 = vmatprep.subr.mxu0 0.0
    %7072 = vmatpush1.msra.mxu0 %v5369
    %7073 = vmatprep.subr.mxu0 0.0
    %7074 = vmatpush1.msra.mxu0 %v5370
    %7075 = vmatprep.subr.mxu0 0.0
    %7076 = vmatpush1.msra.mxu0 %v5371
    %7077 = vmatprep.subr.mxu0 0.0
    %7078 = vmatpush1.msra.mxu0 %v5372
    %7079 = vmatprep.subr.mxu0 0.0
    %7080 = vmatpush1.msra.mxu0 %v5373
    %7081 = vmatprep.mubr.f32.mxu0 %v4631
    %7082 = vmatmul.mubr.f32.gmra.mrb[0].mxu0 %v4630
    %v7083 = vpop.f32.mrb[0].mxu0
    %v7084 = vadd.f32 %v7014, %v7083
    %v7085 = vpop.f32.mrb[0].mxu0
    %7086 = vdwg.mxu0
    %7087 = vmatprep.subr.mxu0 0.0
    %7088 = vmatpush1.msra.mxu0 %v5374
    %7089 = vmatprep.subr.mxu0 0.0
    %7090 = vmatpush1.msra.mxu0 %v5375
    %7091 = vmatprep.subr.mxu0 0.0
    %7092 = vmatpush1.msra.mxu0 %v5376
    %7093 = vmatprep.subr.mxu0 0.0
    %7094 = vmatpush1.msra.mxu0 %v5377
    %7095 = vmatprep.subr.mxu0 0.0
    %7096 = vmatpush1.msra.mxu0 %v5378
    %7097 = vmatprep.subr.mxu0 0.0
    %7098 = vmatpush1.msra.mxu0 %v5379
    %7099 = vmatprep.subr.mxu0 0.0
    %7100 = vmatpush1.msra.mxu0 %v5380
    %7101 = vmatprep.subr.mxu0 0.0
    %7102 = vmatpush1.msra.mxu0 %v5381
    %7103 = vmatprep.subr.mxu0 0.0
    %7104 = vmatpush1.msra.mxu0 %v5382
    %7105 = vmatprep.subr.mxu0 0.0
    %7106 = vmatpush1.msra.mxu0 %v5383
    %7107 = vmatprep.subr.mxu0 0.0
    %7108 = vmatpush1.msra.mxu0 %v5384
    %7109 = vmatprep.subr.mxu0 0.0
    %7110 = vmatpush1.msra.mxu0 %v5385
    %7111 = vmatprep.subr.mxu0 0.0
    %7112 = vmatpush1.msra.mxu0 %v5386
    %7113 = vmatprep.subr.mxu0 0.0
    %7114 = vmatpush1.msra.mxu0 %v5387
    %7115 = vmatprep.subr.mxu0 0.0
    %7116 = vmatpush1.msra.mxu0 %v5388
    %7117 = vmatprep.subr.mxu0 0.0
    %7118 = vmatpush1.msra.mxu0 %v5389
    %7119 = vmatprep.subr.mxu0 0.0
    %7120 = vmatpush1.msra.mxu0 %v5390
    %7121 = vmatprep.subr.mxu0 0.0
    %7122 = vmatpush1.msra.mxu0 %v5391
    %7123 = vmatprep.subr.mxu0 0.0
    %7124 = vmatpush1.msra.mxu0 %v5392
    %7125 = vmatprep.subr.mxu0 0.0
    %7126 = vmatpush1.msra.mxu0 %v5393
    %7127 = vmatprep.subr.mxu0 0.0
    %7128 = vmatpush1.msra.mxu0 %v5394
    %7129 = vmatprep.subr.mxu0 0.0
    %7130 = vmatpush1.msra.mxu0 %v5395
    %7131 = vmatprep.subr.mxu0 0.0
    %7132 = vmatpush1.msra.mxu0 %v5396
    %7133 = vmatprep.subr.mxu0 0.0
    %7134 = vmatpush1.msra.mxu0 %v5397
    %7135 = vmatprep.subr.mxu0 0.0
    %7136 = vmatpush1.msra.mxu0 %v5398
    %7137 = vmatprep.subr.mxu0 0.0
    %7138 = vmatpush1.msra.mxu0 %v5399
    %7139 = vmatprep.subr.mxu0 0.0
    %7140 = vmatpush1.msra.mxu0 %v5400
    %7141 = vmatprep.subr.mxu0 0.0
    %7142 = vmatpush1.msra.mxu0 %v5401
    %7143 = vmatprep.subr.mxu0 0.0
    %7144 = vmatpush1.msra.mxu0 %v5402
    %7145 = vmatprep.subr.mxu0 0.0
    %7146 = vmatpush1.msra.mxu0 %v5403
    %7147 = vmatprep.subr.mxu0 0.0
    %7148 = vmatpush1.msra.mxu0 %v5404
    %7149 = vmatprep.subr.mxu0 0.0
    %7150 = vmatpush1.msra.mxu0 %v5405
    %7151 = vmatprep.mubr.f32.mxu0 %v4633
    %7152 = vmatmul.mubr.f32.gmra.mrb[0].mxu0 %v4632
    %v7153 = vpop.f32.mrb[0].mxu0
    %v7154 = vadd.f32 %v7084, %v7153
    %v7155 = vpop.f32.mrb[0].mxu0
    %7156 = vdwg.mxu0
    %7157 = vmatprep.subr.mxu0 0.0
    %7158 = vmatpush1.msra.mxu0 %v5406
    %7159 = vmatprep.subr.mxu0 0.0
    %7160 = vmatpush1.msra.mxu0 %v5407
    %7161 = vmatprep.subr.mxu0 0.0
    %7162 = vmatpush1.msra.mxu0 %v5408
    %7163 = vmatprep.subr.mxu0 0.0
    %7164 = vmatpush1.msra.mxu0 %v5409
    %7165 = vmatprep.subr.mxu0 0.0
    %7166 = vmatpush1.msra.mxu0 %v5410
    %7167 = vmatprep.subr.mxu0 0.0
    %7168 = vmatpush1.msra.mxu0 %v5411
    %7169 = vmatprep.subr.mxu0 0.0
    %7170 = vmatpush1.msra.mxu0 %v5412
    %7171 = vmatprep.subr.mxu0 0.0
    %7172 = vmatpush1.msra.mxu0 %v5413
    %7173 = vmatprep.subr.mxu0 0.0
    %7174 = vmatpush1.msra.mxu0 %v5414
    %7175 = vmatprep.subr.mxu0 0.0
    %7176 = vmatpush1.msra.mxu0 %v5415
    %7177 = vmatprep.subr.mxu0 0.0
    %7178 = vmatpush1.msra.mxu0 %v5416
    %7179 = vmatprep.subr.mxu0 0.0
    %7180 = vmatpush1.msra.mxu0 %v5417
    %7181 = vmatprep.subr.mxu0 0.0
    %7182 = vmatpush1.msra.mxu0 %v5418
    %7183 = vmatprep.subr.mxu0 0.0
    %7184 = vmatpush1.msra.mxu0 %v5419
    %7185 = vmatprep.subr.mxu0 0.0
    %7186 = vmatpush1.msra.mxu0 %v5420
    %7187 = vmatprep.subr.mxu0 0.0
    %7188 = vmatpush1.msra.mxu0 %v5421
    %7189 = vmatprep.subr.mxu0 0.0
    %7190 = vmatpush1.msra.mxu0 %v5422
    %7191 = vmatprep.subr.mxu0 0.0
    %7192 = vmatpush1.msra.mxu0 %v5423
    %7193 = vmatprep.subr.mxu0 0.0
    %7194 = vmatpush1.msra.mxu0 %v5424
    %7195 = vmatprep.subr.mxu0 0.0
    %7196 = vmatpush1.msra.mxu0 %v5425
    %7197 = vmatprep.subr.mxu0 0.0
    %7198 = vmatpush1.msra.mxu0 %v5426
    %7199 = vmatprep.subr.mxu0 0.0
    %7200 = vmatpush1.msra.mxu0 %v5427
    %7201 = vmatprep.subr.mxu0 0.0
    %7202 = vmatpush1.msra.mxu0 %v5428
    %7203 = vmatprep.subr.mxu0 0.0
    %7204 = vmatpush1.msra.mxu0 %v5429
    %7205 = vmatprep.subr.mxu0 0.0
    %7206 = vmatpush1.msra.mxu0 %v5430
    %7207 = vmatprep.subr.mxu0 0.0
    %7208 = vmatpush1.msra.mxu0 %v5431
    %7209 = vmatprep.subr.mxu0 0.0
    %7210 = vmatpush1.msra.mxu0 %v5432
    %7211 = vmatprep.subr.mxu0 0.0
    %7212 = vmatpush1.msra.mxu0 %v5433
    %7213 = vmatprep.subr.mxu0 0.0
    %7214 = vmatpush1.msra.mxu0 %v5434
    %7215 = vmatprep.subr.mxu0 0.0
    %7216 = vmatpush1.msra.mxu0 %v5435
    %7217 = vmatprep.subr.mxu0 0.0
    %7218 = vmatpush1.msra.mxu0 %v5436
    %7219 = vmatprep.subr.mxu0 0.0
    %7220 = vmatpush1.msra.mxu0 %v5437
    %7221 = vmatprep.mubr.f32.mxu0 %v4635
    %7222 = vmatmul.mubr.f32.gmra.mrb[0].mxu0 %v4634
    %v7223 = vpop.f32.mrb[0].mxu0
    %v7224 = vadd.f32 %v7154, %v7223
    %v7225 = vpop.f32.mrb[0].mxu0
    %7226 = vdwg.mxu0
    %7227 = vmatprep.subr.mxu0 0.0
    %7228 = vmatpush1.msra.mxu0 %v5438
    %7229 = vmatprep.subr.mxu0 0.0
    %7230 = vmatpush1.msra.mxu0 %v5439
    %7231 = vmatprep.subr.mxu0 0.0
    %7232 = vmatpush1.msra.mxu0 %v5440
    %7233 = vmatprep.subr.mxu0 0.0
    %7234 = vmatpush1.msra.mxu0 %v5441
    %7235 = vmatprep.subr.mxu0 0.0
    %7236 = vmatpush1.msra.mxu0 %v5442
    %7237 = vmatprep.subr.mxu0 0.0
    %7238 = vmatpush1.msra.mxu0 %v5443
    %7239 = vmatprep.subr.mxu0 0.0
    %7240 = vmatpush1.msra.mxu0 %v5444
    %7241 = vmatprep.subr.mxu0 0.0
    %7242 = vmatpush1.msra.mxu0 %v5445
    %7243 = vmatprep.subr.mxu0 0.0
    %7244 = vmatpush1.msra.mxu0 %v5446
    %7245 = vmatprep.subr.mxu0 0.0
    %7246 = vmatpush1.msra.mxu0 %v5447
    %7247 = vmatprep.subr.mxu0 0.0
    %7248 = vmatpush1.msra.mxu0 %v5448
    %7249 = vmatprep.subr.mxu0 0.0
    %7250 = vmatpush1.msra.mxu0 %v5449
    %7251 = vmatprep.subr.mxu0 0.0
    %7252 = vmatpush1.msra.mxu0 %v5450
    %7253 = vmatprep.subr.mxu0 0.0
    %7254 = vmatpush1.msra.mxu0 %v5451
    %7255 = vmatprep.subr.mxu0 0.0
    %7256 = vmatpush1.msra.mxu0 %v5452
    %7257 = vmatprep.subr.mxu0 0.0
    %7258 = vmatpush1.msra.mxu0 %v5453
    %7259 = vmatprep.subr.mxu0 0.0
    %7260 = vmatpush1.msra.mxu0 %v5454
    %7261 = vmatprep.subr.mxu0 0.0
    %7262 = vmatpush1.msra.mxu0 %v5455
    %7263 = vmatprep.subr.mxu0 0.0
    %7264 = vmatpush1.msra.mxu0 %v5456
    %7265 = vmatprep.subr.mxu0 0.0
    %7266 = vmatpush1.msra.mxu0 %v5457
    %7267 = vmatprep.subr.mxu0 0.0
    %7268 = vmatpush1.msra.mxu0 %v5458
    %7269 = vmatprep.subr.mxu0 0.0
    %7270 = vmatpush1.msra.mxu0 %v5459
    %7271 = vmatprep.subr.mxu0 0.0
    %7272 = vmatpush1.msra.mxu0 %v5460
    %7273 = vmatprep.subr.mxu0 0.0
    %7274 = vmatpush1.msra.mxu0 %v5461
    %7275 = vmatprep.subr.mxu0 0.0
    %7276 = vmatpush1.msra.mxu0 %v5462
    %7277 = vmatprep.subr.mxu0 0.0
    %7278 = vmatpush1.msra.mxu0 %v5463
    %7279 = vmatprep.subr.mxu0 0.0
    %7280 = vmatpush1.msra.mxu0 %v5464
    %7281 = vmatprep.subr.mxu0 0.0
    %7282 = vmatpush1.msra.mxu0 %v5465
    %7283 = vmatprep.subr.mxu0 0.0
    %7284 = vmatpush1.msra.mxu0 %v5466
    %7285 = vmatprep.subr.mxu0 0.0
    %7286 = vmatpush1.msra.mxu0 %v5467
    %7287 = vmatprep.subr.mxu0 0.0
    %7288 = vmatpush1.msra.mxu0 %v5468
    %7289 = vmatprep.subr.mxu0 0.0
    %7290 = vmatpush1.msra.mxu0 %v5469
    %7291 = vmatprep.mubr.f32.mxu0 %v4637
    %7292 = vmatmul.mubr.f32.gmra.mrb[0].mxu0 %v4636
    %v7293 = vpop.f32.mrb[0].mxu0
    %v7294 = vadd.f32 %v7224, %v7293
    %v7295 = vpop.f32.mrb[0].mxu0
    %7296 = vdwg.mxu0
    %v7297 = vmax.f32 %v7294, 0.0
    %v7298 = vld [vmem:[#allocation9] sm:$0xff]
    %v7299 = vld [vmem:[#allocation9 + $0x8] sm:$0xff]
    %v7300 = vld [vmem:[#allocation9 + $0x10] sm:$0xff]
    %v7301 = vld [vmem:[#allocation9 + $0x18] sm:$0xff]
    %v7302 = vld [vmem:[#allocation9 + $0x20] sm:$0xff]
    %v7303 = vld [vmem:[#allocation9 + $0x28] sm:$0xff]
    %v7304 = vld [vmem:[#allocation9 + $0x30] sm:$0xff]
    %v7305 = vld [vmem:[#allocation9 + $0x38] sm:$0xff]
    %v7306 = vld [vmem:[#allocation9 + $0x40] sm:$0xff]
    %v7307 = vld [vmem:[#allocation9 + $0x48] sm:$0xff]
    %v7308 = vld [vmem:[#allocation9 + $0x50] sm:$0xff]
    %v7309 = vld [vmem:[#allocation9 + $0x58] sm:$0xff]
    %v7310 = vld [vmem:[#allocation9 + $0x60] sm:$0xff]
    %v7311 = vld [vmem:[#allocation9 + $0x68] sm:$0xff]
    %v7312 = vld [vmem:[#allocation9 + $0x70] sm:$0xff]
    %v7313 = vld [vmem:[#allocation9 + $0x78] sm:$0xff]
    %v7314 = vld [vmem:[#allocation10] sm:$0x1]
    %v7316 = vlaneseq
    %v7317 = vshrl.u32 %v7316, 7
    %v7318 = vsub.s32 0, %v7317
    %v7319 = vrot.slane %v7314, %v7318
    %7321 = vmatprep.subr.mxu0 0.0
    %7322 = vmatpush1.msra.mxu0 %v7298
    %7323 = vmatprep.subr.mxu0 0.0
    %7324 = vmatpush1.msra.mxu0 %v7299
    %7325 = vmatprep.subr.mxu0 0.0
    %7326 = vmatpush1.msra.mxu0 %v7300
    %7327 = vmatprep.subr.mxu0 0.0
    %7328 = vmatpush1.msra.mxu0 %v7301
    %7329 = vmatprep.subr.mxu0 0.0
    %7330 = vmatpush1.msra.mxu0 %v7302
    %7331 = vmatprep.subr.mxu0 0.0
    %7332 = vmatpush1.msra.mxu0 %v7303
    %7333 = vmatprep.subr.mxu0 0.0
    %7334 = vmatpush1.msra.mxu0 %v7304
    %7335 = vmatprep.subr.mxu0 0.0
    %7336 = vmatpush1.msra.mxu0 %v7305
    %7337 = vmatprep.subr.mxu0 0.0
    %7338 = vmatpush1.msra.mxu0 %v7306
    %7339 = vmatprep.subr.mxu0 0.0
    %7340 = vmatpush1.msra.mxu0 %v7307
    %7341 = vmatprep.subr.mxu0 0.0
    %7342 = vmatpush1.msra.mxu0 %v7308
    %7343 = vmatprep.subr.mxu0 0.0
    %7344 = vmatpush1.msra.mxu0 %v7309
    %7345 = vmatprep.subr.mxu0 0.0
    %7346 = vmatpush1.msra.mxu0 %v7310
    %7347 = vmatprep.subr.mxu0 0.0
    %7348 = vmatpush1.msra.mxu0 %v7311
    %7349 = vmatprep.subr.mxu0 0.0
    %7350 = vmatpush1.msra.mxu0 %v7312
    %7351 = vmatprep.subr.mxu0 0.0
    %7352 = vmatpush1.msra.mxu0 %v7313
    %7353 = vmatprep.subr.mxu0 0.0
    %7354 = vmatpush1.msra.mxu0 0.0
    %7355 = vmatprep.subr.mxu0 0.0
    %7356 = vmatpush1.msra.mxu0 0.0
    %7357 = vmatprep.subr.mxu0 0.0
    %7358 = vmatpush1.msra.mxu0 0.0
    %7359 = vmatprep.subr.mxu0 0.0
    %7360 = vmatpush1.msra.mxu0 0.0
    %7361 = vmatprep.subr.mxu0 0.0
    %7362 = vmatpush1.msra.mxu0 0.0
    %7363 = vmatprep.subr.mxu0 0.0
    %7364 = vmatpush1.msra.mxu0 0.0
    %7365 = vmatprep.subr.mxu0 0.0
    %7366 = vmatpush1.msra.mxu0 0.0
    %7367 = vmatprep.subr.mxu0 0.0
    %7368 = vmatpush1.msra.mxu0 0.0
    %7369 = vmatprep.subr.mxu0 0.0
    %7370 = vmatpush1.msra.mxu0 0.0
    %7371 = vmatprep.subr.mxu0 0.0
    %7372 = vmatpush1.msra.mxu0 0.0
    %7373 = vmatprep.subr.mxu0 0.0
    %7374 = vmatpush1.msra.mxu0 0.0
    %7375 = vmatprep.subr.mxu0 0.0
    %7376 = vmatpush1.msra.mxu0 0.0
    %7377 = vmatprep.subr.mxu0 0.0
    %7378 = vmatpush1.msra.mxu0 0.0
    %7379 = vmatprep.subr.mxu0 0.0
    %7380 = vmatpush1.msra.mxu0 0.0
    %7381 = vmatprep.subr.mxu0 0.0
    %7382 = vmatpush1.msra.mxu0 0.0
    %7383 = vmatprep.subr.mxu0 0.0
    %7384 = vmatpush1.msra.mxu0 0.0
    %7385 = vmatprep.mubr.f32.mxu0 0.0
    %7386 = vmatmul.mubr.f32.gmra.mrb[0].mxu0 %v7297
    %v7387 = vpop.f32.mrb[0].mxu0
    %v7388 = vadd.f32 %v7319, %v7387
    %v7389 = vpop.f32.mrb[0].mxu0
    %7390 = vdwg.mxu0
    %7391 = vst [vmem:[%s7] sm:$0xff] %v7388
    // Predicated region
    $region54: #{cnn_forward.1} parent=1 // pred_check
      _
    $region55: #{cnn_forward.1} parent=1 // pred_check_branch
      %7393 = sbr.rel (0) target = $region57
    $region56: #{cnn_forward.1} parent=1 // pred_region
      _
    $region57: #{cnn_forward.1} parent=1 // pred_fallthru
      _
    // Predicated region
    $region58: #{cnn_forward.1} parent=1 // pred_check
      _
    $region59: #{cnn_forward.1} parent=1 // pred_check_branch
      %7395 = sbr.rel (0) target = $region61
    $region60: #{cnn_forward.1} parent=1 // pred_region
      _
    $region61: #{cnn_forward.1} parent=1 // pred_fallthru
      _
    %7396 = vsyncpa [#allocation3], 1
    %7397 = vsyncpa [#allocation5], 1
    %7398 = vsyncpa [#allocation8], 1
    %7399 = vsyncpa [#allocation11], 1

</llo_original>
